<compile_context>
chip_gen: v5e
topology: v5e:2x2
jax: 0.10.0
libtpu: 0.0.40
codegen_flags: <defaults>
</compile_context>

<pallas_src>
import functools

import numpy as np
import jax
import jax.numpy as jnp
from jax.experimental import pallas as pl
from jax.experimental.pallas import tpu as pltpu


# --------------------------- fused conv block ------------------------------ #

def _conv_block_kernel(*refs, n_in, pool, halo, k, pad, activation, has_final):
    # Ref order: per input [main, (left-halo, right-halo if halo)], then the
    # per-input reshaped weights, bias, (final 1x1 weight, bias), output.
    pos = 0
    parts = []
    for i in range(n_in):
        if halo:
            parts.append((refs[pos], refs[pos + 1], refs[pos + 2], pool[i]))
            pos += 3
        else:
            parts.append((refs[pos], None, None, pool[i]))
            pos += 1
    w_refs = refs[pos:pos + n_in]
    pos += n_in
    b_ref = refs[pos]
    pos += 1
    if has_final:
        wf_ref, bf_ref = refs[pos], refs[pos + 1]
        pos += 2
    out_ref = refs[pos]

    tl = out_ref.shape[1]
    cout = b_ref.shape[1]
    ti = pl.program_id(1)
    t_last = pl.num_programs(1) - 1

    acc = jnp.zeros((tl, cout), jnp.float32)
    for (x_ref, lh_ref, rh_ref, do_pool), w_ref in zip(parts, w_refs):
        if do_pool:
            # Input delivered as (1, TL, 2, Cin): fused MaxPool1d(2).
            xm = jnp.maximum(x_ref[0, :, 0, :], x_ref[0, :, 1, :])
        else:
            xm = x_ref[0]                                   # (TL, Cin)
        cin = xm.shape[-1]

        if halo:
            if do_pool:
                lh = jnp.maximum(lh_ref[0, :, 0, :], lh_ref[0, :, 1, :])
                rh = jnp.maximum(rh_ref[0, :, 0, :], rh_ref[0, :, 1, :])
            else:
                lh = lh_ref[0]
                rh = rh_ref[0]
            left = lh[8 - pad:, :]                          # last `pad` rows
            right = rh[:pad, :]                             # first `pad` rows
            left = jnp.where(ti == 0, jnp.zeros_like(left), left)
            right = jnp.where(ti == t_last, jnp.zeros_like(right), right)
        else:
            left = jnp.zeros((pad, cin), xm.dtype)
            right = jnp.zeros((pad, cin), xm.dtype)

        xpad = jnp.concatenate([left, xm, right], axis=0)   # (TL + 2*pad, Cin)
        # Tap fusion: one deep matmul instead of K shallow ones.
        slab = jnp.concatenate([xpad[kk:kk + tl, :] for kk in range(k)], axis=1)
        acc = acc + jnp.dot(slab, w_ref[...],
                            preferred_element_type=jnp.float32)

    acc = acc + b_ref[...]
    if activation == "relu":
        acc = jnp.maximum(acc, 0.0)

    if has_final:
        # Fused final Conv1d(K=1) + tanh epilogue.
        y = jnp.dot(acc, wf_ref[...], preferred_element_type=jnp.float32)
        out_ref[0] = jnp.tanh(y + bf_ref[...]).astype(out_ref.dtype)
    else:
        out_ref[0] = acc.astype(out_ref.dtype)


def _choose_tile(lc, tl_max):
    if lc <= tl_max:
        return lc, 1, False
    t = tl_max - (tl_max % 16)
    while t >= 16:
        if lc % t == 0:
            return t, lc // t, True
        t -= 16
    return lc, 1, False


def conv_block(inputs, w, b, *, pool=None, activation="relu",
               final_wb=None, tl_max=256):
    """Fused [pool] -> Conv1d(K, pad=(K-1)/2) -> bias -> act [-> 1x1 + tanh]."""
    n_in = len(inputs)
    if pool is None:
        pool = (False,) * n_in
    cout, cin_tot, ksz = w.shape
    pad = (ksz - 1) // 2
    bsz = inputs[0].shape[0]
    lc = inputs[0].shape[1] // (2 if pool[0] else 1)        # conv-rate length
    cins = [int(inp.shape[2]) for inp in inputs]
    assert sum(cins) == cin_tot
    dtype = inputs[0].dtype

    tl, n_t, halo = _choose_tile(lc, tl_max)
    if halo:
        assert pad <= 8 and tl % 16 == 0 and lc % 8 == 0

    # Torch weight (Cout, Cin_tot, K) -> per-input (K*Cin_i, Cout), row = k*Cin+ci.
    wt = jnp.transpose(w, (2, 1, 0))                        # (K, Cin_tot, Cout)
    w_parts, off = [], 0
    for cin in cins:
        w_parts.append(
            wt[:, off:off + cin, :].reshape(ksz * cin, cout).astype(dtype))
        off += cin
    bias2 = b.reshape(1, cout).astype(jnp.float32)

    nb8 = tl // 8
    nmax8 = lc // 8 - 1

    call_args, in_specs = [], []
    for inp, cin, do_pool in zip(inputs, cins, pool):
        if do_pool:
            x = inp.reshape(bsz, lc, 2, cin)                # free reshape (pairs)
            call_args.append(x)
            in_specs.append(
                pl.BlockSpec((1, tl, 2, cin), lambda bi, ti: (bi, ti, 0, 0)))
            if halo:
                call_args.append(x)
                in_specs.append(pl.BlockSpec(
                    (1, 8, 2, cin),
                    lambda bi, ti, nb=nb8:
                        (bi, jnp.maximum(ti * nb - 1, 0), 0, 0)))
                call_args.append(x)
                in_specs.append(pl.BlockSpec(
                    (1, 8, 2, cin),
                    lambda bi, ti, nb=nb8, mx=nmax8:
                        (bi, jnp.minimum((ti + 1) * nb, mx), 0, 0)))
        else:
            call_args.append(inp)
            in_specs.append(
                pl.BlockSpec((1, tl, cin), lambda bi, ti: (bi, ti, 0)))
            if halo:
                call_args.append(inp)
                in_specs.append(pl.BlockSpec(
                    (1, 8, cin),
                    lambda bi, ti, nb=nb8:
                        (bi, jnp.maximum(ti * nb - 1, 0), 0)))
                call_args.append(inp)
                in_specs.append(pl.BlockSpec(
                    (1, 8, cin),
                    lambda bi, ti, nb=nb8, mx=nmax8:
                        (bi, jnp.minimum((ti + 1) * nb, mx), 0)))

    for wp in w_parts:
        call_args.append(wp)
        in_specs.append(pl.BlockSpec(wp.shape, lambda bi, ti: (0, 0)))
    call_args.append(bias2)
    in_specs.append(pl.BlockSpec((1, cout), lambda bi, ti: (0, 0)))

    has_final = final_wb is not None
    if has_final:
        wf, bf = final_wb                                   # (Cf, Cout, 1), (Cf,)
        cf = wf.shape[0]
        wf2 = jnp.transpose(wf[:, :, 0], (1, 0)).astype(jnp.float32)   # (Cout, Cf)
        bf2 = bf.reshape(1, cf).astype(jnp.float32)
        call_args += [wf2, bf2]
        in_specs += [pl.BlockSpec((cout, cf), lambda bi, ti: (0, 0)),
                     pl.BlockSpec((1, cf), lambda bi, ti: (0, 0))]
        c_primary = cf
    else:
        c_primary = cout

    kern = functools.partial(
        _conv_block_kernel, n_in=n_in, pool=tuple(pool), halo=halo,
        k=ksz, pad=pad, activation=activation, has_final=has_final)

    return pl.pallas_call(
        kern,
        out_shape=jax.ShapeDtypeStruct((bsz, lc, c_primary), dtype),
        grid=(bsz, n_t),
        in_specs=in_specs,
        out_specs=pl.BlockSpec((1, tl, c_primary), lambda bi, ti: (bi, ti, 0)),
        compiler_params=pltpu.CompilerParams(
            dimension_semantics=("parallel", "parallel")),
    )(*call_args)


# ---------------- Upsample(x2, linear, align_corners=True) ----------------- #

def _upsample_kernel(x_ref, c_ref, o_ref):
    x = x_ref[0]                                            # (Lin, C)
    c = c_ref[...]                                          # (Lin, 6) f32
    zrow = jnp.zeros((1, x.shape[1]), x.dtype)
    xm1 = jnp.concatenate([zrow, x[:-1, :]], axis=0).astype(jnp.float32)
    xp1 = jnp.concatenate([x[1:, :], zrow], axis=0).astype(jnp.float32)
    x32 = x.astype(jnp.float32)
    even = c[:, 0:1] * xm1 + c[:, 1:2] * x32 + c[:, 2:3] * xp1
    odd = c[:, 3:4] * xm1 + c[:, 4:5] * x32 + c[:, 5:6] * xp1
    o_ref[0] = jnp.concatenate([even, odd], axis=1).astype(o_ref.dtype)


def upsample_linear_x2(x):
    # Banded 3-tap form: out[2m+p] = a[m,p]*x[m-1] + b[m,p]*x[m] + c[m,p]*x[m+1]
    # (out-of-range taps always get zero coefficients, so no masking needed).
    bsz, lin, ch = x.shape
    lout = 2 * lin
    j = np.arange(lout)
    pos = j * (lin - 1) / (lout - 1)
    i0 = np.clip(np.floor(pos).astype(np.int64), 0, lin - 1)
    i1 = np.minimum(i0 + 1, lin - 1)
    frac = pos - i0
    m = j // 2
    base = 3 * (j % 2)
    coef = np.zeros((lin, 6), np.float64)
    np.add.at(coef, (m, base + (i0 - (m - 1))), 1.0 - frac)
    np.add.at(coef, (m, base + (i1 - (m - 1))), frac)
    coef = jnp.asarray(coef.astype(np.float32))

    out = pl.pallas_call(
        _upsample_kernel,
        out_shape=jax.ShapeDtypeStruct((bsz, lin, 2 * ch), x.dtype),
        grid=(bsz,),
        in_specs=[pl.BlockSpec((1, lin, ch), lambda bi: (bi, 0, 0)),
                  pl.BlockSpec((lin, 6), lambda bi: (0, 0))],
        out_specs=pl.BlockSpec((1, lin, 2 * ch), lambda bi: (bi, 0, 0)),
        compiler_params=pltpu.CompilerParams(dimension_semantics=("parallel",)),
    )(x, coef)
    return out.reshape(bsz, lout, ch)        # free: (B, Lin, 2C) -> (B, 2Lin, C)


# ------------------------------ model wrapper ------------------------------ #

def init_params(key, canale_intrare=2, canale_iesire=2):
    # Deterministic init mimicking PyTorch Conv1d default U[-1/sqrt(fan_in), ..].
    def conv_init(k, cout, cin, ksz):
        kw, kb = jax.random.split(k)
        bound = 1.0 / np.sqrt(cin * ksz)
        w = jax.random.uniform(kw, (cout, cin, ksz), jnp.float32, -bound, bound)
        b = jax.random.uniform(kb, (cout,), jnp.float32, -bound, bound)
        return w, b

    keys = jax.random.split(key, 8)
    return {
        "conv1": conv_init(keys[0], 16, canale_intrare, 15),
        "conv2": conv_init(keys[1], 32, 16, 15),
        "conv3": conv_init(keys[2], 64, 32, 15),
        "bottleneck": conv_init(keys[3], 128, 64, 15),
        "conv4": conv_init(keys[4], 64, 128 + 64, 15),
        "conv5": conv_init(keys[5], 32, 64 + 32, 15),
        "conv6": conv_init(keys[6], 16, 32 + 16, 15),
        "final": conv_init(keys[7], canale_iesire, 16, 1),
    }


def wave_unet_forward(params, strat, *, tl_max=256, compute_dtype=jnp.float32):
    # strat: (B, C_in, L), exactly like the PyTorch module's input.
    x = jnp.transpose(strat, (0, 2, 1)).astype(compute_dtype)       # (B, L, C)
    assert x.shape[1] % 8 == 0, "L must be divisible by 8 (3 pooling levels)"

    s1 = conv_block([x], *params["conv1"], activation="relu", tl_max=tl_max)
    s2 = conv_block([s1], *params["conv2"], activation="relu",
                    pool=(True,), tl_max=tl_max)
    s3 = conv_block([s2], *params["conv3"], activation="relu",
                    pool=(True,), tl_max=tl_max)
    s4 = conv_block([s3], *params["bottleneck"], activation=None,
                    pool=(True,), tl_max=tl_max)          # no ReLU (matches torch)
    u = upsample_linear_x2(s4)
    d = conv_block([u, s3], *params["conv4"], activation="relu", tl_max=tl_max)
    u = upsample_linear_x2(d)
    d = conv_block([u, s2], *params["conv5"], activation="relu", tl_max=tl_max)
    u = upsample_linear_x2(d)
    out = conv_block([u, s1], *params["conv6"], activation="relu",
                     final_wb=params["final"], tl_max=tl_max)   # fused 1x1 + tanh
    return jnp.transpose(out, (0, 2, 1))                  # back to (B, C_out, L)


# ------------------------- pure-JAX reference (NCL) ------------------------ #

def reference_forward(params, strat):
    def conv(v, wb, padding):
        w, b = wb
        y = jax.lax.conv_general_dilated(
            v, w, (1,), [(padding, padding)],
            dimension_numbers=("NCH", "OIH", "NCH"),
            precision=jax.lax.Precision.HIGHEST)
        return y + b[None, :, None]

    relu = lambda v: jnp.maximum(v, 0.0)

    def pool(v):
        bsz, ch, ln = v.shape
        return jnp.max(v.reshape(bsz, ch, ln // 2, 2), axis=-1)

    def up(v):
        bsz, ch, lin = v.shape
        lout = 2 * lin
        pos = jnp.arange(lout) * (lin - 1) / (lout - 1)
        i0 = jnp.clip(jnp.floor(pos).astype(jnp.int32), 0, lin - 1)
        i1 = jnp.minimum(i0 + 1, lin - 1)
        fr = (pos - i0).astype(v.dtype)
        return v[:, :, i0] * (1.0 - fr) + v[:, :, i1] * fr

    s1 = relu(conv(strat, params["conv1"], 7))
    s2 = relu(conv(pool(s1), params["conv2"], 7))
    s3 = relu(conv(pool(s2), params["conv3"], 7))
    s4 = conv(pool(s3), params["bottleneck"], 7)
    h = jnp.concatenate([up(s4), s3], axis=1)
    h = relu(conv(h, params["conv4"], 7))
    h = jnp.concatenate([up(h), s2], axis=1)
    h = relu(conv(h, params["conv5"], 7))
    h = jnp.concatenate([up(h), s1], axis=1)
    h = relu(conv(h, params["conv6"], 7))
    return jnp.tanh(conv(h, params["final"], 0))


if __name__ == "__main__":
    key = jax.random.PRNGKey(0)
    kp, kx = jax.random.split(key)
    params = init_params(kp, canale_intrare=2, canale_iesire=2)

    # Small shapes consistent with the module: B=2, C_in=2, L=64 (3x pool-able).
    # tl_max=16 keeps tiles tiny AND exercises the multi-tile halo path.
    bsz, cin, seq = 2, 2, 64
    strat = jax.random.normal(kx, (bsz, cin, seq), jnp.float32)

    fwd = jax.jit(functools.partial(wave_unet_forward, tl_max=16))
    out = jax.block_until_ready(fwd(params, strat))

    assert out.shape == (bsz, 2, seq), out.shape
    ref = reference_forward(params, strat)
    err = float(jnp.max(jnp.abs(out - ref)))
    assert np.isfinite(err) and err < 3e-2, f"max abs err vs reference: {err}"
    print("KERNEL_OK")
</pallas_src>

<mosaic_0001>
module attributes {stable_mosaic.version = 11 : i64} {
  func.func @_conv_block_kernel(%arg0: i32, %arg1: i32, %arg2: memref<1x16x2xf32, #tpu.memory_space<vmem>>, %arg3: memref<1x8x2xf32, #tpu.memory_space<vmem>>, %arg4: memref<1x8x2xf32, #tpu.memory_space<vmem>>, %arg5: memref<30x16xf32, #tpu.memory_space<vmem>>, %arg6: memref<1x16xf32, #tpu.memory_space<vmem>>, %arg7: memref<1x16x16xf32, #tpu.memory_space<vmem>>) attributes {dimension_semantics = [#tpu.dimension_semantics<parallel>, #tpu.dimension_semantics<parallel>], iteration_bounds = array<i64: 2, 4>, scalar_prefetch = 0 : i64, scratch_operands = 0 : i64, tpu.core_type = #tpu.core_type<tc>, window_params = [{transform_indices = @transform_0, window_bounds = array<i64: 1, 16, 2>}, {transform_indices = @transform_1, window_bounds = array<i64: 1, 8, 2>}, {transform_indices = @transform_2, window_bounds = array<i64: 1, 8, 2>}, {pipeline_mode = #tpu.pipeline_mode<synchronous>, transform_indices = @transform_3, window_bounds = array<i64: 30, 16>}, {pipeline_mode = #tpu.pipeline_mode<synchronous>, transform_indices = @transform_4, window_bounds = array<i64: 1, 16>}, {transform_indices = @transform_5, window_bounds = array<i64: 1, 16, 16>}]} {
    %cst = arith.constant 0.000000e+00 : f32
    %0 = vector.broadcast %cst : f32 to vector<16x16xf32>
    %c0 = arith.constant 0 : index
    %c0_0 = arith.constant 0 : index
    %c0_1 = arith.constant 0 : index
    %1 = vector.load %arg2[%c0, %c0_0, %c0_1] : memref<1x16x2xf32, #tpu.memory_space<vmem>>, vector<1x16x2xf32>
    %2 = vector.shape_cast %1 : vector<1x16x2xf32> to vector<16x2xf32>
    %c0_2 = arith.constant 0 : index
    %c0_3 = arith.constant 0 : index
    %c0_4 = arith.constant 0 : index
    %3 = vector.load %arg3[%c0_2, %c0_3, %c0_4] : memref<1x8x2xf32, #tpu.memory_space<vmem>>, vector<1x8x2xf32>
    %4 = vector.shape_cast %3 : vector<1x8x2xf32> to vector<8x2xf32>
    %c0_5 = arith.constant 0 : index
    %c0_6 = arith.constant 0 : index
    %c0_7 = arith.constant 0 : index
    %5 = vector.load %arg4[%c0_5, %c0_6, %c0_7] : memref<1x8x2xf32, #tpu.memory_space<vmem>>, vector<1x8x2xf32>
    %6 = vector.shape_cast %5 : vector<1x8x2xf32> to vector<8x2xf32>
    %7 = vector.extract_strided_slice %4 {offsets = [1, 0], sizes = [7, 2], strides = [1, 1]} : vector<8x2xf32> to vector<7x2xf32>
    %8 = vector.extract_strided_slice %6 {offsets = [0, 0], sizes = [7, 2], strides = [1, 1]} : vector<8x2xf32> to vector<7x2xf32>
    %c0_i32 = arith.constant 0 : i32
    %9 = arith.cmpi eq, %arg1, %c0_i32 : i32
    %cst_8 = arith.constant 0.000000e+00 : f32
    %10 = vector.broadcast %cst_8 : f32 to vector<7x2xf32>
    %11 = arith.select %9, %10, %7 : vector<7x2xf32>
    %c3_i32 = arith.constant 3 : i32
    %12 = arith.cmpi eq, %arg1, %c3_i32 : i32
    %cst_9 = arith.constant 0.000000e+00 : f32
    %13 = vector.broadcast %cst_9 : f32 to vector<7x2xf32>
    %14 = arith.select %12, %13, %8 : vector<7x2xf32>
    %15 = tpu.concatenate %11, %2, %14 in 0 : vector<7x2xf32>, vector<16x2xf32>, vector<7x2xf32> -> vector<30x2xf32>
    %16 = vector.extract_strided_slice %15 {offsets = [0, 0], sizes = [16, 2], strides = [1, 1]} : vector<30x2xf32> to vector<16x2xf32>
    %17 = vector.extract_strided_slice %15 {offsets = [1, 0], sizes = [16, 2], strides = [1, 1]} : vector<30x2xf32> to vector<16x2xf32>
    %18 = vector.extract_strided_slice %15 {offsets = [2, 0], sizes = [16, 2], strides = [1, 1]} : vector<30x2xf32> to vector<16x2xf32>
    %19 = vector.extract_strided_slice %15 {offsets = [3, 0], sizes = [16, 2], strides = [1, 1]} : vector<30x2xf32> to vector<16x2xf32>
    %20 = vector.extract_strided_slice %15 {offsets = [4, 0], sizes = [16, 2], strides = [1, 1]} : vector<30x2xf32> to vector<16x2xf32>
    %21 = vector.extract_strided_slice %15 {offsets = [5, 0], sizes = [16, 2], strides = [1, 1]} : vector<30x2xf32> to vector<16x2xf32>
    %22 = vector.extract_strided_slice %15 {offsets = [6, 0], sizes = [16, 2], strides = [1, 1]} : vector<30x2xf32> to vector<16x2xf32>
    %23 = vector.extract_strided_slice %15 {offsets = [7, 0], sizes = [16, 2], strides = [1, 1]} : vector<30x2xf32> to vector<16x2xf32>
    %24 = vector.extract_strided_slice %15 {offsets = [8, 0], sizes = [16, 2], strides = [1, 1]} : vector<30x2xf32> to vector<16x2xf32>
    %25 = vector.extract_strided_slice %15 {offsets = [9, 0], sizes = [16, 2], strides = [1, 1]} : vector<30x2xf32> to vector<16x2xf32>
    %26 = vector.extract_strided_slice %15 {offsets = [10, 0], sizes = [16, 2], strides = [1, 1]} : vector<30x2xf32> to vector<16x2xf32>
    %27 = vector.extract_strided_slice %15 {offsets = [11, 0], sizes = [16, 2], strides = [1, 1]} : vector<30x2xf32> to vector<16x2xf32>
    %28 = vector.extract_strided_slice %15 {offsets = [12, 0], sizes = [16, 2], strides = [1, 1]} : vector<30x2xf32> to vector<16x2xf32>
    %29 = vector.extract_strided_slice %15 {offsets = [13, 0], sizes = [16, 2], strides = [1, 1]} : vector<30x2xf32> to vector<16x2xf32>
    %30 = vector.extract_strided_slice %15 {offsets = [14, 0], sizes = [16, 2], strides = [1, 1]} : vector<30x2xf32> to vector<16x2xf32>
    %31 = tpu.concatenate %16, %17, %18, %19, %20, %21, %22, %23, %24, %25, %26, %27, %28, %29, %30 in 1 : vector<16x2xf32>, vector<16x2xf32>, vector<16x2xf32>, vector<16x2xf32>, vector<16x2xf32>, vector<16x2xf32>, vector<16x2xf32>, vector<16x2xf32>, vector<16x2xf32>, vector<16x2xf32>, vector<16x2xf32>, vector<16x2xf32>, vector<16x2xf32>, vector<16x2xf32>, vector<16x2xf32> -> vector<16x30xf32>
    %c0_10 = arith.constant 0 : index
    %c0_11 = arith.constant 0 : index
    %32 = vector.load %arg5[%c0_10, %c0_11] : memref<30x16xf32, #tpu.memory_space<vmem>>, vector<30x16xf32>
    %cst_12 = arith.constant dense<0.000000e+00> : vector<16x16xf32>
    %33 = tpu.matmul %31, %32, %cst_12 {dimension_numbers = #tpu.dot_dimension_numbers<[1], [0], [0], [1], [0, 0, 1, 1], [], []>} : vector<16x30xf32>, vector<30x16xf32>, vector<16x16xf32> -> vector<16x16xf32>
    %34 = arith.addf %0, %33 : vector<16x16xf32>
    %c0_13 = arith.constant 0 : index
    %c0_14 = arith.constant 0 : index
    %35 = vector.load %arg6[%c0_13, %c0_14] : memref<1x16xf32, #tpu.memory_space<vmem>>, vector<1x16xf32>
    %36 = vector.broadcast %35 : vector<1x16xf32> to vector<16x16xf32>
    %37 = arith.addf %34, %36 : vector<16x16xf32>
    %cst_15 = arith.constant 0.000000e+00 : f32
    %38 = vector.broadcast %cst_15 : f32 to vector<16x16xf32>
    %39 = arith.maximumf %37, %38 : vector<16x16xf32>
    %c0_16 = arith.constant 0 : index
    %c0_17 = arith.constant 0 : index
    %c0_18 = arith.constant 0 : index
    %40 = vector.load %arg7[%c0_16, %c0_17, %c0_18] : memref<1x16x16xf32, #tpu.memory_space<vmem>>, vector<1x16x16xf32>
    %41 = vector.shape_cast %40 : vector<1x16x16xf32> to vector<16x16xf32>
    %42 = vector.shape_cast %39 : vector<16x16xf32> to vector<1x16x16xf32>
    tpu.vector_store %arg7[%c0_16, %c0_17, %c0_18], %42 {strides = array<i32>} : memref<1x16x16xf32, #tpu.memory_space<vmem>>, vector<1x16x16xf32>,
    return
  }
  func.func @transform_0(%arg0: i32, %arg1: i32) -> (i32, i32, i32) {
    %c0_i32 = arith.constant 0 : i32
    %c0_i32_0 = arith.constant 0 : i32
    return %arg0, %arg1, %c0_i32 : i32, i32, i32
  }
  func.func @transform_1(%arg0: i32, %arg1: i32) -> (i32, i32, i32) {
    %c2_i32 = arith.constant 2 : i32
    %0 = arith.muli %arg1, %c2_i32 : i32
    %c1_i32 = arith.constant 1 : i32
    %1 = arith.subi %0, %c1_i32 : i32
    %c0_i32 = arith.constant 0 : i32
    %2 = arith.maxsi %1, %c0_i32 : i32
    %c0_i32_0 = arith.constant 0 : i32
    %c0_i32_1 = arith.constant 0 : i32
    return %arg0, %2, %c0_i32_0 : i32, i32, i32
  }
  func.func @transform_2(%arg0: i32, %arg1: i32) -> (i32, i32, i32) {
    %c1_i32 = arith.constant 1 : i32
    %0 = arith.addi %arg1, %c1_i32 : i32
    %c2_i32 = arith.constant 2 : i32
    %1 = arith.muli %0, %c2_i32 : i32
    %c7_i32 = arith.constant 7 : i32
    %2 = arith.minsi %1, %c7_i32 : i32
    %c0_i32 = arith.constant 0 : i32
    %c0_i32_0 = arith.constant 0 : i32
    return %arg0, %2, %c0_i32 : i32, i32, i32
  }
  func.func @transform_3(%arg0: i32, %arg1: i32) -> (i32, i32) {
    %c0_i32 = arith.constant 0 : i32
    %c0_i32_0 = arith.constant 0 : i32
    %c0_i32_1 = arith.constant 0 : i32
    return %c0_i32, %c0_i32_0 : i32, i32
  }
  func.func @transform_4(%arg0: i32, %arg1: i32) -> (i32, i32) {
    %c0_i32 = arith.constant 0 : i32
    %c0_i32_0 = arith.constant 0 : i32
    %c0_i32_1 = arith.constant 0 : i32
    return %c0_i32, %c0_i32_0 : i32, i32
  }
  func.func @transform_5(%arg0: i32, %arg1: i32) -> (i32, i32, i32) {
    %c0_i32 = arith.constant 0 : i32
    %c0_i32_0 = arith.constant 0 : i32
    return %arg0, %arg1, %c0_i32 : i32, i32, i32
  }
}

module attributes {stable_mosaic.version = 11 : i64} {
  func.func @_conv_block_kernel(%arg0: i32, %arg1: i32, %arg2: memref<1x16x2x16xf32, #tpu.memory_space<vmem>>, %arg3: memref<1x8x2x16xf32, #tpu.memory_space<vmem>>, %arg4: memref<1x8x2x16xf32, #tpu.memory_space<vmem>>, %arg5: memref<240x32xf32, #tpu.memory_space<vmem>>, %arg6: memref<1x32xf32, #tpu.memory_space<vmem>>, %arg7: memref<1x16x32xf32, #tpu.memory_space<vmem>>) attributes {dimension_semantics = [#tpu.dimension_semantics<parallel>, #tpu.dimension_semantics<parallel>], iteration_bounds = array<i64: 2, 2>, scalar_prefetch = 0 : i64, scratch_operands = 0 : i64, tpu.core_type = #tpu.core_type<tc>, window_params = [{transform_indices = @transform_0, window_bounds = array<i64: 1, 16, 2, 16>}, {transform_indices = @transform_1, window_bounds = array<i64: 1, 8, 2, 16>}, {transform_indices = @transform_2, window_bounds = array<i64: 1, 8, 2, 16>}, {pipeline_mode = #tpu.pipeline_mode<synchronous>, transform_indices = @transform_3, window_bounds = array<i64: 240, 32>}, {pipeline_mode = #tpu.pipeline_mode<synchronous>, transform_indices = @transform_4, window_bounds = array<i64: 1, 32>}, {transform_indices = @transform_5, window_bounds = array<i64: 1, 16, 32>}]} {
    %cst = arith.constant 0.000000e+00 : f32
    %0 = vector.broadcast %cst : f32 to vector<16x32xf32>
    %c0 = arith.constant 0 : index
    %c0_0 = arith.constant 0 : index
    %c0_1 = arith.constant 0 : index
    %c0_2 = arith.constant 0 : index
    %1 = vector.load %arg2[%c0, %c0_0, %c0_1, %c0_2] : memref<1x16x2x16xf32, #tpu.memory_space<vmem>>, vector<1x16x1x16xf32>
    %2 = vector.shape_cast %1 : vector<1x16x1x16xf32> to vector<16x16xf32>
    %c0_3 = arith.constant 0 : index
    %c0_4 = arith.constant 0 : index
    %c1 = arith.constant 1 : index
    %c0_5 = arith.constant 0 : index
    %3 = vector.load %arg2[%c0_3, %c0_4, %c1, %c0_5] : memref<1x16x2x16xf32, #tpu.memory_space<vmem>>, vector<1x16x1x16xf32>
    %4 = vector.shape_cast %3 : vector<1x16x1x16xf32> to vector<16x16xf32>
    %5 = arith.maximumf %2, %4 : vector<16x16xf32>
    %c0_6 = arith.constant 0 : index
    %c0_7 = arith.constant 0 : index
    %c0_8 = arith.constant 0 : index
    %c0_9 = arith.constant 0 : index
    %6 = vector.load %arg3[%c0_6, %c0_7, %c0_8, %c0_9] : memref<1x8x2x16xf32, #tpu.memory_space<vmem>>, vector<1x8x1x16xf32>
    %7 = vector.shape_cast %6 : vector<1x8x1x16xf32> to vector<8x16xf32>
    %c0_10 = arith.constant 0 : index
    %c0_11 = arith.constant 0 : index
    %c1_12 = arith.constant 1 : index
    %c0_13 = arith.constant 0 : index
    %8 = vector.load %arg3[%c0_10, %c0_11, %c1_12, %c0_13] : memref<1x8x2x16xf32, #tpu.memory_space<vmem>>, vector<1x8x1x16xf32>
    %9 = vector.shape_cast %8 : vector<1x8x1x16xf32> to vector<8x16xf32>
    %10 = arith.maximumf %7, %9 : vector<8x16xf32>
    %c0_14 = arith.constant 0 : index
    %c0_15 = arith.constant 0 : index
    %c0_16 = arith.constant 0 : index
    %c0_17 = arith.constant 0 : index
    %11 = vector.load %arg4[%c0_14, %c0_15, %c0_16, %c0_17] : memref<1x8x2x16xf32, #tpu.memory_space<vmem>>, vector<1x8x1x16xf32>
    %12 = vector.shape_cast %11 : vector<1x8x1x16xf32> to vector<8x16xf32>
    %c0_18 = arith.constant 0 : index
    %c0_19 = arith.constant 0 : index
    %c1_20 = arith.constant 1 : index
    %c0_21 = arith.constant 0 : index
    %13 = vector.load %arg4[%c0_18, %c0_19, %c1_20, %c0_21] : memref<1x8x2x16xf32, #tpu.memory_space<vmem>>, vector<1x8x1x16xf32>
    %14 = vector.shape_cast %13 : vector<1x8x1x16xf32> to vector<8x16xf32>
    %15 = arith.maximumf %12, %14 : vector<8x16xf32>
    %16 = vector.extract_strided_slice %10 {offsets = [1, 0], sizes = [7, 16], strides = [1, 1]} : vector<8x16xf32> to vector<7x16xf32>
    %17 = vector.extract_strided_slice %15 {offsets = [0, 0], sizes = [7, 16], strides = [1, 1]} : vector<8x16xf32> to vector<7x16xf32>
    %c0_i32 = arith.constant 0 : i32
    %18 = arith.cmpi eq, %arg1, %c0_i32 : i32
    %cst_22 = arith.constant 0.000000e+00 : f32
    %19 = vector.broadcast %cst_22 : f32 to vector<7x16xf32>
    %20 = arith.select %18, %19, %16 : vector<7x16xf32>
    %c1_i32 = arith.constant 1 : i32
    %21 = arith.cmpi eq, %arg1, %c1_i32 : i32
    %cst_23 = arith.constant 0.000000e+00 : f32
    %22 = vector.broadcast %cst_23 : f32 to vector<7x16xf32>
    %23 = arith.select %21, %22, %17 : vector<7x16xf32>
    %24 = tpu.concatenate %20, %5, %23 in 0 : vector<7x16xf32>, vector<16x16xf32>, vector<7x16xf32> -> vector<30x16xf32>
    %25 = vector.extract_strided_slice %24 {offsets = [0, 0], sizes = [16, 16], strides = [1, 1]} : vector<30x16xf32> to vector<16x16xf32>
    %26 = vector.extract_strided_slice %24 {offsets = [1, 0], sizes = [16, 16], strides = [1, 1]} : vector<30x16xf32> to vector<16x16xf32>
    %27 = vector.extract_strided_slice %24 {offsets = [2, 0], sizes = [16, 16], strides = [1, 1]} : vector<30x16xf32> to vector<16x16xf32>
    %28 = vector.extract_strided_slice %24 {offsets = [3, 0], sizes = [16, 16], strides = [1, 1]} : vector<30x16xf32> to vector<16x16xf32>
    %29 = vector.extract_strided_slice %24 {offsets = [4, 0], sizes = [16, 16], strides = [1, 1]} : vector<30x16xf32> to vector<16x16xf32>
    %30 = vector.extract_strided_slice %24 {offsets = [5, 0], sizes = [16, 16], strides = [1, 1]} : vector<30x16xf32> to vector<16x16xf32>
    %31 = vector.extract_strided_slice %24 {offsets = [6, 0], sizes = [16, 16], strides = [1, 1]} : vector<30x16xf32> to vector<16x16xf32>
    %32 = vector.extract_strided_slice %24 {offsets = [7, 0], sizes = [16, 16], strides = [1, 1]} : vector<30x16xf32> to vector<16x16xf32>
    %33 = vector.extract_strided_slice %24 {offsets = [8, 0], sizes = [16, 16], strides = [1, 1]} : vector<30x16xf32> to vector<16x16xf32>
    %34 = vector.extract_strided_slice %24 {offsets = [9, 0], sizes = [16, 16], strides = [1, 1]} : vector<30x16xf32> to vector<16x16xf32>
    %35 = vector.extract_strided_slice %24 {offsets = [10, 0], sizes = [16, 16], strides = [1, 1]} : vector<30x16xf32> to vector<16x16xf32>
    %36 = vector.extract_strided_slice %24 {offsets = [11, 0], sizes = [16, 16], strides = [1, 1]} : vector<30x16xf32> to vector<16x16xf32>
    %37 = vector.extract_strided_slice %24 {offsets = [12, 0], sizes = [16, 16], strides = [1, 1]} : vector<30x16xf32> to vector<16x16xf32>
    %38 = vector.extract_strided_slice %24 {offsets = [13, 0], sizes = [16, 16], strides = [1, 1]} : vector<30x16xf32> to vector<16x16xf32>
    %39 = vector.extract_strided_slice %24 {offsets = [14, 0], sizes = [16, 16], strides = [1, 1]} : vector<30x16xf32> to vector<16x16xf32>
    %40 = tpu.concatenate %25, %26, %27, %28, %29, %30, %31, %32, %33, %34, %35, %36, %37, %38, %39 in 1 : vector<16x16xf32>, vector<16x16xf32>, vector<16x16xf32>, vector<16x16xf32>, vector<16x16xf32>, vector<16x16xf32>, vector<16x16xf32>, vector<16x16xf32>, vector<16x16xf32>, vector<16x16xf32>, vector<16x16xf32>, vector<16x16xf32>, vector<16x16xf32>, vector<16x16xf32>, vector<16x16xf32> -> vector<16x240xf32>
    %c0_24 = arith.constant 0 : index
    %c0_25 = arith.constant 0 : index
    %41 = vector.load %arg5[%c0_24, %c0_25] : memref<240x32xf32, #tpu.memory_space<vmem>>, vector<240x32xf32>
    %cst_26 = arith.constant dense<0.000000e+00> : vector<16x32xf32>
    %42 = tpu.matmul %40, %41, %cst_26 {dimension_numbers = #tpu.dot_dimension_numbers<[1], [0], [0], [1], [0, 0, 1, 1], [], []>} : vector<16x240xf32>, vector<240x32xf32>, vector<16x32xf32> -> vector<16x32xf32>
    %43 = arith.addf %0, %42 : vector<16x32xf32>
    %c0_27 = arith.constant 0 : index
    %c0_28 = arith.constant 0 : index
    %44 = vector.load %arg6[%c0_27, %c0_28] : memref<1x32xf32, #tpu.memory_space<vmem>>, vector<1x32xf32>
    %45 = vector.broadcast %44 : vector<1x32xf32> to vector<16x32xf32>
    %46 = arith.addf %43, %45 : vector<16x32xf32>
    %cst_29 = arith.constant 0.000000e+00 : f32
    %47 = vector.broadcast %cst_29 : f32 to vector<16x32xf32>
    %48 = arith.maximumf %46, %47 : vector<16x32xf32>
    %c0_30 = arith.constant 0 : index
    %c0_31 = arith.constant 0 : index
    %c0_32 = arith.constant 0 : index
    %49 = vector.load %arg7[%c0_30, %c0_31, %c0_32] : memref<1x16x32xf32, #tpu.memory_space<vmem>>, vector<1x16x32xf32>
    %50 = vector.shape_cast %49 : vector<1x16x32xf32> to vector<16x32xf32>
    %51 = vector.shape_cast %48 : vector<16x32xf32> to vector<1x16x32xf32>
    tpu.vector_store %arg7[%c0_30, %c0_31, %c0_32], %51 {strides = array<i32>} : memref<1x16x32xf32, #tpu.memory_space<vmem>>, vector<1x16x32xf32>,
    return
  }
  func.func @transform_0(%arg0: i32, %arg1: i32) -> (i32, i32, i32, i32) {
    %c0_i32 = arith.constant 0 : i32
    %c0_i32_0 = arith.constant 0 : i32
    %c0_i32_1 = arith.constant 0 : i32
    return %arg0, %arg1, %c0_i32, %c0_i32_0 : i32, i32, i32, i32
  }
  func.func @transform_1(%arg0: i32, %arg1: i32) -> (i32, i32, i32, i32) {
    %c2_i32 = arith.constant 2 : i32
    %0 = arith.muli %arg1, %c2_i32 : i32
    %c1_i32 = arith.constant 1 : i32
    %1 = arith.subi %0, %c1_i32 : i32
    %c0_i32 = arith.constant 0 : i32
    %2 = arith.maxsi %1, %c0_i32 : i32
    %c0_i32_0 = arith.constant 0 : i32
    %c0_i32_1 = arith.constant 0 : i32
    %c0_i32_2 = arith.constant 0 : i32
    return %arg0, %2, %c0_i32_0, %c0_i32_1 : i32, i32, i32, i32
  }
  func.func @transform_2(%arg0: i32, %arg1: i32) -> (i32, i32, i32, i32) {
    %c1_i32 = arith.constant 1 : i32
    %0 = arith.addi %arg1, %c1_i32 : i32
    %c2_i32 = arith.constant 2 : i32
    %1 = arith.muli %0, %c2_i32 : i32
    %c3_i32 = arith.constant 3 : i32
    %2 = arith.minsi %1, %c3_i32 : i32
    %c0_i32 = arith.constant 0 : i32
    %c0_i32_0 = arith.constant 0 : i32
    %c0_i32_1 = arith.constant 0 : i32
    return %arg0, %2, %c0_i32, %c0_i32_0 : i32, i32, i32, i32
  }
  func.func @transform_3(%arg0: i32, %arg1: i32) -> (i32, i32) {
    %c0_i32 = arith.constant 0 : i32
    %c0_i32_0 = arith.constant 0 : i32
    %c0_i32_1 = arith.constant 0 : i32
    return %c0_i32, %c0_i32_0 : i32, i32
  }
  func.func @transform_4(%arg0: i32, %arg1: i32) -> (i32, i32) {
    %c0_i32 = arith.constant 0 : i32
    %c0_i32_0 = arith.constant 0 : i32
    %c0_i32_1 = arith.constant 0 : i32
    return %c0_i32, %c0_i32_0 : i32, i32
  }
  func.func @transform_5(%arg0: i32, %arg1: i32) -> (i32, i32, i32) {
    %c0_i32 = arith.constant 0 : i32
    %c0_i32_0 = arith.constant 0 : i32
    return %arg0, %arg1, %c0_i32 : i32, i32, i32
  }
}

module attributes {stable_mosaic.version = 11 : i64} {
  func.func @_conv_block_kernel(%arg0: i32, %arg1: i32, %arg2: memref<1x8x2x64xf32, #tpu.memory_space<vmem>>, %arg3: memref<960x128xf32, #tpu.memory_space<vmem>>, %arg4: memref<1x128xf32, #tpu.memory_space<vmem>>, %arg5: memref<1x8x128xf32, #tpu.memory_space<vmem>>) attributes {dimension_semantics = [#tpu.dimension_semantics<parallel>, #tpu.dimension_semantics<parallel>], iteration_bounds = array<i64: 2, 1>, scalar_prefetch = 0 : i64, scratch_operands = 0 : i64, tpu.core_type = #tpu.core_type<tc>, window_params = [{transform_indices = @transform_0, window_bounds = array<i64: 1, 8, 2, 64>}, {pipeline_mode = #tpu.pipeline_mode<synchronous>, transform_indices = @transform_1, window_bounds = array<i64: 960, 128>}, {pipeline_mode = #tpu.pipeline_mode<synchronous>, transform_indices = @transform_2, window_bounds = array<i64: 1, 128>}, {transform_indices = @transform_3, window_bounds = array<i64: 1, 8, 128>}]} {
    %cst = arith.constant 0.000000e+00 : f32
    %0 = vector.broadcast %cst : f32 to vector<8x128xf32>
    %c0 = arith.constant 0 : index
    %c0_0 = arith.constant 0 : index
    %c0_1 = arith.constant 0 : index
    %c0_2 = arith.constant 0 : index
    %1 = vector.load %arg2[%c0, %c0_0, %c0_1, %c0_2] : memref<1x8x2x64xf32, #tpu.memory_space<vmem>>, vector<1x8x1x64xf32>
    %2 = vector.shape_cast %1 : vector<1x8x1x64xf32> to vector<8x64xf32>
    %c0_3 = arith.constant 0 : index
    %c0_4 = arith.constant 0 : index
    %c1 = arith.constant 1 : index
    %c0_5 = arith.constant 0 : index
    %3 = vector.load %arg2[%c0_3, %c0_4, %c1, %c0_5] : memref<1x8x2x64xf32, #tpu.memory_space<vmem>>, vector<1x8x1x64xf32>
    %4 = vector.shape_cast %3 : vector<1x8x1x64xf32> to vector<8x64xf32>
    %5 = arith.maximumf %2, %4 : vector<8x64xf32>
    %cst_6 = arith.constant 0.000000e+00 : f32
    %6 = vector.broadcast %cst_6 : f32 to vector<7x64xf32>
    %cst_7 = arith.constant 0.000000e+00 : f32
    %7 = vector.broadcast %cst_7 : f32 to vector<7x64xf32>
    %8 = tpu.concatenate %6, %5, %7 in 0 : vector<7x64xf32>, vector<8x64xf32>, vector<7x64xf32> -> vector<22x64xf32>
    %9 = vector.extract_strided_slice %8 {offsets = [0, 0], sizes = [8, 64], strides = [1, 1]} : vector<22x64xf32> to vector<8x64xf32>
    %10 = vector.extract_strided_slice %8 {offsets = [1, 0], sizes = [8, 64], strides = [1, 1]} : vector<22x64xf32> to vector<8x64xf32>
    %11 = vector.extract_strided_slice %8 {offsets = [2, 0], sizes = [8, 64], strides = [1, 1]} : vector<22x64xf32> to vector<8x64xf32>
    %12 = vector.extract_strided_slice %8 {offsets = [3, 0], sizes = [8, 64], strides = [1, 1]} : vector<22x64xf32> to vector<8x64xf32>
    %13 = vector.extract_strided_slice %8 {offsets = [4, 0], sizes = [8, 64], strides = [1, 1]} : vector<22x64xf32> to vector<8x64xf32>
    %14 = vector.extract_strided_slice %8 {offsets = [5, 0], sizes = [8, 64], strides = [1, 1]} : vector<22x64xf32> to vector<8x64xf32>
    %15 = vector.extract_strided_slice %8 {offsets = [6, 0], sizes = [8, 64], strides = [1, 1]} : vector<22x64xf32> to vector<8x64xf32>
    %16 = vector.extract_strided_slice %8 {offsets = [7, 0], sizes = [8, 64], strides = [1, 1]} : vector<22x64xf32> to vector<8x64xf32>
    %17 = vector.extract_strided_slice %8 {offsets = [8, 0], sizes = [8, 64], strides = [1, 1]} : vector<22x64xf32> to vector<8x64xf32>
    %18 = vector.extract_strided_slice %8 {offsets = [9, 0], sizes = [8, 64], strides = [1, 1]} : vector<22x64xf32> to vector<8x64xf32>
    %19 = vector.extract_strided_slice %8 {offsets = [10, 0], sizes = [8, 64], strides = [1, 1]} : vector<22x64xf32> to vector<8x64xf32>
    %20 = vector.extract_strided_slice %8 {offsets = [11, 0], sizes = [8, 64], strides = [1, 1]} : vector<22x64xf32> to vector<8x64xf32>
    %21 = vector.extract_strided_slice %8 {offsets = [12, 0], sizes = [8, 64], strides = [1, 1]} : vector<22x64xf32> to vector<8x64xf32>
    %22 = vector.extract_strided_slice %8 {offsets = [13, 0], sizes = [8, 64], strides = [1, 1]} : vector<22x64xf32> to vector<8x64xf32>
    %23 = vector.extract_strided_slice %8 {offsets = [14, 0], sizes = [8, 64], strides = [1, 1]} : vector<22x64xf32> to vector<8x64xf32>
    %24 = tpu.concatenate %9, %10, %11, %12, %13, %14, %15, %16, %17, %18, %19, %20, %21, %22, %23 in 1 : vector<8x64xf32>, vector<8x64xf32>, vector<8x64xf32>, vector<8x64xf32>, vector<8x64xf32>, vector<8x64xf32>, vector<8x64xf32>, vector<8x64xf32>, vector<8x64xf32>, vector<8x64xf32>, vector<8x64xf32>, vector<8x64xf32>, vector<8x64xf32>, vector<8x64xf32>, vector<8x64xf32> -> vector<8x960xf32>
    %c0_8 = arith.constant 0 : index
    %c0_9 = arith.constant 0 : index
    %25 = vector.load %arg3[%c0_8, %c0_9] : memref<960x128xf32, #tpu.memory_space<vmem>>, vector<960x128xf32>
    %cst_10 = arith.constant dense<0.000000e+00> : vector<8x128xf32>
    %26 = tpu.matmul %24, %25, %cst_10 {dimension_numbers = #tpu.dot_dimension_numbers<[1], [0], [0], [1], [0, 0, 1, 1], [], []>} : vector<8x960xf32>, vector<960x128xf32>, vector<8x128xf32> -> vector<8x128xf32>
    %27 = arith.addf %0, %26 : vector<8x128xf32>
    %c0_11 = arith.constant 0 : index
    %c0_12 = arith.constant 0 : index
    %28 = vector.load %arg4[%c0_11, %c0_12] : memref<1x128xf32, #tpu.memory_space<vmem>>, vector<1x128xf32>
    %29 = vector.broadcast %28 : vector<1x128xf32> to vector<8x128xf32>
    %30 = arith.addf %27, %29 : vector<8x128xf32>
    %c0_13 = arith.constant 0 : index
    %c0_14 = arith.constant 0 : index
    %c0_15 = arith.constant 0 : index
    %31 = vector.load %arg5[%c0_13, %c0_14, %c0_15] : memref<1x8x128xf32, #tpu.memory_space<vmem>>, vector<1x8x128xf32>
    %32 = vector.shape_cast %31 : vector<1x8x128xf32> to vector<8x128xf32>
    %33 = vector.shape_cast %30 : vector<8x128xf32> to vector<1x8x128xf32>
    tpu.vector_store %arg5[%c0_13, %c0_14, %c0_15], %33 {strides = array<i32>} : memref<1x8x128xf32, #tpu.memory_space<vmem>>, vector<1x8x128xf32>,
    return
  }
  func.func @transform_0(%arg0: i32, %arg1: i32) -> (i32, i32, i32, i32) {
    %c0_i32 = arith.constant 0 : i32
    %c0_i32_0 = arith.constant 0 : i32
    %c0_i32_1 = arith.constant 0 : i32
    return %arg0, %arg1, %c0_i32, %c0_i32_0 : i32, i32, i32, i32
  }
  func.func @transform_1(%arg0: i32, %arg1: i32) -> (i32, i32) {
    %c0_i32 = arith.constant 0 : i32
    %c0_i32_0 = arith.constant 0 : i32
    %c0_i32_1 = arith.constant 0 : i32
    return %c0_i32, %c0_i32_0 : i32, i32
  }
  func.func @transform_2(%arg0: i32, %arg1: i32) -> (i32, i32) {
    %c0_i32 = arith.constant 0 : i32
    %c0_i32_0 = arith.constant 0 : i32
    %c0_i32_1 = arith.constant 0 : i32
    return %c0_i32, %c0_i32_0 : i32, i32
  }
  func.func @transform_3(%arg0: i32, %arg1: i32) -> (i32, i32, i32) {
    %c0_i32 = arith.constant 0 : i32
    %c0_i32_0 = arith.constant 0 : i32
    return %arg0, %arg1, %c0_i32 : i32, i32, i32
  }
}

module attributes {stable_mosaic.version = 11 : i64} {
  func.func @_conv_block_kernel(%arg0: i32, %arg1: i32, %arg2: memref<1x16x2x32xf32, #tpu.memory_space<vmem>>, %arg3: memref<480x64xf32, #tpu.memory_space<vmem>>, %arg4: memref<1x64xf32, #tpu.memory_space<vmem>>, %arg5: memref<1x16x64xf32, #tpu.memory_space<vmem>>) attributes {dimension_semantics = [#tpu.dimension_semantics<parallel>, #tpu.dimension_semantics<parallel>], iteration_bounds = array<i64: 2, 1>, scalar_prefetch = 0 : i64, scratch_operands = 0 : i64, tpu.core_type = #tpu.core_type<tc>, window_params = [{transform_indices = @transform_0, window_bounds = array<i64: 1, 16, 2, 32>}, {pipeline_mode = #tpu.pipeline_mode<synchronous>, transform_indices = @transform_1, window_bounds = array<i64: 480, 64>}, {pipeline_mode = #tpu.pipeline_mode<synchronous>, transform_indices = @transform_2, window_bounds = array<i64: 1, 64>}, {transform_indices = @transform_3, window_bounds = array<i64: 1, 16, 64>}]} {
    %cst = arith.constant 0.000000e+00 : f32
    %0 = vector.broadcast %cst : f32 to vector<16x64xf32>
    %c0 = arith.constant 0 : index
    %c0_0 = arith.constant 0 : index
    %c0_1 = arith.constant 0 : index
    %c0_2 = arith.constant 0 : index
    %1 = vector.load %arg2[%c0, %c0_0, %c0_1, %c0_2] : memref<1x16x2x32xf32, #tpu.memory_space<vmem>>, vector<1x16x1x32xf32>
    %2 = vector.shape_cast %1 : vector<1x16x1x32xf32> to vector<16x32xf32>
    %c0_3 = arith.constant 0 : index
    %c0_4 = arith.constant 0 : index
    %c1 = arith.constant 1 : index
    %c0_5 = arith.constant 0 : index
    %3 = vector.load %arg2[%c0_3, %c0_4, %c1, %c0_5] : memref<1x16x2x32xf32, #tpu.memory_space<vmem>>, vector<1x16x1x32xf32>
    %4 = vector.shape_cast %3 : vector<1x16x1x32xf32> to vector<16x32xf32>
    %5 = arith.maximumf %2, %4 : vector<16x32xf32>
    %cst_6 = arith.constant 0.000000e+00 : f32
    %6 = vector.broadcast %cst_6 : f32 to vector<7x32xf32>
    %cst_7 = arith.constant 0.000000e+00 : f32
    %7 = vector.broadcast %cst_7 : f32 to vector<7x32xf32>
    %8 = tpu.concatenate %6, %5, %7 in 0 : vector<7x32xf32>, vector<16x32xf32>, vector<7x32xf32> -> vector<30x32xf32>
    %9 = vector.extract_strided_slice %8 {offsets = [0, 0], sizes = [16, 32], strides = [1, 1]} : vector<30x32xf32> to vector<16x32xf32>
    %10 = vector.extract_strided_slice %8 {offsets = [1, 0], sizes = [16, 32], strides = [1, 1]} : vector<30x32xf32> to vector<16x32xf32>
    %11 = vector.extract_strided_slice %8 {offsets = [2, 0], sizes = [16, 32], strides = [1, 1]} : vector<30x32xf32> to vector<16x32xf32>
    %12 = vector.extract_strided_slice %8 {offsets = [3, 0], sizes = [16, 32], strides = [1, 1]} : vector<30x32xf32> to vector<16x32xf32>
    %13 = vector.extract_strided_slice %8 {offsets = [4, 0], sizes = [16, 32], strides = [1, 1]} : vector<30x32xf32> to vector<16x32xf32>
    %14 = vector.extract_strided_slice %8 {offsets = [5, 0], sizes = [16, 32], strides = [1, 1]} : vector<30x32xf32> to vector<16x32xf32>
    %15 = vector.extract_strided_slice %8 {offsets = [6, 0], sizes = [16, 32], strides = [1, 1]} : vector<30x32xf32> to vector<16x32xf32>
    %16 = vector.extract_strided_slice %8 {offsets = [7, 0], sizes = [16, 32], strides = [1, 1]} : vector<30x32xf32> to vector<16x32xf32>
    %17 = vector.extract_strided_slice %8 {offsets = [8, 0], sizes = [16, 32], strides = [1, 1]} : vector<30x32xf32> to vector<16x32xf32>
    %18 = vector.extract_strided_slice %8 {offsets = [9, 0], sizes = [16, 32], strides = [1, 1]} : vector<30x32xf32> to vector<16x32xf32>
    %19 = vector.extract_strided_slice %8 {offsets = [10, 0], sizes = [16, 32], strides = [1, 1]} : vector<30x32xf32> to vector<16x32xf32>
    %20 = vector.extract_strided_slice %8 {offsets = [11, 0], sizes = [16, 32], strides = [1, 1]} : vector<30x32xf32> to vector<16x32xf32>
    %21 = vector.extract_strided_slice %8 {offsets = [12, 0], sizes = [16, 32], strides = [1, 1]} : vector<30x32xf32> to vector<16x32xf32>
    %22 = vector.extract_strided_slice %8 {offsets = [13, 0], sizes = [16, 32], strides = [1, 1]} : vector<30x32xf32> to vector<16x32xf32>
    %23 = vector.extract_strided_slice %8 {offsets = [14, 0], sizes = [16, 32], strides = [1, 1]} : vector<30x32xf32> to vector<16x32xf32>
    %24 = tpu.concatenate %9, %10, %11, %12, %13, %14, %15, %16, %17, %18, %19, %20, %21, %22, %23 in 1 : vector<16x32xf32>, vector<16x32xf32>, vector<16x32xf32>, vector<16x32xf32>, vector<16x32xf32>, vector<16x32xf32>, vector<16x32xf32>, vector<16x32xf32>, vector<16x32xf32>, vector<16x32xf32>, vector<16x32xf32>, vector<16x32xf32>, vector<16x32xf32>, vector<16x32xf32>, vector<16x32xf32> -> vector<16x480xf32>
    %c0_8 = arith.constant 0 : index
    %c0_9 = arith.constant 0 : index
    %25 = vector.load %arg3[%c0_8, %c0_9] : memref<480x64xf32, #tpu.memory_space<vmem>>, vector<480x64xf32>
    %cst_10 = arith.constant dense<0.000000e+00> : vector<16x64xf32>
    %26 = tpu.matmul %24, %25, %cst_10 {dimension_numbers = #tpu.dot_dimension_numbers<[1], [0], [0], [1], [0, 0, 1, 1], [], []>} : vector<16x480xf32>, vector<480x64xf32>, vector<16x64xf32> -> vector<16x64xf32>
    %27 = arith.addf %0, %26 : vector<16x64xf32>
    %c0_11 = arith.constant 0 : index
    %c0_12 = arith.constant 0 : index
    %28 = vector.load %arg4[%c0_11, %c0_12] : memref<1x64xf32, #tpu.memory_space<vmem>>, vector<1x64xf32>
    %29 = vector.broadcast %28 : vector<1x64xf32> to vector<16x64xf32>
    %30 = arith.addf %27, %29 : vector<16x64xf32>
    %cst_13 = arith.constant 0.000000e+00 : f32
    %31 = vector.broadcast %cst_13 : f32 to vector<16x64xf32>
    %32 = arith.maximumf %30, %31 : vector<16x64xf32>
    %c0_14 = arith.constant 0 : index
    %c0_15 = arith.constant 0 : index
    %c0_16 = arith.constant 0 : index
    %33 = vector.load %arg5[%c0_14, %c0_15, %c0_16] : memref<1x16x64xf32, #tpu.memory_space<vmem>>, vector<1x16x64xf32>
    %34 = vector.shape_cast %33 : vector<1x16x64xf32> to vector<16x64xf32>
    %35 = vector.shape_cast %32 : vector<16x64xf32> to vector<1x16x64xf32>
    tpu.vector_store %arg5[%c0_14, %c0_15, %c0_16], %35 {strides = array<i32>} : memref<1x16x64xf32, #tpu.memory_space<vmem>>, vector<1x16x64xf32>,
    return
  }
  func.func @transform_0(%arg0: i32, %arg1: i32) -> (i32, i32, i32, i32) {
    %c0_i32 = arith.constant 0 : i32
    %c0_i32_0 = arith.constant 0 : i32
    %c0_i32_1 = arith.constant 0 : i32
    return %arg0, %arg1, %c0_i32, %c0_i32_0 : i32, i32, i32, i32
  }
  func.func @transform_1(%arg0: i32, %arg1: i32) -> (i32, i32) {
    %c0_i32 = arith.constant 0 : i32
    %c0_i32_0 = arith.constant 0 : i32
    %c0_i32_1 = arith.constant 0 : i32
    return %c0_i32, %c0_i32_0 : i32, i32
  }
  func.func @transform_2(%arg0: i32, %arg1: i32) -> (i32, i32) {
    %c0_i32 = arith.constant 0 : i32
    %c0_i32_0 = arith.constant 0 : i32
    %c0_i32_1 = arith.constant 0 : i32
    return %c0_i32, %c0_i32_0 : i32, i32
  }
  func.func @transform_3(%arg0: i32, %arg1: i32) -> (i32, i32, i32) {
    %c0_i32 = arith.constant 0 : i32
    %c0_i32_0 = arith.constant 0 : i32
    return %arg0, %arg1, %c0_i32 : i32, i32, i32
  }
}

module attributes {stable_mosaic.version = 11 : i64} {
  func.func @_upsample_kernel(%arg0: i32, %arg1: memref<1x8x128xf32, #tpu.memory_space<vmem>>, %arg2: memref<8x6xf32, #tpu.memory_space<vmem>>, %arg3: memref<1x8x256xf32, #tpu.memory_space<vmem>>) attributes {dimension_semantics = [#tpu.dimension_semantics<parallel>], iteration_bounds = array<i64: 2>, scalar_prefetch = 0 : i64, scratch_operands = 0 : i64, tpu.core_type = #tpu.core_type<tc>, window_params = [{transform_indices = @transform_0, window_bounds = array<i64: 1, 8, 128>}, {pipeline_mode = #tpu.pipeline_mode<synchronous>, transform_indices = @transform_1, window_bounds = array<i64: 8, 6>}, {transform_indices = @transform_2, window_bounds = array<i64: 1, 8, 256>}]} {
    %c0 = arith.constant 0 : index
    %c0_0 = arith.constant 0 : index
    %c0_1 = arith.constant 0 : index
    %0 = vector.load %arg1[%c0, %c0_0, %c0_1] : memref<1x8x128xf32, #tpu.memory_space<vmem>>, vector<1x8x128xf32>
    %1 = vector.shape_cast %0 : vector<1x8x128xf32> to vector<8x128xf32>
    %c0_2 = arith.constant 0 : index
    %c0_3 = arith.constant 0 : index
    %2 = vector.load %arg2[%c0_2, %c0_3] : memref<8x6xf32, #tpu.memory_space<vmem>>, vector<8x6xf32>
    %cst = arith.constant 0.000000e+00 : f32
    %3 = vector.broadcast %cst : f32 to vector<1x128xf32>
    %4 = vector.extract_strided_slice %1 {offsets = [0, 0], sizes = [7, 128], strides = [1, 1]} : vector<8x128xf32> to vector<7x128xf32>
    %5 = tpu.concatenate %3, %4 in 0 : vector<1x128xf32>, vector<7x128xf32> -> vector<8x128xf32>
    %6 = vector.extract_strided_slice %1 {offsets = [1, 0], sizes = [7, 128], strides = [1, 1]} : vector<8x128xf32> to vector<7x128xf32>
    %7 = tpu.concatenate %6, %3 in 0 : vector<7x128xf32>, vector<1x128xf32> -> vector<8x128xf32>
    %8 = vector.extract_strided_slice %2 {offsets = [0, 0], sizes = [8, 1], strides = [1, 1]} : vector<8x6xf32> to vector<8x1xf32>
    %9 = vector.broadcast %8 : vector<8x1xf32> to vector<8x128xf32>
    %10 = arith.mulf %9, %5 : vector<8x128xf32>
    %11 = vector.extract_strided_slice %2 {offsets = [0, 1], sizes = [8, 1], strides = [1, 1]} : vector<8x6xf32> to vector<8x1xf32>
    %12 = vector.broadcast %11 : vector<8x1xf32> to vector<8x128xf32>
    %13 = arith.mulf %12, %1 : vector<8x128xf32>
    %14 = arith.addf %10, %13 : vector<8x128xf32>
    %15 = vector.extract_strided_slice %2 {offsets = [0, 2], sizes = [8, 1], strides = [1, 1]} : vector<8x6xf32> to vector<8x1xf32>
    %16 = vector.broadcast %15 : vector<8x1xf32> to vector<8x128xf32>
    %17 = arith.mulf %16, %7 : vector<8x128xf32>
    %18 = arith.addf %14, %17 : vector<8x128xf32>
    %19 = vector.extract_strided_slice %2 {offsets = [0, 3], sizes = [8, 1], strides = [1, 1]} : vector<8x6xf32> to vector<8x1xf32>
    %20 = vector.broadcast %19 : vector<8x1xf32> to vector<8x128xf32>
    %21 = arith.mulf %20, %5 : vector<8x128xf32>
    %22 = vector.extract_strided_slice %2 {offsets = [0, 4], sizes = [8, 1], strides = [1, 1]} : vector<8x6xf32> to vector<8x1xf32>
    %23 = vector.broadcast %22 : vector<8x1xf32> to vector<8x128xf32>
    %24 = arith.mulf %23, %1 : vector<8x128xf32>
    %25 = arith.addf %21, %24 : vector<8x128xf32>
    %26 = vector.extract_strided_slice %2 {offsets = [0, 5], sizes = [8, 1], strides = [1, 1]} : vector<8x6xf32> to vector<8x1xf32>
    %27 = vector.broadcast %26 : vector<8x1xf32> to vector<8x128xf32>
    %28 = arith.mulf %27, %7 : vector<8x128xf32>
    %29 = arith.addf %25, %28 : vector<8x128xf32>
    %30 = tpu.concatenate %18, %29 in 1 : vector<8x128xf32>, vector<8x128xf32> -> vector<8x256xf32>
    %c0_4 = arith.constant 0 : index
    %c0_5 = arith.constant 0 : index
    %c0_6 = arith.constant 0 : index
    %31 = vector.load %arg3[%c0_4, %c0_5, %c0_6] : memref<1x8x256xf32, #tpu.memory_space<vmem>>, vector<1x8x256xf32>
    %32 = vector.shape_cast %31 : vector<1x8x256xf32> to vector<8x256xf32>
    %33 = vector.shape_cast %30 : vector<8x256xf32> to vector<1x8x256xf32>
    tpu.vector_store %arg3[%c0_4, %c0_5, %c0_6], %33 {strides = array<i32>} : memref<1x8x256xf32, #tpu.memory_space<vmem>>, vector<1x8x256xf32>,
    return
  }
  func.func @transform_0(%arg0: i32) -> (i32, i32, i32) {
    %c0_i32 = arith.constant 0 : i32
    %c0_i32_0 = arith.constant 0 : i32
    %c0_i32_1 = arith.constant 0 : i32
    return %arg0, %c0_i32, %c0_i32_0 : i32, i32, i32
  }
  func.func @transform_1(%arg0: i32) -> (i32, i32) {
    %c0_i32 = arith.constant 0 : i32
    %c0_i32_0 = arith.constant 0 : i32
    %c0_i32_1 = arith.constant 0 : i32
    return %c0_i32, %c0_i32_0 : i32, i32
  }
  func.func @transform_2(%arg0: i32) -> (i32, i32, i32) {
    %c0_i32 = arith.constant 0 : i32
    %c0_i32_0 = arith.constant 0 : i32
    %c0_i32_1 = arith.constant 0 : i32
    return %arg0, %c0_i32, %c0_i32_0 : i32, i32, i32
  }
}

module attributes {stable_mosaic.version = 11 : i64} {
  func.func @_conv_block_kernel(%arg0: i32, %arg1: i32, %arg2: memref<1x16x128xf32, #tpu.memory_space<vmem>>, %arg3: memref<1x16x64xf32, #tpu.memory_space<vmem>>, %arg4: memref<1920x64xf32, #tpu.memory_space<vmem>>, %arg5: memref<960x64xf32, #tpu.memory_space<vmem>>, %arg6: memref<1x64xf32, #tpu.memory_space<vmem>>, %arg7: memref<1x16x64xf32, #tpu.memory_space<vmem>>) attributes {dimension_semantics = [#tpu.dimension_semantics<parallel>, #tpu.dimension_semantics<parallel>], iteration_bounds = array<i64: 2, 1>, scalar_prefetch = 0 : i64, scratch_operands = 0 : i64, tpu.core_type = #tpu.core_type<tc>, window_params = [{transform_indices = @transform_0, window_bounds = array<i64: 1, 16, 128>}, {transform_indices = @transform_1, window_bounds = array<i64: 1, 16, 64>}, {pipeline_mode = #tpu.pipeline_mode<synchronous>, transform_indices = @transform_2, window_bounds = array<i64: 1920, 64>}, {pipeline_mode = #tpu.pipeline_mode<synchronous>, transform_indices = @transform_3, window_bounds = array<i64: 960, 64>}, {pipeline_mode = #tpu.pipeline_mode<synchronous>, transform_indices = @transform_4, window_bounds = array<i64: 1, 64>}, {transform_indices = @transform_5, window_bounds = array<i64: 1, 16, 64>}]} {
    %cst = arith.constant 0.000000e+00 : f32
    %0 = vector.broadcast %cst : f32 to vector<16x64xf32>
    %c0 = arith.constant 0 : index
    %c0_0 = arith.constant 0 : index
    %c0_1 = arith.constant 0 : index
    %1 = vector.load %arg2[%c0, %c0_0, %c0_1] : memref<1x16x128xf32, #tpu.memory_space<vmem>>, vector<1x16x128xf32>
    %2 = vector.shape_cast %1 : vector<1x16x128xf32> to vector<16x128xf32>
    %cst_2 = arith.constant 0.000000e+00 : f32
    %3 = vector.broadcast %cst_2 : f32 to vector<7x128xf32>
    %cst_3 = arith.constant 0.000000e+00 : f32
    %4 = vector.broadcast %cst_3 : f32 to vector<7x128xf32>
    %5 = tpu.concatenate %3, %2, %4 in 0 : vector<7x128xf32>, vector<16x128xf32>, vector<7x128xf32> -> vector<30x128xf32>
    %6 = vector.extract_strided_slice %5 {offsets = [0, 0], sizes = [16, 128], strides = [1, 1]} : vector<30x128xf32> to vector<16x128xf32>
    %7 = vector.extract_strided_slice %5 {offsets = [1, 0], sizes = [16, 128], strides = [1, 1]} : vector<30x128xf32> to vector<16x128xf32>
    %8 = vector.extract_strided_slice %5 {offsets = [2, 0], sizes = [16, 128], strides = [1, 1]} : vector<30x128xf32> to vector<16x128xf32>
    %9 = vector.extract_strided_slice %5 {offsets = [3, 0], sizes = [16, 128], strides = [1, 1]} : vector<30x128xf32> to vector<16x128xf32>
    %10 = vector.extract_strided_slice %5 {offsets = [4, 0], sizes = [16, 128], strides = [1, 1]} : vector<30x128xf32> to vector<16x128xf32>
    %11 = vector.extract_strided_slice %5 {offsets = [5, 0], sizes = [16, 128], strides = [1, 1]} : vector<30x128xf32> to vector<16x128xf32>
    %12 = vector.extract_strided_slice %5 {offsets = [6, 0], sizes = [16, 128], strides = [1, 1]} : vector<30x128xf32> to vector<16x128xf32>
    %13 = vector.extract_strided_slice %5 {offsets = [7, 0], sizes = [16, 128], strides = [1, 1]} : vector<30x128xf32> to vector<16x128xf32>
    %14 = vector.extract_strided_slice %5 {offsets = [8, 0], sizes = [16, 128], strides = [1, 1]} : vector<30x128xf32> to vector<16x128xf32>
    %15 = vector.extract_strided_slice %5 {offsets = [9, 0], sizes = [16, 128], strides = [1, 1]} : vector<30x128xf32> to vector<16x128xf32>
    %16 = vector.extract_strided_slice %5 {offsets = [10, 0], sizes = [16, 128], strides = [1, 1]} : vector<30x128xf32> to vector<16x128xf32>
    %17 = vector.extract_strided_slice %5 {offsets = [11, 0], sizes = [16, 128], strides = [1, 1]} : vector<30x128xf32> to vector<16x128xf32>
    %18 = vector.extract_strided_slice %5 {offsets = [12, 0], sizes = [16, 128], strides = [1, 1]} : vector<30x128xf32> to vector<16x128xf32>
    %19 = vector.extract_strided_slice %5 {offsets = [13, 0], sizes = [16, 128], strides = [1, 1]} : vector<30x128xf32> to vector<16x128xf32>
    %20 = vector.extract_strided_slice %5 {offsets = [14, 0], sizes = [16, 128], strides = [1, 1]} : vector<30x128xf32> to vector<16x128xf32>
    %21 = tpu.concatenate %6, %7, %8, %9, %10, %11, %12, %13, %14, %15, %16, %17, %18, %19, %20 in 1 : vector<16x128xf32>, vector<16x128xf32>, vector<16x128xf32>, vector<16x128xf32>, vector<16x128xf32>, vector<16x128xf32>, vector<16x128xf32>, vector<16x128xf32>, vector<16x128xf32>, vector<16x128xf32>, vector<16x128xf32>, vector<16x128xf32>, vector<16x128xf32>, vector<16x128xf32>, vector<16x128xf32> -> vector<16x1920xf32>
    %c0_4 = arith.constant 0 : index
    %c0_5 = arith.constant 0 : index
    %22 = vector.load %arg4[%c0_4, %c0_5] : memref<1920x64xf32, #tpu.memory_space<vmem>>, vector<1920x64xf32>
    %cst_6 = arith.constant dense<0.000000e+00> : vector<16x64xf32>
    %23 = tpu.matmul %21, %22, %cst_6 {dimension_numbers = #tpu.dot_dimension_numbers<[1], [0], [0], [1], [0, 0, 1, 1], [], []>} : vector<16x1920xf32>, vector<1920x64xf32>, vector<16x64xf32> -> vector<16x64xf32>
    %24 = arith.addf %0, %23 : vector<16x64xf32>
    %c0_7 = arith.constant 0 : index
    %c0_8 = arith.constant 0 : index
    %c0_9 = arith.constant 0 : index
    %25 = vector.load %arg3[%c0_7, %c0_8, %c0_9] : memref<1x16x64xf32, #tpu.memory_space<vmem>>, vector<1x16x64xf32>
    %26 = vector.shape_cast %25 : vector<1x16x64xf32> to vector<16x64xf32>
    %cst_10 = arith.constant 0.000000e+00 : f32
    %27 = vector.broadcast %cst_10 : f32 to vector<7x64xf32>
    %cst_11 = arith.constant 0.000000e+00 : f32
    %28 = vector.broadcast %cst_11 : f32 to vector<7x64xf32>
    %29 = tpu.concatenate %27, %26, %28 in 0 : vector<7x64xf32>, vector<16x64xf32>, vector<7x64xf32> -> vector<30x64xf32>
    %30 = vector.extract_strided_slice %29 {offsets = [0, 0], sizes = [16, 64], strides = [1, 1]} : vector<30x64xf32> to vector<16x64xf32>
    %31 = vector.extract_strided_slice %29 {offsets = [1, 0], sizes = [16, 64], strides = [1, 1]} : vector<30x64xf32> to vector<16x64xf32>
    %32 = vector.extract_strided_slice %29 {offsets = [2, 0], sizes = [16, 64], strides = [1, 1]} : vector<30x64xf32> to vector<16x64xf32>
    %33 = vector.extract_strided_slice %29 {offsets = [3, 0], sizes = [16, 64], strides = [1, 1]} : vector<30x64xf32> to vector<16x64xf32>
    %34 = vector.extract_strided_slice %29 {offsets = [4, 0], sizes = [16, 64], strides = [1, 1]} : vector<30x64xf32> to vector<16x64xf32>
    %35 = vector.extract_strided_slice %29 {offsets = [5, 0], sizes = [16, 64], strides = [1, 1]} : vector<30x64xf32> to vector<16x64xf32>
    %36 = vector.extract_strided_slice %29 {offsets = [6, 0], sizes = [16, 64], strides = [1, 1]} : vector<30x64xf32> to vector<16x64xf32>
    %37 = vector.extract_strided_slice %29 {offsets = [7, 0], sizes = [16, 64], strides = [1, 1]} : vector<30x64xf32> to vector<16x64xf32>
    %38 = vector.extract_strided_slice %29 {offsets = [8, 0], sizes = [16, 64], strides = [1, 1]} : vector<30x64xf32> to vector<16x64xf32>
    %39 = vector.extract_strided_slice %29 {offsets = [9, 0], sizes = [16, 64], strides = [1, 1]} : vector<30x64xf32> to vector<16x64xf32>
    %40 = vector.extract_strided_slice %29 {offsets = [10, 0], sizes = [16, 64], strides = [1, 1]} : vector<30x64xf32> to vector<16x64xf32>
    %41 = vector.extract_strided_slice %29 {offsets = [11, 0], sizes = [16, 64], strides = [1, 1]} : vector<30x64xf32> to vector<16x64xf32>
    %42 = vector.extract_strided_slice %29 {offsets = [12, 0], sizes = [16, 64], strides = [1, 1]} : vector<30x64xf32> to vector<16x64xf32>
    %43 = vector.extract_strided_slice %29 {offsets = [13, 0], sizes = [16, 64], strides = [1, 1]} : vector<30x64xf32> to vector<16x64xf32>
    %44 = vector.extract_strided_slice %29 {offsets = [14, 0], sizes = [16, 64], strides = [1, 1]} : vector<30x64xf32> to vector<16x64xf32>
    %45 = tpu.concatenate %30, %31, %32, %33, %34, %35, %36, %37, %38, %39, %40, %41, %42, %43, %44 in 1 : vector<16x64xf32>, vector<16x64xf32>, vector<16x64xf32>, vector<16x64xf32>, vector<16x64xf32>, vector<16x64xf32>, vector<16x64xf32>, vector<16x64xf32>, vector<16x64xf32>, vector<16x64xf32>, vector<16x64xf32>, vector<16x64xf32>, vector<16x64xf32>, vector<16x64xf32>, vector<16x64xf32> -> vector<16x960xf32>
    %c0_12 = arith.constant 0 : index
    %c0_13 = arith.constant 0 : index
    %46 = vector.load %arg5[%c0_12, %c0_13] : memref<960x64xf32, #tpu.memory_space<vmem>>, vector<960x64xf32>
    %cst_14 = arith.constant dense<0.000000e+00> : vector<16x64xf32>
    %47 = tpu.matmul %45, %46, %cst_14 {dimension_numbers = #tpu.dot_dimension_numbers<[1], [0], [0], [1], [0, 0, 1, 1], [], []>} : vector<16x960xf32>, vector<960x64xf32>, vector<16x64xf32> -> vector<16x64xf32>
    %48 = arith.addf %24, %47 : vector<16x64xf32>
    %c0_15 = arith.constant 0 : index
    %c0_16 = arith.constant 0 : index
    %49 = vector.load %arg6[%c0_15, %c0_16] : memref<1x64xf32, #tpu.memory_space<vmem>>, vector<1x64xf32>
    %50 = vector.broadcast %49 : vector<1x64xf32> to vector<16x64xf32>
    %51 = arith.addf %48, %50 : vector<16x64xf32>
    %cst_17 = arith.constant 0.000000e+00 : f32
    %52 = vector.broadcast %cst_17 : f32 to vector<16x64xf32>
    %53 = arith.maximumf %51, %52 : vector<16x64xf32>
    %c0_18 = arith.constant 0 : index
    %c0_19 = arith.constant 0 : index
    %c0_20 = arith.constant 0 : index
    %54 = vector.load %arg7[%c0_18, %c0_19, %c0_20] : memref<1x16x64xf32, #tpu.memory_space<vmem>>, vector<1x16x64xf32>
    %55 = vector.shape_cast %54 : vector<1x16x64xf32> to vector<16x64xf32>
    %56 = vector.shape_cast %53 : vector<16x64xf32> to vector<1x16x64xf32>
    tpu.vector_store %arg7[%c0_18, %c0_19, %c0_20], %56 {strides = array<i32>} : memref<1x16x64xf32, #tpu.memory_space<vmem>>, vector<1x16x64xf32>,
    return
  }
  func.func @transform_0(%arg0: i32, %arg1: i32) -> (i32, i32, i32) {
    %c0_i32 = arith.constant 0 : i32
    %c0_i32_0 = arith.constant 0 : i32
    return %arg0, %arg1, %c0_i32 : i32, i32, i32
  }
  func.func @transform_1(%arg0: i32, %arg1: i32) -> (i32, i32, i32) {
    %c0_i32 = arith.constant 0 : i32
    %c0_i32_0 = arith.constant 0 : i32
    return %arg0, %arg1, %c0_i32 : i32, i32, i32
  }
  func.func @transform_2(%arg0: i32, %arg1: i32) -> (i32, i32) {
    %c0_i32 = arith.constant 0 : i32
    %c0_i32_0 = arith.constant 0 : i32
    %c0_i32_1 = arith.constant 0 : i32
    return %c0_i32, %c0_i32_0 : i32, i32
  }
  func.func @transform_3(%arg0: i32, %arg1: i32) -> (i32, i32) {
    %c0_i32 = arith.constant 0 : i32
    %c0_i32_0 = arith.constant 0 : i32
    %c0_i32_1 = arith.constant 0 : i32
    return %c0_i32, %c0_i32_0 : i32, i32
  }
  func.func @transform_4(%arg0: i32, %arg1: i32) -> (i32, i32) {
    %c0_i32 = arith.constant 0 : i32
    %c0_i32_0 = arith.constant 0 : i32
    %c0_i32_1 = arith.constant 0 : i32
    return %c0_i32, %c0_i32_0 : i32, i32
  }
  func.func @transform_5(%arg0: i32, %arg1: i32) -> (i32, i32, i32) {
    %c0_i32 = arith.constant 0 : i32
    %c0_i32_0 = arith.constant 0 : i32
    return %arg0, %arg1, %c0_i32 : i32, i32, i32
  }
}

module attributes {stable_mosaic.version = 11 : i64} {
  func.func @_upsample_kernel(%arg0: i32, %arg1: memref<1x16x64xf32, #tpu.memory_space<vmem>>, %arg2: memref<16x6xf32, #tpu.memory_space<vmem>>, %arg3: memref<1x16x128xf32, #tpu.memory_space<vmem>>) attributes {dimension_semantics = [#tpu.dimension_semantics<parallel>], iteration_bounds = array<i64: 2>, scalar_prefetch = 0 : i64, scratch_operands = 0 : i64, tpu.core_type = #tpu.core_type<tc>, window_params = [{transform_indices = @transform_0, window_bounds = array<i64: 1, 16, 64>}, {pipeline_mode = #tpu.pipeline_mode<synchronous>, transform_indices = @transform_1, window_bounds = array<i64: 16, 6>}, {transform_indices = @transform_2, window_bounds = array<i64: 1, 16, 128>}]} {
    %c0 = arith.constant 0 : index
    %c0_0 = arith.constant 0 : index
    %c0_1 = arith.constant 0 : index
    %0 = vector.load %arg1[%c0, %c0_0, %c0_1] : memref<1x16x64xf32, #tpu.memory_space<vmem>>, vector<1x16x64xf32>
    %1 = vector.shape_cast %0 : vector<1x16x64xf32> to vector<16x64xf32>
    %c0_2 = arith.constant 0 : index
    %c0_3 = arith.constant 0 : index
    %2 = vector.load %arg2[%c0_2, %c0_3] : memref<16x6xf32, #tpu.memory_space<vmem>>, vector<16x6xf32>
    %cst = arith.constant 0.000000e+00 : f32
    %3 = vector.broadcast %cst : f32 to vector<1x64xf32>
    %4 = vector.extract_strided_slice %1 {offsets = [0, 0], sizes = [15, 64], strides = [1, 1]} : vector<16x64xf32> to vector<15x64xf32>
    %5 = tpu.concatenate %3, %4 in 0 : vector<1x64xf32>, vector<15x64xf32> -> vector<16x64xf32>
    %6 = vector.extract_strided_slice %1 {offsets = [1, 0], sizes = [15, 64], strides = [1, 1]} : vector<16x64xf32> to vector<15x64xf32>
    %7 = tpu.concatenate %6, %3 in 0 : vector<15x64xf32>, vector<1x64xf32> -> vector<16x64xf32>
    %8 = vector.extract_strided_slice %2 {offsets = [0, 0], sizes = [16, 1], strides = [1, 1]} : vector<16x6xf32> to vector<16x1xf32>
    %9 = vector.broadcast %8 : vector<16x1xf32> to vector<16x64xf32>
    %10 = arith.mulf %9, %5 : vector<16x64xf32>
    %11 = vector.extract_strided_slice %2 {offsets = [0, 1], sizes = [16, 1], strides = [1, 1]} : vector<16x6xf32> to vector<16x1xf32>
    %12 = vector.broadcast %11 : vector<16x1xf32> to vector<16x64xf32>
    %13 = arith.mulf %12, %1 : vector<16x64xf32>
    %14 = arith.addf %10, %13 : vector<16x64xf32>
    %15 = vector.extract_strided_slice %2 {offsets = [0, 2], sizes = [16, 1], strides = [1, 1]} : vector<16x6xf32> to vector<16x1xf32>
    %16 = vector.broadcast %15 : vector<16x1xf32> to vector<16x64xf32>
    %17 = arith.mulf %16, %7 : vector<16x64xf32>
    %18 = arith.addf %14, %17 : vector<16x64xf32>
    %19 = vector.extract_strided_slice %2 {offsets = [0, 3], sizes = [16, 1], strides = [1, 1]} : vector<16x6xf32> to vector<16x1xf32>
    %20 = vector.broadcast %19 : vector<16x1xf32> to vector<16x64xf32>
    %21 = arith.mulf %20, %5 : vector<16x64xf32>
    %22 = vector.extract_strided_slice %2 {offsets = [0, 4], sizes = [16, 1], strides = [1, 1]} : vector<16x6xf32> to vector<16x1xf32>
    %23 = vector.broadcast %22 : vector<16x1xf32> to vector<16x64xf32>
    %24 = arith.mulf %23, %1 : vector<16x64xf32>
    %25 = arith.addf %21, %24 : vector<16x64xf32>
    %26 = vector.extract_strided_slice %2 {offsets = [0, 5], sizes = [16, 1], strides = [1, 1]} : vector<16x6xf32> to vector<16x1xf32>
    %27 = vector.broadcast %26 : vector<16x1xf32> to vector<16x64xf32>
    %28 = arith.mulf %27, %7 : vector<16x64xf32>
    %29 = arith.addf %25, %28 : vector<16x64xf32>
    %30 = tpu.concatenate %18, %29 in 1 : vector<16x64xf32>, vector<16x64xf32> -> vector<16x128xf32>
    %c0_4 = arith.constant 0 : index
    %c0_5 = arith.constant 0 : index
    %c0_6 = arith.constant 0 : index
    %31 = vector.load %arg3[%c0_4, %c0_5, %c0_6] : memref<1x16x128xf32, #tpu.memory_space<vmem>>, vector<1x16x128xf32>
    %32 = vector.shape_cast %31 : vector<1x16x128xf32> to vector<16x128xf32>
    %33 = vector.shape_cast %30 : vector<16x128xf32> to vector<1x16x128xf32>
    tpu.vector_store %arg3[%c0_4, %c0_5, %c0_6], %33 {strides = array<i32>} : memref<1x16x128xf32, #tpu.memory_space<vmem>>, vector<1x16x128xf32>,
    return
  }
  func.func @transform_0(%arg0: i32) -> (i32, i32, i32) {
    %c0_i32 = arith.constant 0 : i32
    %c0_i32_0 = arith.constant 0 : i32
    %c0_i32_1 = arith.constant 0 : i32
    return %arg0, %c0_i32, %c0_i32_0 : i32, i32, i32
  }
  func.func @transform_1(%arg0: i32) -> (i32, i32) {
    %c0_i32 = arith.constant 0 : i32
    %c0_i32_0 = arith.constant 0 : i32
    %c0_i32_1 = arith.constant 0 : i32
    return %c0_i32, %c0_i32_0 : i32, i32
  }
  func.func @transform_2(%arg0: i32) -> (i32, i32, i32) {
    %c0_i32 = arith.constant 0 : i32
    %c0_i32_0 = arith.constant 0 : i32
    %c0_i32_1 = arith.constant 0 : i32
    return %arg0, %c0_i32, %c0_i32_0 : i32, i32, i32
  }
}

module attributes {stable_mosaic.version = 11 : i64} {
  func.func @_conv_block_kernel(%arg0: i32, %arg1: i32, %arg2: memref<1x16x64xf32, #tpu.memory_space<vmem>>, %arg3: memref<1x8x64xf32, #tpu.memory_space<vmem>>, %arg4: memref<1x8x64xf32, #tpu.memory_space<vmem>>, %arg5: memref<1x16x32xf32, #tpu.memory_space<vmem>>, %arg6: memref<1x8x32xf32, #tpu.memory_space<vmem>>, %arg7: memref<1x8x32xf32, #tpu.memory_space<vmem>>, %arg8: memref<960x32xf32, #tpu.memory_space<vmem>>, %arg9: memref<480x32xf32, #tpu.memory_space<vmem>>, %arg10: memref<1x32xf32, #tpu.memory_space<vmem>>, %arg11: memref<1x16x32xf32, #tpu.memory_space<vmem>>) attributes {dimension_semantics = [#tpu.dimension_semantics<parallel>, #tpu.dimension_semantics<parallel>], iteration_bounds = array<i64: 2, 2>, scalar_prefetch = 0 : i64, scratch_operands = 0 : i64, tpu.core_type = #tpu.core_type<tc>, window_params = [{transform_indices = @transform_0, window_bounds = array<i64: 1, 16, 64>}, {transform_indices = @transform_1, window_bounds = array<i64: 1, 8, 64>}, {transform_indices = @transform_2, window_bounds = array<i64: 1, 8, 64>}, {transform_indices = @transform_3, window_bounds = array<i64: 1, 16, 32>}, {transform_indices = @transform_4, window_bounds = array<i64: 1, 8, 32>}, {transform_indices = @transform_5, window_bounds = array<i64: 1, 8, 32>}, {pipeline_mode = #tpu.pipeline_mode<synchronous>, transform_indices = @transform_6, window_bounds = array<i64: 960, 32>}, {pipeline_mode = #tpu.pipeline_mode<synchronous>, transform_indices = @transform_7, window_bounds = array<i64: 480, 32>}, {pipeline_mode = #tpu.pipeline_mode<synchronous>, transform_indices = @transform_8, window_bounds = array<i64: 1, 32>}, {transform_indices = @transform_9, window_bounds = array<i64: 1, 16, 32>}]} {
    %cst = arith.constant 0.000000e+00 : f32
    %0 = vector.broadcast %cst : f32 to vector<16x32xf32>
    %c0 = arith.constant 0 : index
    %c0_0 = arith.constant 0 : index
    %c0_1 = arith.constant 0 : index
    %1 = vector.load %arg2[%c0, %c0_0, %c0_1] : memref<1x16x64xf32, #tpu.memory_space<vmem>>, vector<1x16x64xf32>
    %2 = vector.shape_cast %1 : vector<1x16x64xf32> to vector<16x64xf32>
    %c0_2 = arith.constant 0 : index
    %c0_3 = arith.constant 0 : index
    %c0_4 = arith.constant 0 : index
    %3 = vector.load %arg3[%c0_2, %c0_3, %c0_4] : memref<1x8x64xf32, #tpu.memory_space<vmem>>, vector<1x8x64xf32>
    %4 = vector.shape_cast %3 : vector<1x8x64xf32> to vector<8x64xf32>
    %c0_5 = arith.constant 0 : index
    %c0_6 = arith.constant 0 : index
    %c0_7 = arith.constant 0 : index
    %5 = vector.load %arg4[%c0_5, %c0_6, %c0_7] : memref<1x8x64xf32, #tpu.memory_space<vmem>>, vector<1x8x64xf32>
    %6 = vector.shape_cast %5 : vector<1x8x64xf32> to vector<8x64xf32>
    %7 = vector.extract_strided_slice %4 {offsets = [1, 0], sizes = [7, 64], strides = [1, 1]} : vector<8x64xf32> to vector<7x64xf32>
    %8 = vector.extract_strided_slice %6 {offsets = [0, 0], sizes = [7, 64], strides = [1, 1]} : vector<8x64xf32> to vector<7x64xf32>
    %c0_i32 = arith.constant 0 : i32
    %9 = arith.cmpi eq, %arg1, %c0_i32 : i32
    %cst_8 = arith.constant 0.000000e+00 : f32
    %10 = vector.broadcast %cst_8 : f32 to vector<7x64xf32>
    %11 = arith.select %9, %10, %7 : vector<7x64xf32>
    %c1_i32 = arith.constant 1 : i32
    %12 = arith.cmpi eq, %arg1, %c1_i32 : i32
    %cst_9 = arith.constant 0.000000e+00 : f32
    %13 = vector.broadcast %cst_9 : f32 to vector<7x64xf32>
    %14 = arith.select %12, %13, %8 : vector<7x64xf32>
    %15 = tpu.concatenate %11, %2, %14 in 0 : vector<7x64xf32>, vector<16x64xf32>, vector<7x64xf32> -> vector<30x64xf32>
    %16 = vector.extract_strided_slice %15 {offsets = [0, 0], sizes = [16, 64], strides = [1, 1]} : vector<30x64xf32> to vector<16x64xf32>
    %17 = vector.extract_strided_slice %15 {offsets = [1, 0], sizes = [16, 64], strides = [1, 1]} : vector<30x64xf32> to vector<16x64xf32>
    %18 = vector.extract_strided_slice %15 {offsets = [2, 0], sizes = [16, 64], strides = [1, 1]} : vector<30x64xf32> to vector<16x64xf32>
    %19 = vector.extract_strided_slice %15 {offsets = [3, 0], sizes = [16, 64], strides = [1, 1]} : vector<30x64xf32> to vector<16x64xf32>
    %20 = vector.extract_strided_slice %15 {offsets = [4, 0], sizes = [16, 64], strides = [1, 1]} : vector<30x64xf32> to vector<16x64xf32>
    %21 = vector.extract_strided_slice %15 {offsets = [5, 0], sizes = [16, 64], strides = [1, 1]} : vector<30x64xf32> to vector<16x64xf32>
    %22 = vector.extract_strided_slice %15 {offsets = [6, 0], sizes = [16, 64], strides = [1, 1]} : vector<30x64xf32> to vector<16x64xf32>
    %23 = vector.extract_strided_slice %15 {offsets = [7, 0], sizes = [16, 64], strides = [1, 1]} : vector<30x64xf32> to vector<16x64xf32>
    %24 = vector.extract_strided_slice %15 {offsets = [8, 0], sizes = [16, 64], strides = [1, 1]} : vector<30x64xf32> to vector<16x64xf32>
    %25 = vector.extract_strided_slice %15 {offsets = [9, 0], sizes = [16, 64], strides = [1, 1]} : vector<30x64xf32> to vector<16x64xf32>
    %26 = vector.extract_strided_slice %15 {offsets = [10, 0], sizes = [16, 64], strides = [1, 1]} : vector<30x64xf32> to vector<16x64xf32>
    %27 = vector.extract_strided_slice %15 {offsets = [11, 0], sizes = [16, 64], strides = [1, 1]} : vector<30x64xf32> to vector<16x64xf32>
    %28 = vector.extract_strided_slice %15 {offsets = [12, 0], sizes = [16, 64], strides = [1, 1]} : vector<30x64xf32> to vector<16x64xf32>
    %29 = vector.extract_strided_slice %15 {offsets = [13, 0], sizes = [16, 64], strides = [1, 1]} : vector<30x64xf32> to vector<16x64xf32>
    %30 = vector.extract_strided_slice %15 {offsets = [14, 0], sizes = [16, 64], strides = [1, 1]} : vector<30x64xf32> to vector<16x64xf32>
    %31 = tpu.concatenate %16, %17, %18, %19, %20, %21, %22, %23, %24, %25, %26, %27, %28, %29, %30 in 1 : vector<16x64xf32>, vector<16x64xf32>, vector<16x64xf32>, vector<16x64xf32>, vector<16x64xf32>, vector<16x64xf32>, vector<16x64xf32>, vector<16x64xf32>, vector<16x64xf32>, vector<16x64xf32>, vector<16x64xf32>, vector<16x64xf32>, vector<16x64xf32>, vector<16x64xf32>, vector<16x64xf32> -> vector<16x960xf32>
    %c0_10 = arith.constant 0 : index
    %c0_11 = arith.constant 0 : index
    %32 = vector.load %arg8[%c0_10, %c0_11] : memref<960x32xf32, #tpu.memory_space<vmem>>, vector<960x32xf32>
    %cst_12 = arith.constant dense<0.000000e+00> : vector<16x32xf32>
    %33 = tpu.matmul %31, %32, %cst_12 {dimension_numbers = #tpu.dot_dimension_numbers<[1], [0], [0], [1], [0, 0, 1, 1], [], []>} : vector<16x960xf32>, vector<960x32xf32>, vector<16x32xf32> -> vector<16x32xf32>
    %34 = arith.addf %0, %33 : vector<16x32xf32>
    %c0_13 = arith.constant 0 : index
    %c0_14 = arith.constant 0 : index
    %c0_15 = arith.constant 0 : index
    %35 = vector.load %arg5[%c0_13, %c0_14, %c0_15] : memref<1x16x32xf32, #tpu.memory_space<vmem>>, vector<1x16x32xf32>
    %36 = vector.shape_cast %35 : vector<1x16x32xf32> to vector<16x32xf32>
    %c0_16 = arith.constant 0 : index
    %c0_17 = arith.constant 0 : index
    %c0_18 = arith.constant 0 : index
    %37 = vector.load %arg6[%c0_16, %c0_17, %c0_18] : memref<1x8x32xf32, #tpu.memory_space<vmem>>, vector<1x8x32xf32>
    %38 = vector.shape_cast %37 : vector<1x8x32xf32> to vector<8x32xf32>
    %c0_19 = arith.constant 0 : index
    %c0_20 = arith.constant 0 : index
    %c0_21 = arith.constant 0 : index
    %39 = vector.load %arg7[%c0_19, %c0_20, %c0_21] : memref<1x8x32xf32, #tpu.memory_space<vmem>>, vector<1x8x32xf32>
    %40 = vector.shape_cast %39 : vector<1x8x32xf32> to vector<8x32xf32>
    %41 = vector.extract_strided_slice %38 {offsets = [1, 0], sizes = [7, 32], strides = [1, 1]} : vector<8x32xf32> to vector<7x32xf32>
    %42 = vector.extract_strided_slice %40 {offsets = [0, 0], sizes = [7, 32], strides = [1, 1]} : vector<8x32xf32> to vector<7x32xf32>
    %c0_i32_22 = arith.constant 0 : i32
    %43 = arith.cmpi eq, %arg1, %c0_i32_22 : i32
    %cst_23 = arith.constant 0.000000e+00 : f32
    %44 = vector.broadcast %cst_23 : f32 to vector<7x32xf32>
    %45 = arith.select %43, %44, %41 : vector<7x32xf32>
    %c1_i32_24 = arith.constant 1 : i32
    %46 = arith.cmpi eq, %arg1, %c1_i32_24 : i32
    %cst_25 = arith.constant 0.000000e+00 : f32
    %47 = vector.broadcast %cst_25 : f32 to vector<7x32xf32>
    %48 = arith.select %46, %47, %42 : vector<7x32xf32>
    %49 = tpu.concatenate %45, %36, %48 in 0 : vector<7x32xf32>, vector<16x32xf32>, vector<7x32xf32> -> vector<30x32xf32>
    %50 = vector.extract_strided_slice %49 {offsets = [0, 0], sizes = [16, 32], strides = [1, 1]} : vector<30x32xf32> to vector<16x32xf32>
    %51 = vector.extract_strided_slice %49 {offsets = [1, 0], sizes = [16, 32], strides = [1, 1]} : vector<30x32xf32> to vector<16x32xf32>
    %52 = vector.extract_strided_slice %49 {offsets = [2, 0], sizes = [16, 32], strides = [1, 1]} : vector<30x32xf32> to vector<16x32xf32>
    %53 = vector.extract_strided_slice %49 {offsets = [3, 0], sizes = [16, 32], strides = [1, 1]} : vector<30x32xf32> to vector<16x32xf32>
    %54 = vector.extract_strided_slice %49 {offsets = [4, 0], sizes = [16, 32], strides = [1, 1]} : vector<30x32xf32> to vector<16x32xf32>
    %55 = vector.extract_strided_slice %49 {offsets = [5, 0], sizes = [16, 32], strides = [1, 1]} : vector<30x32xf32> to vector<16x32xf32>
    %56 = vector.extract_strided_slice %49 {offsets = [6, 0], sizes = [16, 32], strides = [1, 1]} : vector<30x32xf32> to vector<16x32xf32>
    %57 = vector.extract_strided_slice %49 {offsets = [7, 0], sizes = [16, 32], strides = [1, 1]} : vector<30x32xf32> to vector<16x32xf32>
    %58 = vector.extract_strided_slice %49 {offsets = [8, 0], sizes = [16, 32], strides = [1, 1]} : vector<30x32xf32> to vector<16x32xf32>
    %59 = vector.extract_strided_slice %49 {offsets = [9, 0], sizes = [16, 32], strides = [1, 1]} : vector<30x32xf32> to vector<16x32xf32>
    %60 = vector.extract_strided_slice %49 {offsets = [10, 0], sizes = [16, 32], strides = [1, 1]} : vector<30x32xf32> to vector<16x32xf32>
    %61 = vector.extract_strided_slice %49 {offsets = [11, 0], sizes = [16, 32], strides = [1, 1]} : vector<30x32xf32> to vector<16x32xf32>
    %62 = vector.extract_strided_slice %49 {offsets = [12, 0], sizes = [16, 32], strides = [1, 1]} : vector<30x32xf32> to vector<16x32xf32>
    %63 = vector.extract_strided_slice %49 {offsets = [13, 0], sizes = [16, 32], strides = [1, 1]} : vector<30x32xf32> to vector<16x32xf32>
    %64 = vector.extract_strided_slice %49 {offsets = [14, 0], sizes = [16, 32], strides = [1, 1]} : vector<30x32xf32> to vector<16x32xf32>
    %65 = tpu.concatenate %50, %51, %52, %53, %54, %55, %56, %57, %58, %59, %60, %61, %62, %63, %64 in 1 : vector<16x32xf32>, vector<16x32xf32>, vector<16x32xf32>, vector<16x32xf32>, vector<16x32xf32>, vector<16x32xf32>, vector<16x32xf32>, vector<16x32xf32>, vector<16x32xf32>, vector<16x32xf32>, vector<16x32xf32>, vector<16x32xf32>, vector<16x32xf32>, vector<16x32xf32>, vector<16x32xf32> -> vector<16x480xf32>
    %c0_26 = arith.constant 0 : index
    %c0_27 = arith.constant 0 : index
    %66 = vector.load %arg9[%c0_26, %c0_27] : memref<480x32xf32, #tpu.memory_space<vmem>>, vector<480x32xf32>
    %cst_28 = arith.constant dense<0.000000e+00> : vector<16x32xf32>
    %67 = tpu.matmul %65, %66, %cst_28 {dimension_numbers = #tpu.dot_dimension_numbers<[1], [0], [0], [1], [0, 0, 1, 1], [], []>} : vector<16x480xf32>, vector<480x32xf32>, vector<16x32xf32> -> vector<16x32xf32>
    %68 = arith.addf %34, %67 : vector<16x32xf32>
    %c0_29 = arith.constant 0 : index
    %c0_30 = arith.constant 0 : index
    %69 = vector.load %arg10[%c0_29, %c0_30] : memref<1x32xf32, #tpu.memory_space<vmem>>, vector<1x32xf32>
    %70 = vector.broadcast %69 : vector<1x32xf32> to vector<16x32xf32>
    %71 = arith.addf %68, %70 : vector<16x32xf32>
    %cst_31 = arith.constant 0.000000e+00 : f32
    %72 = vector.broadcast %cst_31 : f32 to vector<16x32xf32>
    %73 = arith.maximumf %71, %72 : vector<16x32xf32>
    %c0_32 = arith.constant 0 : index
    %c0_33 = arith.constant 0 : index
    %c0_34 = arith.constant 0 : index
    %74 = vector.load %arg11[%c0_32, %c0_33, %c0_34] : memref<1x16x32xf32, #tpu.memory_space<vmem>>, vector<1x16x32xf32>
    %75 = vector.shape_cast %74 : vector<1x16x32xf32> to vector<16x32xf32>
    %76 = vector.shape_cast %73 : vector<16x32xf32> to vector<1x16x32xf32>
    tpu.vector_store %arg11[%c0_32, %c0_33, %c0_34], %76 {strides = array<i32>} : memref<1x16x32xf32, #tpu.memory_space<vmem>>, vector<1x16x32xf32>,
    return
  }
  func.func @transform_0(%arg0: i32, %arg1: i32) -> (i32, i32, i32) {
    %c0_i32 = arith.constant 0 : i32
    %c0_i32_0 = arith.constant 0 : i32
    return %arg0, %arg1, %c0_i32 : i32, i32, i32
  }
  func.func @transform_1(%arg0: i32, %arg1: i32) -> (i32, i32, i32) {
    %c2_i32 = arith.constant 2 : i32
    %0 = arith.muli %arg1, %c2_i32 : i32
    %c1_i32 = arith.constant 1 : i32
    %1 = arith.subi %0, %c1_i32 : i32
    %c0_i32 = arith.constant 0 : i32
    %2 = arith.maxsi %1, %c0_i32 : i32
    %c0_i32_0 = arith.constant 0 : i32
    %c0_i32_1 = arith.constant 0 : i32
    return %arg0, %2, %c0_i32_0 : i32, i32, i32
  }
  func.func @transform_2(%arg0: i32, %arg1: i32) -> (i32, i32, i32) {
    %c1_i32 = arith.constant 1 : i32
    %0 = arith.addi %arg1, %c1_i32 : i32
    %c2_i32 = arith.constant 2 : i32
    %1 = arith.muli %0, %c2_i32 : i32
    %c3_i32 = arith.constant 3 : i32
    %2 = arith.minsi %1, %c3_i32 : i32
    %c0_i32 = arith.constant 0 : i32
    %c0_i32_0 = arith.constant 0 : i32
    return %arg0, %2, %c0_i32 : i32, i32, i32
  }
  func.func @transform_3(%arg0: i32, %arg1: i32) -> (i32, i32, i32) {
    %c0_i32 = arith.constant 0 : i32
    %c0_i32_0 = arith.constant 0 : i32
    return %arg0, %arg1, %c0_i32 : i32, i32, i32
  }
  func.func @transform_4(%arg0: i32, %arg1: i32) -> (i32, i32, i32) {
    %c2_i32 = arith.constant 2 : i32
    %0 = arith.muli %arg1, %c2_i32 : i32
    %c1_i32 = arith.constant 1 : i32
    %1 = arith.subi %0, %c1_i32 : i32
    %c0_i32 = arith.constant 0 : i32
    %2 = arith.maxsi %1, %c0_i32 : i32
    %c0_i32_0 = arith.constant 0 : i32
    %c0_i32_1 = arith.constant 0 : i32
    return %arg0, %2, %c0_i32_0 : i32, i32, i32
  }
  func.func @transform_5(%arg0: i32, %arg1: i32) -> (i32, i32, i32) {
    %c1_i32 = arith.constant 1 : i32
    %0 = arith.addi %arg1, %c1_i32 : i32
    %c2_i32 = arith.constant 2 : i32
    %1 = arith.muli %0, %c2_i32 : i32
    %c3_i32 = arith.constant 3 : i32
    %2 = arith.minsi %1, %c3_i32 : i32
    %c0_i32 = arith.constant 0 : i32
    %c0_i32_0 = arith.constant 0 : i32
    return %arg0, %2, %c0_i32 : i32, i32, i32
  }
  func.func @transform_6(%arg0: i32, %arg1: i32) -> (i32, i32) {
    %c0_i32 = arith.constant 0 : i32
    %c0_i32_0 = arith.constant 0 : i32
    %c0_i32_1 = arith.constant 0 : i32
    return %c0_i32, %c0_i32_0 : i32, i32
  }
  func.func @transform_7(%arg0: i32, %arg1: i32) -> (i32, i32) {
    %c0_i32 = arith.constant 0 : i32
    %c0_i32_0 = arith.constant 0 : i32
    %c0_i32_1 = arith.constant 0 : i32
    return %c0_i32, %c0_i32_0 : i32, i32
  }
  func.func @transform_8(%arg0: i32, %arg1: i32) -> (i32, i32) {
    %c0_i32 = arith.constant 0 : i32
    %c0_i32_0 = arith.constant 0 : i32
    %c0_i32_1 = arith.constant 0 : i32
    return %c0_i32, %c0_i32_0 : i32, i32
  }
  func.func @transform_9(%arg0: i32, %arg1: i32) -> (i32, i32, i32) {
    %c0_i32 = arith.constant 0 : i32
    %c0_i32_0 = arith.constant 0 : i32
    return %arg0, %arg1, %c0_i32 : i32, i32, i32
  }
}

module attributes {stable_mosaic.version = 11 : i64} {
  func.func @_upsample_kernel(%arg0: i32, %arg1: memref<1x32x32xf32, #tpu.memory_space<vmem>>, %arg2: memref<32x6xf32, #tpu.memory_space<vmem>>, %arg3: memref<1x32x64xf32, #tpu.memory_space<vmem>>) attributes {dimension_semantics = [#tpu.dimension_semantics<parallel>], iteration_bounds = array<i64: 2>, scalar_prefetch = 0 : i64, scratch_operands = 0 : i64, tpu.core_type = #tpu.core_type<tc>, window_params = [{transform_indices = @transform_0, window_bounds = array<i64: 1, 32, 32>}, {pipeline_mode = #tpu.pipeline_mode<synchronous>, transform_indices = @transform_1, window_bounds = array<i64: 32, 6>}, {transform_indices = @transform_2, window_bounds = array<i64: 1, 32, 64>}]} {
    %c0 = arith.constant 0 : index
    %c0_0 = arith.constant 0 : index
    %c0_1 = arith.constant 0 : index
    %0 = vector.load %arg1[%c0, %c0_0, %c0_1] : memref<1x32x32xf32, #tpu.memory_space<vmem>>, vector<1x32x32xf32>
    %1 = vector.shape_cast %0 : vector<1x32x32xf32> to vector<32x32xf32>
    %c0_2 = arith.constant 0 : index
    %c0_3 = arith.constant 0 : index
    %2 = vector.load %arg2[%c0_2, %c0_3] : memref<32x6xf32, #tpu.memory_space<vmem>>, vector<32x6xf32>
    %cst = arith.constant 0.000000e+00 : f32
    %3 = vector.broadcast %cst : f32 to vector<1x32xf32>
    %4 = vector.extract_strided_slice %1 {offsets = [0, 0], sizes = [31, 32], strides = [1, 1]} : vector<32x32xf32> to vector<31x32xf32>
    %5 = tpu.concatenate %3, %4 in 0 : vector<1x32xf32>, vector<31x32xf32> -> vector<32x32xf32>
    %6 = vector.extract_strided_slice %1 {offsets = [1, 0], sizes = [31, 32], strides = [1, 1]} : vector<32x32xf32> to vector<31x32xf32>
    %7 = tpu.concatenate %6, %3 in 0 : vector<31x32xf32>, vector<1x32xf32> -> vector<32x32xf32>
    %8 = vector.extract_strided_slice %2 {offsets = [0, 0], sizes = [32, 1], strides = [1, 1]} : vector<32x6xf32> to vector<32x1xf32>
    %9 = vector.broadcast %8 : vector<32x1xf32> to vector<32x32xf32>
    %10 = arith.mulf %9, %5 : vector<32x32xf32>
    %11 = vector.extract_strided_slice %2 {offsets = [0, 1], sizes = [32, 1], strides = [1, 1]} : vector<32x6xf32> to vector<32x1xf32>
    %12 = vector.broadcast %11 : vector<32x1xf32> to vector<32x32xf32>
    %13 = arith.mulf %12, %1 : vector<32x32xf32>
    %14 = arith.addf %10, %13 : vector<32x32xf32>
    %15 = vector.extract_strided_slice %2 {offsets = [0, 2], sizes = [32, 1], strides = [1, 1]} : vector<32x6xf32> to vector<32x1xf32>
    %16 = vector.broadcast %15 : vector<32x1xf32> to vector<32x32xf32>
    %17 = arith.mulf %16, %7 : vector<32x32xf32>
    %18 = arith.addf %14, %17 : vector<32x32xf32>
    %19 = vector.extract_strided_slice %2 {offsets = [0, 3], sizes = [32, 1], strides = [1, 1]} : vector<32x6xf32> to vector<32x1xf32>
    %20 = vector.broadcast %19 : vector<32x1xf32> to vector<32x32xf32>
    %21 = arith.mulf %20, %5 : vector<32x32xf32>
    %22 = vector.extract_strided_slice %2 {offsets = [0, 4], sizes = [32, 1], strides = [1, 1]} : vector<32x6xf32> to vector<32x1xf32>
    %23 = vector.broadcast %22 : vector<32x1xf32> to vector<32x32xf32>
    %24 = arith.mulf %23, %1 : vector<32x32xf32>
    %25 = arith.addf %21, %24 : vector<32x32xf32>
    %26 = vector.extract_strided_slice %2 {offsets = [0, 5], sizes = [32, 1], strides = [1, 1]} : vector<32x6xf32> to vector<32x1xf32>
    %27 = vector.broadcast %26 : vector<32x1xf32> to vector<32x32xf32>
    %28 = arith.mulf %27, %7 : vector<32x32xf32>
    %29 = arith.addf %25, %28 : vector<32x32xf32>
    %30 = tpu.concatenate %18, %29 in 1 : vector<32x32xf32>, vector<32x32xf32> -> vector<32x64xf32>
    %c0_4 = arith.constant 0 : index
    %c0_5 = arith.constant 0 : index
    %c0_6 = arith.constant 0 : index
    %31 = vector.load %arg3[%c0_4, %c0_5, %c0_6] : memref<1x32x64xf32, #tpu.memory_space<vmem>>, vector<1x32x64xf32>
    %32 = vector.shape_cast %31 : vector<1x32x64xf32> to vector<32x64xf32>
    %33 = vector.shape_cast %30 : vector<32x64xf32> to vector<1x32x64xf32>
    tpu.vector_store %arg3[%c0_4, %c0_5, %c0_6], %33 {strides = array<i32>} : memref<1x32x64xf32, #tpu.memory_space<vmem>>, vector<1x32x64xf32>,
    return
  }
  func.func @transform_0(%arg0: i32) -> (i32, i32, i32) {
    %c0_i32 = arith.constant 0 : i32
    %c0_i32_0 = arith.constant 0 : i32
    %c0_i32_1 = arith.constant 0 : i32
    return %arg0, %c0_i32, %c0_i32_0 : i32, i32, i32
  }
  func.func @transform_1(%arg0: i32) -> (i32, i32) {
    %c0_i32 = arith.constant 0 : i32
    %c0_i32_0 = arith.constant 0 : i32
    %c0_i32_1 = arith.constant 0 : i32
    return %c0_i32, %c0_i32_0 : i32, i32
  }
  func.func @transform_2(%arg0: i32) -> (i32, i32, i32) {
    %c0_i32 = arith.constant 0 : i32
    %c0_i32_0 = arith.constant 0 : i32
    %c0_i32_1 = arith.constant 0 : i32
    return %arg0, %c0_i32, %c0_i32_0 : i32, i32, i32
  }
}

module attributes {stable_mosaic.version = 11 : i64} {
  func.func @_conv_block_kernel(%arg0: i32, %arg1: i32, %arg2: memref<1x16x32xf32, #tpu.memory_space<vmem>>, %arg3: memref<1x8x32xf32, #tpu.memory_space<vmem>>, %arg4: memref<1x8x32xf32, #tpu.memory_space<vmem>>, %arg5: memref<1x16x16xf32, #tpu.memory_space<vmem>>, %arg6: memref<1x8x16xf32, #tpu.memory_space<vmem>>, %arg7: memref<1x8x16xf32, #tpu.memory_space<vmem>>, %arg8: memref<480x16xf32, #tpu.memory_space<vmem>>, %arg9: memref<240x16xf32, #tpu.memory_space<vmem>>, %arg10: memref<1x16xf32, #tpu.memory_space<vmem>>, %arg11: memref<16x2xf32, #tpu.memory_space<vmem>>, %arg12: memref<1x2xf32, #tpu.memory_space<vmem>>, %arg13: memref<1x16x2xf32, #tpu.memory_space<vmem>>) attributes {dimension_semantics = [#tpu.dimension_semantics<parallel>, #tpu.dimension_semantics<parallel>], iteration_bounds = array<i64: 2, 4>, scalar_prefetch = 0 : i64, scratch_operands = 0 : i64, tpu.core_type = #tpu.core_type<tc>, window_params = [{transform_indices = @transform_0, window_bounds = array<i64: 1, 16, 32>}, {transform_indices = @transform_1, window_bounds = array<i64: 1, 8, 32>}, {transform_indices = @transform_2, window_bounds = array<i64: 1, 8, 32>}, {transform_indices = @transform_3, window_bounds = array<i64: 1, 16, 16>}, {transform_indices = @transform_4, window_bounds = array<i64: 1, 8, 16>}, {transform_indices = @transform_5, window_bounds = array<i64: 1, 8, 16>}, {pipeline_mode = #tpu.pipeline_mode<synchronous>, transform_indices = @transform_6, window_bounds = array<i64: 480, 16>}, {pipeline_mode = #tpu.pipeline_mode<synchronous>, transform_indices = @transform_7, window_bounds = array<i64: 240, 16>}, {pipeline_mode = #tpu.pipeline_mode<synchronous>, transform_indices = @transform_8, window_bounds = array<i64: 1, 16>}, {pipeline_mode = #tpu.pipeline_mode<synchronous>, transform_indices = @transform_9, window_bounds = array<i64: 16, 2>}, {pipeline_mode = #tpu.pipeline_mode<synchronous>, transform_indices = @transform_10, window_bounds = array<i64: 1, 2>}, {transform_indices = @transform_11, window_bounds = array<i64: 1, 16, 2>}]} {
    %cst = arith.constant 0.000000e+00 : f32
    %0 = vector.broadcast %cst : f32 to vector<16x16xf32>
    %c0 = arith.constant 0 : index
    %c0_0 = arith.constant 0 : index
    %c0_1 = arith.constant 0 : index
    %1 = vector.load %arg2[%c0, %c0_0, %c0_1] : memref<1x16x32xf32, #tpu.memory_space<vmem>>, vector<1x16x32xf32>
    %2 = vector.shape_cast %1 : vector<1x16x32xf32> to vector<16x32xf32>
    %c0_2 = arith.constant 0 : index
    %c0_3 = arith.constant 0 : index
    %c0_4 = arith.constant 0 : index
    %3 = vector.load %arg3[%c0_2, %c0_3, %c0_4] : memref<1x8x32xf32, #tpu.memory_space<vmem>>, vector<1x8x32xf32>
    %4 = vector.shape_cast %3 : vector<1x8x32xf32> to vector<8x32xf32>
    %c0_5 = arith.constant 0 : index
    %c0_6 = arith.constant 0 : index
    %c0_7 = arith.constant 0 : index
    %5 = vector.load %arg4[%c0_5, %c0_6, %c0_7] : memref<1x8x32xf32, #tpu.memory_space<vmem>>, vector<1x8x32xf32>
    %6 = vector.shape_cast %5 : vector<1x8x32xf32> to vector<8x32xf32>
    %7 = vector.extract_strided_slice %4 {offsets = [1, 0], sizes = [7, 32], strides = [1, 1]} : vector<8x32xf32> to vector<7x32xf32>
    %8 = vector.extract_strided_slice %6 {offsets = [0, 0], sizes = [7, 32], strides = [1, 1]} : vector<8x32xf32> to vector<7x32xf32>
    %c0_i32 = arith.constant 0 : i32
    %9 = arith.cmpi eq, %arg1, %c0_i32 : i32
    %cst_8 = arith.constant 0.000000e+00 : f32
    %10 = vector.broadcast %cst_8 : f32 to vector<7x32xf32>
    %11 = arith.select %9, %10, %7 : vector<7x32xf32>
    %c3_i32 = arith.constant 3 : i32
    %12 = arith.cmpi eq, %arg1, %c3_i32 : i32
    %cst_9 = arith.constant 0.000000e+00 : f32
    %13 = vector.broadcast %cst_9 : f32 to vector<7x32xf32>
    %14 = arith.select %12, %13, %8 : vector<7x32xf32>
    %15 = tpu.concatenate %11, %2, %14 in 0 : vector<7x32xf32>, vector<16x32xf32>, vector<7x32xf32> -> vector<30x32xf32>
    %16 = vector.extract_strided_slice %15 {offsets = [0, 0], sizes = [16, 32], strides = [1, 1]} : vector<30x32xf32> to vector<16x32xf32>
    %17 = vector.extract_strided_slice %15 {offsets = [1, 0], sizes = [16, 32], strides = [1, 1]} : vector<30x32xf32> to vector<16x32xf32>
    %18 = vector.extract_strided_slice %15 {offsets = [2, 0], sizes = [16, 32], strides = [1, 1]} : vector<30x32xf32> to vector<16x32xf32>
    %19 = vector.extract_strided_slice %15 {offsets = [3, 0], sizes = [16, 32], strides = [1, 1]} : vector<30x32xf32> to vector<16x32xf32>
    %20 = vector.extract_strided_slice %15 {offsets = [4, 0], sizes = [16, 32], strides = [1, 1]} : vector<30x32xf32> to vector<16x32xf32>
    %21 = vector.extract_strided_slice %15 {offsets = [5, 0], sizes = [16, 32], strides = [1, 1]} : vector<30x32xf32> to vector<16x32xf32>
    %22 = vector.extract_strided_slice %15 {offsets = [6, 0], sizes = [16, 32], strides = [1, 1]} : vector<30x32xf32> to vector<16x32xf32>
    %23 = vector.extract_strided_slice %15 {offsets = [7, 0], sizes = [16, 32], strides = [1, 1]} : vector<30x32xf32> to vector<16x32xf32>
    %24 = vector.extract_strided_slice %15 {offsets = [8, 0], sizes = [16, 32], strides = [1, 1]} : vector<30x32xf32> to vector<16x32xf32>
    %25 = vector.extract_strided_slice %15 {offsets = [9, 0], sizes = [16, 32], strides = [1, 1]} : vector<30x32xf32> to vector<16x32xf32>
    %26 = vector.extract_strided_slice %15 {offsets = [10, 0], sizes = [16, 32], strides = [1, 1]} : vector<30x32xf32> to vector<16x32xf32>
    %27 = vector.extract_strided_slice %15 {offsets = [11, 0], sizes = [16, 32], strides = [1, 1]} : vector<30x32xf32> to vector<16x32xf32>
    %28 = vector.extract_strided_slice %15 {offsets = [12, 0], sizes = [16, 32], strides = [1, 1]} : vector<30x32xf32> to vector<16x32xf32>
    %29 = vector.extract_strided_slice %15 {offsets = [13, 0], sizes = [16, 32], strides = [1, 1]} : vector<30x32xf32> to vector<16x32xf32>
    %30 = vector.extract_strided_slice %15 {offsets = [14, 0], sizes = [16, 32], strides = [1, 1]} : vector<30x32xf32> to vector<16x32xf32>
    %31 = tpu.concatenate %16, %17, %18, %19, %20, %21, %22, %23, %24, %25, %26, %27, %28, %29, %30 in 1 : vector<16x32xf32>, vector<16x32xf32>, vector<16x32xf32>, vector<16x32xf32>, vector<16x32xf32>, vector<16x32xf32>, vector<16x32xf32>, vector<16x32xf32>, vector<16x32xf32>, vector<16x32xf32>, vector<16x32xf32>, vector<16x32xf32>, vector<16x32xf32>, vector<16x32xf32>, vector<16x32xf32> -> vector<16x480xf32>
    %c0_10 = arith.constant 0 : index
    %c0_11 = arith.constant 0 : index
    %32 = vector.load %arg8[%c0_10, %c0_11] : memref<480x16xf32, #tpu.memory_space<vmem>>, vector<480x16xf32>
    %cst_12 = arith.constant dense<0.000000e+00> : vector<16x16xf32>
    %33 = tpu.matmul %31, %32, %cst_12 {dimension_numbers = #tpu.dot_dimension_numbers<[1], [0], [0], [1], [0, 0, 1, 1], [], []>} : vector<16x480xf32>, vector<480x16xf32>, vector<16x16xf32> -> vector<16x16xf32>
    %34 = arith.addf %0, %33 : vector<16x16xf32>
    %c0_13 = arith.constant 0 : index
    %c0_14 = arith.constant 0 : index
    %c0_15 = arith.constant 0 : index
    %35 = vector.load %arg5[%c0_13, %c0_14, %c0_15] : memref<1x16x16xf32, #tpu.memory_space<vmem>>, vector<1x16x16xf32>
    %36 = vector.shape_cast %35 : vector<1x16x16xf32> to vector<16x16xf32>
    %c0_16 = arith.constant 0 : index
    %c0_17 = arith.constant 0 : index
    %c0_18 = arith.constant 0 : index
    %37 = vector.load %arg6[%c0_16, %c0_17, %c0_18] : memref<1x8x16xf32, #tpu.memory_space<vmem>>, vector<1x8x16xf32>
    %38 = vector.shape_cast %37 : vector<1x8x16xf32> to vector<8x16xf32>
    %c0_19 = arith.constant 0 : index
    %c0_20 = arith.constant 0 : index
    %c0_21 = arith.constant 0 : index
    %39 = vector.load %arg7[%c0_19, %c0_20, %c0_21] : memref<1x8x16xf32, #tpu.memory_space<vmem>>, vector<1x8x16xf32>
    %40 = vector.shape_cast %39 : vector<1x8x16xf32> to vector<8x16xf32>
    %41 = vector.extract_strided_slice %38 {offsets = [1, 0], sizes = [7, 16], strides = [1, 1]} : vector<8x16xf32> to vector<7x16xf32>
    %42 = vector.extract_strided_slice %40 {offsets = [0, 0], sizes = [7, 16], strides = [1, 1]} : vector<8x16xf32> to vector<7x16xf32>
    %c0_i32_22 = arith.constant 0 : i32
    %43 = arith.cmpi eq, %arg1, %c0_i32_22 : i32
    %cst_23 = arith.constant 0.000000e+00 : f32
    %44 = vector.broadcast %cst_23 : f32 to vector<7x16xf32>
    %45 = arith.select %43, %44, %41 : vector<7x16xf32>
    %c3_i32_24 = arith.constant 3 : i32
    %46 = arith.cmpi eq, %arg1, %c3_i32_24 : i32
    %cst_25 = arith.constant 0.000000e+00 : f32
    %47 = vector.broadcast %cst_25 : f32 to vector<7x16xf32>
    %48 = arith.select %46, %47, %42 : vector<7x16xf32>
    %49 = tpu.concatenate %45, %36, %48 in 0 : vector<7x16xf32>, vector<16x16xf32>, vector<7x16xf32> -> vector<30x16xf32>
    %50 = vector.extract_strided_slice %49 {offsets = [0, 0], sizes = [16, 16], strides = [1, 1]} : vector<30x16xf32> to vector<16x16xf32>
    %51 = vector.extract_strided_slice %49 {offsets = [1, 0], sizes = [16, 16], strides = [1, 1]} : vector<30x16xf32> to vector<16x16xf32>
    %52 = vector.extract_strided_slice %49 {offsets = [2, 0], sizes = [16, 16], strides = [1, 1]} : vector<30x16xf32> to vector<16x16xf32>
    %53 = vector.extract_strided_slice %49 {offsets = [3, 0], sizes = [16, 16], strides = [1, 1]} : vector<30x16xf32> to vector<16x16xf32>
    %54 = vector.extract_strided_slice %49 {offsets = [4, 0], sizes = [16, 16], strides = [1, 1]} : vector<30x16xf32> to vector<16x16xf32>
    %55 = vector.extract_strided_slice %49 {offsets = [5, 0], sizes = [16, 16], strides = [1, 1]} : vector<30x16xf32> to vector<16x16xf32>
    %56 = vector.extract_strided_slice %49 {offsets = [6, 0], sizes = [16, 16], strides = [1, 1]} : vector<30x16xf32> to vector<16x16xf32>
    %57 = vector.extract_strided_slice %49 {offsets = [7, 0], sizes = [16, 16], strides = [1, 1]} : vector<30x16xf32> to vector<16x16xf32>
    %58 = vector.extract_strided_slice %49 {offsets = [8, 0], sizes = [16, 16], strides = [1, 1]} : vector<30x16xf32> to vector<16x16xf32>
    %59 = vector.extract_strided_slice %49 {offsets = [9, 0], sizes = [16, 16], strides = [1, 1]} : vector<30x16xf32> to vector<16x16xf32>
    %60 = vector.extract_strided_slice %49 {offsets = [10, 0], sizes = [16, 16], strides = [1, 1]} : vector<30x16xf32> to vector<16x16xf32>
    %61 = vector.extract_strided_slice %49 {offsets = [11, 0], sizes = [16, 16], strides = [1, 1]} : vector<30x16xf32> to vector<16x16xf32>
    %62 = vector.extract_strided_slice %49 {offsets = [12, 0], sizes = [16, 16], strides = [1, 1]} : vector<30x16xf32> to vector<16x16xf32>
    %63 = vector.extract_strided_slice %49 {offsets = [13, 0], sizes = [16, 16], strides = [1, 1]} : vector<30x16xf32> to vector<16x16xf32>
    %64 = vector.extract_strided_slice %49 {offsets = [14, 0], sizes = [16, 16], strides = [1, 1]} : vector<30x16xf32> to vector<16x16xf32>
    %65 = tpu.concatenate %50, %51, %52, %53, %54, %55, %56, %57, %58, %59, %60, %61, %62, %63, %64 in 1 : vector<16x16xf32>, vector<16x16xf32>, vector<16x16xf32>, vector<16x16xf32>, vector<16x16xf32>, vector<16x16xf32>, vector<16x16xf32>, vector<16x16xf32>, vector<16x16xf32>, vector<16x16xf32>, vector<16x16xf32>, vector<16x16xf32>, vector<16x16xf32>, vector<16x16xf32>, vector<16x16xf32> -> vector<16x240xf32>
    %c0_26 = arith.constant 0 : index
    %c0_27 = arith.constant 0 : index
    %66 = vector.load %arg9[%c0_26, %c0_27] : memref<240x16xf32, #tpu.memory_space<vmem>>, vector<240x16xf32>
    %cst_28 = arith.constant dense<0.000000e+00> : vector<16x16xf32>
    %67 = tpu.matmul %65, %66, %cst_28 {dimension_numbers = #tpu.dot_dimension_numbers<[1], [0], [0], [1], [0, 0, 1, 1], [], []>} : vector<16x240xf32>, vector<240x16xf32>, vector<16x16xf32> -> vector<16x16xf32>
    %68 = arith.addf %34, %67 : vector<16x16xf32>
    %c0_29 = arith.constant 0 : index
    %c0_30 = arith.constant 0 : index
    %69 = vector.load %arg10[%c0_29, %c0_30] : memref<1x16xf32, #tpu.memory_space<vmem>>, vector<1x16xf32>
    %70 = vector.broadcast %69 : vector<1x16xf32> to vector<16x16xf32>
    %71 = arith.addf %68, %70 : vector<16x16xf32>
    %cst_31 = arith.constant 0.000000e+00 : f32
    %72 = vector.broadcast %cst_31 : f32 to vector<16x16xf32>
    %73 = arith.maximumf %71, %72 : vector<16x16xf32>
    %c0_32 = arith.constant 0 : index
    %c0_33 = arith.constant 0 : index
    %74 = vector.load %arg11[%c0_32, %c0_33] : memref<16x2xf32, #tpu.memory_space<vmem>>, vector<16x2xf32>
    %cst_34 = arith.constant dense<0.000000e+00> : vector<16x2xf32>
    %75 = tpu.matmul %73, %74, %cst_34 {dimension_numbers = #tpu.dot_dimension_numbers<[1], [0], [0], [1], [0, 0, 1, 1], [], []>} : vector<16x16xf32>, vector<16x2xf32>, vector<16x2xf32> -> vector<16x2xf32>
    %c0_35 = arith.constant 0 : index
    %c0_36 = arith.constant 0 : index
    %76 = vector.load %arg12[%c0_35, %c0_36] : memref<1x2xf32, #tpu.memory_space<vmem>>, vector<1x2xf32>
    %77 = vector.broadcast %76 : vector<1x2xf32> to vector<16x2xf32>
    %78 = arith.addf %75, %77 : vector<16x2xf32>
    %79 = math.tanh %78 : vector<16x2xf32>
    %c0_37 = arith.constant 0 : index
    %c0_38 = arith.constant 0 : index
    %c0_39 = arith.constant 0 : index
    %80 = vector.load %arg13[%c0_37, %c0_38, %c0_39] : memref<1x16x2xf32, #tpu.memory_space<vmem>>, vector<1x16x2xf32>
    %81 = vector.shape_cast %80 : vector<1x16x2xf32> to vector<16x2xf32>
    %82 = vector.shape_cast %79 : vector<16x2xf32> to vector<1x16x2xf32>
    tpu.vector_store %arg13[%c0_37, %c0_38, %c0_39], %82 {strides = array<i32>} : memref<1x16x2xf32, #tpu.memory_space<vmem>>, vector<1x16x2xf32>,
    return
  }
  func.func @transform_0(%arg0: i32, %arg1: i32) -> (i32, i32, i32) {
    %c0_i32 = arith.constant 0 : i32
    %c0_i32_0 = arith.constant 0 : i32
    return %arg0, %arg1, %c0_i32 : i32, i32, i32
  }
  func.func @transform_1(%arg0: i32, %arg1: i32) -> (i32, i32, i32) {
    %c2_i32 = arith.constant 2 : i32
    %0 = arith.muli %arg1, %c2_i32 : i32
    %c1_i32 = arith.constant 1 : i32
    %1 = arith.subi %0, %c1_i32 : i32
    %c0_i32 = arith.constant 0 : i32
    %2 = arith.maxsi %1, %c0_i32 : i32
    %c0_i32_0 = arith.constant 0 : i32
    %c0_i32_1 = arith.constant 0 : i32
    return %arg0, %2, %c0_i32_0 : i32, i32, i32
  }
  func.func @transform_2(%arg0: i32, %arg1: i32) -> (i32, i32, i32) {
    %c1_i32 = arith.constant 1 : i32
    %0 = arith.addi %arg1, %c1_i32 : i32
    %c2_i32 = arith.constant 2 : i32
    %1 = arith.muli %0, %c2_i32 : i32
    %c7_i32 = arith.constant 7 : i32
    %2 = arith.minsi %1, %c7_i32 : i32
    %c0_i32 = arith.constant 0 : i32
    %c0_i32_0 = arith.constant 0 : i32
    return %arg0, %2, %c0_i32 : i32, i32, i32
  }
  func.func @transform_3(%arg0: i32, %arg1: i32) -> (i32, i32, i32) {
    %c0_i32 = arith.constant 0 : i32
    %c0_i32_0 = arith.constant 0 : i32
    return %arg0, %arg1, %c0_i32 : i32, i32, i32
  }
  func.func @transform_4(%arg0: i32, %arg1: i32) -> (i32, i32, i32) {
    %c2_i32 = arith.constant 2 : i32
    %0 = arith.muli %arg1, %c2_i32 : i32
    %c1_i32 = arith.constant 1 : i32
    %1 = arith.subi %0, %c1_i32 : i32
    %c0_i32 = arith.constant 0 : i32
    %2 = arith.maxsi %1, %c0_i32 : i32
    %c0_i32_0 = arith.constant 0 : i32
    %c0_i32_1 = arith.constant 0 : i32
    return %arg0, %2, %c0_i32_0 : i32, i32, i32
  }
  func.func @transform_5(%arg0: i32, %arg1: i32) -> (i32, i32, i32) {
    %c1_i32 = arith.constant 1 : i32
    %0 = arith.addi %arg1, %c1_i32 : i32
    %c2_i32 = arith.constant 2 : i32
    %1 = arith.muli %0, %c2_i32 : i32
    %c7_i32 = arith.constant 7 : i32
    %2 = arith.minsi %1, %c7_i32 : i32
    %c0_i32 = arith.constant 0 : i32
    %c0_i32_0 = arith.constant 0 : i32
    return %arg0, %2, %c0_i32 : i32, i32, i32
  }
  func.func @transform_6(%arg0: i32, %arg1: i32) -> (i32, i32) {
    %c0_i32 = arith.constant 0 : i32
    %c0_i32_0 = arith.constant 0 : i32
    %c0_i32_1 = arith.constant 0 : i32
    return %c0_i32, %c0_i32_0 : i32, i32
  }
  func.func @transform_7(%arg0: i32, %arg1: i32) -> (i32, i32) {
    %c0_i32 = arith.constant 0 : i32
    %c0_i32_0 = arith.constant 0 : i32
    %c0_i32_1 = arith.constant 0 : i32
    return %c0_i32, %c0_i32_0 : i32, i32
  }
  func.func @transform_8(%arg0: i32, %arg1: i32) -> (i32, i32) {
    %c0_i32 = arith.constant 0 : i32
    %c0_i32_0 = arith.constant 0 : i32
    %c0_i32_1 = arith.constant 0 : i32
    return %c0_i32, %c0_i32_0 : i32, i32
  }
  func.func @transform_9(%arg0: i32, %arg1: i32) -> (i32, i32) {
    %c0_i32 = arith.constant 0 : i32
    %c0_i32_0 = arith.constant 0 : i32
    %c0_i32_1 = arith.constant 0 : i32
    return %c0_i32, %c0_i32_0 : i32, i32
  }
  func.func @transform_10(%arg0: i32, %arg1: i32) -> (i32, i32) {
    %c0_i32 = arith.constant 0 : i32
    %c0_i32_0 = arith.constant 0 : i32
    %c0_i32_1 = arith.constant 0 : i32
    return %c0_i32, %c0_i32_0 : i32, i32
  }
  func.func @transform_11(%arg0: i32, %arg1: i32) -> (i32, i32, i32) {
    %c0_i32 = arith.constant 0 : i32
    %c0_i32_0 = arith.constant 0 : i32
    return %arg0, %arg1, %c0_i32 : i32, i32, i32
  }
}

</mosaic_0001>

<llo_original>
// kernel: wave_unet_forward.11
$region0: #{wave_unet_forward.11}
  #allocation0 [shape = 'u32[]', space=smem, size = 0x4, offset = 0x4, fixed_abs, tag = 'smem constant byte address 0x4 - core index']
  #allocation1 [shape = 'u32[72,128]{1,0:T(1,128)}', space=vmem, size = 0x9000, scoped, tag = 'internal scratch']
  %s0 = inlined_call_operand.vmem [shape: f32[2,32,2,16], index: 0, kind: input, shape index: {}, may-alias: {0,1,2}]
  %s1 = inlined_call_operand.vmem [shape: f32[2,32,2,16], index: 1, kind: input, shape index: {}, may-alias: {0,1,2}]
  %s2 = inlined_call_operand.vmem [shape: f32[2,32,2,16], index: 2, kind: input, shape index: {}, may-alias: {0,1,2}]
  %s3 = inlined_call_operand.hbm [shape: f32[240,32], index: 3, kind: input, shape index: {}]
  %s4 = inlined_call_operand.vmem [shape: f32[1,32], index: 4, kind: input, shape index: {}]
  %s5 = inlined_call_operand.vmem [shape: f32[2,32,32], index: 5, kind: output, shape index: {}]
  %s6 = sld [smem:[#allocation0]]
  $region57: #{wave_unet_forward.11} parent=0
    _
  %s8 = ssub.s32 1, %s6
  %s9 = scalar_select 0, %s8, %s6
  $region1: #{wave_unet_forward.11} parent=0
    #allocation2 [shape = 'u8[122880]{0}', space=vmem, size = 0x1e000, scoped, tag = 'input window, operand 3, single buffered']
    #allocation3 [shape = 's32[2]{0}', space=sflag, size = 0x8, scoped, tag = 'scoped memory for wave_unet_forward.11']
    %10 = vsyncpa [#allocation3], 0
    loop: start=0, step=1, limit=6
    $region2: #{wave_unet_forward.11} parent=1 // loop_pre_header
      _
    $region3: #{wave_unet_forward.11} parent=1 // loop_header
      %s12 = sphi 0, %s16
      %p13 = scmp.ge.s32.totalorder %s12, 6
      %s19 = sphi 0, %s31
      %s20 = sphi 0, %s27
      %s21 = sphi 0, %s19
      %s22 = sphi 0, %s20
      %s23 = sphi 0, %s21
      %s24 = sphi 0, %s22
      %s36 = sphi 0, %s38
      %s39 = sphi 0, %s36
      %s40 = sphi 0, %s39
      %s56 = sphi 0, %s40
      %s72 = sphi 0, %s74
      %s75 = sphi 0, %s72
      %s76 = sphi 0, %s75
      %s92 = sphi 0, %s76
      %s108 = sphi 0, %s110
      %s111 = sphi 0, %s108
      %s112 = sphi 0, %s111
      %s128 = sphi 0, %s112
      %s132 = sphi 0, %s132
      %s134 = sphi 0, %s132
      %s135 = sphi 0, %s134
      %s149 = sphi 0, %s135
      %s153 = sphi 0, %s153
      %s155 = sphi 0, %s153
      %s156 = sphi 0, %s155
      %s170 = sphi 0, %s156
      %s178 = sphi 0, %s180
      %s181 = sphi 0, %s178
      %s182 = sphi 0, %s181
      %s198 = sphi 0, %s182
    $region4: #{wave_unet_forward.11} parent=1 // loop_header_branch
      %15 = sbr.rel (%p13) target = $region8
    $region5: #{wave_unet_forward.11} parent=1 // loop_body
      %s17 = ssub.s32 %s12, 1
      %s18 = ssub.s32 %s12, 2
      %s25 = sadd.s32 1, %s20
      %p26 = scmp.ge.s32.totalorder %s25, 2
      %s27 = scalar_select %p26, 0, %s25
      %s28 = sadd.s32 1, %s19
      %s29 = scalar_select %p26, %s28, %s19
      %p30 = scmp.ge.s32.totalorder %s29, 2
      %s31 = scalar_select %p30, 0, %s29
      %s32 = ssub.s32 %s19, %s31
      %s33 = ssub.s32 %s20, %s27
      %s34 = sor.u32 %s32, %s33
      %p35 = scmp.eq.s32.totalorder %s34, 0
      %s37 = sadd.s32 %s36, 1
      %s38 = scalar_select %p35, %s36, %s37
      %p41 = pneg %p35
      %p42 = scmp.eq.s32.totalorder %s12, 3
      %p43 = por %p41, %p42
      %p44 = scmp.ne.s32.totalorder %s36, %s39
      %p45 = scmp.eq.s32.totalorder %s12, 0
      %p46 = por %p44, %p45
      %p47 = scmp.ne.s32.totalorder %s36, %s39
      %p48 = scmp.eq.s32.totalorder %s17, 3
      %p49 = por %p47, %p48
      %p50 = scmp.ne.s32.totalorder %s39, %s40
      %p51 = scmp.eq.s32.totalorder %s17, 0
      %p52 = por %p50, %p51
      %p53 = scmp.ne.s32.totalorder %s39, %s40
      %p54 = scmp.eq.s32.totalorder %s18, 3
      %p55 = por %p53, %p54
      %p57 = scmp.ne.s32.totalorder %s40, %s56
      %p58 = scmp.eq.s32.totalorder %s18, 0
      %p59 = por %p57, %p58
      %s60 = smul.u32 %s20, 2
      %s61 = ssub.s32 %s60, 1
      %p62 = scmp.gt.s32.totalorder %s61, 0
      %s63 = scalar_select %p62, %s61, 0
      %s64 = smul.u32 %s27, 2
      %s65 = ssub.s32 %s64, 1
      %p66 = scmp.gt.s32.totalorder %s65, 0
      %s67 = scalar_select %p66, %s65, 0
      %s68 = ssub.s32 %s19, %s31
      %s69 = ssub.s32 %s63, %s67
      %s70 = sor.u32 %s68, %s69
      %p71 = scmp.eq.s32.totalorder %s70, 0
      %s73 = sadd.s32 %s72, 1
      %s74 = scalar_select %p71, %s72, %s73
      %p77 = pneg %p71
      %p78 = scmp.eq.s32.totalorder %s12, 3
      %p79 = por %p77, %p78
      %p80 = scmp.ne.s32.totalorder %s72, %s75
      %p81 = scmp.eq.s32.totalorder %s12, 0
      %p82 = por %p80, %p81
      %p83 = scmp.ne.s32.totalorder %s72, %s75
      %p84 = scmp.eq.s32.totalorder %s17, 3
      %p85 = por %p83, %p84
      %p86 = scmp.ne.s32.totalorder %s75, %s76
      %p87 = scmp.eq.s32.totalorder %s17, 0
      %p88 = por %p86, %p87
      %p89 = scmp.ne.s32.totalorder %s75, %s76
      %p90 = scmp.eq.s32.totalorder %s18, 3
      %p91 = por %p89, %p90
      %p93 = scmp.ne.s32.totalorder %s76, %s92
      %p94 = scmp.eq.s32.totalorder %s18, 0
      %p95 = por %p93, %p94
      %s96 = sadd.s32 %s20, 1
      %s97 = smul.u32 %s96, 2
      %p98 = scmp.lt.s32.totalorder %s97, 3
      %s99 = scalar_select %p98, %s97, 3
      %s100 = sadd.s32 %s27, 1
      %s101 = smul.u32 %s100, 2
      %p102 = scmp.lt.s32.totalorder %s101, 3
      %s103 = scalar_select %p102, %s101, 3
      %s104 = ssub.s32 %s19, %s31
      %s105 = ssub.s32 %s99, %s103
      %s106 = sor.u32 %s104, %s105
      %p107 = scmp.eq.s32.totalorder %s106, 0
      %s109 = sadd.s32 %s108, 1
      %s110 = scalar_select %p107, %s108, %s109
      %p113 = pneg %p107
      %p114 = scmp.eq.s32.totalorder %s12, 3
      %p115 = por %p113, %p114
      %p116 = scmp.ne.s32.totalorder %s108, %s111
      %p117 = scmp.eq.s32.totalorder %s12, 0
      %p118 = por %p116, %p117
      %p119 = scmp.ne.s32.totalorder %s108, %s111
      %p120 = scmp.eq.s32.totalorder %s17, 3
      %p121 = por %p119, %p120
      %p122 = scmp.ne.s32.totalorder %s111, %s112
      %p123 = scmp.eq.s32.totalorder %s17, 0
      %p124 = por %p122, %p123
      %p125 = scmp.ne.s32.totalorder %s111, %s112
      %p126 = scmp.eq.s32.totalorder %s18, 3
      %p127 = por %p125, %p126
      %p129 = scmp.ne.s32.totalorder %s112, %s128
      %p130 = scmp.eq.s32.totalorder %s18, 0
      %p131 = por %p129, %p130
      %s133 = sadd.s32 %s132, 1
      %p136 = scmp.eq.s32.totalorder %s12, 3
      %p137 = scmp.ne.s32.totalorder %s132, %s134
      %p138 = scmp.eq.s32.totalorder %s12, 0
      %p139 = por %p137, %p138
      %p140 = scmp.ne.s32.totalorder %s132, %s134
      %p141 = scmp.eq.s32.totalorder %s17, 3
      %p142 = por %p140, %p141
      %p143 = scmp.ne.s32.totalorder %s134, %s135
      %p144 = scmp.eq.s32.totalorder %s17, 0
      %p145 = por %p143, %p144
      %p146 = scmp.ne.s32.totalorder %s134, %s135
      %p147 = scmp.eq.s32.totalorder %s18, 3
      %p148 = por %p146, %p147
      %p150 = scmp.ne.s32.totalorder %s135, %s149
      %p151 = scmp.eq.s32.totalorder %s18, 0
      %p152 = por %p150, %p151
      %s154 = sadd.s32 %s153, 1
      %p157 = scmp.eq.s32.totalorder %s12, 3
      %p158 = scmp.ne.s32.totalorder %s153, %s155
      %p159 = scmp.eq.s32.totalorder %s12, 0
      %p160 = por %p158, %p159
      %p161 = scmp.ne.s32.totalorder %s153, %s155
      %p162 = scmp.eq.s32.totalorder %s17, 3
      %p163 = por %p161, %p162
      %p164 = scmp.ne.s32.totalorder %s155, %s156
      %p165 = scmp.eq.s32.totalorder %s17, 0
      %p166 = por %p164, %p165
      %p167 = scmp.ne.s32.totalorder %s155, %s156
      %p168 = scmp.eq.s32.totalorder %s18, 3
      %p169 = por %p167, %p168
      %p171 = scmp.ne.s32.totalorder %s156, %s170
      %p172 = scmp.eq.s32.totalorder %s18, 0
      %p173 = por %p171, %p172
      %s174 = ssub.s32 %s19, %s31
      %s175 = ssub.s32 %s20, %s27
      %s176 = sor.u32 %s174, %s175
      %p177 = scmp.eq.s32.totalorder %s176, 0
      %s179 = sadd.s32 %s178, 1
      %s180 = scalar_select %p177, %s178, %s179
      %p183 = pneg %p177
      %p184 = scmp.eq.s32.totalorder %s12, 3
      %p185 = por %p183, %p184
      %p186 = scmp.ne.s32.totalorder %s178, %s181
      %p187 = scmp.eq.s32.totalorder %s12, 0
      %p188 = por %p186, %p187
      %p189 = scmp.ne.s32.totalorder %s178, %s181
      %p190 = scmp.eq.s32.totalorder %s17, 3
      %p191 = por %p189, %p190
      %p192 = scmp.ne.s32.totalorder %s181, %s182
      %p193 = scmp.eq.s32.totalorder %s17, 0
      %p194 = por %p192, %p193
      %p195 = scmp.ne.s32.totalorder %s181, %s182
      %p196 = scmp.eq.s32.totalorder %s18, 3
      %p197 = por %p195, %p196
      %p199 = scmp.ne.s32.totalorder %s182, %s198
      %p200 = scmp.eq.s32.totalorder %s18, 0
      %p201 = por %p199, %p200
      %p202 = scmp.le.s32.totalorder 1, %s12
      %p203 = scmp.lt.s32.totalorder %s12, 5
      %p204 = pnand %p202, %p203
      %p205 = pneg %p204
      // Predicated region
      $region9: #{wave_unet_forward.11} parent=5 // pred_check
        _
      $region10: #{wave_unet_forward.11} parent=5 // pred_check_branch
        %207 = sbr.rel (%p204) target = $region12
      $region11: #{wave_unet_forward.11} parent=5 // pred_region
        %s208 = ssub.s32 %s12, 1
        // Predicated region
        $region13: #{wave_unet_forward.11} parent=11 // pred_check
          %p209 = pneg %p145
        $region14: #{wave_unet_forward.11} parent=11 // pred_check_branch
          %211 = sbr.rel (%p209) target = $region16
        $region15: #{wave_unet_forward.11} parent=11 // pred_region
          %213 = vsyncadd [#allocation3], 0
          %s214 = sshll.u32 %s3, 4
          %s215 = int_to_ptr.hbm [resolvable:$true] %s214
          %s216 = sshll.u32 [#allocation2], 4
          %s217 = int_to_ptr.vmem [resolvable:$true] %s216
          %222 = dma.hbm_to_vmem [thread:$0]  %s215, 3840, %s217, [#allocation3], 128, 128, 8
        $region16: #{wave_unet_forward.11} parent=11 // pred_fallthru
          _
        // Predicated region
        $region17: #{wave_unet_forward.11} parent=11 // pred_check
          %p223 = pneg %p166
        $region18: #{wave_unet_forward.11} parent=11 // pred_check_branch
          %225 = sbr.rel (%p223) target = $region20
        $region19: #{wave_unet_forward.11} parent=11 // pred_region
          _
        $region20: #{wave_unet_forward.11} parent=11 // pred_fallthru
          _
      $region12: #{wave_unet_forward.11} parent=5 // pred_fallthru
        _
      %p226 = scmp.lt.s32.totalorder %s12, 4
      // Predicated region
      $region21: #{wave_unet_forward.11} parent=5 // pred_check
        %p227 = pneg %p226
      $region22: #{wave_unet_forward.11} parent=5 // pred_check_branch
        %229 = sbr.rel (%p227) target = $region24
      $region23: #{wave_unet_forward.11} parent=5 // pred_region
        // Predicated region
        $region25: #{wave_unet_forward.11} parent=23 // pred_check
          %p230 = pneg %p46
        $region26: #{wave_unet_forward.11} parent=23 // pred_check_branch
          %232 = sbr.rel (%p230) target = $region28
        $region27: #{wave_unet_forward.11} parent=23 // pred_region
          %s233 = smul.u32 16, %s20
          %p234 = scmp.lt.s32.totalorder %s19, 1
          %s235 = scalar_select %p234, %s19, 1
          %p236 = scmp.lt.s32.totalorder %s233, 31
          %s237 = scalar_select %p236, %s233, 31
          %s238 = smul.addr %s235, 32
          %s239 = sadd.s32 %s237, %s238
          %s240 = smul.addr %s239, 2
          %s241 = scalar_lea.vmem %s0, %s240
          %s242 = smul.u32 16, %s20
        $region28: #{wave_unet_forward.11} parent=23 // pred_fallthru
          _
        // Predicated region
        $region29: #{wave_unet_forward.11} parent=23 // pred_check
          %p243 = pneg %p82
        $region30: #{wave_unet_forward.11} parent=23 // pred_check_branch
          %245 = sbr.rel (%p243) target = $region32
        $region31: #{wave_unet_forward.11} parent=23 // pred_region
          %s246 = smul.u32 %s20, 2
          %s247 = ssub.s32 %s246, 1
          %p248 = scmp.gt.s32.totalorder %s247, 0
          %s249 = scalar_select %p248, %s247, 0
          %s250 = smul.u32 8, %s249
          %p251 = scmp.lt.s32.totalorder %s19, 1
          %s252 = scalar_select %p251, %s19, 1
          %p253 = scmp.lt.s32.totalorder %s250, 31
          %s254 = scalar_select %p253, %s250, 31
          %s255 = smul.addr %s252, 32
          %s256 = sadd.s32 %s254, %s255
          %s257 = smul.addr %s256, 2
          %s258 = scalar_lea.vmem %s1, %s257
          %s259 = smul.u32 %s20, 2
          %s260 = ssub.s32 %s259, 1
          %p261 = scmp.gt.s32.totalorder %s260, 0
          %s262 = scalar_select %p261, %s260, 0
          %s263 = smul.u32 8, %s262
        $region32: #{wave_unet_forward.11} parent=23 // pred_fallthru
          _
        // Predicated region
        $region33: #{wave_unet_forward.11} parent=23 // pred_check
          %p264 = pneg %p118
        $region34: #{wave_unet_forward.11} parent=23 // pred_check_branch
          %266 = sbr.rel (%p264) target = $region36
        $region35: #{wave_unet_forward.11} parent=23 // pred_region
          %s267 = sadd.s32 %s20, 1
          %s268 = smul.u32 %s267, 2
          %p269 = scmp.lt.s32.totalorder %s268, 3
          %s270 = scalar_select %p269, %s268, 3
          %s271 = smul.u32 8, %s270
          %p272 = scmp.lt.s32.totalorder %s19, 1
          %s273 = scalar_select %p272, %s19, 1
          %p274 = scmp.lt.s32.totalorder %s271, 31
          %s275 = scalar_select %p274, %s271, 31
          %s276 = smul.addr %s273, 32
          %s277 = sadd.s32 %s275, %s276
          %s278 = smul.addr %s277, 2
          %s279 = scalar_lea.vmem %s2, %s278
          %s280 = sadd.s32 %s20, 1
          %s281 = smul.u32 %s280, 2
          %p282 = scmp.lt.s32.totalorder %s281, 3
          %s283 = scalar_select %p282, %s281, 3
          %s284 = smul.u32 8, %s283
        $region36: #{wave_unet_forward.11} parent=23 // pred_fallthru
          _
      $region24: #{wave_unet_forward.11} parent=5 // pred_fallthru
        _
      %p285 = scmp.le.s32.totalorder 1, %s12
      %p286 = scmp.lt.s32.totalorder %s12, 5
      %p287 = pnand %p285, %p286
      %p288 = pneg %p287
      // Predicated region
      $region37: #{wave_unet_forward.11} parent=5 // pred_check
        _
      $region38: #{wave_unet_forward.11} parent=5 // pred_check_branch
        %290 = sbr.rel (%p287) target = $region40
      $region39: #{wave_unet_forward.11} parent=5 // pred_region
        %s291 = ssub.s32 %s12, 1
        // Predicated region
        $region41: #{wave_unet_forward.11} parent=39 // pred_check
          %p292 = pneg %p145
        $region42: #{wave_unet_forward.11} parent=39 // pred_check_branch
          %294 = sbr.rel (%p292) target = $region44
        $region43: #{wave_unet_forward.11} parent=39 // pred_region
          %296 = dma.done [#allocation3], 3840
        $region44: #{wave_unet_forward.11} parent=39 // pred_fallthru
          _
        %s297 = smul.u32 16, %s22
        %p298 = scmp.lt.s32.totalorder %s21, 1
        %s299 = scalar_select %p298, %s21, 1
        %p300 = scmp.lt.s32.totalorder %s297, 31
        %s301 = scalar_select %p300, %s297, 31
        %s302 = smul.addr %s299, 32
        %s303 = sadd.s32 %s301, %s302
        %s304 = smul.addr %s303, 2
        %s305 = scalar_lea.vmem %s0, %s304
        %p306 = pneg %p52
        %p307 = pneg %p49
        %s308 = smul.u32 %s22, 2
        %s309 = ssub.s32 %s308, 1
        %p310 = scmp.gt.s32.totalorder %s309, 0
        %s311 = scalar_select %p310, %s309, 0
        %s312 = smul.u32 8, %s311
        %p313 = scmp.lt.s32.totalorder %s21, 1
        %s314 = scalar_select %p313, %s21, 1
        %p315 = scmp.lt.s32.totalorder %s312, 31
        %s316 = scalar_select %p315, %s312, 31
        %s317 = smul.addr %s314, 32
        %s318 = sadd.s32 %s316, %s317
        %s319 = smul.addr %s318, 2
        %s320 = scalar_lea.vmem %s1, %s319
        %p321 = pneg %p88
        %p322 = pneg %p85
        %s323 = sadd.s32 %s22, 1
        %s324 = smul.u32 %s323, 2
        %p325 = scmp.lt.s32.totalorder %s324, 3
        %s326 = scalar_select %p325, %s324, 3
        %s327 = smul.u32 8, %s326
        %p328 = scmp.lt.s32.totalorder %s21, 1
        %s329 = scalar_select %p328, %s21, 1
        %p330 = scmp.lt.s32.totalorder %s327, 31
        %s331 = scalar_select %p330, %s327, 31
        %s332 = smul.addr %s329, 32
        %s333 = sadd.s32 %s331, %s332
        %s334 = smul.addr %s333, 2
        %s335 = scalar_lea.vmem %s2, %s334
        %p336 = pneg %p124
        %p337 = pneg %p121
        %p338 = pneg %p145
        %p339 = pneg %p142
        %p340 = pneg %p166
        %p341 = pneg %p163
        %p342 = pneg %p194
        %p343 = pneg %p191
        %s344 = smul.u32 2, %s22
        %p345 = scmp.lt.s32.totalorder %s21, 1
        %s346 = scalar_select %p345, %s21, 1
        %p347 = scmp.lt.s32.totalorder %s344, 3
        %s348 = scalar_select %p347, %s344, 3
        %s349 = smul.addr %s346, 4
        %s350 = sadd.s32 %s348, %s349
        %s351 = smul.addr %s350, 8
        %s352 = scalar_lea.vmem %s5, %s351
        %s353 = smul.u32 16, %s22
        %p354 = scmp.lt.s32.totalorder %s21, 1
        %s355 = scalar_select %p354, %s21, 1
        %p356 = scmp.lt.s32.totalorder %s353, 31
        %s357 = scalar_select %p356, %s353, 31
        %s358 = smul.addr %s355, 32
        %s359 = sadd.s32 %s357, %s358
        %s360 = smul.addr %s359, 2
        %s361 = scalar_lea.vmem %s0, %s360
        %s362 = smul.u32 16, %s22
        %s363 = smul.u32 %s22, 2
        %s364 = ssub.s32 %s363, 1
        %p365 = scmp.gt.s32.totalorder %s364, 0
        %s366 = scalar_select %p365, %s364, 0
        %s367 = smul.u32 8, %s366
        %p368 = scmp.lt.s32.totalorder %s21, 1
        %s369 = scalar_select %p368, %s21, 1
        %p370 = scmp.lt.s32.totalorder %s367, 31
        %s371 = scalar_select %p370, %s367, 31
        %s372 = smul.addr %s369, 32
        %s373 = sadd.s32 %s371, %s372
        %s374 = smul.addr %s373, 2
        %s375 = scalar_lea.vmem %s1, %s374
        %s376 = smul.u32 %s22, 2
        %s377 = ssub.s32 %s376, 1
        %p378 = scmp.gt.s32.totalorder %s377, 0
        %s379 = scalar_select %p378, %s377, 0
        %s380 = smul.u32 8, %s379
        %s381 = sadd.s32 %s22, 1
        %s382 = smul.u32 %s381, 2
        %p383 = scmp.lt.s32.totalorder %s382, 3
        %s384 = scalar_select %p383, %s382, 3
        %s385 = smul.u32 8, %s384
        %p386 = scmp.lt.s32.totalorder %s21, 1
        %s387 = scalar_select %p386, %s21, 1
        %p388 = scmp.lt.s32.totalorder %s385, 31
        %s389 = scalar_select %p388, %s385, 31
        %s390 = smul.addr %s387, 32
        %s391 = sadd.s32 %s389, %s390
        %s392 = smul.addr %s391, 2
        %s393 = scalar_lea.vmem %s2, %s392
        %s394 = sadd.s32 %s22, 1
        %s395 = smul.u32 %s394, 2
        %p396 = scmp.lt.s32.totalorder %s395, 3
        %s397 = scalar_select %p396, %s395, 3
        %s398 = smul.u32 8, %s397
        %s399 = smul.u32 2, %s22
        %p400 = scmp.lt.s32.totalorder %s21, 1
        %s401 = scalar_select %p400, %s21, 1
        %p402 = scmp.lt.s32.totalorder %s399, 3
        %s403 = scalar_select %p402, %s399, 3
        %s404 = smul.addr %s401, 4
        %s405 = sadd.s32 %s403, %s404
        %s406 = smul.addr %s405, 8
        %s407 = scalar_lea.vmem %s5, %s406
        %s408 = smul.u32 2, %s22
        %v409 = vld [vmem:[%s361] sm:$0x1]
        %v410 = vld [vmem:[%s361 + $0x2] sm:$0x1]
        %v411 = vld [vmem:[%s361 + $0x4] sm:$0x1]
        %v412 = vld [vmem:[%s361 + $0x6] sm:$0x1]
        %v413 = vld [vmem:[%s361 + $0x8] sm:$0x1]
        %v414 = vld [vmem:[%s361 + $0xa] sm:$0x1]
        %v415 = vld [vmem:[%s361 + $0xc] sm:$0x1]
        %v416 = vld [vmem:[%s361 + $0xe] sm:$0x1]
        %v417 = vld [vmem:[%s361 + $0x10] sm:$0x1]
        %v418 = vld [vmem:[%s361 + $0x12] sm:$0x1]
        %v419 = vld [vmem:[%s361 + $0x14] sm:$0x1]
        %v420 = vld [vmem:[%s361 + $0x16] sm:$0x1]
        %v421 = vld [vmem:[%s361 + $0x18] sm:$0x1]
        %v422 = vld [vmem:[%s361 + $0x1a] sm:$0x1]
        %v423 = vld [vmem:[%s361 + $0x1c] sm:$0x1]
        %v424 = vld [vmem:[%s361 + $0x1e] sm:$0x1]
        %v425 = vld [vmem:[%s361 + $0x1] sm:$0x1]
        %v426 = vld [vmem:[%s361 + $0x3] sm:$0x1]
        %v427 = vld [vmem:[%s361 + $0x5] sm:$0x1]
        %v428 = vld [vmem:[%s361 + $0x7] sm:$0x1]
        %v429 = vld [vmem:[%s361 + $0x9] sm:$0x1]
        %v430 = vld [vmem:[%s361 + $0xb] sm:$0x1]
        %v431 = vld [vmem:[%s361 + $0xd] sm:$0x1]
        %v432 = vld [vmem:[%s361 + $0xf] sm:$0x1]
        %v433 = vld [vmem:[%s361 + $0x11] sm:$0x1]
        %v434 = vld [vmem:[%s361 + $0x13] sm:$0x1]
        %v435 = vld [vmem:[%s361 + $0x15] sm:$0x1]
        %v436 = vld [vmem:[%s361 + $0x17] sm:$0x1]
        %v437 = vld [vmem:[%s361 + $0x19] sm:$0x1]
        %v438 = vld [vmem:[%s361 + $0x1b] sm:$0x1]
        %v439 = vld [vmem:[%s361 + $0x1d] sm:$0x1]
        %v440 = vld [vmem:[%s361 + $0x1f] sm:$0x1]
        %v441 = vmax.f32 %v409, %v425
        %v442 = vmax.f32 %v410, %v426
        %v443 = vmax.f32 %v411, %v427
        %v444 = vmax.f32 %v412, %v428
        %v445 = vmax.f32 %v413, %v429
        %v446 = vmax.f32 %v414, %v430
        %v447 = vmax.f32 %v415, %v431
        %v448 = vmax.f32 %v416, %v432
        %v449 = vmax.f32 %v417, %v433
        %v450 = vmax.f32 %v418, %v434
        %v451 = vmax.f32 %v419, %v435
        %v452 = vmax.f32 %v420, %v436
        %v453 = vmax.f32 %v421, %v437
        %v454 = vmax.f32 %v422, %v438
        %v455 = vmax.f32 %v423, %v439
        %v456 = vmax.f32 %v424, %v440
        %v457 = vld [vmem:[%s375 + $0x2] sm:$0x1]
        %v458 = vld [vmem:[%s375 + $0x4] sm:$0x1]
        %v459 = vld [vmem:[%s375 + $0x6] sm:$0x1]
        %v460 = vld [vmem:[%s375 + $0x8] sm:$0x1]
        %v461 = vld [vmem:[%s375 + $0xa] sm:$0x1]
        %v462 = vld [vmem:[%s375 + $0xc] sm:$0x1]
        %v463 = vld [vmem:[%s375 + $0xe] sm:$0x1]
        %v464 = vld [vmem:[%s375 + $0x3] sm:$0x1]
        %v465 = vld [vmem:[%s375 + $0x5] sm:$0x1]
        %v466 = vld [vmem:[%s375 + $0x7] sm:$0x1]
        %v467 = vld [vmem:[%s375 + $0x9] sm:$0x1]
        %v468 = vld [vmem:[%s375 + $0xb] sm:$0x1]
        %v469 = vld [vmem:[%s375 + $0xd] sm:$0x1]
        %v470 = vld [vmem:[%s375 + $0xf] sm:$0x1]
        %v471 = vmax.f32 %v457, %v464
        %v472 = vmax.f32 %v458, %v465
        %v473 = vmax.f32 %v459, %v466
        %v474 = vmax.f32 %v460, %v467
        %v475 = vmax.f32 %v461, %v468
        %v476 = vmax.f32 %v462, %v469
        %v477 = vmax.f32 %v463, %v470
        %v478 = vld [vmem:[%s393] sm:$0x1]
        %v479 = vld [vmem:[%s393 + $0x2] sm:$0x1]
        %v480 = vld [vmem:[%s393 + $0x4] sm:$0x1]
        %v481 = vld [vmem:[%s393 + $0x6] sm:$0x1]
        %v482 = vld [vmem:[%s393 + $0x8] sm:$0x1]
        %v483 = vld [vmem:[%s393 + $0xa] sm:$0x1]
        %v484 = vld [vmem:[%s393 + $0xc] sm:$0x1]
        %v485 = vld [vmem:[%s393 + $0x1] sm:$0x1]
        %v486 = vld [vmem:[%s393 + $0x3] sm:$0x1]
        %v487 = vld [vmem:[%s393 + $0x5] sm:$0x1]
        %v488 = vld [vmem:[%s393 + $0x7] sm:$0x1]
        %v489 = vld [vmem:[%s393 + $0x9] sm:$0x1]
        %v490 = vld [vmem:[%s393 + $0xb] sm:$0x1]
        %v491 = vld [vmem:[%s393 + $0xd] sm:$0x1]
        %v492 = vmax.f32 %v478, %v485
        %v493 = vmax.f32 %v479, %v486
        %v494 = vmax.f32 %v480, %v487
        %v495 = vmax.f32 %v481, %v488
        %v496 = vmax.f32 %v482, %v489
        %v497 = vmax.f32 %v483, %v490
        %v498 = vmax.f32 %v484, %v491
        %p499 = scmp.eq.s32.totalorder %s22, 0
        %s500 = scalar_select %p499, 1, 0
        %v501 = vstv %s500
        %vm502 = vcmp.eq.s32.totalorder %v501, 1
        %v503 = vsel %vm502, 0.0, %v471
        %v504 = vsel %vm502, 0.0, %v472
        %v505 = vsel %vm502, 0.0, %v473
        %v506 = vsel %vm502, 0.0, %v474
        %v507 = vsel %vm502, 0.0, %v475
        %v508 = vsel %vm502, 0.0, %v476
        %v509 = vsel %vm502, 0.0, %v477
        %p510 = scmp.eq.s32.totalorder %s22, 1
        %s511 = scalar_select %p510, 1, 0
        %v512 = vstv %s511
        %vm513 = vcmp.eq.s32.totalorder %v512, 1
        %v514 = vsel %vm513, 0.0, %v492
        %v515 = vsel %vm513, 0.0, %v493
        %v516 = vsel %vm513, 0.0, %v494
        %v517 = vsel %vm513, 0.0, %v495
        %v518 = vsel %vm513, 0.0, %v496
        %v519 = vsel %vm513, 0.0, %v497
        %v520 = vsel %vm513, 0.0, %v498
        %v528 = vrot.slane %v504, 7
        %vm529 = vcmask 1041409
        %v530 = vsel %vm529, %v528, %v503
        %v531 = vrot.slane %v505, 6
        %vm532 = vcmask 1042434
        %v533 = vsel %vm532, %v531, %v530
        %v534 = vrot.slane %v506, 5
        %vm535 = vcmask 1043459
        %v536 = vsel %vm535, %v534, %v533
        %v537 = vrot.slane %v507, 4
        %vm538 = vcmask 1044484
        %v539 = vsel %vm538, %v537, %v536
        %v540 = vrot.slane %v508, 3
        %vm541 = vcmask 1045509
        %v542 = vsel %vm541, %v540, %v539
        %v543 = vrot.slane %v509, 2
        %vm544 = vcmask 1046534
        %v545 = vsel %vm544, %v543, %v542
        %v563 = vrot.slane %v441, 1
        %v564 = vrot.slane %v443, 7
        %v565 = vsel %vm529, %v564, %v442
        %v566 = vrot.slane %v444, 6
        %v567 = vsel %vm532, %v566, %v565
        %v568 = vrot.slane %v445, 5
        %v569 = vsel %vm535, %v568, %v567
        %v570 = vrot.slane %v446, 4
        %v571 = vsel %vm538, %v570, %v569
        %v572 = vrot.slane %v447, 3
        %v573 = vsel %vm541, %v572, %v571
        %v574 = vrot.slane %v448, 2
        %v575 = vsel %vm544, %v574, %v573
        %v576 = vrot.slane %v449, 1
        %vm577 = vcmask 1047559
        %v578 = vsel %vm577, %v576, %v575
        %v579 = vrot.slane %v451, 7
        %v580 = vsel %vm529, %v579, %v450
        %v581 = vrot.slane %v452, 6
        %v582 = vsel %vm532, %v581, %v580
        %v583 = vrot.slane %v453, 5
        %v584 = vsel %vm535, %v583, %v582
        %v585 = vrot.slane %v454, 4
        %v586 = vsel %vm538, %v585, %v584
        %v587 = vrot.slane %v455, 3
        %v588 = vsel %vm541, %v587, %v586
        %v589 = vrot.slane %v456, 2
        %v590 = vsel %vm544, %v589, %v588
        %v601 = vrot.slane %v514, 1
        %v602 = vrot.slane %v516, 7
        %v603 = vsel %vm529, %v602, %v515
        %v604 = vrot.slane %v517, 6
        %v605 = vsel %vm532, %v604, %v603
        %v606 = vrot.slane %v518, 5
        %v607 = vsel %vm535, %v606, %v605
        %v608 = vrot.slane %v519, 4
        %v609 = vsel %vm538, %v608, %v607
        %v610 = vrot.slane %v520, 3
        %v611 = vsel %vm541, %v610, %v609
        %vm613 = vcmask 1046528
        %v614 = vsel %vm613, %v545, %v563
        %v615 = vsel %vm613, %v590, %v601
        %v618 = vrot.slane %v614, 1
        %v619 = vrot.slane %v578, 1
        %v620 = vsel %vm613, %v618, %v619
        %v621 = vrot.slane %v615, 1
        %v622 = vsel %vm613, %v619, %v621
        %623 = vrot.lane.b32.xlu0 %v620, 16
        %v624 = vpop.permute.xlu0 %623
        %625 = vrot.lane.b32.xlu0 %v622, 16
        %v626 = vpop.permute.xlu0 %625
        %vm629 = vcmask 1045504
        %v630 = vrot.slane %v614, 2
        %v631 = vrot.slane %v578, 2
        %v632 = vsel %vm629, %v630, %v631
        %v633 = vrot.slane %v615, 2
        %v634 = vsel %vm629, %v631, %v633
        %635 = vrot.lane.b32.xlu0 %v632, 32
        %v636 = vpop.permute.xlu0 %635
        %637 = vrot.lane.b32.xlu0 %v634, 32
        %v638 = vpop.permute.xlu0 %637
        %vm641 = vcmask 1044480
        %v642 = vrot.slane %v614, 3
        %v643 = vrot.slane %v578, 3
        %v644 = vsel %vm641, %v642, %v643
        %v645 = vrot.slane %v615, 3
        %v646 = vsel %vm641, %v643, %v645
        %647 = vrot.lane.b32.xlu0 %v644, 48
        %v648 = vpop.permute.xlu0 %647
        %649 = vrot.lane.b32.xlu0 %v646, 48
        %v650 = vpop.permute.xlu0 %649
        %vm653 = vcmask 1043456
        %v654 = vrot.slane %v614, 4
        %v655 = vrot.slane %v578, 4
        %v656 = vsel %vm653, %v654, %v655
        %v657 = vrot.slane %v615, 4
        %v658 = vsel %vm653, %v655, %v657
        %659 = vrot.lane.b32.xlu0 %v656, 64
        %v660 = vpop.permute.xlu0 %659
        %661 = vrot.lane.b32.xlu0 %v658, 64
        %v662 = vpop.permute.xlu0 %661
        %vm665 = vcmask 1042432
        %v666 = vrot.slane %v614, 5
        %v667 = vrot.slane %v578, 5
        %v668 = vsel %vm665, %v666, %v667
        %v669 = vrot.slane %v615, 5
        %v670 = vsel %vm665, %v667, %v669
        %671 = vrot.lane.b32.xlu0 %v668, 80
        %v672 = vpop.permute.xlu0 %671
        %673 = vrot.lane.b32.xlu0 %v670, 80
        %v674 = vpop.permute.xlu0 %673
        %vm677 = vcmask 1041408
        %v678 = vrot.slane %v614, 6
        %v679 = vrot.slane %v578, 6
        %v680 = vsel %vm677, %v678, %v679
        %v681 = vrot.slane %v615, 6
        %v682 = vsel %vm677, %v679, %v681
        %683 = vrot.lane.b32.xlu0 %v680, 96
        %v684 = vpop.permute.xlu0 %683
        %685 = vrot.lane.b32.xlu0 %v682, 96
        %v686 = vpop.permute.xlu0 %685
        %vm689 = vcmask 1040384
        %v690 = vrot.slane %v614, 7
        %v691 = vrot.slane %v578, 7
        %v692 = vsel %vm689, %v690, %v691
        %v693 = vrot.slane %v615, 7
        %v694 = vsel %vm689, %v691, %v693
        %695 = vrot.lane.b32.xlu0 %v692, 112
        %v696 = vpop.permute.xlu0 %695
        %697 = vrot.lane.b32.xlu0 %v694, 112
        %v698 = vpop.permute.xlu0 %697
        %v701 = vrot.slane %v611, 1
        %v702 = vsel %vm613, %v621, %v701
        %703 = vrot.lane.b32.xlu0 %v702, 16
        %v704 = vpop.permute.xlu0 %703
        %v706 = vrot.slane %v611, 2
        %v707 = vsel %vm629, %v633, %v706
        %708 = vrot.lane.b32.xlu0 %v707, 32
        %v709 = vpop.permute.xlu0 %708
        %v711 = vrot.slane %v611, 3
        %v712 = vsel %vm641, %v645, %v711
        %713 = vrot.lane.b32.xlu0 %v712, 48
        %v714 = vpop.permute.xlu0 %713
        %v716 = vrot.slane %v611, 4
        %v717 = vsel %vm653, %v657, %v716
        %718 = vrot.lane.b32.xlu0 %v717, 64
        %v719 = vpop.permute.xlu0 %718
        %v721 = vrot.slane %v611, 5
        %v722 = vsel %vm665, %v669, %v721
        %723 = vrot.lane.b32.xlu0 %v722, 80
        %v724 = vpop.permute.xlu0 %723
        %v726 = vrot.slane %v611, 6
        %v727 = vsel %vm677, %v681, %v726
        %728 = vrot.lane.b32.xlu0 %v727, 96
        %v729 = vpop.permute.xlu0 %728
        %vm731 = vcmask 130048
        %v732 = vsel %vm731, %v614, %v624
        %v733 = vsel %vm731, %v578, %v626
        %vm734 = vcmask 261120
        %v735 = vsel %vm734, %v732, %v636
        %v736 = vsel %vm734, %v733, %v638
        %vm737 = vcmask 392192
        %v738 = vsel %vm737, %v735, %v648
        %v739 = vsel %vm737, %v736, %v650
        %vm740 = vcmask 523264
        %v741 = vsel %vm740, %v738, %v660
        %v742 = vsel %vm740, %v739, %v662
        %vm743 = vcmask 654336
        %v744 = vsel %vm743, %v741, %v672
        %v745 = vsel %vm743, %v742, %v674
        %vm746 = vcmask 785408
        %v747 = vsel %vm746, %v744, %v684
        %v748 = vsel %vm746, %v745, %v686
        %vm749 = vcmask 916480
        %v750 = vsel %vm749, %v747, %v696
        %v751 = vsel %vm749, %v748, %v698
        %v752 = vsel %vm731, %v615, %v704
        %v753 = vsel %vm734, %v752, %v709
        %v754 = vsel %vm737, %v753, %v714
        %v755 = vsel %vm740, %v754, %v719
        %v756 = vsel %vm743, %v755, %v724
        %v757 = vsel %vm746, %v756, %v729
        %v758 = vld [vmem:[#allocation2] sm:$0xff]
        %v759 = vld [vmem:[#allocation2 + $0x8] sm:$0xff]
        %v760 = vld [vmem:[#allocation2 + $0x10] sm:$0xff]
        %v761 = vld [vmem:[#allocation2 + $0x18] sm:$0xff]
        %v762 = vld [vmem:[#allocation2 + $0x20] sm:$0xff]
        %v763 = vld [vmem:[#allocation2 + $0x28] sm:$0xff]
        %v764 = vld [vmem:[#allocation2 + $0x30] sm:$0xff]
        %v765 = vld [vmem:[#allocation2 + $0x38] sm:$0xff]
        %v766 = vld [vmem:[#allocation2 + $0x40] sm:$0xff]
        %v767 = vld [vmem:[#allocation2 + $0x48] sm:$0xff]
        %v768 = vld [vmem:[#allocation2 + $0x50] sm:$0xff]
        %v769 = vld [vmem:[#allocation2 + $0x58] sm:$0xff]
        %v770 = vld [vmem:[#allocation2 + $0x60] sm:$0xff]
        %v771 = vld [vmem:[#allocation2 + $0x68] sm:$0xff]
        %v772 = vld [vmem:[#allocation2 + $0x70] sm:$0xff]
        %v773 = vld [vmem:[#allocation2 + $0x78] sm:$0xff]
        %v774 = vld [vmem:[#allocation2 + $0x80] sm:$0xff]
        %v775 = vld [vmem:[#allocation2 + $0x88] sm:$0xff]
        %v776 = vld [vmem:[#allocation2 + $0x90] sm:$0xff]
        %v777 = vld [vmem:[#allocation2 + $0x98] sm:$0xff]
        %v778 = vld [vmem:[#allocation2 + $0xa0] sm:$0xff]
        %v779 = vld [vmem:[#allocation2 + $0xa8] sm:$0xff]
        %v780 = vld [vmem:[#allocation2 + $0xb0] sm:$0xff]
        %v781 = vld [vmem:[#allocation2 + $0xb8] sm:$0xff]
        %v782 = vld [vmem:[#allocation2 + $0xc0] sm:$0xff]
        %v783 = vld [vmem:[#allocation2 + $0xc8] sm:$0xff]
        %v784 = vld [vmem:[#allocation2 + $0xd0] sm:$0xff]
        %v785 = vld [vmem:[#allocation2 + $0xd8] sm:$0xff]
        %v786 = vld [vmem:[#allocation2 + $0xe0] sm:$0xff]
        %v787 = vld [vmem:[#allocation2 + $0xe8] sm:$0xff]
        %v788 = vld [vmem:[%s4] sm:$0x1]
        %v790 = vperm.slane %v788, 0
        %v793 = vsel %vm749, %v748, 0
        %v796 = vsel %vm749, %v757, 0
        %798 = vmatpush.msra.mxu0 %v773
        %799 = vmatpush.msra.mxu0 %v772
        %800 = vmatpush.msra.mxu0 %v771
        %801 = vmatpush.msra.mxu0 %v770
        %802 = vmatpush.msra.mxu0 %v769
        %803 = vmatpush.msra.mxu0 %v768
        %804 = vmatpush.msra.mxu0 %v767
        %805 = vmatpush.msra.mxu0 %v766
        %806 = vmatpush.msra.mxu0 %v765
        %807 = vmatpush.msra.mxu0 %v764
        %808 = vmatpush.msra.mxu0 %v763
        %809 = vmatpush.msra.mxu0 %v762
        %810 = vmatpush.msra.mxu0 %v761
        %811 = vmatpush.msra.mxu0 %v760
        %812 = vmatpush.msra.mxu0 %v759
        %813 = vmatpush.msra.mxu0 %v758
        %814 = vmatmul.f32.gmra.mxu0 %v750
        %v815 = vpop.f32.mrf.mxu0
        %v816 = vadd.f32 %v790, %v815
        %817 = vmatmul.f32.gmra.mxu0 %v751
        %v818 = vpop.f32.mrf.mxu0
        %v819 = vadd.f32 %v790, %v818
        %820 = vdwg.mxu0
        %821 = vmatpush.msra.mxu0 0.0
        %822 = vmatpush.msra.mxu0 0.0
        %823 = vmatpush.msra.mxu0 %v787
        %824 = vmatpush.msra.mxu0 %v786
        %825 = vmatpush.msra.mxu0 %v785
        %826 = vmatpush.msra.mxu0 %v784
        %827 = vmatpush.msra.mxu0 %v783
        %828 = vmatpush.msra.mxu0 %v782
        %829 = vmatpush.msra.mxu0 %v781
        %830 = vmatpush.msra.mxu0 %v780
        %831 = vmatpush.msra.mxu0 %v779
        %832 = vmatpush.msra.mxu0 %v778
        %833 = vmatpush.msra.mxu0 %v777
        %834 = vmatpush.msra.mxu0 %v776
        %835 = vmatpush.msra.mxu0 %v775
        %836 = vmatpush.msra.mxu0 %v774
        %837 = vmatmul.f32.gmra.mxu0 %v793
        %v838 = vpop.f32.mrf.mxu0
        %v839 = vadd.f32 %v816, %v838
        %840 = vmatmul.f32.gmra.mxu0 %v796
        %v841 = vpop.f32.mrf.mxu0
        %v842 = vadd.f32 %v819, %v841
        %843 = vdwg.mxu0
        %v844 = vmax.f32 %v839, 0.0
        %v845 = vmax.f32 %v842, 0.0
        %846 = vst.msk [vmem:[%s407] sm:$0xff] %vm734, %v844
        %847 = vst.msk [vmem:[%s407 + $0x8] sm:$0xff] %vm734, %v845
        %s848 = smul.u32 2, %s22
        %p849 = scmp.lt.s32.totalorder %s21, 1
        %s850 = scalar_select %p849, %s21, 1
        %p851 = scmp.lt.s32.totalorder %s848, 3
        %s852 = scalar_select %p851, %s848, 3
        %s853 = smul.addr %s850, 4
        %s854 = sadd.s32 %s852, %s853
        %s855 = smul.addr %s854, 8
        %s856 = scalar_lea.vmem %s5, %s855
        // Predicated region
        $region45: #{wave_unet_forward.11} parent=39 // pred_check
          %p857 = pneg %p191
        $region46: #{wave_unet_forward.11} parent=39 // pred_check_branch
          %859 = sbr.rel (%p857) target = $region48
        $region47: #{wave_unet_forward.11} parent=39 // pred_region
          %s860 = smul.u32 2, %s22
        $region48: #{wave_unet_forward.11} parent=39 // pred_fallthru
          _
      $region40: #{wave_unet_forward.11} parent=5 // pred_fallthru
        _
      %p861 = scmp.le.s32.totalorder 2, %s12
      // Predicated region
      $region49: #{wave_unet_forward.11} parent=5 // pred_check
        %p862 = pneg %p861
      $region50: #{wave_unet_forward.11} parent=5 // pred_check_branch
        %864 = sbr.rel (%p862) target = $region52
      $region51: #{wave_unet_forward.11} parent=5 // pred_region
        %s865 = ssub.s32 %s12, 2
        // Predicated region
        $region53: #{wave_unet_forward.11} parent=51 // pred_check
          %p866 = pneg %p197
        $region54: #{wave_unet_forward.11} parent=51 // pred_check_branch
          %868 = sbr.rel (%p866) target = $region56
        $region55: #{wave_unet_forward.11} parent=51 // pred_region
          %s869 = smul.u32 2, %s24
          %p870 = scmp.lt.s32.totalorder %s23, 1
          %s871 = scalar_select %p870, %s23, 1
          %p872 = scmp.lt.s32.totalorder %s869, 3
          %s873 = scalar_select %p872, %s869, 3
          %s874 = smul.addr %s871, 4
          %s875 = sadd.s32 %s873, %s874
          %s876 = smul.addr %s875, 8
          %s877 = scalar_lea.vmem %s5, %s876
        $region56: #{wave_unet_forward.11} parent=51 // pred_fallthru
          _
      $region52: #{wave_unet_forward.11} parent=5 // pred_fallthru
        _
    $region6: #{wave_unet_forward.11} parent=1 // loop_footer
      %s16 = sadd.s32 1, %s12
    $region7: #{wave_unet_forward.11} parent=1 // loop_footer_branch
      %11 = sbr.rel target = $region3
    $region8: #{wave_unet_forward.11} parent=1 // loop_exit
      _
    %878 = vsyncpa [#allocation3], 1
    %s879 = scalar_lea.sflag [#allocation3], 1
    %880 = vsyncpa %s879, 1

// kernel: wave_unet_forward.10
$region0: #{wave_unet_forward.10}
  #allocation0 [shape = 'u32[]', space=smem, size = 0x4, offset = 0x4, fixed_abs, tag = 'smem constant byte address 0x4 - core index']
  #allocation1 [shape = 'u32[72,128]{1,0:T(1,128)}', space=vmem, size = 0x9000, scoped, tag = 'internal scratch']
  %s0 = inlined_call_operand.vmem [shape: f32[2,64,2], index: 0, kind: input, shape index: {}, may-alias: {0,1,2}]
  %s1 = inlined_call_operand.vmem [shape: f32[2,64,2], index: 1, kind: input, shape index: {}, may-alias: {0,1,2}]
  %s2 = inlined_call_operand.vmem [shape: f32[2,64,2], index: 2, kind: input, shape index: {}, may-alias: {0,1,2}]
  %s3 = inlined_call_operand.vmem [shape: f32[30,16], index: 3, kind: input, shape index: {}]
  %s4 = inlined_call_operand.vmem [shape: f32[1,16], index: 4, kind: input, shape index: {}]
  %s5 = inlined_call_operand.vmem [shape: f32[2,64,16], index: 5, kind: output, shape index: {}]
  %s6 = sld [smem:[#allocation0]]
  $region53: #{wave_unet_forward.10} parent=0
    _
  %s8 = ssub.s32 1, %s6
  %s9 = scalar_select 0, %s8, %s6
  loop: start=0, step=1, limit=10
  $region2: #{wave_unet_forward.10} parent=0 // loop_pre_header
    _
  $region3: #{wave_unet_forward.10} parent=0 // loop_header
    %s11 = sphi 0, %s15
    %p12 = scmp.ge.s32.totalorder %s11, 10
    %s18 = sphi 0, %s30
    %s19 = sphi 0, %s26
    %s20 = sphi 0, %s18
    %s21 = sphi 0, %s19
    %s22 = sphi 0, %s20
    %s23 = sphi 0, %s21
    %s35 = sphi 0, %s37
    %s38 = sphi 0, %s35
    %s39 = sphi 0, %s38
    %s55 = sphi 0, %s39
    %s71 = sphi 0, %s73
    %s74 = sphi 0, %s71
    %s75 = sphi 0, %s74
    %s91 = sphi 0, %s75
    %s107 = sphi 0, %s109
    %s110 = sphi 0, %s107
    %s111 = sphi 0, %s110
    %s127 = sphi 0, %s111
    %s131 = sphi 0, %s131
    %s133 = sphi 0, %s131
    %s134 = sphi 0, %s133
    %s148 = sphi 0, %s134
    %s152 = sphi 0, %s152
    %s154 = sphi 0, %s152
    %s155 = sphi 0, %s154
    %s169 = sphi 0, %s155
    %s177 = sphi 0, %s179
    %s180 = sphi 0, %s177
    %s181 = sphi 0, %s180
    %s197 = sphi 0, %s181
  $region4: #{wave_unet_forward.10} parent=0 // loop_header_branch
    %14 = sbr.rel (%p12) target = $region8
  $region5: #{wave_unet_forward.10} parent=0 // loop_body
    %s16 = ssub.s32 %s11, 1
    %s17 = ssub.s32 %s11, 2
    %s24 = sadd.s32 1, %s19
    %p25 = scmp.ge.s32.totalorder %s24, 4
    %s26 = scalar_select %p25, 0, %s24
    %s27 = sadd.s32 1, %s18
    %s28 = scalar_select %p25, %s27, %s18
    %p29 = scmp.ge.s32.totalorder %s28, 2
    %s30 = scalar_select %p29, 0, %s28
    %s31 = ssub.s32 %s18, %s30
    %s32 = ssub.s32 %s19, %s26
    %s33 = sor.u32 %s31, %s32
    %p34 = scmp.eq.s32.totalorder %s33, 0
    %s36 = sadd.s32 %s35, 1
    %s37 = scalar_select %p34, %s35, %s36
    %p40 = pneg %p34
    %p41 = scmp.eq.s32.totalorder %s11, 7
    %p42 = por %p40, %p41
    %p43 = scmp.ne.s32.totalorder %s35, %s38
    %p44 = scmp.eq.s32.totalorder %s11, 0
    %p45 = por %p43, %p44
    %p46 = scmp.ne.s32.totalorder %s35, %s38
    %p47 = scmp.eq.s32.totalorder %s16, 7
    %p48 = por %p46, %p47
    %p49 = scmp.ne.s32.totalorder %s38, %s39
    %p50 = scmp.eq.s32.totalorder %s16, 0
    %p51 = por %p49, %p50
    %p52 = scmp.ne.s32.totalorder %s38, %s39
    %p53 = scmp.eq.s32.totalorder %s17, 7
    %p54 = por %p52, %p53
    %p56 = scmp.ne.s32.totalorder %s39, %s55
    %p57 = scmp.eq.s32.totalorder %s17, 0
    %p58 = por %p56, %p57
    %s59 = smul.u32 %s19, 2
    %s60 = ssub.s32 %s59, 1
    %p61 = scmp.gt.s32.totalorder %s60, 0
    %s62 = scalar_select %p61, %s60, 0
    %s63 = smul.u32 %s26, 2
    %s64 = ssub.s32 %s63, 1
    %p65 = scmp.gt.s32.totalorder %s64, 0
    %s66 = scalar_select %p65, %s64, 0
    %s67 = ssub.s32 %s18, %s30
    %s68 = ssub.s32 %s62, %s66
    %s69 = sor.u32 %s67, %s68
    %p70 = scmp.eq.s32.totalorder %s69, 0
    %s72 = sadd.s32 %s71, 1
    %s73 = scalar_select %p70, %s71, %s72
    %p76 = pneg %p70
    %p77 = scmp.eq.s32.totalorder %s11, 7
    %p78 = por %p76, %p77
    %p79 = scmp.ne.s32.totalorder %s71, %s74
    %p80 = scmp.eq.s32.totalorder %s11, 0
    %p81 = por %p79, %p80
    %p82 = scmp.ne.s32.totalorder %s71, %s74
    %p83 = scmp.eq.s32.totalorder %s16, 7
    %p84 = por %p82, %p83
    %p85 = scmp.ne.s32.totalorder %s74, %s75
    %p86 = scmp.eq.s32.totalorder %s16, 0
    %p87 = por %p85, %p86
    %p88 = scmp.ne.s32.totalorder %s74, %s75
    %p89 = scmp.eq.s32.totalorder %s17, 7
    %p90 = por %p88, %p89
    %p92 = scmp.ne.s32.totalorder %s75, %s91
    %p93 = scmp.eq.s32.totalorder %s17, 0
    %p94 = por %p92, %p93
    %s95 = sadd.s32 %s19, 1
    %s96 = smul.u32 %s95, 2
    %p97 = scmp.lt.s32.totalorder %s96, 7
    %s98 = scalar_select %p97, %s96, 7
    %s99 = sadd.s32 %s26, 1
    %s100 = smul.u32 %s99, 2
    %p101 = scmp.lt.s32.totalorder %s100, 7
    %s102 = scalar_select %p101, %s100, 7
    %s103 = ssub.s32 %s18, %s30
    %s104 = ssub.s32 %s98, %s102
    %s105 = sor.u32 %s103, %s104
    %p106 = scmp.eq.s32.totalorder %s105, 0
    %s108 = sadd.s32 %s107, 1
    %s109 = scalar_select %p106, %s107, %s108
    %p112 = pneg %p106
    %p113 = scmp.eq.s32.totalorder %s11, 7
    %p114 = por %p112, %p113
    %p115 = scmp.ne.s32.totalorder %s107, %s110
    %p116 = scmp.eq.s32.totalorder %s11, 0
    %p117 = por %p115, %p116
    %p118 = scmp.ne.s32.totalorder %s107, %s110
    %p119 = scmp.eq.s32.totalorder %s16, 7
    %p120 = por %p118, %p119
    %p121 = scmp.ne.s32.totalorder %s110, %s111
    %p122 = scmp.eq.s32.totalorder %s16, 0
    %p123 = por %p121, %p122
    %p124 = scmp.ne.s32.totalorder %s110, %s111
    %p125 = scmp.eq.s32.totalorder %s17, 7
    %p126 = por %p124, %p125
    %p128 = scmp.ne.s32.totalorder %s111, %s127
    %p129 = scmp.eq.s32.totalorder %s17, 0
    %p130 = por %p128, %p129
    %s132 = sadd.s32 %s131, 1
    %p135 = scmp.eq.s32.totalorder %s11, 7
    %p136 = scmp.ne.s32.totalorder %s131, %s133
    %p137 = scmp.eq.s32.totalorder %s11, 0
    %p138 = por %p136, %p137
    %p139 = scmp.ne.s32.totalorder %s131, %s133
    %p140 = scmp.eq.s32.totalorder %s16, 7
    %p141 = por %p139, %p140
    %p142 = scmp.ne.s32.totalorder %s133, %s134
    %p143 = scmp.eq.s32.totalorder %s16, 0
    %p144 = por %p142, %p143
    %p145 = scmp.ne.s32.totalorder %s133, %s134
    %p146 = scmp.eq.s32.totalorder %s17, 7
    %p147 = por %p145, %p146
    %p149 = scmp.ne.s32.totalorder %s134, %s148
    %p150 = scmp.eq.s32.totalorder %s17, 0
    %p151 = por %p149, %p150
    %s153 = sadd.s32 %s152, 1
    %p156 = scmp.eq.s32.totalorder %s11, 7
    %p157 = scmp.ne.s32.totalorder %s152, %s154
    %p158 = scmp.eq.s32.totalorder %s11, 0
    %p159 = por %p157, %p158
    %p160 = scmp.ne.s32.totalorder %s152, %s154
    %p161 = scmp.eq.s32.totalorder %s16, 7
    %p162 = por %p160, %p161
    %p163 = scmp.ne.s32.totalorder %s154, %s155
    %p164 = scmp.eq.s32.totalorder %s16, 0
    %p165 = por %p163, %p164
    %p166 = scmp.ne.s32.totalorder %s154, %s155
    %p167 = scmp.eq.s32.totalorder %s17, 7
    %p168 = por %p166, %p167
    %p170 = scmp.ne.s32.totalorder %s155, %s169
    %p171 = scmp.eq.s32.totalorder %s17, 0
    %p172 = por %p170, %p171
    %s173 = ssub.s32 %s18, %s30
    %s174 = ssub.s32 %s19, %s26
    %s175 = sor.u32 %s173, %s174
    %p176 = scmp.eq.s32.totalorder %s175, 0
    %s178 = sadd.s32 %s177, 1
    %s179 = scalar_select %p176, %s177, %s178
    %p182 = pneg %p176
    %p183 = scmp.eq.s32.totalorder %s11, 7
    %p184 = por %p182, %p183
    %p185 = scmp.ne.s32.totalorder %s177, %s180
    %p186 = scmp.eq.s32.totalorder %s11, 0
    %p187 = por %p185, %p186
    %p188 = scmp.ne.s32.totalorder %s177, %s180
    %p189 = scmp.eq.s32.totalorder %s16, 7
    %p190 = por %p188, %p189
    %p191 = scmp.ne.s32.totalorder %s180, %s181
    %p192 = scmp.eq.s32.totalorder %s16, 0
    %p193 = por %p191, %p192
    %p194 = scmp.ne.s32.totalorder %s180, %s181
    %p195 = scmp.eq.s32.totalorder %s17, 7
    %p196 = por %p194, %p195
    %p198 = scmp.ne.s32.totalorder %s181, %s197
    %p199 = scmp.eq.s32.totalorder %s17, 0
    %p200 = por %p198, %p199
    %p201 = scmp.le.s32.totalorder 1, %s11
    %p202 = scmp.lt.s32.totalorder %s11, 9
    %p203 = pnand %p201, %p202
    %p204 = pneg %p203
    // Predicated region
    $region9: #{wave_unet_forward.10} parent=5 // pred_check
      _
    $region10: #{wave_unet_forward.10} parent=5 // pred_check_branch
      %206 = sbr.rel (%p203) target = $region12
    $region11: #{wave_unet_forward.10} parent=5 // pred_region
      %s207 = ssub.s32 %s11, 1
      // Predicated region
      $region13: #{wave_unet_forward.10} parent=11 // pred_check
        %p208 = pneg %p144
      $region14: #{wave_unet_forward.10} parent=11 // pred_check_branch
        %210 = sbr.rel (%p208) target = $region16
      $region15: #{wave_unet_forward.10} parent=11 // pred_region
        _
      $region16: #{wave_unet_forward.10} parent=11 // pred_fallthru
        _
      // Predicated region
      $region17: #{wave_unet_forward.10} parent=11 // pred_check
        %p211 = pneg %p165
      $region18: #{wave_unet_forward.10} parent=11 // pred_check_branch
        %213 = sbr.rel (%p211) target = $region20
      $region19: #{wave_unet_forward.10} parent=11 // pred_region
        _
      $region20: #{wave_unet_forward.10} parent=11 // pred_fallthru
        _
    $region12: #{wave_unet_forward.10} parent=5 // pred_fallthru
      _
    %p214 = scmp.lt.s32.totalorder %s11, 8
    // Predicated region
    $region21: #{wave_unet_forward.10} parent=5 // pred_check
      %p215 = pneg %p214
    $region22: #{wave_unet_forward.10} parent=5 // pred_check_branch
      %217 = sbr.rel (%p215) target = $region24
    $region23: #{wave_unet_forward.10} parent=5 // pred_region
      // Predicated region
      $region25: #{wave_unet_forward.10} parent=23 // pred_check
        %p218 = pneg %p45
      $region26: #{wave_unet_forward.10} parent=23 // pred_check_branch
        %220 = sbr.rel (%p218) target = $region28
      $region27: #{wave_unet_forward.10} parent=23 // pred_region
        %s221 = smul.u32 2, %s19
        %p222 = scmp.lt.s32.totalorder %s18, 1
        %s223 = scalar_select %p222, %s18, 1
        %p224 = scmp.lt.s32.totalorder %s221, 7
        %s225 = scalar_select %p224, %s221, 7
        %s226 = smul.addr %s223, 8
        %s227 = sadd.s32 %s225, %s226
        %s228 = smul.addr %s227, 8
        %s229 = scalar_lea.vmem %s0, %s228
        %s230 = smul.u32 2, %s19
      $region28: #{wave_unet_forward.10} parent=23 // pred_fallthru
        _
      // Predicated region
      $region29: #{wave_unet_forward.10} parent=23 // pred_check
        %p231 = pneg %p81
      $region30: #{wave_unet_forward.10} parent=23 // pred_check_branch
        %233 = sbr.rel (%p231) target = $region32
      $region31: #{wave_unet_forward.10} parent=23 // pred_region
        %s234 = smul.u32 %s19, 2
        %s235 = ssub.s32 %s234, 1
        %p236 = scmp.gt.s32.totalorder %s235, 0
        %s237 = scalar_select %p236, %s235, 0
        %p238 = scmp.lt.s32.totalorder %s18, 1
        %s239 = scalar_select %p238, %s18, 1
        %p240 = scmp.lt.s32.totalorder %s237, 7
        %s241 = scalar_select %p240, %s237, 7
        %s242 = smul.addr %s239, 8
        %s243 = sadd.s32 %s241, %s242
        %s244 = smul.addr %s243, 8
        %s245 = scalar_lea.vmem %s1, %s244
        %s246 = smul.u32 %s19, 2
        %s247 = ssub.s32 %s246, 1
        %p248 = scmp.gt.s32.totalorder %s247, 0
        %s249 = scalar_select %p248, %s247, 0
      $region32: #{wave_unet_forward.10} parent=23 // pred_fallthru
        _
      // Predicated region
      $region33: #{wave_unet_forward.10} parent=23 // pred_check
        %p250 = pneg %p117
      $region34: #{wave_unet_forward.10} parent=23 // pred_check_branch
        %252 = sbr.rel (%p250) target = $region36
      $region35: #{wave_unet_forward.10} parent=23 // pred_region
        %s253 = sadd.s32 %s19, 1
        %s254 = smul.u32 %s253, 2
        %p255 = scmp.lt.s32.totalorder %s254, 7
        %s256 = scalar_select %p255, %s254, 7
        %p257 = scmp.lt.s32.totalorder %s18, 1
        %s258 = scalar_select %p257, %s18, 1
        %p259 = scmp.lt.s32.totalorder %s256, 7
        %s260 = scalar_select %p259, %s256, 7
        %s261 = smul.addr %s258, 8
        %s262 = sadd.s32 %s260, %s261
        %s263 = smul.addr %s262, 8
        %s264 = scalar_lea.vmem %s2, %s263
        %s265 = sadd.s32 %s19, 1
        %s266 = smul.u32 %s265, 2
        %p267 = scmp.lt.s32.totalorder %s266, 7
        %s268 = scalar_select %p267, %s266, 7
      $region36: #{wave_unet_forward.10} parent=23 // pred_fallthru
        _
    $region24: #{wave_unet_forward.10} parent=5 // pred_fallthru
      _
    %p269 = scmp.le.s32.totalorder 1, %s11
    %p270 = scmp.lt.s32.totalorder %s11, 9
    %p271 = pnand %p269, %p270
    %p272 = pneg %p271
    // Predicated region
    $region37: #{wave_unet_forward.10} parent=5 // pred_check
      _
    $region38: #{wave_unet_forward.10} parent=5 // pred_check_branch
      %274 = sbr.rel (%p271) target = $region40
    $region39: #{wave_unet_forward.10} parent=5 // pred_region
      %s275 = ssub.s32 %s11, 1
      %s276 = smul.u32 2, %s21
      %p277 = scmp.lt.s32.totalorder %s20, 1
      %s278 = scalar_select %p277, %s20, 1
      %p279 = scmp.lt.s32.totalorder %s276, 7
      %s280 = scalar_select %p279, %s276, 7
      %s281 = smul.addr %s278, 8
      %s282 = sadd.s32 %s280, %s281
      %s283 = smul.addr %s282, 8
      %s284 = scalar_lea.vmem %s0, %s283
      %p285 = pneg %p51
      %p286 = pneg %p48
      %s287 = smul.u32 %s21, 2
      %s288 = ssub.s32 %s287, 1
      %p289 = scmp.gt.s32.totalorder %s288, 0
      %s290 = scalar_select %p289, %s288, 0
      %p291 = scmp.lt.s32.totalorder %s20, 1
      %s292 = scalar_select %p291, %s20, 1
      %p293 = scmp.lt.s32.totalorder %s290, 7
      %s294 = scalar_select %p293, %s290, 7
      %s295 = smul.addr %s292, 8
      %s296 = sadd.s32 %s294, %s295
      %s297 = smul.addr %s296, 8
      %s298 = scalar_lea.vmem %s1, %s297
      %p299 = pneg %p87
      %p300 = pneg %p84
      %s301 = sadd.s32 %s21, 1
      %s302 = smul.u32 %s301, 2
      %p303 = scmp.lt.s32.totalorder %s302, 7
      %s304 = scalar_select %p303, %s302, 7
      %p305 = scmp.lt.s32.totalorder %s20, 1
      %s306 = scalar_select %p305, %s20, 1
      %p307 = scmp.lt.s32.totalorder %s304, 7
      %s308 = scalar_select %p307, %s304, 7
      %s309 = smul.addr %s306, 8
      %s310 = sadd.s32 %s308, %s309
      %s311 = smul.addr %s310, 8
      %s312 = scalar_lea.vmem %s2, %s311
      %p313 = pneg %p123
      %p314 = pneg %p120
      %p315 = pneg %p144
      %p316 = pneg %p141
      %p317 = pneg %p165
      %p318 = pneg %p162
      %p319 = pneg %p193
      %p320 = pneg %p190
      %s321 = smul.u32 2, %s21
      %p322 = scmp.lt.s32.totalorder %s20, 1
      %s323 = scalar_select %p322, %s20, 1
      %p324 = scmp.lt.s32.totalorder %s321, 7
      %s325 = scalar_select %p324, %s321, 7
      %s326 = smul.addr %s323, 8
      %s327 = sadd.s32 %s325, %s326
      %s328 = smul.addr %s327, 8
      %s329 = scalar_lea.vmem %s5, %s328
      %s330 = smul.u32 2, %s21
      %p331 = scmp.lt.s32.totalorder %s20, 1
      %s332 = scalar_select %p331, %s20, 1
      %p333 = scmp.lt.s32.totalorder %s330, 7
      %s334 = scalar_select %p333, %s330, 7
      %s335 = smul.addr %s332, 8
      %s336 = sadd.s32 %s334, %s335
      %s337 = smul.addr %s336, 8
      %s338 = scalar_lea.vmem %s0, %s337
      %s339 = smul.u32 2, %s21
      %s340 = smul.u32 %s21, 2
      %s341 = ssub.s32 %s340, 1
      %p342 = scmp.gt.s32.totalorder %s341, 0
      %s343 = scalar_select %p342, %s341, 0
      %p344 = scmp.lt.s32.totalorder %s20, 1
      %s345 = scalar_select %p344, %s20, 1
      %p346 = scmp.lt.s32.totalorder %s343, 7
      %s347 = scalar_select %p346, %s343, 7
      %s348 = smul.addr %s345, 8
      %s349 = sadd.s32 %s347, %s348
      %s350 = smul.addr %s349, 8
      %s351 = scalar_lea.vmem %s1, %s350
      %s352 = smul.u32 %s21, 2
      %s353 = ssub.s32 %s352, 1
      %p354 = scmp.gt.s32.totalorder %s353, 0
      %s355 = scalar_select %p354, %s353, 0
      %s356 = sadd.s32 %s21, 1
      %s357 = smul.u32 %s356, 2
      %p358 = scmp.lt.s32.totalorder %s357, 7
      %s359 = scalar_select %p358, %s357, 7
      %p360 = scmp.lt.s32.totalorder %s20, 1
      %s361 = scalar_select %p360, %s20, 1
      %p362 = scmp.lt.s32.totalorder %s359, 7
      %s363 = scalar_select %p362, %s359, 7
      %s364 = smul.addr %s361, 8
      %s365 = sadd.s32 %s363, %s364
      %s366 = smul.addr %s365, 8
      %s367 = scalar_lea.vmem %s2, %s366
      %s368 = sadd.s32 %s21, 1
      %s369 = smul.u32 %s368, 2
      %p370 = scmp.lt.s32.totalorder %s369, 7
      %s371 = scalar_select %p370, %s369, 7
      %s372 = smul.u32 2, %s21
      %p373 = scmp.lt.s32.totalorder %s20, 1
      %s374 = scalar_select %p373, %s20, 1
      %p375 = scmp.lt.s32.totalorder %s372, 7
      %s376 = scalar_select %p375, %s372, 7
      %s377 = smul.addr %s374, 8
      %s378 = sadd.s32 %s376, %s377
      %s379 = smul.addr %s378, 8
      %s380 = scalar_lea.vmem %s5, %s379
      %s381 = smul.u32 2, %s21
      %v382 = vld [vmem:[%s338] sm:$0xff]
      %v383 = vld [vmem:[%s338 + $0x8] sm:$0xff]
      %v384 = vld [vmem:[%s351] sm:$0xff]
      %v385 = vld [vmem:[%s367] sm:$0xff]
      %p386 = scmp.eq.s32.totalorder %s21, 0
      %s387 = scalar_select %p386, 1, 0
      %v388 = vstv %s387
      %vm389 = vcmp.eq.s32.totalorder %v388, 1
      %v390 = vsel %vm389, 0.0, %v384
      %p391 = scmp.eq.s32.totalorder %s21, 3
      %s392 = scalar_select %p391, 1, 0
      %v393 = vstv %s392
      %vm394 = vcmp.eq.s32.totalorder %v393, 1
      %v395 = vsel %vm394, 0.0, %v385
      %v397 = vrot.slane %v390, 1
      %vm401 = vcmask 1046528
      %v402 = vrot.slane %v382, 1
      %v403 = vrot.slane %v383, 1
      %v404 = vsel %vm401, %v402, %v403
      %v409 = vrot.slane %v395, 1
      %v411 = vsel %vm401, %v397, %v402
      %v412 = vsel %vm401, %v403, %v409
      %v415 = vrot.slane %v411, 1
      %v416 = vrot.slane %v404, 1
      %v417 = vsel %vm401, %v415, %v416
      %v418 = vrot.slane %v412, 1
      %v419 = vsel %vm401, %v416, %v418
      %420 = vrot.lane.b32.xlu0 %v417, 2
      %v421 = vpop.permute.xlu0 %420
      %422 = vrot.lane.b32.xlu0 %v419, 2
      %v423 = vpop.permute.xlu0 %422
      %vm426 = vcmask 1045504
      %v427 = vrot.slane %v411, 2
      %v428 = vrot.slane %v404, 2
      %v429 = vsel %vm426, %v427, %v428
      %v430 = vrot.slane %v412, 2
      %v431 = vsel %vm426, %v428, %v430
      %432 = vrot.lane.b32.xlu0 %v429, 4
      %v433 = vpop.permute.xlu0 %432
      %434 = vrot.lane.b32.xlu0 %v431, 4
      %v435 = vpop.permute.xlu0 %434
      %vm438 = vcmask 1044480
      %v439 = vrot.slane %v411, 3
      %v440 = vrot.slane %v404, 3
      %v441 = vsel %vm438, %v439, %v440
      %v442 = vrot.slane %v412, 3
      %v443 = vsel %vm438, %v440, %v442
      %444 = vrot.lane.b32.xlu0 %v441, 6
      %v445 = vpop.permute.xlu0 %444
      %446 = vrot.lane.b32.xlu0 %v443, 6
      %v447 = vpop.permute.xlu0 %446
      %vm450 = vcmask 1043456
      %v451 = vrot.slane %v411, 4
      %v452 = vrot.slane %v404, 4
      %v453 = vsel %vm450, %v451, %v452
      %v454 = vrot.slane %v412, 4
      %v455 = vsel %vm450, %v452, %v454
      %456 = vrot.lane.b32.xlu0 %v453, 8
      %v457 = vpop.permute.xlu0 %456
      %458 = vrot.lane.b32.xlu0 %v455, 8
      %v459 = vpop.permute.xlu0 %458
      %vm462 = vcmask 1042432
      %v463 = vrot.slane %v411, 5
      %v464 = vrot.slane %v404, 5
      %v465 = vsel %vm462, %v463, %v464
      %v466 = vrot.slane %v412, 5
      %v467 = vsel %vm462, %v464, %v466
      %468 = vrot.lane.b32.xlu0 %v465, 10
      %v469 = vpop.permute.xlu0 %468
      %470 = vrot.lane.b32.xlu0 %v467, 10
      %v471 = vpop.permute.xlu0 %470
      %vm474 = vcmask 1041408
      %v475 = vrot.slane %v411, 6
      %v476 = vrot.slane %v404, 6
      %v477 = vsel %vm474, %v475, %v476
      %v478 = vrot.slane %v412, 6
      %v479 = vsel %vm474, %v476, %v478
      %480 = vrot.lane.b32.xlu0 %v477, 12
      %v481 = vpop.permute.xlu0 %480
      %482 = vrot.lane.b32.xlu0 %v479, 12
      %v483 = vpop.permute.xlu0 %482
      %vm486 = vcmask 1040384
      %v487 = vrot.slane %v411, 7
      %v488 = vrot.slane %v404, 7
      %v489 = vsel %vm486, %v487, %v488
      %v490 = vrot.slane %v412, 7
      %v491 = vsel %vm486, %v488, %v490
      %492 = vrot.lane.b32.xlu0 %v489, 14
      %v493 = vpop.permute.xlu0 %492
      %494 = vrot.lane.b32.xlu0 %v491, 14
      %v495 = vpop.permute.xlu0 %494
      %498 = vrot.lane.b32.xlu0 %v404, 16
      %v499 = vpop.permute.xlu0 %498
      %500 = vrot.lane.b32.xlu0 %v412, 16
      %v501 = vpop.permute.xlu0 %500
      %v504 = vrot.slane %v409, 1
      %v505 = vsel %vm401, %v418, %v504
      %506 = vrot.lane.b32.xlu0 %v419, 18
      %v507 = vpop.permute.xlu0 %506
      %508 = vrot.lane.b32.xlu0 %v505, 18
      %v509 = vpop.permute.xlu0 %508
      %v512 = vrot.slane %v409, 2
      %v513 = vsel %vm426, %v430, %v512
      %514 = vrot.lane.b32.xlu0 %v431, 20
      %v515 = vpop.permute.xlu0 %514
      %516 = vrot.lane.b32.xlu0 %v513, 20
      %v517 = vpop.permute.xlu0 %516
      %v520 = vrot.slane %v409, 3
      %v521 = vsel %vm438, %v442, %v520
      %522 = vrot.lane.b32.xlu0 %v443, 22
      %v523 = vpop.permute.xlu0 %522
      %524 = vrot.lane.b32.xlu0 %v521, 22
      %v525 = vpop.permute.xlu0 %524
      %v528 = vrot.slane %v409, 4
      %v529 = vsel %vm450, %v454, %v528
      %530 = vrot.lane.b32.xlu0 %v455, 24
      %v531 = vpop.permute.xlu0 %530
      %532 = vrot.lane.b32.xlu0 %v529, 24
      %v533 = vpop.permute.xlu0 %532
      %v536 = vrot.slane %v409, 5
      %v537 = vsel %vm462, %v466, %v536
      %538 = vrot.lane.b32.xlu0 %v467, 26
      %v539 = vpop.permute.xlu0 %538
      %540 = vrot.lane.b32.xlu0 %v537, 26
      %v541 = vpop.permute.xlu0 %540
      %v544 = vrot.slane %v409, 6
      %v545 = vsel %vm474, %v478, %v544
      %546 = vrot.lane.b32.xlu0 %v479, 28
      %v547 = vpop.permute.xlu0 %546
      %548 = vrot.lane.b32.xlu0 %v545, 28
      %v549 = vpop.permute.xlu0 %548
      %vm552 = vcmask 15360
      %v553 = vsel %vm552, %v411, %v421
      %v554 = vsel %vm552, %v404, %v423
      %vm555 = vcmask 31744
      %v556 = vsel %vm555, %v553, %v433
      %v557 = vsel %vm555, %v554, %v435
      %vm558 = vcmask 48128
      %v559 = vsel %vm558, %v556, %v445
      %v560 = vsel %vm558, %v557, %v447
      %vm561 = vcmask 64512
      %v562 = vsel %vm561, %v559, %v457
      %v563 = vsel %vm561, %v560, %v459
      %vm564 = vcmask 80896
      %v565 = vsel %vm564, %v562, %v469
      %v566 = vsel %vm564, %v563, %v471
      %vm567 = vcmask 97280
      %v568 = vsel %vm567, %v565, %v481
      %v569 = vsel %vm567, %v566, %v483
      %vm570 = vcmask 113664
      %v571 = vsel %vm570, %v568, %v493
      %v572 = vsel %vm570, %v569, %v495
      %vm573 = vcmask 130048
      %v574 = vsel %vm573, %v571, %v499
      %v575 = vsel %vm573, %v572, %v501
      %vm576 = vcmask 146432
      %v577 = vsel %vm576, %v574, %v507
      %v578 = vsel %vm576, %v575, %v509
      %vm579 = vcmask 162816
      %v580 = vsel %vm579, %v577, %v515
      %v581 = vsel %vm579, %v578, %v517
      %vm582 = vcmask 179200
      %v583 = vsel %vm582, %v580, %v523
      %v584 = vsel %vm582, %v581, %v525
      %vm585 = vcmask 195584
      %v586 = vsel %vm585, %v583, %v531
      %v587 = vsel %vm585, %v584, %v533
      %vm588 = vcmask 211968
      %v589 = vsel %vm588, %v586, %v539
      %v590 = vsel %vm588, %v587, %v541
      %vm591 = vcmask 228352
      %v592 = vsel %vm591, %v589, %v547
      %v593 = vsel %vm591, %v590, %v549
      %v594 = vld [vmem:[%s3] sm:$0xff]
      %v595 = vld [vmem:[%s3 + $0x8] sm:$0xff]
      %v596 = vld [vmem:[%s3 + $0x10] sm:$0xff]
      %v597 = vld [vmem:[%s3 + $0x18] sm:$0x3f]
      %v598 = vld [vmem:[%s4] sm:$0x1]
      %v600 = vperm.slane %v598, 0
      %vm602 = vcmask 244736
      %v604 = vsel %vm602, %v592, 0
      %v607 = vsel %vm602, %v593, 0
      %v610 = vsel %vm426, %v597, 0
      %612 = vmatpush.msra.mxu0 0.0
      %613 = vmatpush.msra.mxu0 0.0
      %614 = vmatpush.msra.mxu0 0.0
      %615 = vmatpush.msra.mxu0 0.0
      %616 = vmatpush.msra.mxu0 0.0
      %617 = vmatpush.msra.mxu0 0.0
      %618 = vmatpush.msra.mxu0 0.0
      %619 = vmatpush.msra.mxu0 0.0
      %620 = vmatpush.msra.mxu0 0.0
      %621 = vmatpush.msra.mxu0 0.0
      %622 = vmatpush.msra.mxu0 0.0
      %623 = vmatpush.msra.mxu0 0.0
      %624 = vmatpush.msra.mxu0 %v610
      %625 = vmatpush.msra.mxu0 %v596
      %626 = vmatpush.msra.mxu0 %v595
      %627 = vmatpush.msra.mxu0 %v594
      %628 = vmatmul.f32.gmra.mxu0 %v604
      %v629 = vpop.f32.mrf.mxu0
      %v630 = vadd.f32 %v600, %v629
      %631 = vmatmul.f32.gmra.mxu0 %v607
      %v632 = vpop.f32.mrf.mxu0
      %v633 = vadd.f32 %v600, %v632
      %634 = vdwg.mxu0
      %v635 = vmax.f32 %v630, 0.0
      %v636 = vmax.f32 %v633, 0.0
      %637 = vst.msk [vmem:[%s380] sm:$0xff] %vm573, %v635
      %638 = vst.msk [vmem:[%s380 + $0x8] sm:$0xff] %vm573, %v636
      %s639 = smul.u32 2, %s21
      %p640 = scmp.lt.s32.totalorder %s20, 1
      %s641 = scalar_select %p640, %s20, 1
      %p642 = scmp.lt.s32.totalorder %s639, 7
      %s643 = scalar_select %p642, %s639, 7
      %s644 = smul.addr %s641, 8
      %s645 = sadd.s32 %s643, %s644
      %s646 = smul.addr %s645, 8
      %s647 = scalar_lea.vmem %s5, %s646
      // Predicated region
      $region41: #{wave_unet_forward.10} parent=39 // pred_check
        %p648 = pneg %p190
      $region42: #{wave_unet_forward.10} parent=39 // pred_check_branch
        %650 = sbr.rel (%p648) target = $region44
      $region43: #{wave_unet_forward.10} parent=39 // pred_region
        %s651 = smul.u32 2, %s21
      $region44: #{wave_unet_forward.10} parent=39 // pred_fallthru
        _
    $region40: #{wave_unet_forward.10} parent=5 // pred_fallthru
      _
    %p652 = scmp.le.s32.totalorder 2, %s11
    // Predicated region
    $region45: #{wave_unet_forward.10} parent=5 // pred_check
      %p653 = pneg %p652
    $region46: #{wave_unet_forward.10} parent=5 // pred_check_branch
      %655 = sbr.rel (%p653) target = $region48
    $region47: #{wave_unet_forward.10} parent=5 // pred_region
      %s656 = ssub.s32 %s11, 2
      // Predicated region
      $region49: #{wave_unet_forward.10} parent=47 // pred_check
        %p657 = pneg %p196
      $region50: #{wave_unet_forward.10} parent=47 // pred_check_branch
        %659 = sbr.rel (%p657) target = $region52
      $region51: #{wave_unet_forward.10} parent=47 // pred_region
        %s660 = smul.u32 2, %s23
        %p661 = scmp.lt.s32.totalorder %s22, 1
        %s662 = scalar_select %p661, %s22, 1
        %p663 = scmp.lt.s32.totalorder %s660, 7
        %s664 = scalar_select %p663, %s660, 7
        %s665 = smul.addr %s662, 8
        %s666 = sadd.s32 %s664, %s665
        %s667 = smul.addr %s666, 8
        %s668 = scalar_lea.vmem %s5, %s667
      $region52: #{wave_unet_forward.10} parent=47 // pred_fallthru
        _
    $region48: #{wave_unet_forward.10} parent=5 // pred_fallthru
      _
  $region6: #{wave_unet_forward.10} parent=0 // loop_footer
    %s15 = sadd.s32 1, %s11
  $region7: #{wave_unet_forward.10} parent=0 // loop_footer_branch
    %10 = sbr.rel target = $region3
  $region8: #{wave_unet_forward.10} parent=0 // loop_exit
    _

// kernel: wave_unet_forward.13
$region0: #{wave_unet_forward.13}
  #allocation0 [shape = 'u32[]', space=smem, size = 0x4, offset = 0x4, fixed_abs, tag = 'smem constant byte address 0x4 - core index']
  #allocation1 [shape = 'u32[72,128]{1,0:T(1,128)}', space=vmem, size = 0x9000, scoped, tag = 'internal scratch']
  %s0 = inlined_call_operand.vmem [shape: f32[2,8,2,64], index: 0, kind: input, shape index: {}]
  %s1 = inlined_call_operand.hbm [shape: f32[960,128], index: 1, kind: input, shape index: {}]
  %s2 = inlined_call_operand.vmem [shape: f32[1,128], index: 2, kind: input, shape index: {}]
  %s3 = inlined_call_operand.vmem [shape: f32[2,8,128], index: 3, kind: output, shape index: {}]
  %s4 = sld [smem:[#allocation0]]
  $region49: #{wave_unet_forward.13} parent=0
    _
  %s6 = ssub.s32 1, %s4
  %s7 = scalar_select 0, %s6, %s4
  $region1: #{wave_unet_forward.13} parent=0
    #allocation2 [shape = 'u8[491520]{0}', space=vmem, size = 0x78000, scoped, tag = 'input window, operand 1, single buffered']
    #allocation3 [shape = 's32[2]{0}', space=sflag, size = 0x8, scoped, tag = 'scoped memory for wave_unet_forward.13']
    %8 = vsyncpa [#allocation3], 0
    loop: start=0, step=1, limit=4
    $region2: #{wave_unet_forward.13} parent=1 // loop_pre_header
      _
    $region3: #{wave_unet_forward.13} parent=1 // loop_header
      %s10 = sphi 0, %s14
      %p11 = scmp.ge.s32.totalorder %s10, 4
      %s17 = sphi 0, %s29
      %s18 = sphi 0, %s25
      %s19 = sphi 0, %s17
      %s20 = sphi 0, %s18
      %s21 = sphi 0, %s19
      %s22 = sphi 0, %s20
      %s34 = sphi 0, %s36
      %s37 = sphi 0, %s34
      %s38 = sphi 0, %s37
      %s54 = sphi 0, %s38
      %s58 = sphi 0, %s58
      %s60 = sphi 0, %s58
      %s61 = sphi 0, %s60
      %s75 = sphi 0, %s61
      %s79 = sphi 0, %s79
      %s81 = sphi 0, %s79
      %s82 = sphi 0, %s81
      %s96 = sphi 0, %s82
      %s104 = sphi 0, %s106
      %s107 = sphi 0, %s104
      %s108 = sphi 0, %s107
      %s124 = sphi 0, %s108
    $region4: #{wave_unet_forward.13} parent=1 // loop_header_branch
      %13 = sbr.rel (%p11) target = $region8
    $region5: #{wave_unet_forward.13} parent=1 // loop_body
      %s15 = ssub.s32 %s10, 1
      %s16 = ssub.s32 %s10, 2
      %s23 = sadd.s32 1, %s18
      %p24 = scmp.ge.s32.totalorder %s23, 1
      %s25 = scalar_select %p24, 0, %s23
      %s26 = sadd.s32 1, %s17
      %s27 = scalar_select %p24, %s26, %s17
      %p28 = scmp.ge.s32.totalorder %s27, 2
      %s29 = scalar_select %p28, 0, %s27
      %s30 = ssub.s32 %s17, %s29
      %s31 = ssub.s32 %s18, %s25
      %s32 = sor.u32 %s30, %s31
      %p33 = scmp.eq.s32.totalorder %s32, 0
      %s35 = sadd.s32 %s34, 1
      %s36 = scalar_select %p33, %s34, %s35
      %p39 = pneg %p33
      %p40 = scmp.eq.s32.totalorder %s10, 1
      %p41 = por %p39, %p40
      %p42 = scmp.ne.s32.totalorder %s34, %s37
      %p43 = scmp.eq.s32.totalorder %s10, 0
      %p44 = por %p42, %p43
      %p45 = scmp.ne.s32.totalorder %s34, %s37
      %p46 = scmp.eq.s32.totalorder %s15, 1
      %p47 = por %p45, %p46
      %p48 = scmp.ne.s32.totalorder %s37, %s38
      %p49 = scmp.eq.s32.totalorder %s15, 0
      %p50 = por %p48, %p49
      %p51 = scmp.ne.s32.totalorder %s37, %s38
      %p52 = scmp.eq.s32.totalorder %s16, 1
      %p53 = por %p51, %p52
      %p55 = scmp.ne.s32.totalorder %s38, %s54
      %p56 = scmp.eq.s32.totalorder %s16, 0
      %p57 = por %p55, %p56
      %s59 = sadd.s32 %s58, 1
      %p62 = scmp.eq.s32.totalorder %s10, 1
      %p63 = scmp.ne.s32.totalorder %s58, %s60
      %p64 = scmp.eq.s32.totalorder %s10, 0
      %p65 = por %p63, %p64
      %p66 = scmp.ne.s32.totalorder %s58, %s60
      %p67 = scmp.eq.s32.totalorder %s15, 1
      %p68 = por %p66, %p67
      %p69 = scmp.ne.s32.totalorder %s60, %s61
      %p70 = scmp.eq.s32.totalorder %s15, 0
      %p71 = por %p69, %p70
      %p72 = scmp.ne.s32.totalorder %s60, %s61
      %p73 = scmp.eq.s32.totalorder %s16, 1
      %p74 = por %p72, %p73
      %p76 = scmp.ne.s32.totalorder %s61, %s75
      %p77 = scmp.eq.s32.totalorder %s16, 0
      %p78 = por %p76, %p77
      %s80 = sadd.s32 %s79, 1
      %p83 = scmp.eq.s32.totalorder %s10, 1
      %p84 = scmp.ne.s32.totalorder %s79, %s81
      %p85 = scmp.eq.s32.totalorder %s10, 0
      %p86 = por %p84, %p85
      %p87 = scmp.ne.s32.totalorder %s79, %s81
      %p88 = scmp.eq.s32.totalorder %s15, 1
      %p89 = por %p87, %p88
      %p90 = scmp.ne.s32.totalorder %s81, %s82
      %p91 = scmp.eq.s32.totalorder %s15, 0
      %p92 = por %p90, %p91
      %p93 = scmp.ne.s32.totalorder %s81, %s82
      %p94 = scmp.eq.s32.totalorder %s16, 1
      %p95 = por %p93, %p94
      %p97 = scmp.ne.s32.totalorder %s82, %s96
      %p98 = scmp.eq.s32.totalorder %s16, 0
      %p99 = por %p97, %p98
      %s100 = ssub.s32 %s17, %s29
      %s101 = ssub.s32 %s18, %s25
      %s102 = sor.u32 %s100, %s101
      %p103 = scmp.eq.s32.totalorder %s102, 0
      %s105 = sadd.s32 %s104, 1
      %s106 = scalar_select %p103, %s104, %s105
      %p109 = pneg %p103
      %p110 = scmp.eq.s32.totalorder %s10, 1
      %p111 = por %p109, %p110
      %p112 = scmp.ne.s32.totalorder %s104, %s107
      %p113 = scmp.eq.s32.totalorder %s10, 0
      %p114 = por %p112, %p113
      %p115 = scmp.ne.s32.totalorder %s104, %s107
      %p116 = scmp.eq.s32.totalorder %s15, 1
      %p117 = por %p115, %p116
      %p118 = scmp.ne.s32.totalorder %s107, %s108
      %p119 = scmp.eq.s32.totalorder %s15, 0
      %p120 = por %p118, %p119
      %p121 = scmp.ne.s32.totalorder %s107, %s108
      %p122 = scmp.eq.s32.totalorder %s16, 1
      %p123 = por %p121, %p122
      %p125 = scmp.ne.s32.totalorder %s108, %s124
      %p126 = scmp.eq.s32.totalorder %s16, 0
      %p127 = por %p125, %p126
      %p128 = scmp.le.s32.totalorder 1, %s10
      %p129 = scmp.lt.s32.totalorder %s10, 3
      %p130 = pnand %p128, %p129
      %p131 = pneg %p130
      // Predicated region
      $region9: #{wave_unet_forward.13} parent=5 // pred_check
        _
      $region10: #{wave_unet_forward.13} parent=5 // pred_check_branch
        %133 = sbr.rel (%p130) target = $region12
      $region11: #{wave_unet_forward.13} parent=5 // pred_region
        %s134 = ssub.s32 %s10, 1
        // Predicated region
        $region13: #{wave_unet_forward.13} parent=11 // pred_check
          %p135 = pneg %p71
        $region14: #{wave_unet_forward.13} parent=11 // pred_check_branch
          %137 = sbr.rel (%p135) target = $region16
        $region15: #{wave_unet_forward.13} parent=11 // pred_region
          %139 = vsyncadd [#allocation3], 0
          %s140 = sshll.u32 %s1, 4
          %s141 = int_to_ptr.hbm [resolvable:$true] %s140
          %s142 = sshll.u32 [#allocation2], 4
          %s143 = int_to_ptr.vmem [resolvable:$true] %s142
          %148 = dma.hbm_to_vmem [thread:$0]  %s141, 15360, %s143, [#allocation3], 128, 128, 8
        $region16: #{wave_unet_forward.13} parent=11 // pred_fallthru
          _
        // Predicated region
        $region17: #{wave_unet_forward.13} parent=11 // pred_check
          %p149 = pneg %p92
        $region18: #{wave_unet_forward.13} parent=11 // pred_check_branch
          %151 = sbr.rel (%p149) target = $region20
        $region19: #{wave_unet_forward.13} parent=11 // pred_region
          _
        $region20: #{wave_unet_forward.13} parent=11 // pred_fallthru
          _
      $region12: #{wave_unet_forward.13} parent=5 // pred_fallthru
        _
      %p152 = scmp.lt.s32.totalorder %s10, 2
      // Predicated region
      $region21: #{wave_unet_forward.13} parent=5 // pred_check
        %p153 = pneg %p152
      $region22: #{wave_unet_forward.13} parent=5 // pred_check_branch
        %155 = sbr.rel (%p153) target = $region24
      $region23: #{wave_unet_forward.13} parent=5 // pred_region
        // Predicated region
        $region25: #{wave_unet_forward.13} parent=23 // pred_check
          %p156 = pneg %p44
        $region26: #{wave_unet_forward.13} parent=23 // pred_check_branch
          %158 = sbr.rel (%p156) target = $region28
        $region27: #{wave_unet_forward.13} parent=23 // pred_region
          %s159 = smul.u32 8, %s18
          %p160 = scmp.lt.s32.totalorder %s17, 1
          %s161 = scalar_select %p160, %s17, 1
          %p162 = scmp.lt.s32.totalorder %s159, 7
          %s163 = scalar_select %p162, %s159, 7
          %s164 = smul.addr %s161, 8
          %s165 = sadd.s32 %s163, %s164
          %s166 = smul.addr %s165, 2
          %s167 = scalar_lea.vmem %s0, %s166
          %s168 = smul.u32 8, %s18
        $region28: #{wave_unet_forward.13} parent=23 // pred_fallthru
          _
      $region24: #{wave_unet_forward.13} parent=5 // pred_fallthru
        _
      %p169 = scmp.le.s32.totalorder 1, %s10
      %p170 = scmp.lt.s32.totalorder %s10, 3
      %p171 = pnand %p169, %p170
      %p172 = pneg %p171
      // Predicated region
      $region29: #{wave_unet_forward.13} parent=5 // pred_check
        _
      $region30: #{wave_unet_forward.13} parent=5 // pred_check_branch
        %174 = sbr.rel (%p171) target = $region32
      $region31: #{wave_unet_forward.13} parent=5 // pred_region
        %s175 = ssub.s32 %s10, 1
        // Predicated region
        $region33: #{wave_unet_forward.13} parent=31 // pred_check
          %p176 = pneg %p71
        $region34: #{wave_unet_forward.13} parent=31 // pred_check_branch
          %178 = sbr.rel (%p176) target = $region36
        $region35: #{wave_unet_forward.13} parent=31 // pred_region
          %180 = dma.done [#allocation3], 15360
        $region36: #{wave_unet_forward.13} parent=31 // pred_fallthru
          _
        %s181 = smul.u32 8, %s20
        %p182 = scmp.lt.s32.totalorder %s19, 1
        %s183 = scalar_select %p182, %s19, 1
        %p184 = scmp.lt.s32.totalorder %s181, 7
        %s185 = scalar_select %p184, %s181, 7
        %s186 = smul.addr %s183, 8
        %s187 = sadd.s32 %s185, %s186
        %s188 = smul.addr %s187, 2
        %s189 = scalar_lea.vmem %s0, %s188
        %p190 = pneg %p50
        %p191 = pneg %p47
        %p192 = pneg %p71
        %p193 = pneg %p68
        %p194 = pneg %p92
        %p195 = pneg %p89
        %p196 = pneg %p120
        %p197 = pneg %p117
        %p198 = scmp.lt.s32.totalorder %s19, 1
        %s199 = scalar_select %p198, %s19, 1
        %p200 = scmp.lt.s32.totalorder %s20, 0
        %s201 = scalar_select %p200, %s20, 0
        %s202 = sadd.s32 %s201, %s199
        %s203 = smul.addr %s202, 8
        %s204 = scalar_lea.vmem %s3, %s203
        %s205 = smul.u32 8, %s20
        %p206 = scmp.lt.s32.totalorder %s19, 1
        %s207 = scalar_select %p206, %s19, 1
        %p208 = scmp.lt.s32.totalorder %s205, 7
        %s209 = scalar_select %p208, %s205, 7
        %s210 = smul.addr %s207, 8
        %s211 = sadd.s32 %s209, %s210
        %s212 = smul.addr %s211, 2
        %s213 = scalar_lea.vmem %s0, %s212
        %s214 = smul.u32 8, %s20
        %p215 = scmp.lt.s32.totalorder %s19, 1
        %s216 = scalar_select %p215, %s19, 1
        %p217 = scmp.lt.s32.totalorder %s20, 0
        %s218 = scalar_select %p217, %s20, 0
        %s219 = sadd.s32 %s218, %s216
        %s220 = smul.addr %s219, 8
        %s221 = scalar_lea.vmem %s3, %s220
        %v222 = vld [vmem:[%s213] sm:$0x1]
        %v223 = vld [vmem:[%s213 + $0x2] sm:$0x1]
        %v224 = vld [vmem:[%s213 + $0x4] sm:$0x1]
        %v225 = vld [vmem:[%s213 + $0x6] sm:$0x1]
        %v226 = vld [vmem:[%s213 + $0x8] sm:$0x1]
        %v227 = vld [vmem:[%s213 + $0xa] sm:$0x1]
        %v228 = vld [vmem:[%s213 + $0xc] sm:$0x1]
        %v229 = vld [vmem:[%s213 + $0xe] sm:$0x1]
        %v230 = vld [vmem:[%s213 + $0x1] sm:$0x1]
        %v231 = vld [vmem:[%s213 + $0x3] sm:$0x1]
        %v232 = vld [vmem:[%s213 + $0x5] sm:$0x1]
        %v233 = vld [vmem:[%s213 + $0x7] sm:$0x1]
        %v234 = vld [vmem:[%s213 + $0x9] sm:$0x1]
        %v235 = vld [vmem:[%s213 + $0xb] sm:$0x1]
        %v236 = vld [vmem:[%s213 + $0xd] sm:$0x1]
        %v237 = vld [vmem:[%s213 + $0xf] sm:$0x1]
        %v238 = vmax.f32 %v222, %v230
        %v239 = vmax.f32 %v223, %v231
        %v240 = vmax.f32 %v224, %v232
        %v241 = vmax.f32 %v225, %v233
        %v242 = vmax.f32 %v226, %v234
        %v243 = vmax.f32 %v227, %v235
        %v244 = vmax.f32 %v228, %v236
        %v245 = vmax.f32 %v229, %v237
        %v254 = vrot.slane %v238, 1
        %v255 = vrot.slane %v240, 7
        %vm256 = vcmask 1041409
        %v257 = vsel %vm256, %v255, %v239
        %v258 = vrot.slane %v241, 6
        %vm259 = vcmask 1042434
        %v260 = vsel %vm259, %v258, %v257
        %v261 = vrot.slane %v242, 5
        %vm262 = vcmask 1043459
        %v263 = vsel %vm262, %v261, %v260
        %v264 = vrot.slane %v243, 4
        %vm265 = vcmask 1044484
        %v266 = vsel %vm265, %v264, %v263
        %v267 = vrot.slane %v244, 3
        %vm268 = vcmask 1045509
        %v269 = vsel %vm268, %v267, %v266
        %v270 = vrot.slane %v245, 2
        %vm271 = vcmask 1046534
        %v272 = vsel %vm271, %v270, %v269
        %vm275 = vcmask 1046528
        %v276 = vsel %vm275, 0.0, %v254
        %v277 = vsel %vm275, %v272, 0.0
        %v280 = vrot.slane %v276, 1
        %v281 = vrot.slane %v277, 1
        %v282 = vsel %vm275, %v280, %v281
        %283 = vrot.lane.b32.xlu0 %v282, 64
        %v284 = vpop.permute.xlu0 %283
        %vm286 = vcmask 1045504
        %v287 = vrot.slane %v276, 2
        %v288 = vrot.slane %v277, 2
        %v289 = vsel %vm286, %v287, %v288
        %vm291 = vcmask 1044480
        %v292 = vrot.slane %v276, 3
        %v293 = vrot.slane %v277, 3
        %v294 = vsel %vm291, %v292, %v293
        %295 = vrot.lane.b32.xlu0 %v294, 64
        %v296 = vpop.permute.xlu0 %295
        %vm298 = vcmask 1043456
        %v299 = vrot.slane %v276, 4
        %v300 = vrot.slane %v277, 4
        %v301 = vsel %vm298, %v299, %v300
        %vm303 = vcmask 1042432
        %v304 = vrot.slane %v276, 5
        %v305 = vrot.slane %v277, 5
        %v306 = vsel %vm303, %v304, %v305
        %307 = vrot.lane.b32.xlu0 %v306, 64
        %v308 = vpop.permute.xlu0 %307
        %vm310 = vcmask 1041408
        %v311 = vrot.slane %v276, 6
        %v312 = vrot.slane %v277, 6
        %v313 = vsel %vm310, %v311, %v312
        %vm315 = vcmask 1040384
        %v316 = vrot.slane %v276, 7
        %v317 = vrot.slane %v277, 7
        %v318 = vsel %vm315, %v316, %v317
        %319 = vrot.lane.b32.xlu0 %v318, 64
        %v320 = vpop.permute.xlu0 %319
        %v323 = vrot.slane 0.0, 1
        %v324 = vsel %vm275, %v281, %v323
        %325 = vrot.lane.b32.xlu0 %v324, 64
        %v326 = vpop.permute.xlu0 %325
        %v328 = vrot.slane 0.0, 2
        %v329 = vsel %vm286, %v288, %v328
        %v331 = vrot.slane 0.0, 3
        %v332 = vsel %vm291, %v293, %v331
        %333 = vrot.lane.b32.xlu0 %v332, 64
        %v334 = vpop.permute.xlu0 %333
        %v336 = vrot.slane 0.0, 4
        %v337 = vsel %vm298, %v300, %v336
        %v339 = vrot.slane 0.0, 5
        %v340 = vsel %vm303, %v305, %v339
        %341 = vrot.lane.b32.xlu0 %v340, 64
        %v342 = vpop.permute.xlu0 %341
        %v344 = vrot.slane 0.0, 6
        %v345 = vsel %vm310, %v312, %v344
        %vm346 = vcmask 523264
        %v347 = vsel %vm346, %v276, %v284
        %v348 = vsel %vm346, %v289, %v296
        %v349 = vsel %vm346, %v301, %v308
        %v350 = vsel %vm346, %v313, %v320
        %v351 = vsel %vm346, %v277, %v326
        %v352 = vsel %vm346, %v329, %v334
        %v353 = vsel %vm346, %v337, %v342
        %v354 = vld [vmem:[#allocation2] sm:$0xff]
        %v355 = vld [vmem:[#allocation2 + $0x8] sm:$0xff]
        %v356 = vld [vmem:[#allocation2 + $0x10] sm:$0xff]
        %v357 = vld [vmem:[#allocation2 + $0x18] sm:$0xff]
        %v358 = vld [vmem:[#allocation2 + $0x20] sm:$0xff]
        %v359 = vld [vmem:[#allocation2 + $0x28] sm:$0xff]
        %v360 = vld [vmem:[#allocation2 + $0x30] sm:$0xff]
        %v361 = vld [vmem:[#allocation2 + $0x38] sm:$0xff]
        %v362 = vld [vmem:[#allocation2 + $0x40] sm:$0xff]
        %v363 = vld [vmem:[#allocation2 + $0x48] sm:$0xff]
        %v364 = vld [vmem:[#allocation2 + $0x50] sm:$0xff]
        %v365 = vld [vmem:[#allocation2 + $0x58] sm:$0xff]
        %v366 = vld [vmem:[#allocation2 + $0x60] sm:$0xff]
        %v367 = vld [vmem:[#allocation2 + $0x68] sm:$0xff]
        %v368 = vld [vmem:[#allocation2 + $0x70] sm:$0xff]
        %v369 = vld [vmem:[#allocation2 + $0x78] sm:$0xff]
        %v370 = vld [vmem:[#allocation2 + $0x80] sm:$0xff]
        %v371 = vld [vmem:[#allocation2 + $0x88] sm:$0xff]
        %v372 = vld [vmem:[#allocation2 + $0x90] sm:$0xff]
        %v373 = vld [vmem:[#allocation2 + $0x98] sm:$0xff]
        %v374 = vld [vmem:[#allocation2 + $0xa0] sm:$0xff]
        %v375 = vld [vmem:[#allocation2 + $0xa8] sm:$0xff]
        %v376 = vld [vmem:[#allocation2 + $0xb0] sm:$0xff]
        %v377 = vld [vmem:[#allocation2 + $0xb8] sm:$0xff]
        %v378 = vld [vmem:[#allocation2 + $0xc0] sm:$0xff]
        %v379 = vld [vmem:[#allocation2 + $0xc8] sm:$0xff]
        %v380 = vld [vmem:[#allocation2 + $0xd0] sm:$0xff]
        %v381 = vld [vmem:[#allocation2 + $0xd8] sm:$0xff]
        %v382 = vld [vmem:[#allocation2 + $0xe0] sm:$0xff]
        %v383 = vld [vmem:[#allocation2 + $0xe8] sm:$0xff]
        %v384 = vld [vmem:[#allocation2 + $0xf0] sm:$0xff]
        %v385 = vld [vmem:[#allocation2 + $0xf8] sm:$0xff]
        %v386 = vld [vmem:[#allocation2 + $0x100] sm:$0xff]
        %v387 = vld [vmem:[#allocation2 + $0x108] sm:$0xff]
        %v388 = vld [vmem:[#allocation2 + $0x110] sm:$0xff]
        %v389 = vld [vmem:[#allocation2 + $0x118] sm:$0xff]
        %v390 = vld [vmem:[#allocation2 + $0x120] sm:$0xff]
        %v391 = vld [vmem:[#allocation2 + $0x128] sm:$0xff]
        %v392 = vld [vmem:[#allocation2 + $0x130] sm:$0xff]
        %v393 = vld [vmem:[#allocation2 + $0x138] sm:$0xff]
        %v394 = vld [vmem:[#allocation2 + $0x140] sm:$0xff]
        %v395 = vld [vmem:[#allocation2 + $0x148] sm:$0xff]
        %v396 = vld [vmem:[#allocation2 + $0x150] sm:$0xff]
        %v397 = vld [vmem:[#allocation2 + $0x158] sm:$0xff]
        %v398 = vld [vmem:[#allocation2 + $0x160] sm:$0xff]
        %v399 = vld [vmem:[#allocation2 + $0x168] sm:$0xff]
        %v400 = vld [vmem:[#allocation2 + $0x170] sm:$0xff]
        %v401 = vld [vmem:[#allocation2 + $0x178] sm:$0xff]
        %v402 = vld [vmem:[#allocation2 + $0x180] sm:$0xff]
        %v403 = vld [vmem:[#allocation2 + $0x188] sm:$0xff]
        %v404 = vld [vmem:[#allocation2 + $0x190] sm:$0xff]
        %v405 = vld [vmem:[#allocation2 + $0x198] sm:$0xff]
        %v406 = vld [vmem:[#allocation2 + $0x1a0] sm:$0xff]
        %v407 = vld [vmem:[#allocation2 + $0x1a8] sm:$0xff]
        %v408 = vld [vmem:[#allocation2 + $0x1b0] sm:$0xff]
        %v409 = vld [vmem:[#allocation2 + $0x1b8] sm:$0xff]
        %v410 = vld [vmem:[#allocation2 + $0x1c0] sm:$0xff]
        %v411 = vld [vmem:[#allocation2 + $0x1c8] sm:$0xff]
        %v412 = vld [vmem:[#allocation2 + $0x1d0] sm:$0xff]
        %v413 = vld [vmem:[#allocation2 + $0x1d8] sm:$0xff]
        %v414 = vld [vmem:[#allocation2 + $0x1e0] sm:$0xff]
        %v415 = vld [vmem:[#allocation2 + $0x1e8] sm:$0xff]
        %v416 = vld [vmem:[#allocation2 + $0x1f0] sm:$0xff]
        %v417 = vld [vmem:[#allocation2 + $0x1f8] sm:$0xff]
        %v418 = vld [vmem:[#allocation2 + $0x200] sm:$0xff]
        %v419 = vld [vmem:[#allocation2 + $0x208] sm:$0xff]
        %v420 = vld [vmem:[#allocation2 + $0x210] sm:$0xff]
        %v421 = vld [vmem:[#allocation2 + $0x218] sm:$0xff]
        %v422 = vld [vmem:[#allocation2 + $0x220] sm:$0xff]
        %v423 = vld [vmem:[#allocation2 + $0x228] sm:$0xff]
        %v424 = vld [vmem:[#allocation2 + $0x230] sm:$0xff]
        %v425 = vld [vmem:[#allocation2 + $0x238] sm:$0xff]
        %v426 = vld [vmem:[#allocation2 + $0x240] sm:$0xff]
        %v427 = vld [vmem:[#allocation2 + $0x248] sm:$0xff]
        %v428 = vld [vmem:[#allocation2 + $0x250] sm:$0xff]
        %v429 = vld [vmem:[#allocation2 + $0x258] sm:$0xff]
        %v430 = vld [vmem:[#allocation2 + $0x260] sm:$0xff]
        %v431 = vld [vmem:[#allocation2 + $0x268] sm:$0xff]
        %v432 = vld [vmem:[#allocation2 + $0x270] sm:$0xff]
        %v433 = vld [vmem:[#allocation2 + $0x278] sm:$0xff]
        %v434 = vld [vmem:[#allocation2 + $0x280] sm:$0xff]
        %v435 = vld [vmem:[#allocation2 + $0x288] sm:$0xff]
        %v436 = vld [vmem:[#allocation2 + $0x290] sm:$0xff]
        %v437 = vld [vmem:[#allocation2 + $0x298] sm:$0xff]
        %v438 = vld [vmem:[#allocation2 + $0x2a0] sm:$0xff]
        %v439 = vld [vmem:[#allocation2 + $0x2a8] sm:$0xff]
        %v440 = vld [vmem:[#allocation2 + $0x2b0] sm:$0xff]
        %v441 = vld [vmem:[#allocation2 + $0x2b8] sm:$0xff]
        %v442 = vld [vmem:[#allocation2 + $0x2c0] sm:$0xff]
        %v443 = vld [vmem:[#allocation2 + $0x2c8] sm:$0xff]
        %v444 = vld [vmem:[#allocation2 + $0x2d0] sm:$0xff]
        %v445 = vld [vmem:[#allocation2 + $0x2d8] sm:$0xff]
        %v446 = vld [vmem:[#allocation2 + $0x2e0] sm:$0xff]
        %v447 = vld [vmem:[#allocation2 + $0x2e8] sm:$0xff]
        %v448 = vld [vmem:[#allocation2 + $0x2f0] sm:$0xff]
        %v449 = vld [vmem:[#allocation2 + $0x2f8] sm:$0xff]
        %v450 = vld [vmem:[#allocation2 + $0x300] sm:$0xff]
        %v451 = vld [vmem:[#allocation2 + $0x308] sm:$0xff]
        %v452 = vld [vmem:[#allocation2 + $0x310] sm:$0xff]
        %v453 = vld [vmem:[#allocation2 + $0x318] sm:$0xff]
        %v454 = vld [vmem:[#allocation2 + $0x320] sm:$0xff]
        %v455 = vld [vmem:[#allocation2 + $0x328] sm:$0xff]
        %v456 = vld [vmem:[#allocation2 + $0x330] sm:$0xff]
        %v457 = vld [vmem:[#allocation2 + $0x338] sm:$0xff]
        %v458 = vld [vmem:[#allocation2 + $0x340] sm:$0xff]
        %v459 = vld [vmem:[#allocation2 + $0x348] sm:$0xff]
        %v460 = vld [vmem:[#allocation2 + $0x350] sm:$0xff]
        %v461 = vld [vmem:[#allocation2 + $0x358] sm:$0xff]
        %v462 = vld [vmem:[#allocation2 + $0x360] sm:$0xff]
        %v463 = vld [vmem:[#allocation2 + $0x368] sm:$0xff]
        %v464 = vld [vmem:[#allocation2 + $0x370] sm:$0xff]
        %v465 = vld [vmem:[#allocation2 + $0x378] sm:$0xff]
        %v466 = vld [vmem:[#allocation2 + $0x380] sm:$0xff]
        %v467 = vld [vmem:[#allocation2 + $0x388] sm:$0xff]
        %v468 = vld [vmem:[#allocation2 + $0x390] sm:$0xff]
        %v469 = vld [vmem:[#allocation2 + $0x398] sm:$0xff]
        %v470 = vld [vmem:[#allocation2 + $0x3a0] sm:$0xff]
        %v471 = vld [vmem:[#allocation2 + $0x3a8] sm:$0xff]
        %v472 = vld [vmem:[#allocation2 + $0x3b0] sm:$0xff]
        %v473 = vld [vmem:[#allocation2 + $0x3b8] sm:$0xff]
        %v474 = vld [vmem:[%s2] sm:$0x1]
        %v476 = vperm.slane %v474, 0
        %v478 = vsel %vm346, %v345, 0
        %480 = vmatpush.msra.mxu0 %v369
        %481 = vmatpush.msra.mxu0 %v368
        %482 = vmatpush.msra.mxu0 %v367
        %483 = vmatpush.msra.mxu0 %v366
        %484 = vmatpush.msra.mxu0 %v365
        %485 = vmatpush.msra.mxu0 %v364
        %486 = vmatpush.msra.mxu0 %v363
        %487 = vmatpush.msra.mxu0 %v362
        %488 = vmatpush.msra.mxu0 %v361
        %489 = vmatpush.msra.mxu0 %v360
        %490 = vmatpush.msra.mxu0 %v359
        %491 = vmatpush.msra.mxu0 %v358
        %492 = vmatpush.msra.mxu0 %v357
        %493 = vmatpush.msra.mxu0 %v356
        %494 = vmatpush.msra.mxu0 %v355
        %495 = vmatpush.msra.mxu0 %v354
        %496 = vmatmul.f32.gmra.mxu0 %v347
        %v497 = vpop.f32.mrf.mxu0
        %v498 = vadd.f32 %v476, %v497
        %499 = vdwg.mxu0
        %500 = vmatpush.msra.mxu0 %v385
        %501 = vmatpush.msra.mxu0 %v384
        %502 = vmatpush.msra.mxu0 %v383
        %503 = vmatpush.msra.mxu0 %v382
        %504 = vmatpush.msra.mxu0 %v381
        %505 = vmatpush.msra.mxu0 %v380
        %506 = vmatpush.msra.mxu0 %v379
        %507 = vmatpush.msra.mxu0 %v378
        %508 = vmatpush.msra.mxu0 %v377
        %509 = vmatpush.msra.mxu0 %v376
        %510 = vmatpush.msra.mxu0 %v375
        %511 = vmatpush.msra.mxu0 %v374
        %512 = vmatpush.msra.mxu0 %v373
        %513 = vmatpush.msra.mxu0 %v372
        %514 = vmatpush.msra.mxu0 %v371
        %515 = vmatpush.msra.mxu0 %v370
        %516 = vmatmul.f32.gmra.mxu0 %v348
        %v517 = vpop.f32.mrf.mxu0
        %v518 = vadd.f32 %v498, %v517
        %519 = vdwg.mxu0
        %520 = vmatpush.msra.mxu0 %v401
        %521 = vmatpush.msra.mxu0 %v400
        %522 = vmatpush.msra.mxu0 %v399
        %523 = vmatpush.msra.mxu0 %v398
        %524 = vmatpush.msra.mxu0 %v397
        %525 = vmatpush.msra.mxu0 %v396
        %526 = vmatpush.msra.mxu0 %v395
        %527 = vmatpush.msra.mxu0 %v394
        %528 = vmatpush.msra.mxu0 %v393
        %529 = vmatpush.msra.mxu0 %v392
        %530 = vmatpush.msra.mxu0 %v391
        %531 = vmatpush.msra.mxu0 %v390
        %532 = vmatpush.msra.mxu0 %v389
        %533 = vmatpush.msra.mxu0 %v388
        %534 = vmatpush.msra.mxu0 %v387
        %535 = vmatpush.msra.mxu0 %v386
        %536 = vmatmul.f32.gmra.mxu0 %v349
        %v537 = vpop.f32.mrf.mxu0
        %v538 = vadd.f32 %v518, %v537
        %539 = vdwg.mxu0
        %540 = vmatpush.msra.mxu0 %v417
        %541 = vmatpush.msra.mxu0 %v416
        %542 = vmatpush.msra.mxu0 %v415
        %543 = vmatpush.msra.mxu0 %v414
        %544 = vmatpush.msra.mxu0 %v413
        %545 = vmatpush.msra.mxu0 %v412
        %546 = vmatpush.msra.mxu0 %v411
        %547 = vmatpush.msra.mxu0 %v410
        %548 = vmatpush.msra.mxu0 %v409
        %549 = vmatpush.msra.mxu0 %v408
        %550 = vmatpush.msra.mxu0 %v407
        %551 = vmatpush.msra.mxu0 %v406
        %552 = vmatpush.msra.mxu0 %v405
        %553 = vmatpush.msra.mxu0 %v404
        %554 = vmatpush.msra.mxu0 %v403
        %555 = vmatpush.msra.mxu0 %v402
        %556 = vmatmul.f32.gmra.mxu0 %v350
        %v557 = vpop.f32.mrf.mxu0
        %v558 = vadd.f32 %v538, %v557
        %559 = vdwg.mxu0
        %560 = vmatpush.msra.mxu0 %v433
        %561 = vmatpush.msra.mxu0 %v432
        %562 = vmatpush.msra.mxu0 %v431
        %563 = vmatpush.msra.mxu0 %v430
        %564 = vmatpush.msra.mxu0 %v429
        %565 = vmatpush.msra.mxu0 %v428
        %566 = vmatpush.msra.mxu0 %v427
        %567 = vmatpush.msra.mxu0 %v426
        %568 = vmatpush.msra.mxu0 %v425
        %569 = vmatpush.msra.mxu0 %v424
        %570 = vmatpush.msra.mxu0 %v423
        %571 = vmatpush.msra.mxu0 %v422
        %572 = vmatpush.msra.mxu0 %v421
        %573 = vmatpush.msra.mxu0 %v420
        %574 = vmatpush.msra.mxu0 %v419
        %575 = vmatpush.msra.mxu0 %v418
        %576 = vmatmul.f32.gmra.mxu0 %v351
        %v577 = vpop.f32.mrf.mxu0
        %v578 = vadd.f32 %v558, %v577
        %579 = vdwg.mxu0
        %580 = vmatpush.msra.mxu0 %v449
        %581 = vmatpush.msra.mxu0 %v448
        %582 = vmatpush.msra.mxu0 %v447
        %583 = vmatpush.msra.mxu0 %v446
        %584 = vmatpush.msra.mxu0 %v445
        %585 = vmatpush.msra.mxu0 %v444
        %586 = vmatpush.msra.mxu0 %v443
        %587 = vmatpush.msra.mxu0 %v442
        %588 = vmatpush.msra.mxu0 %v441
        %589 = vmatpush.msra.mxu0 %v440
        %590 = vmatpush.msra.mxu0 %v439
        %591 = vmatpush.msra.mxu0 %v438
        %592 = vmatpush.msra.mxu0 %v437
        %593 = vmatpush.msra.mxu0 %v436
        %594 = vmatpush.msra.mxu0 %v435
        %595 = vmatpush.msra.mxu0 %v434
        %596 = vmatmul.f32.gmra.mxu0 %v352
        %v597 = vpop.f32.mrf.mxu0
        %v598 = vadd.f32 %v578, %v597
        %599 = vdwg.mxu0
        %600 = vmatpush.msra.mxu0 %v465
        %601 = vmatpush.msra.mxu0 %v464
        %602 = vmatpush.msra.mxu0 %v463
        %603 = vmatpush.msra.mxu0 %v462
        %604 = vmatpush.msra.mxu0 %v461
        %605 = vmatpush.msra.mxu0 %v460
        %606 = vmatpush.msra.mxu0 %v459
        %607 = vmatpush.msra.mxu0 %v458
        %608 = vmatpush.msra.mxu0 %v457
        %609 = vmatpush.msra.mxu0 %v456
        %610 = vmatpush.msra.mxu0 %v455
        %611 = vmatpush.msra.mxu0 %v454
        %612 = vmatpush.msra.mxu0 %v453
        %613 = vmatpush.msra.mxu0 %v452
        %614 = vmatpush.msra.mxu0 %v451
        %615 = vmatpush.msra.mxu0 %v450
        %616 = vmatmul.f32.gmra.mxu0 %v353
        %v617 = vpop.f32.mrf.mxu0
        %v618 = vadd.f32 %v598, %v617
        %619 = vdwg.mxu0
        %620 = vmatpush.msra.mxu0 0.0
        %621 = vmatpush.msra.mxu0 0.0
        %622 = vmatpush.msra.mxu0 0.0
        %623 = vmatpush.msra.mxu0 0.0
        %624 = vmatpush.msra.mxu0 0.0
        %625 = vmatpush.msra.mxu0 0.0
        %626 = vmatpush.msra.mxu0 0.0
        %627 = vmatpush.msra.mxu0 0.0
        %628 = vmatpush.msra.mxu0 %v473
        %629 = vmatpush.msra.mxu0 %v472
        %630 = vmatpush.msra.mxu0 %v471
        %631 = vmatpush.msra.mxu0 %v470
        %632 = vmatpush.msra.mxu0 %v469
        %633 = vmatpush.msra.mxu0 %v468
        %634 = vmatpush.msra.mxu0 %v467
        %635 = vmatpush.msra.mxu0 %v466
        %636 = vmatmul.f32.gmra.mxu0 %v478
        %v637 = vpop.f32.mrf.mxu0
        %v638 = vadd.f32 %v618, %v637
        %639 = vdwg.mxu0
        %640 = vst [vmem:[%s221] sm:$0xff] %v638
        %p641 = scmp.lt.s32.totalorder %s19, 1
        %s642 = scalar_select %p641, %s19, 1
        %p643 = scmp.lt.s32.totalorder %s20, 0
        %s644 = scalar_select %p643, %s20, 0
        %s645 = sadd.s32 %s644, %s642
        %s646 = smul.addr %s645, 8
        %s647 = scalar_lea.vmem %s3, %s646
        // Predicated region
        $region37: #{wave_unet_forward.13} parent=31 // pred_check
          %p648 = pneg %p117
        $region38: #{wave_unet_forward.13} parent=31 // pred_check_branch
          %650 = sbr.rel (%p648) target = $region40
        $region39: #{wave_unet_forward.13} parent=31 // pred_region
          _
        $region40: #{wave_unet_forward.13} parent=31 // pred_fallthru
          _
      $region32: #{wave_unet_forward.13} parent=5 // pred_fallthru
        _
      %p651 = scmp.le.s32.totalorder 2, %s10
      // Predicated region
      $region41: #{wave_unet_forward.13} parent=5 // pred_check
        %p652 = pneg %p651
      $region42: #{wave_unet_forward.13} parent=5 // pred_check_branch
        %654 = sbr.rel (%p652) target = $region44
      $region43: #{wave_unet_forward.13} parent=5 // pred_region
        %s655 = ssub.s32 %s10, 2
        // Predicated region
        $region45: #{wave_unet_forward.13} parent=43 // pred_check
          %p656 = pneg %p123
        $region46: #{wave_unet_forward.13} parent=43 // pred_check_branch
          %658 = sbr.rel (%p656) target = $region48
        $region47: #{wave_unet_forward.13} parent=43 // pred_region
          %p659 = scmp.lt.s32.totalorder %s21, 1
          %s660 = scalar_select %p659, %s21, 1
          %p661 = scmp.lt.s32.totalorder %s22, 0
          %s662 = scalar_select %p661, %s22, 0
          %s663 = sadd.s32 %s662, %s660
          %s664 = smul.addr %s663, 8
          %s665 = scalar_lea.vmem %s3, %s664
        $region48: #{wave_unet_forward.13} parent=43 // pred_fallthru
          _
      $region44: #{wave_unet_forward.13} parent=5 // pred_fallthru
        _
    $region6: #{wave_unet_forward.13} parent=1 // loop_footer
      %s14 = sadd.s32 1, %s10
    $region7: #{wave_unet_forward.13} parent=1 // loop_footer_branch
      %9 = sbr.rel target = $region3
    $region8: #{wave_unet_forward.13} parent=1 // loop_exit
      _
    %666 = vsyncpa [#allocation3], 1
    %s667 = scalar_lea.sflag [#allocation3], 1
    %668 = vsyncpa %s667, 1

// kernel: wave_unet_forward.12
$region0: #{wave_unet_forward.12}
  #allocation0 [shape = 'u32[]', space=smem, size = 0x4, offset = 0x4, fixed_abs, tag = 'smem constant byte address 0x4 - core index']
  #allocation1 [shape = 'u32[72,128]{1,0:T(1,128)}', space=vmem, size = 0x9000, scoped, tag = 'internal scratch']
  %s0 = inlined_call_operand.vmem [shape: f32[2,16,2,32], index: 0, kind: input, shape index: {}]
  %s1 = inlined_call_operand.hbm [shape: f32[480,64], index: 1, kind: input, shape index: {}]
  %s2 = inlined_call_operand.vmem [shape: f32[1,64], index: 2, kind: input, shape index: {}]
  %s3 = inlined_call_operand.vmem [shape: f32[2,16,64], index: 3, kind: output, shape index: {}]
  %s4 = sld [smem:[#allocation0]]
  $region49: #{wave_unet_forward.12} parent=0
    _
  %s6 = ssub.s32 1, %s4
  %s7 = scalar_select 0, %s6, %s4
  $region1: #{wave_unet_forward.12} parent=0
    #allocation2 [shape = 'u8[245760]{0}', space=vmem, size = 0x3c000, scoped, tag = 'input window, operand 1, single buffered']
    #allocation3 [shape = 's32[2]{0}', space=sflag, size = 0x8, scoped, tag = 'scoped memory for wave_unet_forward.12']
    %8 = vsyncpa [#allocation3], 0
    loop: start=0, step=1, limit=4
    $region2: #{wave_unet_forward.12} parent=1 // loop_pre_header
      _
    $region3: #{wave_unet_forward.12} parent=1 // loop_header
      %s10 = sphi 0, %s14
      %p11 = scmp.ge.s32.totalorder %s10, 4
      %s17 = sphi 0, %s29
      %s18 = sphi 0, %s25
      %s19 = sphi 0, %s17
      %s20 = sphi 0, %s18
      %s21 = sphi 0, %s19
      %s22 = sphi 0, %s20
      %s34 = sphi 0, %s36
      %s37 = sphi 0, %s34
      %s38 = sphi 0, %s37
      %s54 = sphi 0, %s38
      %s58 = sphi 0, %s58
      %s60 = sphi 0, %s58
      %s61 = sphi 0, %s60
      %s75 = sphi 0, %s61
      %s79 = sphi 0, %s79
      %s81 = sphi 0, %s79
      %s82 = sphi 0, %s81
      %s96 = sphi 0, %s82
      %s104 = sphi 0, %s106
      %s107 = sphi 0, %s104
      %s108 = sphi 0, %s107
      %s124 = sphi 0, %s108
    $region4: #{wave_unet_forward.12} parent=1 // loop_header_branch
      %13 = sbr.rel (%p11) target = $region8
    $region5: #{wave_unet_forward.12} parent=1 // loop_body
      %s15 = ssub.s32 %s10, 1
      %s16 = ssub.s32 %s10, 2
      %s23 = sadd.s32 1, %s18
      %p24 = scmp.ge.s32.totalorder %s23, 1
      %s25 = scalar_select %p24, 0, %s23
      %s26 = sadd.s32 1, %s17
      %s27 = scalar_select %p24, %s26, %s17
      %p28 = scmp.ge.s32.totalorder %s27, 2
      %s29 = scalar_select %p28, 0, %s27
      %s30 = ssub.s32 %s17, %s29
      %s31 = ssub.s32 %s18, %s25
      %s32 = sor.u32 %s30, %s31
      %p33 = scmp.eq.s32.totalorder %s32, 0
      %s35 = sadd.s32 %s34, 1
      %s36 = scalar_select %p33, %s34, %s35
      %p39 = pneg %p33
      %p40 = scmp.eq.s32.totalorder %s10, 1
      %p41 = por %p39, %p40
      %p42 = scmp.ne.s32.totalorder %s34, %s37
      %p43 = scmp.eq.s32.totalorder %s10, 0
      %p44 = por %p42, %p43
      %p45 = scmp.ne.s32.totalorder %s34, %s37
      %p46 = scmp.eq.s32.totalorder %s15, 1
      %p47 = por %p45, %p46
      %p48 = scmp.ne.s32.totalorder %s37, %s38
      %p49 = scmp.eq.s32.totalorder %s15, 0
      %p50 = por %p48, %p49
      %p51 = scmp.ne.s32.totalorder %s37, %s38
      %p52 = scmp.eq.s32.totalorder %s16, 1
      %p53 = por %p51, %p52
      %p55 = scmp.ne.s32.totalorder %s38, %s54
      %p56 = scmp.eq.s32.totalorder %s16, 0
      %p57 = por %p55, %p56
      %s59 = sadd.s32 %s58, 1
      %p62 = scmp.eq.s32.totalorder %s10, 1
      %p63 = scmp.ne.s32.totalorder %s58, %s60
      %p64 = scmp.eq.s32.totalorder %s10, 0
      %p65 = por %p63, %p64
      %p66 = scmp.ne.s32.totalorder %s58, %s60
      %p67 = scmp.eq.s32.totalorder %s15, 1
      %p68 = por %p66, %p67
      %p69 = scmp.ne.s32.totalorder %s60, %s61
      %p70 = scmp.eq.s32.totalorder %s15, 0
      %p71 = por %p69, %p70
      %p72 = scmp.ne.s32.totalorder %s60, %s61
      %p73 = scmp.eq.s32.totalorder %s16, 1
      %p74 = por %p72, %p73
      %p76 = scmp.ne.s32.totalorder %s61, %s75
      %p77 = scmp.eq.s32.totalorder %s16, 0
      %p78 = por %p76, %p77
      %s80 = sadd.s32 %s79, 1
      %p83 = scmp.eq.s32.totalorder %s10, 1
      %p84 = scmp.ne.s32.totalorder %s79, %s81
      %p85 = scmp.eq.s32.totalorder %s10, 0
      %p86 = por %p84, %p85
      %p87 = scmp.ne.s32.totalorder %s79, %s81
      %p88 = scmp.eq.s32.totalorder %s15, 1
      %p89 = por %p87, %p88
      %p90 = scmp.ne.s32.totalorder %s81, %s82
      %p91 = scmp.eq.s32.totalorder %s15, 0
      %p92 = por %p90, %p91
      %p93 = scmp.ne.s32.totalorder %s81, %s82
      %p94 = scmp.eq.s32.totalorder %s16, 1
      %p95 = por %p93, %p94
      %p97 = scmp.ne.s32.totalorder %s82, %s96
      %p98 = scmp.eq.s32.totalorder %s16, 0
      %p99 = por %p97, %p98
      %s100 = ssub.s32 %s17, %s29
      %s101 = ssub.s32 %s18, %s25
      %s102 = sor.u32 %s100, %s101
      %p103 = scmp.eq.s32.totalorder %s102, 0
      %s105 = sadd.s32 %s104, 1
      %s106 = scalar_select %p103, %s104, %s105
      %p109 = pneg %p103
      %p110 = scmp.eq.s32.totalorder %s10, 1
      %p111 = por %p109, %p110
      %p112 = scmp.ne.s32.totalorder %s104, %s107
      %p113 = scmp.eq.s32.totalorder %s10, 0
      %p114 = por %p112, %p113
      %p115 = scmp.ne.s32.totalorder %s104, %s107
      %p116 = scmp.eq.s32.totalorder %s15, 1
      %p117 = por %p115, %p116
      %p118 = scmp.ne.s32.totalorder %s107, %s108
      %p119 = scmp.eq.s32.totalorder %s15, 0
      %p120 = por %p118, %p119
      %p121 = scmp.ne.s32.totalorder %s107, %s108
      %p122 = scmp.eq.s32.totalorder %s16, 1
      %p123 = por %p121, %p122
      %p125 = scmp.ne.s32.totalorder %s108, %s124
      %p126 = scmp.eq.s32.totalorder %s16, 0
      %p127 = por %p125, %p126
      %p128 = scmp.le.s32.totalorder 1, %s10
      %p129 = scmp.lt.s32.totalorder %s10, 3
      %p130 = pnand %p128, %p129
      %p131 = pneg %p130
      // Predicated region
      $region9: #{wave_unet_forward.12} parent=5 // pred_check
        _
      $region10: #{wave_unet_forward.12} parent=5 // pred_check_branch
        %133 = sbr.rel (%p130) target = $region12
      $region11: #{wave_unet_forward.12} parent=5 // pred_region
        %s134 = ssub.s32 %s10, 1
        // Predicated region
        $region13: #{wave_unet_forward.12} parent=11 // pred_check
          %p135 = pneg %p71
        $region14: #{wave_unet_forward.12} parent=11 // pred_check_branch
          %137 = sbr.rel (%p135) target = $region16
        $region15: #{wave_unet_forward.12} parent=11 // pred_region
          %139 = vsyncadd [#allocation3], 0
          %s140 = sshll.u32 %s1, 4
          %s141 = int_to_ptr.hbm [resolvable:$true] %s140
          %s142 = sshll.u32 [#allocation2], 4
          %s143 = int_to_ptr.vmem [resolvable:$true] %s142
          %148 = dma.hbm_to_vmem [thread:$0]  %s141, 7680, %s143, [#allocation3], 128, 128, 8
        $region16: #{wave_unet_forward.12} parent=11 // pred_fallthru
          _
        // Predicated region
        $region17: #{wave_unet_forward.12} parent=11 // pred_check
          %p149 = pneg %p92
        $region18: #{wave_unet_forward.12} parent=11 // pred_check_branch
          %151 = sbr.rel (%p149) target = $region20
        $region19: #{wave_unet_forward.12} parent=11 // pred_region
          _
        $region20: #{wave_unet_forward.12} parent=11 // pred_fallthru
          _
      $region12: #{wave_unet_forward.12} parent=5 // pred_fallthru
        _
      %p152 = scmp.lt.s32.totalorder %s10, 2
      // Predicated region
      $region21: #{wave_unet_forward.12} parent=5 // pred_check
        %p153 = pneg %p152
      $region22: #{wave_unet_forward.12} parent=5 // pred_check_branch
        %155 = sbr.rel (%p153) target = $region24
      $region23: #{wave_unet_forward.12} parent=5 // pred_region
        // Predicated region
        $region25: #{wave_unet_forward.12} parent=23 // pred_check
          %p156 = pneg %p44
        $region26: #{wave_unet_forward.12} parent=23 // pred_check_branch
          %158 = sbr.rel (%p156) target = $region28
        $region27: #{wave_unet_forward.12} parent=23 // pred_region
          %s159 = smul.u32 16, %s18
          %p160 = scmp.lt.s32.totalorder %s17, 1
          %s161 = scalar_select %p160, %s17, 1
          %p162 = scmp.lt.s32.totalorder %s159, 15
          %s163 = scalar_select %p162, %s159, 15
          %s164 = smul.addr %s161, 16
          %s165 = sadd.s32 %s163, %s164
          %s166 = smul.addr %s165, 2
          %s167 = scalar_lea.vmem %s0, %s166
          %s168 = smul.u32 16, %s18
        $region28: #{wave_unet_forward.12} parent=23 // pred_fallthru
          _
      $region24: #{wave_unet_forward.12} parent=5 // pred_fallthru
        _
      %p169 = scmp.le.s32.totalorder 1, %s10
      %p170 = scmp.lt.s32.totalorder %s10, 3
      %p171 = pnand %p169, %p170
      %p172 = pneg %p171
      // Predicated region
      $region29: #{wave_unet_forward.12} parent=5 // pred_check
        _
      $region30: #{wave_unet_forward.12} parent=5 // pred_check_branch
        %174 = sbr.rel (%p171) target = $region32
      $region31: #{wave_unet_forward.12} parent=5 // pred_region
        %s175 = ssub.s32 %s10, 1
        // Predicated region
        $region33: #{wave_unet_forward.12} parent=31 // pred_check
          %p176 = pneg %p71
        $region34: #{wave_unet_forward.12} parent=31 // pred_check_branch
          %178 = sbr.rel (%p176) target = $region36
        $region35: #{wave_unet_forward.12} parent=31 // pred_region
          %180 = dma.done [#allocation3], 7680
        $region36: #{wave_unet_forward.12} parent=31 // pred_fallthru
          _
        %s181 = smul.u32 16, %s20
        %p182 = scmp.lt.s32.totalorder %s19, 1
        %s183 = scalar_select %p182, %s19, 1
        %p184 = scmp.lt.s32.totalorder %s181, 15
        %s185 = scalar_select %p184, %s181, 15
        %s186 = smul.addr %s183, 16
        %s187 = sadd.s32 %s185, %s186
        %s188 = smul.addr %s187, 2
        %s189 = scalar_lea.vmem %s0, %s188
        %p190 = pneg %p50
        %p191 = pneg %p47
        %p192 = pneg %p71
        %p193 = pneg %p68
        %p194 = pneg %p92
        %p195 = pneg %p89
        %p196 = pneg %p120
        %p197 = pneg %p117
        %s198 = smul.u32 2, %s20
        %p199 = scmp.lt.s32.totalorder %s19, 1
        %s200 = scalar_select %p199, %s19, 1
        %p201 = scmp.lt.s32.totalorder %s198, 1
        %s202 = scalar_select %p201, %s198, 1
        %s203 = smul.addr %s200, 2
        %s204 = sadd.s32 %s202, %s203
        %s205 = smul.addr %s204, 8
        %s206 = scalar_lea.vmem %s3, %s205
        %s207 = smul.u32 16, %s20
        %p208 = scmp.lt.s32.totalorder %s19, 1
        %s209 = scalar_select %p208, %s19, 1
        %p210 = scmp.lt.s32.totalorder %s207, 15
        %s211 = scalar_select %p210, %s207, 15
        %s212 = smul.addr %s209, 16
        %s213 = sadd.s32 %s211, %s212
        %s214 = smul.addr %s213, 2
        %s215 = scalar_lea.vmem %s0, %s214
        %s216 = smul.u32 16, %s20
        %s217 = smul.u32 2, %s20
        %p218 = scmp.lt.s32.totalorder %s19, 1
        %s219 = scalar_select %p218, %s19, 1
        %p220 = scmp.lt.s32.totalorder %s217, 1
        %s221 = scalar_select %p220, %s217, 1
        %s222 = smul.addr %s219, 2
        %s223 = sadd.s32 %s221, %s222
        %s224 = smul.addr %s223, 8
        %s225 = scalar_lea.vmem %s3, %s224
        %s226 = smul.u32 2, %s20
        %v227 = vld [vmem:[%s215] sm:$0x1]
        %v228 = vld [vmem:[%s215 + $0x2] sm:$0x1]
        %v229 = vld [vmem:[%s215 + $0x4] sm:$0x1]
        %v230 = vld [vmem:[%s215 + $0x6] sm:$0x1]
        %v231 = vld [vmem:[%s215 + $0x8] sm:$0x1]
        %v232 = vld [vmem:[%s215 + $0xa] sm:$0x1]
        %v233 = vld [vmem:[%s215 + $0xc] sm:$0x1]
        %v234 = vld [vmem:[%s215 + $0xe] sm:$0x1]
        %v235 = vld [vmem:[%s215 + $0x10] sm:$0x1]
        %v236 = vld [vmem:[%s215 + $0x12] sm:$0x1]
        %v237 = vld [vmem:[%s215 + $0x14] sm:$0x1]
        %v238 = vld [vmem:[%s215 + $0x16] sm:$0x1]
        %v239 = vld [vmem:[%s215 + $0x18] sm:$0x1]
        %v240 = vld [vmem:[%s215 + $0x1a] sm:$0x1]
        %v241 = vld [vmem:[%s215 + $0x1c] sm:$0x1]
        %v242 = vld [vmem:[%s215 + $0x1e] sm:$0x1]
        %v243 = vld [vmem:[%s215 + $0x1] sm:$0x1]
        %v244 = vld [vmem:[%s215 + $0x3] sm:$0x1]
        %v245 = vld [vmem:[%s215 + $0x5] sm:$0x1]
        %v246 = vld [vmem:[%s215 + $0x7] sm:$0x1]
        %v247 = vld [vmem:[%s215 + $0x9] sm:$0x1]
        %v248 = vld [vmem:[%s215 + $0xb] sm:$0x1]
        %v249 = vld [vmem:[%s215 + $0xd] sm:$0x1]
        %v250 = vld [vmem:[%s215 + $0xf] sm:$0x1]
        %v251 = vld [vmem:[%s215 + $0x11] sm:$0x1]
        %v252 = vld [vmem:[%s215 + $0x13] sm:$0x1]
        %v253 = vld [vmem:[%s215 + $0x15] sm:$0x1]
        %v254 = vld [vmem:[%s215 + $0x17] sm:$0x1]
        %v255 = vld [vmem:[%s215 + $0x19] sm:$0x1]
        %v256 = vld [vmem:[%s215 + $0x1b] sm:$0x1]
        %v257 = vld [vmem:[%s215 + $0x1d] sm:$0x1]
        %v258 = vld [vmem:[%s215 + $0x1f] sm:$0x1]
        %v259 = vmax.f32 %v227, %v243
        %v260 = vmax.f32 %v228, %v244
        %v261 = vmax.f32 %v229, %v245
        %v262 = vmax.f32 %v230, %v246
        %v263 = vmax.f32 %v231, %v247
        %v264 = vmax.f32 %v232, %v248
        %v265 = vmax.f32 %v233, %v249
        %v266 = vmax.f32 %v234, %v250
        %v267 = vmax.f32 %v235, %v251
        %v268 = vmax.f32 %v236, %v252
        %v269 = vmax.f32 %v237, %v253
        %v270 = vmax.f32 %v238, %v254
        %v271 = vmax.f32 %v239, %v255
        %v272 = vmax.f32 %v240, %v256
        %v273 = vmax.f32 %v241, %v257
        %v274 = vmax.f32 %v242, %v258
        %v291 = vrot.slane %v259, 1
        %v292 = vrot.slane %v261, 7
        %vm293 = vcmask 1041409
        %v294 = vsel %vm293, %v292, %v260
        %v295 = vrot.slane %v262, 6
        %vm296 = vcmask 1042434
        %v297 = vsel %vm296, %v295, %v294
        %v298 = vrot.slane %v263, 5
        %vm299 = vcmask 1043459
        %v300 = vsel %vm299, %v298, %v297
        %v301 = vrot.slane %v264, 4
        %vm302 = vcmask 1044484
        %v303 = vsel %vm302, %v301, %v300
        %v304 = vrot.slane %v265, 3
        %vm305 = vcmask 1045509
        %v306 = vsel %vm305, %v304, %v303
        %v307 = vrot.slane %v266, 2
        %vm308 = vcmask 1046534
        %v309 = vsel %vm308, %v307, %v306
        %v310 = vrot.slane %v267, 1
        %vm311 = vcmask 1047559
        %v312 = vsel %vm311, %v310, %v309
        %v313 = vrot.slane %v269, 7
        %v314 = vsel %vm293, %v313, %v268
        %v315 = vrot.slane %v270, 6
        %v316 = vsel %vm296, %v315, %v314
        %v317 = vrot.slane %v271, 5
        %v318 = vsel %vm299, %v317, %v316
        %v319 = vrot.slane %v272, 4
        %v320 = vsel %vm302, %v319, %v318
        %v321 = vrot.slane %v273, 3
        %v322 = vsel %vm305, %v321, %v320
        %v323 = vrot.slane %v274, 2
        %v324 = vsel %vm308, %v323, %v322
        %vm328 = vcmask 1046528
        %v329 = vsel %vm328, 0.0, %v291
        %v330 = vsel %vm328, %v324, 0.0
        %v333 = vrot.slane %v329, 1
        %v334 = vrot.slane %v312, 1
        %v335 = vsel %vm328, %v333, %v334
        %v336 = vrot.slane %v330, 1
        %v337 = vsel %vm328, %v334, %v336
        %338 = vrot.lane.b32.xlu0 %v335, 32
        %v339 = vpop.permute.xlu0 %338
        %340 = vrot.lane.b32.xlu0 %v337, 32
        %v341 = vpop.permute.xlu0 %340
        %vm344 = vcmask 1045504
        %v345 = vrot.slane %v329, 2
        %v346 = vrot.slane %v312, 2
        %v347 = vsel %vm344, %v345, %v346
        %v348 = vrot.slane %v330, 2
        %v349 = vsel %vm344, %v346, %v348
        %350 = vrot.lane.b32.xlu0 %v347, 64
        %v351 = vpop.permute.xlu0 %350
        %352 = vrot.lane.b32.xlu0 %v349, 64
        %v353 = vpop.permute.xlu0 %352
        %vm356 = vcmask 1044480
        %v357 = vrot.slane %v329, 3
        %v358 = vrot.slane %v312, 3
        %v359 = vsel %vm356, %v357, %v358
        %v360 = vrot.slane %v330, 3
        %v361 = vsel %vm356, %v358, %v360
        %362 = vrot.lane.b32.xlu0 %v359, 96
        %v363 = vpop.permute.xlu0 %362
        %364 = vrot.lane.b32.xlu0 %v361, 96
        %v365 = vpop.permute.xlu0 %364
        %vm368 = vcmask 1043456
        %v369 = vrot.slane %v329, 4
        %v370 = vrot.slane %v312, 4
        %v371 = vsel %vm368, %v369, %v370
        %v372 = vrot.slane %v330, 4
        %v373 = vsel %vm368, %v370, %v372
        %vm376 = vcmask 1042432
        %v377 = vrot.slane %v329, 5
        %v378 = vrot.slane %v312, 5
        %v379 = vsel %vm376, %v377, %v378
        %v380 = vrot.slane %v330, 5
        %v381 = vsel %vm376, %v378, %v380
        %382 = vrot.lane.b32.xlu0 %v379, 32
        %v383 = vpop.permute.xlu0 %382
        %384 = vrot.lane.b32.xlu0 %v381, 32
        %v385 = vpop.permute.xlu0 %384
        %vm388 = vcmask 1041408
        %v389 = vrot.slane %v329, 6
        %v390 = vrot.slane %v312, 6
        %v391 = vsel %vm388, %v389, %v390
        %v392 = vrot.slane %v330, 6
        %v393 = vsel %vm388, %v390, %v392
        %394 = vrot.lane.b32.xlu0 %v391, 64
        %v395 = vpop.permute.xlu0 %394
        %396 = vrot.lane.b32.xlu0 %v393, 64
        %v397 = vpop.permute.xlu0 %396
        %vm400 = vcmask 1040384
        %v401 = vrot.slane %v329, 7
        %v402 = vrot.slane %v312, 7
        %v403 = vsel %vm400, %v401, %v402
        %v404 = vrot.slane %v330, 7
        %v405 = vsel %vm400, %v402, %v404
        %406 = vrot.lane.b32.xlu0 %v403, 96
        %v407 = vpop.permute.xlu0 %406
        %408 = vrot.lane.b32.xlu0 %v405, 96
        %v409 = vpop.permute.xlu0 %408
        %v413 = vrot.slane 0.0, 1
        %v414 = vsel %vm328, %v336, %v413
        %415 = vrot.lane.b32.xlu0 %v414, 32
        %v416 = vpop.permute.xlu0 %415
        %v418 = vrot.slane 0.0, 2
        %v419 = vsel %vm344, %v348, %v418
        %420 = vrot.lane.b32.xlu0 %v419, 64
        %v421 = vpop.permute.xlu0 %420
        %v423 = vrot.slane 0.0, 3
        %v424 = vsel %vm356, %v360, %v423
        %425 = vrot.lane.b32.xlu0 %v424, 96
        %v426 = vpop.permute.xlu0 %425
        %v428 = vrot.slane 0.0, 4
        %v429 = vsel %vm368, %v372, %v428
        %v431 = vrot.slane 0.0, 5
        %v432 = vsel %vm376, %v380, %v431
        %433 = vrot.lane.b32.xlu0 %v432, 32
        %v434 = vpop.permute.xlu0 %433
        %v436 = vrot.slane 0.0, 6
        %v437 = vsel %vm388, %v392, %v436
        %438 = vrot.lane.b32.xlu0 %v437, 64
        %v439 = vpop.permute.xlu0 %438
        %vm441 = vcmask 261120
        %v442 = vsel %vm441, %v329, %v339
        %v443 = vsel %vm441, %v312, %v341
        %vm444 = vcmask 523264
        %v445 = vsel %vm444, %v442, %v351
        %v446 = vsel %vm444, %v443, %v353
        %vm447 = vcmask 785408
        %v448 = vsel %vm447, %v445, %v363
        %v449 = vsel %vm447, %v446, %v365
        %v450 = vsel %vm441, %v371, %v383
        %v451 = vsel %vm441, %v373, %v385
        %v452 = vsel %vm444, %v450, %v395
        %v453 = vsel %vm444, %v451, %v397
        %v454 = vsel %vm447, %v452, %v407
        %v455 = vsel %vm447, %v453, %v409
        %v456 = vsel %vm441, %v330, %v416
        %v457 = vsel %vm444, %v456, %v421
        %v458 = vsel %vm447, %v457, %v426
        %v459 = vsel %vm441, %v429, %v434
        %v460 = vsel %vm444, %v459, %v439
        %v461 = vld [vmem:[#allocation2] sm:$0xff]
        %v462 = vld [vmem:[#allocation2 + $0x8] sm:$0xff]
        %v463 = vld [vmem:[#allocation2 + $0x10] sm:$0xff]
        %v464 = vld [vmem:[#allocation2 + $0x18] sm:$0xff]
        %v465 = vld [vmem:[#allocation2 + $0x20] sm:$0xff]
        %v466 = vld [vmem:[#allocation2 + $0x28] sm:$0xff]
        %v467 = vld [vmem:[#allocation2 + $0x30] sm:$0xff]
        %v468 = vld [vmem:[#allocation2 + $0x38] sm:$0xff]
        %v469 = vld [vmem:[#allocation2 + $0x40] sm:$0xff]
        %v470 = vld [vmem:[#allocation2 + $0x48] sm:$0xff]
        %v471 = vld [vmem:[#allocation2 + $0x50] sm:$0xff]
        %v472 = vld [vmem:[#allocation2 + $0x58] sm:$0xff]
        %v473 = vld [vmem:[#allocation2 + $0x60] sm:$0xff]
        %v474 = vld [vmem:[#allocation2 + $0x68] sm:$0xff]
        %v475 = vld [vmem:[#allocation2 + $0x70] sm:$0xff]
        %v476 = vld [vmem:[#allocation2 + $0x78] sm:$0xff]
        %v477 = vld [vmem:[#allocation2 + $0x80] sm:$0xff]
        %v478 = vld [vmem:[#allocation2 + $0x88] sm:$0xff]
        %v479 = vld [vmem:[#allocation2 + $0x90] sm:$0xff]
        %v480 = vld [vmem:[#allocation2 + $0x98] sm:$0xff]
        %v481 = vld [vmem:[#allocation2 + $0xa0] sm:$0xff]
        %v482 = vld [vmem:[#allocation2 + $0xa8] sm:$0xff]
        %v483 = vld [vmem:[#allocation2 + $0xb0] sm:$0xff]
        %v484 = vld [vmem:[#allocation2 + $0xb8] sm:$0xff]
        %v485 = vld [vmem:[#allocation2 + $0xc0] sm:$0xff]
        %v486 = vld [vmem:[#allocation2 + $0xc8] sm:$0xff]
        %v487 = vld [vmem:[#allocation2 + $0xd0] sm:$0xff]
        %v488 = vld [vmem:[#allocation2 + $0xd8] sm:$0xff]
        %v489 = vld [vmem:[#allocation2 + $0xe0] sm:$0xff]
        %v490 = vld [vmem:[#allocation2 + $0xe8] sm:$0xff]
        %v491 = vld [vmem:[#allocation2 + $0xf0] sm:$0xff]
        %v492 = vld [vmem:[#allocation2 + $0xf8] sm:$0xff]
        %v493 = vld [vmem:[#allocation2 + $0x100] sm:$0xff]
        %v494 = vld [vmem:[#allocation2 + $0x108] sm:$0xff]
        %v495 = vld [vmem:[#allocation2 + $0x110] sm:$0xff]
        %v496 = vld [vmem:[#allocation2 + $0x118] sm:$0xff]
        %v497 = vld [vmem:[#allocation2 + $0x120] sm:$0xff]
        %v498 = vld [vmem:[#allocation2 + $0x128] sm:$0xff]
        %v499 = vld [vmem:[#allocation2 + $0x130] sm:$0xff]
        %v500 = vld [vmem:[#allocation2 + $0x138] sm:$0xff]
        %v501 = vld [vmem:[#allocation2 + $0x140] sm:$0xff]
        %v502 = vld [vmem:[#allocation2 + $0x148] sm:$0xff]
        %v503 = vld [vmem:[#allocation2 + $0x150] sm:$0xff]
        %v504 = vld [vmem:[#allocation2 + $0x158] sm:$0xff]
        %v505 = vld [vmem:[#allocation2 + $0x160] sm:$0xff]
        %v506 = vld [vmem:[#allocation2 + $0x168] sm:$0xff]
        %v507 = vld [vmem:[#allocation2 + $0x170] sm:$0xff]
        %v508 = vld [vmem:[#allocation2 + $0x178] sm:$0xff]
        %v509 = vld [vmem:[#allocation2 + $0x180] sm:$0xff]
        %v510 = vld [vmem:[#allocation2 + $0x188] sm:$0xff]
        %v511 = vld [vmem:[#allocation2 + $0x190] sm:$0xff]
        %v512 = vld [vmem:[#allocation2 + $0x198] sm:$0xff]
        %v513 = vld [vmem:[#allocation2 + $0x1a0] sm:$0xff]
        %v514 = vld [vmem:[#allocation2 + $0x1a8] sm:$0xff]
        %v515 = vld [vmem:[#allocation2 + $0x1b0] sm:$0xff]
        %v516 = vld [vmem:[#allocation2 + $0x1b8] sm:$0xff]
        %v517 = vld [vmem:[#allocation2 + $0x1c0] sm:$0xff]
        %v518 = vld [vmem:[#allocation2 + $0x1c8] sm:$0xff]
        %v519 = vld [vmem:[#allocation2 + $0x1d0] sm:$0xff]
        %v520 = vld [vmem:[#allocation2 + $0x1d8] sm:$0xff]
        %v521 = vld [vmem:[%s2] sm:$0x1]
        %v523 = vperm.slane %v521, 0
        %v526 = vsel %vm447, %v453, 0
        %v529 = vsel %vm447, %v460, 0
        %531 = vmatpush.msra.mxu0 %v476
        %532 = vmatpush.msra.mxu0 %v475
        %533 = vmatpush.msra.mxu0 %v474
        %534 = vmatpush.msra.mxu0 %v473
        %535 = vmatpush.msra.mxu0 %v472
        %536 = vmatpush.msra.mxu0 %v471
        %537 = vmatpush.msra.mxu0 %v470
        %538 = vmatpush.msra.mxu0 %v469
        %539 = vmatpush.msra.mxu0 %v468
        %540 = vmatpush.msra.mxu0 %v467
        %541 = vmatpush.msra.mxu0 %v466
        %542 = vmatpush.msra.mxu0 %v465
        %543 = vmatpush.msra.mxu0 %v464
        %544 = vmatpush.msra.mxu0 %v463
        %545 = vmatpush.msra.mxu0 %v462
        %546 = vmatpush.msra.mxu0 %v461
        %547 = vmatmul.f32.gmra.mxu0 %v448
        %v548 = vpop.f32.mrf.mxu0
        %v549 = vadd.f32 %v523, %v548
        %550 = vmatmul.f32.gmra.mxu0 %v449
        %v551 = vpop.f32.mrf.mxu0
        %v552 = vadd.f32 %v523, %v551
        %553 = vdwg.mxu0
        %554 = vmatpush.msra.mxu0 %v492
        %555 = vmatpush.msra.mxu0 %v491
        %556 = vmatpush.msra.mxu0 %v490
        %557 = vmatpush.msra.mxu0 %v489
        %558 = vmatpush.msra.mxu0 %v488
        %559 = vmatpush.msra.mxu0 %v487
        %560 = vmatpush.msra.mxu0 %v486
        %561 = vmatpush.msra.mxu0 %v485
        %562 = vmatpush.msra.mxu0 %v484
        %563 = vmatpush.msra.mxu0 %v483
        %564 = vmatpush.msra.mxu0 %v482
        %565 = vmatpush.msra.mxu0 %v481
        %566 = vmatpush.msra.mxu0 %v480
        %567 = vmatpush.msra.mxu0 %v479
        %568 = vmatpush.msra.mxu0 %v478
        %569 = vmatpush.msra.mxu0 %v477
        %570 = vmatmul.f32.gmra.mxu0 %v454
        %v571 = vpop.f32.mrf.mxu0
        %v572 = vadd.f32 %v549, %v571
        %573 = vmatmul.f32.gmra.mxu0 %v455
        %v574 = vpop.f32.mrf.mxu0
        %v575 = vadd.f32 %v552, %v574
        %576 = vdwg.mxu0
        %577 = vmatpush.msra.mxu0 %v508
        %578 = vmatpush.msra.mxu0 %v507
        %579 = vmatpush.msra.mxu0 %v506
        %580 = vmatpush.msra.mxu0 %v505
        %581 = vmatpush.msra.mxu0 %v504
        %582 = vmatpush.msra.mxu0 %v503
        %583 = vmatpush.msra.mxu0 %v502
        %584 = vmatpush.msra.mxu0 %v501
        %585 = vmatpush.msra.mxu0 %v500
        %586 = vmatpush.msra.mxu0 %v499
        %587 = vmatpush.msra.mxu0 %v498
        %588 = vmatpush.msra.mxu0 %v497
        %589 = vmatpush.msra.mxu0 %v496
        %590 = vmatpush.msra.mxu0 %v495
        %591 = vmatpush.msra.mxu0 %v494
        %592 = vmatpush.msra.mxu0 %v493
        %593 = vmatmul.f32.gmra.mxu0 %v449
        %v594 = vpop.f32.mrf.mxu0
        %v595 = vadd.f32 %v572, %v594
        %596 = vmatmul.f32.gmra.mxu0 %v458
        %v597 = vpop.f32.mrf.mxu0
        %v598 = vadd.f32 %v575, %v597
        %599 = vdwg.mxu0
        %600 = vmatpush.msra.mxu0 0.0
        %601 = vmatpush.msra.mxu0 0.0
        %602 = vmatpush.msra.mxu0 0.0
        %603 = vmatpush.msra.mxu0 0.0
        %604 = vmatpush.msra.mxu0 %v520
        %605 = vmatpush.msra.mxu0 %v519
        %606 = vmatpush.msra.mxu0 %v518
        %607 = vmatpush.msra.mxu0 %v517
        %608 = vmatpush.msra.mxu0 %v516
        %609 = vmatpush.msra.mxu0 %v515
        %610 = vmatpush.msra.mxu0 %v514
        %611 = vmatpush.msra.mxu0 %v513
        %612 = vmatpush.msra.mxu0 %v512
        %613 = vmatpush.msra.mxu0 %v511
        %614 = vmatpush.msra.mxu0 %v510
        %615 = vmatpush.msra.mxu0 %v509
        %616 = vmatmul.f32.gmra.mxu0 %v526
        %v617 = vpop.f32.mrf.mxu0
        %v618 = vadd.f32 %v595, %v617
        %619 = vmatmul.f32.gmra.mxu0 %v529
        %v620 = vpop.f32.mrf.mxu0
        %v621 = vadd.f32 %v598, %v620
        %622 = vdwg.mxu0
        %v623 = vmax.f32 %v618, 0.0
        %v624 = vmax.f32 %v621, 0.0
        %625 = vst.msk [vmem:[%s225] sm:$0xff] %vm444, %v623
        %626 = vst.msk [vmem:[%s225 + $0x8] sm:$0xff] %vm444, %v624
        %s627 = smul.u32 2, %s20
        %p628 = scmp.lt.s32.totalorder %s19, 1
        %s629 = scalar_select %p628, %s19, 1
        %p630 = scmp.lt.s32.totalorder %s627, 1
        %s631 = scalar_select %p630, %s627, 1
        %s632 = smul.addr %s629, 2
        %s633 = sadd.s32 %s631, %s632
        %s634 = smul.addr %s633, 8
        %s635 = scalar_lea.vmem %s3, %s634
        // Predicated region
        $region37: #{wave_unet_forward.12} parent=31 // pred_check
          %p636 = pneg %p117
        $region38: #{wave_unet_forward.12} parent=31 // pred_check_branch
          %638 = sbr.rel (%p636) target = $region40
        $region39: #{wave_unet_forward.12} parent=31 // pred_region
          %s639 = smul.u32 2, %s20
        $region40: #{wave_unet_forward.12} parent=31 // pred_fallthru
          _
      $region32: #{wave_unet_forward.12} parent=5 // pred_fallthru
        _
      %p640 = scmp.le.s32.totalorder 2, %s10
      // Predicated region
      $region41: #{wave_unet_forward.12} parent=5 // pred_check
        %p641 = pneg %p640
      $region42: #{wave_unet_forward.12} parent=5 // pred_check_branch
        %643 = sbr.rel (%p641) target = $region44
      $region43: #{wave_unet_forward.12} parent=5 // pred_region
        %s644 = ssub.s32 %s10, 2
        // Predicated region
        $region45: #{wave_unet_forward.12} parent=43 // pred_check
          %p645 = pneg %p123
        $region46: #{wave_unet_forward.12} parent=43 // pred_check_branch
          %647 = sbr.rel (%p645) target = $region48
        $region47: #{wave_unet_forward.12} parent=43 // pred_region
          %s648 = smul.u32 2, %s22
          %p649 = scmp.lt.s32.totalorder %s21, 1
          %s650 = scalar_select %p649, %s21, 1
          %p651 = scmp.lt.s32.totalorder %s648, 1
          %s652 = scalar_select %p651, %s648, 1
          %s653 = smul.addr %s650, 2
          %s654 = sadd.s32 %s652, %s653
          %s655 = smul.addr %s654, 8
          %s656 = scalar_lea.vmem %s3, %s655
        $region48: #{wave_unet_forward.12} parent=43 // pred_fallthru
          _
      $region44: #{wave_unet_forward.12} parent=5 // pred_fallthru
        _
    $region6: #{wave_unet_forward.12} parent=1 // loop_footer
      %s14 = sadd.s32 1, %s10
    $region7: #{wave_unet_forward.12} parent=1 // loop_footer_branch
      %9 = sbr.rel target = $region3
    $region8: #{wave_unet_forward.12} parent=1 // loop_exit
      _
    %657 = vsyncpa [#allocation3], 1
    %s658 = scalar_lea.sflag [#allocation3], 1
    %659 = vsyncpa %s658, 1

// kernel: wave_unet_forward.14
$region0: #{wave_unet_forward.14}
  #allocation0 [shape = 'u32[]', space=smem, size = 0x4, offset = 0x4, fixed_abs, tag = 'smem constant byte address 0x4 - core index']
  #allocation1 [shape = 'u32[72,128]{1,0:T(1,128)}', space=vmem, size = 0x9000, scoped, tag = 'internal scratch']
  %s0 = inlined_call_operand.vmem [shape: f32[2,8,128], index: 0, kind: input, shape index: {}]
  %s1 = inlined_call_operand.vmem [shape: f32[8,6], index: 1, kind: input, shape index: {}]
  %s2 = inlined_call_operand.vmem [shape: f32[2,8,256], index: 2, kind: output, shape index: {}]
  %s3 = sld [smem:[#allocation0]]
  $region41: #{wave_unet_forward.14} parent=0
    _
  %s5 = ssub.s32 1, %s3
  %s6 = scalar_select 0, %s5, %s3
  loop: start=0, step=1, limit=4
  $region2: #{wave_unet_forward.14} parent=0 // loop_pre_header
    _
  $region3: #{wave_unet_forward.14} parent=0 // loop_header
    %s8 = sphi 0, %s12
    %p9 = scmp.ge.s32.totalorder %s8, 4
    %s18 = sphi 0, %s20
    %s21 = sphi 0, %s18
    %s22 = sphi 0, %s21
    %s38 = sphi 0, %s22
    %s42 = sphi 0, %s42
    %s44 = sphi 0, %s42
    %s45 = sphi 0, %s44
    %s59 = sphi 0, %s45
    %s65 = sphi 0, %s67
    %s68 = sphi 0, %s65
    %s69 = sphi 0, %s68
    %s85 = sphi 0, %s69
  $region4: #{wave_unet_forward.14} parent=0 // loop_header_branch
    %11 = sbr.rel (%p9) target = $region8
  $region5: #{wave_unet_forward.14} parent=0 // loop_body
    %s13 = ssub.s32 %s8, 1
    %s14 = ssub.s32 %s8, 2
    %s15 = sadd.s32 %s8, 1
    %s16 = ssub.s32 %s8, %s15
    %p17 = scmp.eq.s32.totalorder %s16, 0
    %s19 = sadd.s32 %s18, 1
    %s20 = scalar_select %p17, %s18, %s19
    %p23 = pneg %p17
    %p24 = scmp.eq.s32.totalorder %s8, 1
    %p25 = por %p23, %p24
    %p26 = scmp.ne.s32.totalorder %s18, %s21
    %p27 = scmp.eq.s32.totalorder %s8, 0
    %p28 = por %p26, %p27
    %p29 = scmp.ne.s32.totalorder %s18, %s21
    %p30 = scmp.eq.s32.totalorder %s13, 1
    %p31 = por %p29, %p30
    %p32 = scmp.ne.s32.totalorder %s21, %s22
    %p33 = scmp.eq.s32.totalorder %s13, 0
    %p34 = por %p32, %p33
    %p35 = scmp.ne.s32.totalorder %s21, %s22
    %p36 = scmp.eq.s32.totalorder %s14, 1
    %p37 = por %p35, %p36
    %p39 = scmp.ne.s32.totalorder %s22, %s38
    %p40 = scmp.eq.s32.totalorder %s14, 0
    %p41 = por %p39, %p40
    %s43 = sadd.s32 %s42, 1
    %p46 = scmp.eq.s32.totalorder %s8, 1
    %p47 = scmp.ne.s32.totalorder %s42, %s44
    %p48 = scmp.eq.s32.totalorder %s8, 0
    %p49 = por %p47, %p48
    %p50 = scmp.ne.s32.totalorder %s42, %s44
    %p51 = scmp.eq.s32.totalorder %s13, 1
    %p52 = por %p50, %p51
    %p53 = scmp.ne.s32.totalorder %s44, %s45
    %p54 = scmp.eq.s32.totalorder %s13, 0
    %p55 = por %p53, %p54
    %p56 = scmp.ne.s32.totalorder %s44, %s45
    %p57 = scmp.eq.s32.totalorder %s14, 1
    %p58 = por %p56, %p57
    %p60 = scmp.ne.s32.totalorder %s45, %s59
    %p61 = scmp.eq.s32.totalorder %s14, 0
    %p62 = por %p60, %p61
    %s63 = ssub.s32 %s8, %s15
    %p64 = scmp.eq.s32.totalorder %s63, 0
    %s66 = sadd.s32 %s65, 1
    %s67 = scalar_select %p64, %s65, %s66
    %p70 = pneg %p64
    %p71 = scmp.eq.s32.totalorder %s8, 1
    %p72 = por %p70, %p71
    %p73 = scmp.ne.s32.totalorder %s65, %s68
    %p74 = scmp.eq.s32.totalorder %s8, 0
    %p75 = por %p73, %p74
    %p76 = scmp.ne.s32.totalorder %s65, %s68
    %p77 = scmp.eq.s32.totalorder %s13, 1
    %p78 = por %p76, %p77
    %p79 = scmp.ne.s32.totalorder %s68, %s69
    %p80 = scmp.eq.s32.totalorder %s13, 0
    %p81 = por %p79, %p80
    %p82 = scmp.ne.s32.totalorder %s68, %s69
    %p83 = scmp.eq.s32.totalorder %s14, 1
    %p84 = por %p82, %p83
    %p86 = scmp.ne.s32.totalorder %s69, %s85
    %p87 = scmp.eq.s32.totalorder %s14, 0
    %p88 = por %p86, %p87
    %p89 = scmp.le.s32.totalorder 1, %s8
    %p90 = scmp.lt.s32.totalorder %s8, 3
    %p91 = pnand %p89, %p90
    %p92 = pneg %p91
    // Predicated region
    $region9: #{wave_unet_forward.14} parent=5 // pred_check
      _
    $region10: #{wave_unet_forward.14} parent=5 // pred_check_branch
      %94 = sbr.rel (%p91) target = $region12
    $region11: #{wave_unet_forward.14} parent=5 // pred_region
      %s95 = ssub.s32 %s8, 1
      // Predicated region
      $region13: #{wave_unet_forward.14} parent=11 // pred_check
        %p96 = pneg %p55
      $region14: #{wave_unet_forward.14} parent=11 // pred_check_branch
        %98 = sbr.rel (%p96) target = $region16
      $region15: #{wave_unet_forward.14} parent=11 // pred_region
        _
      $region16: #{wave_unet_forward.14} parent=11 // pred_fallthru
        _
    $region12: #{wave_unet_forward.14} parent=5 // pred_fallthru
      _
    %p99 = scmp.lt.s32.totalorder %s8, 2
    // Predicated region
    $region17: #{wave_unet_forward.14} parent=5 // pred_check
      %p100 = pneg %p99
    $region18: #{wave_unet_forward.14} parent=5 // pred_check_branch
      %102 = sbr.rel (%p100) target = $region20
    $region19: #{wave_unet_forward.14} parent=5 // pred_region
      // Predicated region
      $region21: #{wave_unet_forward.14} parent=19 // pred_check
        %p103 = pneg %p28
      $region22: #{wave_unet_forward.14} parent=19 // pred_check_branch
        %105 = sbr.rel (%p103) target = $region24
      $region23: #{wave_unet_forward.14} parent=19 // pred_region
        %p106 = scmp.lt.s32.totalorder %s8, 1
        %s107 = scalar_select %p106, %s8, 1
        %s108 = smul.addr %s107, 8
        %s109 = scalar_lea.vmem %s0, %s108
      $region24: #{wave_unet_forward.14} parent=19 // pred_fallthru
        _
    $region20: #{wave_unet_forward.14} parent=5 // pred_fallthru
      _
    %p110 = scmp.le.s32.totalorder 1, %s8
    %p111 = scmp.lt.s32.totalorder %s8, 3
    %p112 = pnand %p110, %p111
    %p113 = pneg %p112
    // Predicated region
    $region25: #{wave_unet_forward.14} parent=5 // pred_check
      _
    $region26: #{wave_unet_forward.14} parent=5 // pred_check_branch
      %115 = sbr.rel (%p112) target = $region28
    $region27: #{wave_unet_forward.14} parent=5 // pred_region
      %s116 = ssub.s32 %s8, 1
      %p117 = scmp.lt.s32.totalorder %s13, 1
      %s118 = scalar_select %p117, %s13, 1
      %s119 = smul.addr %s118, 8
      %s120 = scalar_lea.vmem %s0, %s119
      %p121 = pneg %p34
      %p122 = pneg %p31
      %p123 = pneg %p55
      %p124 = pneg %p52
      %p125 = pneg %p81
      %p126 = pneg %p78
      %p127 = scmp.lt.s32.totalorder %s13, 1
      %s128 = scalar_select %p127, %s13, 1
      %s129 = smul.addr %s128, 2
      %s130 = smul.addr %s129, 8
      %s131 = scalar_lea.vmem %s2, %s130
      %p132 = scmp.lt.s32.totalorder %s13, 1
      %s133 = scalar_select %p132, %s13, 1
      %s134 = smul.addr %s133, 8
      %s135 = scalar_lea.vmem %s0, %s134
      %p136 = scmp.lt.s32.totalorder %s13, 1
      %s137 = scalar_select %p136, %s13, 1
      %s138 = smul.addr %s137, 2
      %s139 = smul.addr %s138, 8
      %s140 = scalar_lea.vmem %s2, %s139
      %v141 = vld [vmem:[%s135] sm:$0xff]
      %v142 = vld [vmem:[%s1] sm:$0xff]
      %v144 = vrot.slane %v141, 7
      %vm146 = vcmask 1040384
      %v147 = vsel %vm146, 0.0, %v144
      %v148 = vrot.slane %v141, 1
      %vm150 = vcmask 1046528
      %v151 = vsel %vm150, %v148, 0.0
      %153 = vset.pattern.permute.xlu0 0
      %154 = vperm.xlu0 %153, %v142
      %v155 = vpop.permute.xlu0 %154
      %v157 = vmul.f32 %v155, %v147
      %158 = vset.pattern.permute.xlu0 1
      %159 = vperm.xlu0 %158, %v142
      %v160 = vpop.permute.xlu0 %159
      %v162 = vmul.f32 %v160, %v141
      %v163 = vadd.f32 %v157, %v162
      %164 = vset.pattern.permute.xlu0 2
      %165 = vperm.xlu0 %164, %v142
      %v166 = vpop.permute.xlu0 %165
      %v168 = vmul.f32 %v166, %v151
      %v169 = vadd.f32 %v163, %v168
      %170 = vset.pattern.permute.xlu0 3
      %171 = vperm.xlu0 %170, %v142
      %v172 = vpop.permute.xlu0 %171
      %v174 = vmul.f32 %v172, %v147
      %175 = vset.pattern.permute.xlu0 4
      %176 = vperm.xlu0 %175, %v142
      %v177 = vpop.permute.xlu0 %176
      %v179 = vmul.f32 %v177, %v141
      %v180 = vadd.f32 %v174, %v179
      %181 = vset.pattern.permute.xlu0 5
      %182 = vperm.xlu0 %181, %v142
      %v183 = vpop.permute.xlu0 %182
      %v185 = vmul.f32 %v183, %v151
      %v186 = vadd.f32 %v180, %v185
      %187 = vst [vmem:[%s140] sm:$0xff] %v169
      %188 = vst [vmem:[%s140 + $0x8] sm:$0xff] %v186
      %p189 = scmp.lt.s32.totalorder %s13, 1
      %s190 = scalar_select %p189, %s13, 1
      %s191 = smul.addr %s190, 2
      %s192 = smul.addr %s191, 8
      %s193 = scalar_lea.vmem %s2, %s192
      // Predicated region
      $region29: #{wave_unet_forward.14} parent=27 // pred_check
        %p194 = pneg %p78
      $region30: #{wave_unet_forward.14} parent=27 // pred_check_branch
        %196 = sbr.rel (%p194) target = $region32
      $region31: #{wave_unet_forward.14} parent=27 // pred_region
        _
      $region32: #{wave_unet_forward.14} parent=27 // pred_fallthru
        _
    $region28: #{wave_unet_forward.14} parent=5 // pred_fallthru
      _
    %p197 = scmp.le.s32.totalorder 2, %s8
    // Predicated region
    $region33: #{wave_unet_forward.14} parent=5 // pred_check
      %p198 = pneg %p197
    $region34: #{wave_unet_forward.14} parent=5 // pred_check_branch
      %200 = sbr.rel (%p198) target = $region36
    $region35: #{wave_unet_forward.14} parent=5 // pred_region
      %s201 = ssub.s32 %s8, 2
      // Predicated region
      $region37: #{wave_unet_forward.14} parent=35 // pred_check
        %p202 = pneg %p84
      $region38: #{wave_unet_forward.14} parent=35 // pred_check_branch
        %204 = sbr.rel (%p202) target = $region40
      $region39: #{wave_unet_forward.14} parent=35 // pred_region
        %p205 = scmp.lt.s32.totalorder %s14, 1
        %s206 = scalar_select %p205, %s14, 1
        %s207 = smul.addr %s206, 2
        %s208 = smul.addr %s207, 8
        %s209 = scalar_lea.vmem %s2, %s208
      $region40: #{wave_unet_forward.14} parent=35 // pred_fallthru
        _
    $region36: #{wave_unet_forward.14} parent=5 // pred_fallthru
      _
  $region6: #{wave_unet_forward.14} parent=0 // loop_footer
    %s12 = sadd.s32 1, %s8
  $region7: #{wave_unet_forward.14} parent=0 // loop_footer_branch
    %7 = sbr.rel target = $region3
  $region8: #{wave_unet_forward.14} parent=0 // loop_exit
    _

// kernel: wave_unet_forward.16
$region0: #{wave_unet_forward.16}
  #allocation0 [shape = 'u32[]', space=smem, size = 0x4, offset = 0x4, fixed_abs, tag = 'smem constant byte address 0x4 - core index']
  #allocation1 [shape = 'u32[72,128]{1,0:T(1,128)}', space=vmem, size = 0x9000, scoped, tag = 'internal scratch']
  %s0 = inlined_call_operand.vmem [shape: f32[2,16,64], index: 0, kind: input, shape index: {}]
  %s1 = inlined_call_operand.vmem [shape: f32[16,6], index: 1, kind: input, shape index: {}]
  %s2 = inlined_call_operand.vmem [shape: f32[2,16,128], index: 2, kind: output, shape index: {}]
  %s3 = sld [smem:[#allocation0]]
  $region41: #{wave_unet_forward.16} parent=0
    _
  %s5 = ssub.s32 1, %s3
  %s6 = scalar_select 0, %s5, %s3
  loop: start=0, step=1, limit=4
  $region2: #{wave_unet_forward.16} parent=0 // loop_pre_header
    _
  $region3: #{wave_unet_forward.16} parent=0 // loop_header
    %s8 = sphi 0, %s12
    %p9 = scmp.ge.s32.totalorder %s8, 4
    %s18 = sphi 0, %s20
    %s21 = sphi 0, %s18
    %s22 = sphi 0, %s21
    %s38 = sphi 0, %s22
    %s42 = sphi 0, %s42
    %s44 = sphi 0, %s42
    %s45 = sphi 0, %s44
    %s59 = sphi 0, %s45
    %s65 = sphi 0, %s67
    %s68 = sphi 0, %s65
    %s69 = sphi 0, %s68
    %s85 = sphi 0, %s69
  $region4: #{wave_unet_forward.16} parent=0 // loop_header_branch
    %11 = sbr.rel (%p9) target = $region8
  $region5: #{wave_unet_forward.16} parent=0 // loop_body
    %s13 = ssub.s32 %s8, 1
    %s14 = ssub.s32 %s8, 2
    %s15 = sadd.s32 %s8, 1
    %s16 = ssub.s32 %s8, %s15
    %p17 = scmp.eq.s32.totalorder %s16, 0
    %s19 = sadd.s32 %s18, 1
    %s20 = scalar_select %p17, %s18, %s19
    %p23 = pneg %p17
    %p24 = scmp.eq.s32.totalorder %s8, 1
    %p25 = por %p23, %p24
    %p26 = scmp.ne.s32.totalorder %s18, %s21
    %p27 = scmp.eq.s32.totalorder %s8, 0
    %p28 = por %p26, %p27
    %p29 = scmp.ne.s32.totalorder %s18, %s21
    %p30 = scmp.eq.s32.totalorder %s13, 1
    %p31 = por %p29, %p30
    %p32 = scmp.ne.s32.totalorder %s21, %s22
    %p33 = scmp.eq.s32.totalorder %s13, 0
    %p34 = por %p32, %p33
    %p35 = scmp.ne.s32.totalorder %s21, %s22
    %p36 = scmp.eq.s32.totalorder %s14, 1
    %p37 = por %p35, %p36
    %p39 = scmp.ne.s32.totalorder %s22, %s38
    %p40 = scmp.eq.s32.totalorder %s14, 0
    %p41 = por %p39, %p40
    %s43 = sadd.s32 %s42, 1
    %p46 = scmp.eq.s32.totalorder %s8, 1
    %p47 = scmp.ne.s32.totalorder %s42, %s44
    %p48 = scmp.eq.s32.totalorder %s8, 0
    %p49 = por %p47, %p48
    %p50 = scmp.ne.s32.totalorder %s42, %s44
    %p51 = scmp.eq.s32.totalorder %s13, 1
    %p52 = por %p50, %p51
    %p53 = scmp.ne.s32.totalorder %s44, %s45
    %p54 = scmp.eq.s32.totalorder %s13, 0
    %p55 = por %p53, %p54
    %p56 = scmp.ne.s32.totalorder %s44, %s45
    %p57 = scmp.eq.s32.totalorder %s14, 1
    %p58 = por %p56, %p57
    %p60 = scmp.ne.s32.totalorder %s45, %s59
    %p61 = scmp.eq.s32.totalorder %s14, 0
    %p62 = por %p60, %p61
    %s63 = ssub.s32 %s8, %s15
    %p64 = scmp.eq.s32.totalorder %s63, 0
    %s66 = sadd.s32 %s65, 1
    %s67 = scalar_select %p64, %s65, %s66
    %p70 = pneg %p64
    %p71 = scmp.eq.s32.totalorder %s8, 1
    %p72 = por %p70, %p71
    %p73 = scmp.ne.s32.totalorder %s65, %s68
    %p74 = scmp.eq.s32.totalorder %s8, 0
    %p75 = por %p73, %p74
    %p76 = scmp.ne.s32.totalorder %s65, %s68
    %p77 = scmp.eq.s32.totalorder %s13, 1
    %p78 = por %p76, %p77
    %p79 = scmp.ne.s32.totalorder %s68, %s69
    %p80 = scmp.eq.s32.totalorder %s13, 0
    %p81 = por %p79, %p80
    %p82 = scmp.ne.s32.totalorder %s68, %s69
    %p83 = scmp.eq.s32.totalorder %s14, 1
    %p84 = por %p82, %p83
    %p86 = scmp.ne.s32.totalorder %s69, %s85
    %p87 = scmp.eq.s32.totalorder %s14, 0
    %p88 = por %p86, %p87
    %p89 = scmp.le.s32.totalorder 1, %s8
    %p90 = scmp.lt.s32.totalorder %s8, 3
    %p91 = pnand %p89, %p90
    %p92 = pneg %p91
    // Predicated region
    $region9: #{wave_unet_forward.16} parent=5 // pred_check
      _
    $region10: #{wave_unet_forward.16} parent=5 // pred_check_branch
      %94 = sbr.rel (%p91) target = $region12
    $region11: #{wave_unet_forward.16} parent=5 // pred_region
      %s95 = ssub.s32 %s8, 1
      // Predicated region
      $region13: #{wave_unet_forward.16} parent=11 // pred_check
        %p96 = pneg %p55
      $region14: #{wave_unet_forward.16} parent=11 // pred_check_branch
        %98 = sbr.rel (%p96) target = $region16
      $region15: #{wave_unet_forward.16} parent=11 // pred_region
        _
      $region16: #{wave_unet_forward.16} parent=11 // pred_fallthru
        _
    $region12: #{wave_unet_forward.16} parent=5 // pred_fallthru
      _
    %p99 = scmp.lt.s32.totalorder %s8, 2
    // Predicated region
    $region17: #{wave_unet_forward.16} parent=5 // pred_check
      %p100 = pneg %p99
    $region18: #{wave_unet_forward.16} parent=5 // pred_check_branch
      %102 = sbr.rel (%p100) target = $region20
    $region19: #{wave_unet_forward.16} parent=5 // pred_region
      // Predicated region
      $region21: #{wave_unet_forward.16} parent=19 // pred_check
        %p103 = pneg %p28
      $region22: #{wave_unet_forward.16} parent=19 // pred_check_branch
        %105 = sbr.rel (%p103) target = $region24
      $region23: #{wave_unet_forward.16} parent=19 // pred_region
        %p106 = scmp.lt.s32.totalorder %s8, 1
        %s107 = scalar_select %p106, %s8, 1
        %s108 = smul.addr %s107, 2
        %s109 = smul.addr %s108, 8
        %s110 = scalar_lea.vmem %s0, %s109
      $region24: #{wave_unet_forward.16} parent=19 // pred_fallthru
        _
    $region20: #{wave_unet_forward.16} parent=5 // pred_fallthru
      _
    %p111 = scmp.le.s32.totalorder 1, %s8
    %p112 = scmp.lt.s32.totalorder %s8, 3
    %p113 = pnand %p111, %p112
    %p114 = pneg %p113
    // Predicated region
    $region25: #{wave_unet_forward.16} parent=5 // pred_check
      _
    $region26: #{wave_unet_forward.16} parent=5 // pred_check_branch
      %116 = sbr.rel (%p113) target = $region28
    $region27: #{wave_unet_forward.16} parent=5 // pred_region
      %s117 = ssub.s32 %s8, 1
      %p118 = scmp.lt.s32.totalorder %s13, 1
      %s119 = scalar_select %p118, %s13, 1
      %s120 = smul.addr %s119, 2
      %s121 = smul.addr %s120, 8
      %s122 = scalar_lea.vmem %s0, %s121
      %p123 = pneg %p34
      %p124 = pneg %p31
      %p125 = pneg %p55
      %p126 = pneg %p52
      %p127 = pneg %p81
      %p128 = pneg %p78
      %p129 = scmp.lt.s32.totalorder %s13, 1
      %s130 = scalar_select %p129, %s13, 1
      %s131 = smul.addr %s130, 2
      %s132 = smul.addr %s131, 8
      %s133 = scalar_lea.vmem %s2, %s132
      %p134 = scmp.lt.s32.totalorder %s13, 1
      %s135 = scalar_select %p134, %s13, 1
      %s136 = smul.addr %s135, 2
      %s137 = smul.addr %s136, 8
      %s138 = scalar_lea.vmem %s0, %s137
      %p139 = scmp.lt.s32.totalorder %s13, 1
      %s140 = scalar_select %p139, %s13, 1
      %s141 = smul.addr %s140, 2
      %s142 = smul.addr %s141, 8
      %s143 = scalar_lea.vmem %s2, %s142
      %v144 = vld [vmem:[%s138] sm:$0xff]
      %v145 = vld [vmem:[%s138 + $0x8] sm:$0xff]
      %v146 = vld [vmem:[%s1] sm:$0xff]
      %v147 = vld [vmem:[%s1 + $0x8] sm:$0xff]
      %vm150 = vcmask 1040384
      %v151 = vrot.slane %v144, 7
      %v152 = vrot.slane %v145, 7
      %v153 = vsel %vm150, %v151, %v152
      %v156 = vsel %vm150, 0.0, %v151
      %vm157 = vcmask 1046528
      %v158 = vrot.slane %v144, 1
      %v159 = vrot.slane %v145, 1
      %v160 = vsel %vm157, %v158, %v159
      %v163 = vsel %vm157, %v159, 0.0
      %165 = vset.pattern.permute.xlu0 0
      %166 = vperm.xlu0 %165, %v146
      %v167 = vpop.permute.xlu0 %166
      %170 = vset.pattern.permute.xlu0 0
      %171 = vperm.xlu0 %170, %v147
      %v172 = vpop.permute.xlu0 %171
      %v174 = vmul.f32 %v167, %v156
      %v175 = vmul.f32 %v172, %v153
      %176 = vset.pattern.permute.xlu0 1
      %177 = vperm.xlu0 %176, %v146
      %v178 = vpop.permute.xlu0 %177
      %180 = vset.pattern.permute.xlu0 1
      %181 = vperm.xlu0 %180, %v147
      %v182 = vpop.permute.xlu0 %181
      %v184 = vmul.f32 %v178, %v144
      %v185 = vmul.f32 %v182, %v145
      %v186 = vadd.f32 %v174, %v184
      %v187 = vadd.f32 %v175, %v185
      %188 = vset.pattern.permute.xlu0 2
      %189 = vperm.xlu0 %188, %v146
      %v190 = vpop.permute.xlu0 %189
      %192 = vset.pattern.permute.xlu0 2
      %193 = vperm.xlu0 %192, %v147
      %v194 = vpop.permute.xlu0 %193
      %v196 = vmul.f32 %v190, %v160
      %v197 = vmul.f32 %v194, %v163
      %v198 = vadd.f32 %v186, %v196
      %v199 = vadd.f32 %v187, %v197
      %200 = vset.pattern.permute.xlu0 3
      %201 = vperm.xlu0 %200, %v146
      %v202 = vpop.permute.xlu0 %201
      %204 = vset.pattern.permute.xlu0 3
      %205 = vperm.xlu0 %204, %v147
      %v206 = vpop.permute.xlu0 %205
      %v208 = vmul.f32 %v202, %v156
      %v209 = vmul.f32 %v206, %v153
      %210 = vset.pattern.permute.xlu0 4
      %211 = vperm.xlu0 %210, %v146
      %v212 = vpop.permute.xlu0 %211
      %214 = vset.pattern.permute.xlu0 4
      %215 = vperm.xlu0 %214, %v147
      %v216 = vpop.permute.xlu0 %215
      %v218 = vmul.f32 %v212, %v144
      %v219 = vmul.f32 %v216, %v145
      %v220 = vadd.f32 %v208, %v218
      %v221 = vadd.f32 %v209, %v219
      %222 = vset.pattern.permute.xlu0 5
      %223 = vperm.xlu0 %222, %v146
      %v224 = vpop.permute.xlu0 %223
      %226 = vset.pattern.permute.xlu0 5
      %227 = vperm.xlu0 %226, %v147
      %v228 = vpop.permute.xlu0 %227
      %v230 = vmul.f32 %v224, %v160
      %v231 = vmul.f32 %v228, %v163
      %v232 = vadd.f32 %v220, %v230
      %v233 = vadd.f32 %v221, %v231
      %236 = vrot.lane.b32.xlu0 %v232, 64
      %v237 = vpop.permute.xlu0 %236
      %238 = vrot.lane.b32.xlu0 %v233, 64
      %v239 = vpop.permute.xlu0 %238
      %vm242 = vcmask 523264
      %v243 = vsel %vm242, %v198, %v237
      %v244 = vsel %vm242, %v199, %v239
      %245 = vst [vmem:[%s143] sm:$0xff] %v243
      %246 = vst [vmem:[%s143 + $0x8] sm:$0xff] %v244
      %p247 = scmp.lt.s32.totalorder %s13, 1
      %s248 = scalar_select %p247, %s13, 1
      %s249 = smul.addr %s248, 2
      %s250 = smul.addr %s249, 8
      %s251 = scalar_lea.vmem %s2, %s250
      // Predicated region
      $region29: #{wave_unet_forward.16} parent=27 // pred_check
        %p252 = pneg %p78
      $region30: #{wave_unet_forward.16} parent=27 // pred_check_branch
        %254 = sbr.rel (%p252) target = $region32
      $region31: #{wave_unet_forward.16} parent=27 // pred_region
        _
      $region32: #{wave_unet_forward.16} parent=27 // pred_fallthru
        _
    $region28: #{wave_unet_forward.16} parent=5 // pred_fallthru
      _
    %p255 = scmp.le.s32.totalorder 2, %s8
    // Predicated region
    $region33: #{wave_unet_forward.16} parent=5 // pred_check
      %p256 = pneg %p255
    $region34: #{wave_unet_forward.16} parent=5 // pred_check_branch
      %258 = sbr.rel (%p256) target = $region36
    $region35: #{wave_unet_forward.16} parent=5 // pred_region
      %s259 = ssub.s32 %s8, 2
      // Predicated region
      $region37: #{wave_unet_forward.16} parent=35 // pred_check
        %p260 = pneg %p84
      $region38: #{wave_unet_forward.16} parent=35 // pred_check_branch
        %262 = sbr.rel (%p260) target = $region40
      $region39: #{wave_unet_forward.16} parent=35 // pred_region
        %p263 = scmp.lt.s32.totalorder %s14, 1
        %s264 = scalar_select %p263, %s14, 1
        %s265 = smul.addr %s264, 2
        %s266 = smul.addr %s265, 8
        %s267 = scalar_lea.vmem %s2, %s266
      $region40: #{wave_unet_forward.16} parent=35 // pred_fallthru
        _
    $region36: #{wave_unet_forward.16} parent=5 // pred_fallthru
      _
  $region6: #{wave_unet_forward.16} parent=0 // loop_footer
    %s12 = sadd.s32 1, %s8
  $region7: #{wave_unet_forward.16} parent=0 // loop_footer_branch
    %7 = sbr.rel target = $region3
  $region8: #{wave_unet_forward.16} parent=0 // loop_exit
    _

// kernel: wave_unet_forward.15
$region0: #{wave_unet_forward.15}
  #allocation0 [shape = 'u32[]', space=smem, size = 0x4, offset = 0x4, fixed_abs, tag = 'smem constant byte address 0x4 - core index']
  #allocation1 [shape = 'u32[72,128]{1,0:T(1,128)}', space=vmem, size = 0x9000, scoped, tag = 'internal scratch']
  %s0 = inlined_call_operand.vmem [shape: f32[2,16,128], index: 0, kind: input, shape index: {}]
  %s1 = inlined_call_operand.vmem [shape: f32[2,16,64], index: 1, kind: input, shape index: {}]
  %s2 = inlined_call_operand.vmem [shape: f32[1920,64], index: 2, kind: input, shape index: {}]
  %s3 = inlined_call_operand.vmem [shape: f32[960,64], index: 3, kind: input, shape index: {}]
  %s4 = inlined_call_operand.vmem [shape: f32[1,64], index: 4, kind: input, shape index: {}]
  %s5 = inlined_call_operand.vmem [shape: f32[2,16,64], index: 5, kind: output, shape index: {}]
  %s6 = sld [smem:[#allocation0]]
  $region53: #{wave_unet_forward.15} parent=0
    _
  %s8 = ssub.s32 1, %s6
  %s9 = scalar_select 0, %s8, %s6
  loop: start=0, step=1, limit=4
  $region2: #{wave_unet_forward.15} parent=0 // loop_pre_header
    _
  $region3: #{wave_unet_forward.15} parent=0 // loop_header
    %s11 = sphi 0, %s15
    %p12 = scmp.ge.s32.totalorder %s11, 4
    %s18 = sphi 0, %s30
    %s19 = sphi 0, %s26
    %s20 = sphi 0, %s18
    %s21 = sphi 0, %s19
    %s22 = sphi 0, %s20
    %s23 = sphi 0, %s21
    %s35 = sphi 0, %s37
    %s38 = sphi 0, %s35
    %s39 = sphi 0, %s38
    %s55 = sphi 0, %s39
    %s63 = sphi 0, %s65
    %s66 = sphi 0, %s63
    %s67 = sphi 0, %s66
    %s83 = sphi 0, %s67
    %s87 = sphi 0, %s87
    %s89 = sphi 0, %s87
    %s90 = sphi 0, %s89
    %s104 = sphi 0, %s90
    %s108 = sphi 0, %s108
    %s110 = sphi 0, %s108
    %s111 = sphi 0, %s110
    %s125 = sphi 0, %s111
    %s129 = sphi 0, %s129
    %s131 = sphi 0, %s129
    %s132 = sphi 0, %s131
    %s146 = sphi 0, %s132
    %s154 = sphi 0, %s156
    %s157 = sphi 0, %s154
    %s158 = sphi 0, %s157
    %s174 = sphi 0, %s158
  $region4: #{wave_unet_forward.15} parent=0 // loop_header_branch
    %14 = sbr.rel (%p12) target = $region8
  $region5: #{wave_unet_forward.15} parent=0 // loop_body
    %s16 = ssub.s32 %s11, 1
    %s17 = ssub.s32 %s11, 2
    %s24 = sadd.s32 1, %s19
    %p25 = scmp.ge.s32.totalorder %s24, 1
    %s26 = scalar_select %p25, 0, %s24
    %s27 = sadd.s32 1, %s18
    %s28 = scalar_select %p25, %s27, %s18
    %p29 = scmp.ge.s32.totalorder %s28, 2
    %s30 = scalar_select %p29, 0, %s28
    %s31 = ssub.s32 %s18, %s30
    %s32 = ssub.s32 %s19, %s26
    %s33 = sor.u32 %s31, %s32
    %p34 = scmp.eq.s32.totalorder %s33, 0
    %s36 = sadd.s32 %s35, 1
    %s37 = scalar_select %p34, %s35, %s36
    %p40 = pneg %p34
    %p41 = scmp.eq.s32.totalorder %s11, 1
    %p42 = por %p40, %p41
    %p43 = scmp.ne.s32.totalorder %s35, %s38
    %p44 = scmp.eq.s32.totalorder %s11, 0
    %p45 = por %p43, %p44
    %p46 = scmp.ne.s32.totalorder %s35, %s38
    %p47 = scmp.eq.s32.totalorder %s16, 1
    %p48 = por %p46, %p47
    %p49 = scmp.ne.s32.totalorder %s38, %s39
    %p50 = scmp.eq.s32.totalorder %s16, 0
    %p51 = por %p49, %p50
    %p52 = scmp.ne.s32.totalorder %s38, %s39
    %p53 = scmp.eq.s32.totalorder %s17, 1
    %p54 = por %p52, %p53
    %p56 = scmp.ne.s32.totalorder %s39, %s55
    %p57 = scmp.eq.s32.totalorder %s17, 0
    %p58 = por %p56, %p57
    %s59 = ssub.s32 %s18, %s30
    %s60 = ssub.s32 %s19, %s26
    %s61 = sor.u32 %s59, %s60
    %p62 = scmp.eq.s32.totalorder %s61, 0
    %s64 = sadd.s32 %s63, 1
    %s65 = scalar_select %p62, %s63, %s64
    %p68 = pneg %p62
    %p69 = scmp.eq.s32.totalorder %s11, 1
    %p70 = por %p68, %p69
    %p71 = scmp.ne.s32.totalorder %s63, %s66
    %p72 = scmp.eq.s32.totalorder %s11, 0
    %p73 = por %p71, %p72
    %p74 = scmp.ne.s32.totalorder %s63, %s66
    %p75 = scmp.eq.s32.totalorder %s16, 1
    %p76 = por %p74, %p75
    %p77 = scmp.ne.s32.totalorder %s66, %s67
    %p78 = scmp.eq.s32.totalorder %s16, 0
    %p79 = por %p77, %p78
    %p80 = scmp.ne.s32.totalorder %s66, %s67
    %p81 = scmp.eq.s32.totalorder %s17, 1
    %p82 = por %p80, %p81
    %p84 = scmp.ne.s32.totalorder %s67, %s83
    %p85 = scmp.eq.s32.totalorder %s17, 0
    %p86 = por %p84, %p85
    %s88 = sadd.s32 %s87, 1
    %p91 = scmp.eq.s32.totalorder %s11, 1
    %p92 = scmp.ne.s32.totalorder %s87, %s89
    %p93 = scmp.eq.s32.totalorder %s11, 0
    %p94 = por %p92, %p93
    %p95 = scmp.ne.s32.totalorder %s87, %s89
    %p96 = scmp.eq.s32.totalorder %s16, 1
    %p97 = por %p95, %p96
    %p98 = scmp.ne.s32.totalorder %s89, %s90
    %p99 = scmp.eq.s32.totalorder %s16, 0
    %p100 = por %p98, %p99
    %p101 = scmp.ne.s32.totalorder %s89, %s90
    %p102 = scmp.eq.s32.totalorder %s17, 1
    %p103 = por %p101, %p102
    %p105 = scmp.ne.s32.totalorder %s90, %s104
    %p106 = scmp.eq.s32.totalorder %s17, 0
    %p107 = por %p105, %p106
    %s109 = sadd.s32 %s108, 1
    %p112 = scmp.eq.s32.totalorder %s11, 1
    %p113 = scmp.ne.s32.totalorder %s108, %s110
    %p114 = scmp.eq.s32.totalorder %s11, 0
    %p115 = por %p113, %p114
    %p116 = scmp.ne.s32.totalorder %s108, %s110
    %p117 = scmp.eq.s32.totalorder %s16, 1
    %p118 = por %p116, %p117
    %p119 = scmp.ne.s32.totalorder %s110, %s111
    %p120 = scmp.eq.s32.totalorder %s16, 0
    %p121 = por %p119, %p120
    %p122 = scmp.ne.s32.totalorder %s110, %s111
    %p123 = scmp.eq.s32.totalorder %s17, 1
    %p124 = por %p122, %p123
    %p126 = scmp.ne.s32.totalorder %s111, %s125
    %p127 = scmp.eq.s32.totalorder %s17, 0
    %p128 = por %p126, %p127
    %s130 = sadd.s32 %s129, 1
    %p133 = scmp.eq.s32.totalorder %s11, 1
    %p134 = scmp.ne.s32.totalorder %s129, %s131
    %p135 = scmp.eq.s32.totalorder %s11, 0
    %p136 = por %p134, %p135
    %p137 = scmp.ne.s32.totalorder %s129, %s131
    %p138 = scmp.eq.s32.totalorder %s16, 1
    %p139 = por %p137, %p138
    %p140 = scmp.ne.s32.totalorder %s131, %s132
    %p141 = scmp.eq.s32.totalorder %s16, 0
    %p142 = por %p140, %p141
    %p143 = scmp.ne.s32.totalorder %s131, %s132
    %p144 = scmp.eq.s32.totalorder %s17, 1
    %p145 = por %p143, %p144
    %p147 = scmp.ne.s32.totalorder %s132, %s146
    %p148 = scmp.eq.s32.totalorder %s17, 0
    %p149 = por %p147, %p148
    %s150 = ssub.s32 %s18, %s30
    %s151 = ssub.s32 %s19, %s26
    %s152 = sor.u32 %s150, %s151
    %p153 = scmp.eq.s32.totalorder %s152, 0
    %s155 = sadd.s32 %s154, 1
    %s156 = scalar_select %p153, %s154, %s155
    %p159 = pneg %p153
    %p160 = scmp.eq.s32.totalorder %s11, 1
    %p161 = por %p159, %p160
    %p162 = scmp.ne.s32.totalorder %s154, %s157
    %p163 = scmp.eq.s32.totalorder %s11, 0
    %p164 = por %p162, %p163
    %p165 = scmp.ne.s32.totalorder %s154, %s157
    %p166 = scmp.eq.s32.totalorder %s16, 1
    %p167 = por %p165, %p166
    %p168 = scmp.ne.s32.totalorder %s157, %s158
    %p169 = scmp.eq.s32.totalorder %s16, 0
    %p170 = por %p168, %p169
    %p171 = scmp.ne.s32.totalorder %s157, %s158
    %p172 = scmp.eq.s32.totalorder %s17, 1
    %p173 = por %p171, %p172
    %p175 = scmp.ne.s32.totalorder %s158, %s174
    %p176 = scmp.eq.s32.totalorder %s17, 0
    %p177 = por %p175, %p176
    %p178 = scmp.le.s32.totalorder 1, %s11
    %p179 = scmp.lt.s32.totalorder %s11, 3
    %p180 = pnand %p178, %p179
    %p181 = pneg %p180
    // Predicated region
    $region9: #{wave_unet_forward.15} parent=5 // pred_check
      _
    $region10: #{wave_unet_forward.15} parent=5 // pred_check_branch
      %183 = sbr.rel (%p180) target = $region12
    $region11: #{wave_unet_forward.15} parent=5 // pred_region
      %s184 = ssub.s32 %s11, 1
      // Predicated region
      $region13: #{wave_unet_forward.15} parent=11 // pred_check
        %p185 = pneg %p100
      $region14: #{wave_unet_forward.15} parent=11 // pred_check_branch
        %187 = sbr.rel (%p185) target = $region16
      $region15: #{wave_unet_forward.15} parent=11 // pred_region
        _
      $region16: #{wave_unet_forward.15} parent=11 // pred_fallthru
        _
      // Predicated region
      $region17: #{wave_unet_forward.15} parent=11 // pred_check
        %p188 = pneg %p121
      $region18: #{wave_unet_forward.15} parent=11 // pred_check_branch
        %190 = sbr.rel (%p188) target = $region20
      $region19: #{wave_unet_forward.15} parent=11 // pred_region
        _
      $region20: #{wave_unet_forward.15} parent=11 // pred_fallthru
        _
      // Predicated region
      $region21: #{wave_unet_forward.15} parent=11 // pred_check
        %p191 = pneg %p142
      $region22: #{wave_unet_forward.15} parent=11 // pred_check_branch
        %193 = sbr.rel (%p191) target = $region24
      $region23: #{wave_unet_forward.15} parent=11 // pred_region
        _
      $region24: #{wave_unet_forward.15} parent=11 // pred_fallthru
        _
    $region12: #{wave_unet_forward.15} parent=5 // pred_fallthru
      _
    %p194 = scmp.lt.s32.totalorder %s11, 2
    // Predicated region
    $region25: #{wave_unet_forward.15} parent=5 // pred_check
      %p195 = pneg %p194
    $region26: #{wave_unet_forward.15} parent=5 // pred_check_branch
      %197 = sbr.rel (%p195) target = $region28
    $region27: #{wave_unet_forward.15} parent=5 // pred_region
      // Predicated region
      $region29: #{wave_unet_forward.15} parent=27 // pred_check
        %p198 = pneg %p45
      $region30: #{wave_unet_forward.15} parent=27 // pred_check_branch
        %200 = sbr.rel (%p198) target = $region32
      $region31: #{wave_unet_forward.15} parent=27 // pred_region
        %s201 = smul.u32 2, %s19
        %p202 = scmp.lt.s32.totalorder %s18, 1
        %s203 = scalar_select %p202, %s18, 1
        %p204 = scmp.lt.s32.totalorder %s201, 1
        %s205 = scalar_select %p204, %s201, 1
        %s206 = smul.addr %s203, 2
        %s207 = sadd.s32 %s205, %s206
        %s208 = smul.addr %s207, 8
        %s209 = scalar_lea.vmem %s0, %s208
        %s210 = smul.u32 2, %s19
      $region32: #{wave_unet_forward.15} parent=27 // pred_fallthru
        _
      // Predicated region
      $region33: #{wave_unet_forward.15} parent=27 // pred_check
        %p211 = pneg %p73
      $region34: #{wave_unet_forward.15} parent=27 // pred_check_branch
        %213 = sbr.rel (%p211) target = $region36
      $region35: #{wave_unet_forward.15} parent=27 // pred_region
        %s214 = smul.u32 2, %s19
        %p215 = scmp.lt.s32.totalorder %s18, 1
        %s216 = scalar_select %p215, %s18, 1
        %p217 = scmp.lt.s32.totalorder %s214, 1
        %s218 = scalar_select %p217, %s214, 1
        %s219 = smul.addr %s216, 2
        %s220 = sadd.s32 %s218, %s219
        %s221 = smul.addr %s220, 8
        %s222 = scalar_lea.vmem %s1, %s221
        %s223 = smul.u32 2, %s19
      $region36: #{wave_unet_forward.15} parent=27 // pred_fallthru
        _
    $region28: #{wave_unet_forward.15} parent=5 // pred_fallthru
      _
    %p224 = scmp.le.s32.totalorder 1, %s11
    %p225 = scmp.lt.s32.totalorder %s11, 3
    %p226 = pnand %p224, %p225
    %p227 = pneg %p226
    // Predicated region
    $region37: #{wave_unet_forward.15} parent=5 // pred_check
      _
    $region38: #{wave_unet_forward.15} parent=5 // pred_check_branch
      %229 = sbr.rel (%p226) target = $region40
    $region39: #{wave_unet_forward.15} parent=5 // pred_region
      %s230 = ssub.s32 %s11, 1
      %s231 = smul.u32 2, %s21
      %p232 = scmp.lt.s32.totalorder %s20, 1
      %s233 = scalar_select %p232, %s20, 1
      %p234 = scmp.lt.s32.totalorder %s231, 1
      %s235 = scalar_select %p234, %s231, 1
      %s236 = smul.addr %s233, 2
      %s237 = sadd.s32 %s235, %s236
      %s238 = smul.addr %s237, 8
      %s239 = scalar_lea.vmem %s0, %s238
      %p240 = pneg %p51
      %p241 = pneg %p48
      %s242 = smul.u32 2, %s21
      %p243 = scmp.lt.s32.totalorder %s20, 1
      %s244 = scalar_select %p243, %s20, 1
      %p245 = scmp.lt.s32.totalorder %s242, 1
      %s246 = scalar_select %p245, %s242, 1
      %s247 = smul.addr %s244, 2
      %s248 = sadd.s32 %s246, %s247
      %s249 = smul.addr %s248, 8
      %s250 = scalar_lea.vmem %s1, %s249
      %p251 = pneg %p79
      %p252 = pneg %p76
      %p253 = pneg %p100
      %p254 = pneg %p97
      %p255 = pneg %p121
      %p256 = pneg %p118
      %p257 = pneg %p142
      %p258 = pneg %p139
      %p259 = pneg %p170
      %p260 = pneg %p167
      %s261 = smul.u32 2, %s21
      %p262 = scmp.lt.s32.totalorder %s20, 1
      %s263 = scalar_select %p262, %s20, 1
      %p264 = scmp.lt.s32.totalorder %s261, 1
      %s265 = scalar_select %p264, %s261, 1
      %s266 = smul.addr %s263, 2
      %s267 = sadd.s32 %s265, %s266
      %s268 = smul.addr %s267, 8
      %s269 = scalar_lea.vmem %s5, %s268
      %s270 = smul.u32 2, %s21
      %p271 = scmp.lt.s32.totalorder %s20, 1
      %s272 = scalar_select %p271, %s20, 1
      %p273 = scmp.lt.s32.totalorder %s270, 1
      %s274 = scalar_select %p273, %s270, 1
      %s275 = smul.addr %s272, 2
      %s276 = sadd.s32 %s274, %s275
      %s277 = smul.addr %s276, 8
      %s278 = scalar_lea.vmem %s0, %s277
      %s279 = smul.u32 2, %s21
      %s280 = smul.u32 2, %s21
      %p281 = scmp.lt.s32.totalorder %s20, 1
      %s282 = scalar_select %p281, %s20, 1
      %p283 = scmp.lt.s32.totalorder %s280, 1
      %s284 = scalar_select %p283, %s280, 1
      %s285 = smul.addr %s282, 2
      %s286 = sadd.s32 %s284, %s285
      %s287 = smul.addr %s286, 8
      %s288 = scalar_lea.vmem %s1, %s287
      %s289 = smul.u32 2, %s21
      %s290 = smul.u32 2, %s21
      %p291 = scmp.lt.s32.totalorder %s20, 1
      %s292 = scalar_select %p291, %s20, 1
      %p293 = scmp.lt.s32.totalorder %s290, 1
      %s294 = scalar_select %p293, %s290, 1
      %s295 = smul.addr %s292, 2
      %s296 = sadd.s32 %s294, %s295
      %s297 = smul.addr %s296, 8
      %s298 = scalar_lea.vmem %s5, %s297
      %s299 = smul.u32 2, %s21
      %v300 = vld [vmem:[%s278] sm:$0xff]
      %v301 = vld [vmem:[%s278 + $0x8] sm:$0xff]
      %vm304 = vcmask 1046528
      %v305 = vrot.slane %v300, 1
      %v306 = vrot.slane %v301, 1
      %v307 = vsel %vm304, %v305, %v306
      %v311 = vsel %vm304, 0.0, %v305
      %v312 = vsel %vm304, %v306, 0.0
      %v315 = vrot.slane %v311, 1
      %v316 = vrot.slane %v307, 1
      %v317 = vsel %vm304, %v315, %v316
      %v318 = vrot.slane %v312, 1
      %v319 = vsel %vm304, %v316, %v318
      %vm322 = vcmask 1045504
      %v323 = vrot.slane %v311, 2
      %v324 = vrot.slane %v307, 2
      %v325 = vsel %vm322, %v323, %v324
      %v326 = vrot.slane %v312, 2
      %v327 = vsel %vm322, %v324, %v326
      %vm330 = vcmask 1044480
      %v331 = vrot.slane %v311, 3
      %v332 = vrot.slane %v307, 3
      %v333 = vsel %vm330, %v331, %v332
      %v334 = vrot.slane %v312, 3
      %v335 = vsel %vm330, %v332, %v334
      %vm338 = vcmask 1043456
      %v339 = vrot.slane %v311, 4
      %v340 = vrot.slane %v307, 4
      %v341 = vsel %vm338, %v339, %v340
      %v342 = vrot.slane %v312, 4
      %v343 = vsel %vm338, %v340, %v342
      %vm346 = vcmask 1042432
      %v347 = vrot.slane %v311, 5
      %v348 = vrot.slane %v307, 5
      %v349 = vsel %vm346, %v347, %v348
      %v350 = vrot.slane %v312, 5
      %v351 = vsel %vm346, %v348, %v350
      %vm354 = vcmask 1041408
      %v355 = vrot.slane %v311, 6
      %v356 = vrot.slane %v307, 6
      %v357 = vsel %vm354, %v355, %v356
      %v358 = vrot.slane %v312, 6
      %v359 = vsel %vm354, %v356, %v358
      %vm362 = vcmask 1040384
      %v363 = vrot.slane %v311, 7
      %v364 = vrot.slane %v307, 7
      %v365 = vsel %vm362, %v363, %v364
      %v366 = vrot.slane %v312, 7
      %v367 = vsel %vm362, %v364, %v366
      %v371 = vrot.slane 0.0, 1
      %v372 = vsel %vm304, %v318, %v371
      %v374 = vrot.slane 0.0, 2
      %v375 = vsel %vm322, %v326, %v374
      %v377 = vrot.slane 0.0, 3
      %v378 = vsel %vm330, %v334, %v377
      %v380 = vrot.slane 0.0, 4
      %v381 = vsel %vm338, %v342, %v380
      %v383 = vrot.slane 0.0, 5
      %v384 = vsel %vm346, %v350, %v383
      %v386 = vrot.slane 0.0, 6
      %v387 = vsel %vm354, %v358, %v386
      %v389 = vld [vmem:[%s2] sm:$0xff]
      %v390 = vld [vmem:[%s2 + $0x8] sm:$0xff]
      %v391 = vld [vmem:[%s2 + $0x10] sm:$0xff]
      %v392 = vld [vmem:[%s2 + $0x18] sm:$0xff]
      %v393 = vld [vmem:[%s2 + $0x20] sm:$0xff]
      %v394 = vld [vmem:[%s2 + $0x28] sm:$0xff]
      %v395 = vld [vmem:[%s2 + $0x30] sm:$0xff]
      %v396 = vld [vmem:[%s2 + $0x38] sm:$0xff]
      %v397 = vld [vmem:[%s2 + $0x40] sm:$0xff]
      %v398 = vld [vmem:[%s2 + $0x48] sm:$0xff]
      %v399 = vld [vmem:[%s2 + $0x50] sm:$0xff]
      %v400 = vld [vmem:[%s2 + $0x58] sm:$0xff]
      %v401 = vld [vmem:[%s2 + $0x60] sm:$0xff]
      %v402 = vld [vmem:[%s2 + $0x68] sm:$0xff]
      %v403 = vld [vmem:[%s2 + $0x70] sm:$0xff]
      %v404 = vld [vmem:[%s2 + $0x78] sm:$0xff]
      %v405 = vld [vmem:[%s2 + $0x80] sm:$0xff]
      %v406 = vld [vmem:[%s2 + $0x88] sm:$0xff]
      %v407 = vld [vmem:[%s2 + $0x90] sm:$0xff]
      %v408 = vld [vmem:[%s2 + $0x98] sm:$0xff]
      %v409 = vld [vmem:[%s2 + $0xa0] sm:$0xff]
      %v410 = vld [vmem:[%s2 + $0xa8] sm:$0xff]
      %v411 = vld [vmem:[%s2 + $0xb0] sm:$0xff]
      %v412 = vld [vmem:[%s2 + $0xb8] sm:$0xff]
      %v413 = vld [vmem:[%s2 + $0xc0] sm:$0xff]
      %v414 = vld [vmem:[%s2 + $0xc8] sm:$0xff]
      %v415 = vld [vmem:[%s2 + $0xd0] sm:$0xff]
      %v416 = vld [vmem:[%s2 + $0xd8] sm:$0xff]
      %v417 = vld [vmem:[%s2 + $0xe0] sm:$0xff]
      %v418 = vld [vmem:[%s2 + $0xe8] sm:$0xff]
      %v419 = vld [vmem:[%s2 + $0xf0] sm:$0xff]
      %v420 = vld [vmem:[%s2 + $0xf8] sm:$0xff]
      %v421 = vld [vmem:[%s2 + $0x100] sm:$0xff]
      %v422 = vld [vmem:[%s2 + $0x108] sm:$0xff]
      %v423 = vld [vmem:[%s2 + $0x110] sm:$0xff]
      %v424 = vld [vmem:[%s2 + $0x118] sm:$0xff]
      %v425 = vld [vmem:[%s2 + $0x120] sm:$0xff]
      %v426 = vld [vmem:[%s2 + $0x128] sm:$0xff]
      %v427 = vld [vmem:[%s2 + $0x130] sm:$0xff]
      %v428 = vld [vmem:[%s2 + $0x138] sm:$0xff]
      %v429 = vld [vmem:[%s2 + $0x140] sm:$0xff]
      %v430 = vld [vmem:[%s2 + $0x148] sm:$0xff]
      %v431 = vld [vmem:[%s2 + $0x150] sm:$0xff]
      %v432 = vld [vmem:[%s2 + $0x158] sm:$0xff]
      %v433 = vld [vmem:[%s2 + $0x160] sm:$0xff]
      %v434 = vld [vmem:[%s2 + $0x168] sm:$0xff]
      %v435 = vld [vmem:[%s2 + $0x170] sm:$0xff]
      %v436 = vld [vmem:[%s2 + $0x178] sm:$0xff]
      %v437 = vld [vmem:[%s2 + $0x180] sm:$0xff]
      %v438 = vld [vmem:[%s2 + $0x188] sm:$0xff]
      %v439 = vld [vmem:[%s2 + $0x190] sm:$0xff]
      %v440 = vld [vmem:[%s2 + $0x198] sm:$0xff]
      %v441 = vld [vmem:[%s2 + $0x1a0] sm:$0xff]
      %v442 = vld [vmem:[%s2 + $0x1a8] sm:$0xff]
      %v443 = vld [vmem:[%s2 + $0x1b0] sm:$0xff]
      %v444 = vld [vmem:[%s2 + $0x1b8] sm:$0xff]
      %v445 = vld [vmem:[%s2 + $0x1c0] sm:$0xff]
      %v446 = vld [vmem:[%s2 + $0x1c8] sm:$0xff]
      %v447 = vld [vmem:[%s2 + $0x1d0] sm:$0xff]
      %v448 = vld [vmem:[%s2 + $0x1d8] sm:$0xff]
      %v449 = vld [vmem:[%s2 + $0x1e0] sm:$0xff]
      %v450 = vld [vmem:[%s2 + $0x1e8] sm:$0xff]
      %v451 = vld [vmem:[%s2 + $0x1f0] sm:$0xff]
      %v452 = vld [vmem:[%s2 + $0x1f8] sm:$0xff]
      %v453 = vld [vmem:[%s2 + $0x200] sm:$0xff]
      %v454 = vld [vmem:[%s2 + $0x208] sm:$0xff]
      %v455 = vld [vmem:[%s2 + $0x210] sm:$0xff]
      %v456 = vld [vmem:[%s2 + $0x218] sm:$0xff]
      %v457 = vld [vmem:[%s2 + $0x220] sm:$0xff]
      %v458 = vld [vmem:[%s2 + $0x228] sm:$0xff]
      %v459 = vld [vmem:[%s2 + $0x230] sm:$0xff]
      %v460 = vld [vmem:[%s2 + $0x238] sm:$0xff]
      %v461 = vld [vmem:[%s2 + $0x240] sm:$0xff]
      %v462 = vld [vmem:[%s2 + $0x248] sm:$0xff]
      %v463 = vld [vmem:[%s2 + $0x250] sm:$0xff]
      %v464 = vld [vmem:[%s2 + $0x258] sm:$0xff]
      %v465 = vld [vmem:[%s2 + $0x260] sm:$0xff]
      %v466 = vld [vmem:[%s2 + $0x268] sm:$0xff]
      %v467 = vld [vmem:[%s2 + $0x270] sm:$0xff]
      %v468 = vld [vmem:[%s2 + $0x278] sm:$0xff]
      %v469 = vld [vmem:[%s2 + $0x280] sm:$0xff]
      %v470 = vld [vmem:[%s2 + $0x288] sm:$0xff]
      %v471 = vld [vmem:[%s2 + $0x290] sm:$0xff]
      %v472 = vld [vmem:[%s2 + $0x298] sm:$0xff]
      %v473 = vld [vmem:[%s2 + $0x2a0] sm:$0xff]
      %v474 = vld [vmem:[%s2 + $0x2a8] sm:$0xff]
      %v475 = vld [vmem:[%s2 + $0x2b0] sm:$0xff]
      %v476 = vld [vmem:[%s2 + $0x2b8] sm:$0xff]
      %v477 = vld [vmem:[%s2 + $0x2c0] sm:$0xff]
      %v478 = vld [vmem:[%s2 + $0x2c8] sm:$0xff]
      %v479 = vld [vmem:[%s2 + $0x2d0] sm:$0xff]
      %v480 = vld [vmem:[%s2 + $0x2d8] sm:$0xff]
      %v481 = vld [vmem:[%s2 + $0x2e0] sm:$0xff]
      %v482 = vld [vmem:[%s2 + $0x2e8] sm:$0xff]
      %v483 = vld [vmem:[%s2 + $0x2f0] sm:$0xff]
      %v484 = vld [vmem:[%s2 + $0x2f8] sm:$0xff]
      %v485 = vld [vmem:[%s2 + $0x300] sm:$0xff]
      %v486 = vld [vmem:[%s2 + $0x308] sm:$0xff]
      %v487 = vld [vmem:[%s2 + $0x310] sm:$0xff]
      %v488 = vld [vmem:[%s2 + $0x318] sm:$0xff]
      %v489 = vld [vmem:[%s2 + $0x320] sm:$0xff]
      %v490 = vld [vmem:[%s2 + $0x328] sm:$0xff]
      %v491 = vld [vmem:[%s2 + $0x330] sm:$0xff]
      %v492 = vld [vmem:[%s2 + $0x338] sm:$0xff]
      %v493 = vld [vmem:[%s2 + $0x340] sm:$0xff]
      %v494 = vld [vmem:[%s2 + $0x348] sm:$0xff]
      %v495 = vld [vmem:[%s2 + $0x350] sm:$0xff]
      %v496 = vld [vmem:[%s2 + $0x358] sm:$0xff]
      %v497 = vld [vmem:[%s2 + $0x360] sm:$0xff]
      %v498 = vld [vmem:[%s2 + $0x368] sm:$0xff]
      %v499 = vld [vmem:[%s2 + $0x370] sm:$0xff]
      %v500 = vld [vmem:[%s2 + $0x378] sm:$0xff]
      %v501 = vld [vmem:[%s2 + $0x380] sm:$0xff]
      %v502 = vld [vmem:[%s2 + $0x388] sm:$0xff]
      %v503 = vld [vmem:[%s2 + $0x390] sm:$0xff]
      %v504 = vld [vmem:[%s2 + $0x398] sm:$0xff]
      %v505 = vld [vmem:[%s2 + $0x3a0] sm:$0xff]
      %v506 = vld [vmem:[%s2 + $0x3a8] sm:$0xff]
      %v507 = vld [vmem:[%s2 + $0x3b0] sm:$0xff]
      %v508 = vld [vmem:[%s2 + $0x3b8] sm:$0xff]
      %v509 = vld [vmem:[%s2 + $0x3c0] sm:$0xff]
      %v510 = vld [vmem:[%s2 + $0x3c8] sm:$0xff]
      %v511 = vld [vmem:[%s2 + $0x3d0] sm:$0xff]
      %v512 = vld [vmem:[%s2 + $0x3d8] sm:$0xff]
      %v513 = vld [vmem:[%s2 + $0x3e0] sm:$0xff]
      %v514 = vld [vmem:[%s2 + $0x3e8] sm:$0xff]
      %v515 = vld [vmem:[%s2 + $0x3f0] sm:$0xff]
      %v516 = vld [vmem:[%s2 + $0x3f8] sm:$0xff]
      %v517 = vld [vmem:[%s2 + $0x400] sm:$0xff]
      %v518 = vld [vmem:[%s2 + $0x408] sm:$0xff]
      %v519 = vld [vmem:[%s2 + $0x410] sm:$0xff]
      %v520 = vld [vmem:[%s2 + $0x418] sm:$0xff]
      %v521 = vld [vmem:[%s2 + $0x420] sm:$0xff]
      %v522 = vld [vmem:[%s2 + $0x428] sm:$0xff]
      %v523 = vld [vmem:[%s2 + $0x430] sm:$0xff]
      %v524 = vld [vmem:[%s2 + $0x438] sm:$0xff]
      %v525 = vld [vmem:[%s2 + $0x440] sm:$0xff]
      %v526 = vld [vmem:[%s2 + $0x448] sm:$0xff]
      %v527 = vld [vmem:[%s2 + $0x450] sm:$0xff]
      %v528 = vld [vmem:[%s2 + $0x458] sm:$0xff]
      %v529 = vld [vmem:[%s2 + $0x460] sm:$0xff]
      %v530 = vld [vmem:[%s2 + $0x468] sm:$0xff]
      %v531 = vld [vmem:[%s2 + $0x470] sm:$0xff]
      %v532 = vld [vmem:[%s2 + $0x478] sm:$0xff]
      %v533 = vld [vmem:[%s2 + $0x480] sm:$0xff]
      %v534 = vld [vmem:[%s2 + $0x488] sm:$0xff]
      %v535 = vld [vmem:[%s2 + $0x490] sm:$0xff]
      %v536 = vld [vmem:[%s2 + $0x498] sm:$0xff]
      %v537 = vld [vmem:[%s2 + $0x4a0] sm:$0xff]
      %v538 = vld [vmem:[%s2 + $0x4a8] sm:$0xff]
      %v539 = vld [vmem:[%s2 + $0x4b0] sm:$0xff]
      %v540 = vld [vmem:[%s2 + $0x4b8] sm:$0xff]
      %v541 = vld [vmem:[%s2 + $0x4c0] sm:$0xff]
      %v542 = vld [vmem:[%s2 + $0x4c8] sm:$0xff]
      %v543 = vld [vmem:[%s2 + $0x4d0] sm:$0xff]
      %v544 = vld [vmem:[%s2 + $0x4d8] sm:$0xff]
      %v545 = vld [vmem:[%s2 + $0x4e0] sm:$0xff]
      %v546 = vld [vmem:[%s2 + $0x4e8] sm:$0xff]
      %v547 = vld [vmem:[%s2 + $0x4f0] sm:$0xff]
      %v548 = vld [vmem:[%s2 + $0x4f8] sm:$0xff]
      %v549 = vld [vmem:[%s2 + $0x500] sm:$0xff]
      %v550 = vld [vmem:[%s2 + $0x508] sm:$0xff]
      %v551 = vld [vmem:[%s2 + $0x510] sm:$0xff]
      %v552 = vld [vmem:[%s2 + $0x518] sm:$0xff]
      %v553 = vld [vmem:[%s2 + $0x520] sm:$0xff]
      %v554 = vld [vmem:[%s2 + $0x528] sm:$0xff]
      %v555 = vld [vmem:[%s2 + $0x530] sm:$0xff]
      %v556 = vld [vmem:[%s2 + $0x538] sm:$0xff]
      %v557 = vld [vmem:[%s2 + $0x540] sm:$0xff]
      %v558 = vld [vmem:[%s2 + $0x548] sm:$0xff]
      %v559 = vld [vmem:[%s2 + $0x550] sm:$0xff]
      %v560 = vld [vmem:[%s2 + $0x558] sm:$0xff]
      %v561 = vld [vmem:[%s2 + $0x560] sm:$0xff]
      %v562 = vld [vmem:[%s2 + $0x568] sm:$0xff]
      %v563 = vld [vmem:[%s2 + $0x570] sm:$0xff]
      %v564 = vld [vmem:[%s2 + $0x578] sm:$0xff]
      %v565 = vld [vmem:[%s2 + $0x580] sm:$0xff]
      %v566 = vld [vmem:[%s2 + $0x588] sm:$0xff]
      %v567 = vld [vmem:[%s2 + $0x590] sm:$0xff]
      %v568 = vld [vmem:[%s2 + $0x598] sm:$0xff]
      %v569 = vld [vmem:[%s2 + $0x5a0] sm:$0xff]
      %v570 = vld [vmem:[%s2 + $0x5a8] sm:$0xff]
      %v571 = vld [vmem:[%s2 + $0x5b0] sm:$0xff]
      %v572 = vld [vmem:[%s2 + $0x5b8] sm:$0xff]
      %v573 = vld [vmem:[%s2 + $0x5c0] sm:$0xff]
      %v574 = vld [vmem:[%s2 + $0x5c8] sm:$0xff]
      %v575 = vld [vmem:[%s2 + $0x5d0] sm:$0xff]
      %v576 = vld [vmem:[%s2 + $0x5d8] sm:$0xff]
      %v577 = vld [vmem:[%s2 + $0x5e0] sm:$0xff]
      %v578 = vld [vmem:[%s2 + $0x5e8] sm:$0xff]
      %v579 = vld [vmem:[%s2 + $0x5f0] sm:$0xff]
      %v580 = vld [vmem:[%s2 + $0x5f8] sm:$0xff]
      %v581 = vld [vmem:[%s2 + $0x600] sm:$0xff]
      %v582 = vld [vmem:[%s2 + $0x608] sm:$0xff]
      %v583 = vld [vmem:[%s2 + $0x610] sm:$0xff]
      %v584 = vld [vmem:[%s2 + $0x618] sm:$0xff]
      %v585 = vld [vmem:[%s2 + $0x620] sm:$0xff]
      %v586 = vld [vmem:[%s2 + $0x628] sm:$0xff]
      %v587 = vld [vmem:[%s2 + $0x630] sm:$0xff]
      %v588 = vld [vmem:[%s2 + $0x638] sm:$0xff]
      %v589 = vld [vmem:[%s2 + $0x640] sm:$0xff]
      %v590 = vld [vmem:[%s2 + $0x648] sm:$0xff]
      %v591 = vld [vmem:[%s2 + $0x650] sm:$0xff]
      %v592 = vld [vmem:[%s2 + $0x658] sm:$0xff]
      %v593 = vld [vmem:[%s2 + $0x660] sm:$0xff]
      %v594 = vld [vmem:[%s2 + $0x668] sm:$0xff]
      %v595 = vld [vmem:[%s2 + $0x670] sm:$0xff]
      %v596 = vld [vmem:[%s2 + $0x678] sm:$0xff]
      %v597 = vld [vmem:[%s2 + $0x680] sm:$0xff]
      %v598 = vld [vmem:[%s2 + $0x688] sm:$0xff]
      %v599 = vld [vmem:[%s2 + $0x690] sm:$0xff]
      %v600 = vld [vmem:[%s2 + $0x698] sm:$0xff]
      %v601 = vld [vmem:[%s2 + $0x6a0] sm:$0xff]
      %v602 = vld [vmem:[%s2 + $0x6a8] sm:$0xff]
      %v603 = vld [vmem:[%s2 + $0x6b0] sm:$0xff]
      %v604 = vld [vmem:[%s2 + $0x6b8] sm:$0xff]
      %v605 = vld [vmem:[%s2 + $0x6c0] sm:$0xff]
      %v606 = vld [vmem:[%s2 + $0x6c8] sm:$0xff]
      %v607 = vld [vmem:[%s2 + $0x6d0] sm:$0xff]
      %v608 = vld [vmem:[%s2 + $0x6d8] sm:$0xff]
      %v609 = vld [vmem:[%s2 + $0x6e0] sm:$0xff]
      %v610 = vld [vmem:[%s2 + $0x6e8] sm:$0xff]
      %v611 = vld [vmem:[%s2 + $0x6f0] sm:$0xff]
      %v612 = vld [vmem:[%s2 + $0x6f8] sm:$0xff]
      %v613 = vld [vmem:[%s2 + $0x700] sm:$0xff]
      %v614 = vld [vmem:[%s2 + $0x708] sm:$0xff]
      %v615 = vld [vmem:[%s2 + $0x710] sm:$0xff]
      %v616 = vld [vmem:[%s2 + $0x718] sm:$0xff]
      %v617 = vld [vmem:[%s2 + $0x720] sm:$0xff]
      %v618 = vld [vmem:[%s2 + $0x728] sm:$0xff]
      %v619 = vld [vmem:[%s2 + $0x730] sm:$0xff]
      %v620 = vld [vmem:[%s2 + $0x738] sm:$0xff]
      %v621 = vld [vmem:[%s2 + $0x740] sm:$0xff]
      %v622 = vld [vmem:[%s2 + $0x748] sm:$0xff]
      %v623 = vld [vmem:[%s2 + $0x750] sm:$0xff]
      %v624 = vld [vmem:[%s2 + $0x758] sm:$0xff]
      %v625 = vld [vmem:[%s2 + $0x760] sm:$0xff]
      %v626 = vld [vmem:[%s2 + $0x768] sm:$0xff]
      %v627 = vld [vmem:[%s2 + $0x770] sm:$0xff]
      %v628 = vld [vmem:[%s2 + $0x778] sm:$0xff]
      %v629 = vld [vmem:[%s288] sm:$0xff]
      %v630 = vld [vmem:[%s288 + $0x8] sm:$0xff]
      %v633 = vrot.slane %v629, 1
      %v634 = vrot.slane %v630, 1
      %v635 = vsel %vm304, %v633, %v634
      %v639 = vsel %vm304, 0.0, %v633
      %v640 = vsel %vm304, %v634, 0.0
      %v643 = vrot.slane %v639, 1
      %v644 = vrot.slane %v635, 1
      %v645 = vsel %vm304, %v643, %v644
      %v646 = vrot.slane %v640, 1
      %v647 = vsel %vm304, %v644, %v646
      %648 = vrot.lane.b32.xlu0 %v645, 64
      %v649 = vpop.permute.xlu0 %648
      %650 = vrot.lane.b32.xlu0 %v647, 64
      %v651 = vpop.permute.xlu0 %650
      %v654 = vrot.slane %v639, 2
      %v655 = vrot.slane %v635, 2
      %v656 = vsel %vm322, %v654, %v655
      %v657 = vrot.slane %v640, 2
      %v658 = vsel %vm322, %v655, %v657
      %v661 = vrot.slane %v639, 3
      %v662 = vrot.slane %v635, 3
      %v663 = vsel %vm330, %v661, %v662
      %v664 = vrot.slane %v640, 3
      %v665 = vsel %vm330, %v662, %v664
      %666 = vrot.lane.b32.xlu0 %v663, 64
      %v667 = vpop.permute.xlu0 %666
      %668 = vrot.lane.b32.xlu0 %v665, 64
      %v669 = vpop.permute.xlu0 %668
      %v672 = vrot.slane %v639, 4
      %v673 = vrot.slane %v635, 4
      %v674 = vsel %vm338, %v672, %v673
      %v675 = vrot.slane %v640, 4
      %v676 = vsel %vm338, %v673, %v675
      %v679 = vrot.slane %v639, 5
      %v680 = vrot.slane %v635, 5
      %v681 = vsel %vm346, %v679, %v680
      %v682 = vrot.slane %v640, 5
      %v683 = vsel %vm346, %v680, %v682
      %684 = vrot.lane.b32.xlu0 %v681, 64
      %v685 = vpop.permute.xlu0 %684
      %686 = vrot.lane.b32.xlu0 %v683, 64
      %v687 = vpop.permute.xlu0 %686
      %v690 = vrot.slane %v639, 6
      %v691 = vrot.slane %v635, 6
      %v692 = vsel %vm354, %v690, %v691
      %v693 = vrot.slane %v640, 6
      %v694 = vsel %vm354, %v691, %v693
      %v697 = vrot.slane %v639, 7
      %v698 = vrot.slane %v635, 7
      %v699 = vsel %vm362, %v697, %v698
      %v700 = vrot.slane %v640, 7
      %v701 = vsel %vm362, %v698, %v700
      %702 = vrot.lane.b32.xlu0 %v699, 64
      %v703 = vpop.permute.xlu0 %702
      %704 = vrot.lane.b32.xlu0 %v701, 64
      %v705 = vpop.permute.xlu0 %704
      %v708 = vsel %vm304, %v646, %v371
      %709 = vrot.lane.b32.xlu0 %v708, 64
      %v710 = vpop.permute.xlu0 %709
      %v712 = vsel %vm322, %v657, %v374
      %v714 = vsel %vm330, %v664, %v377
      %715 = vrot.lane.b32.xlu0 %v714, 64
      %v716 = vpop.permute.xlu0 %715
      %v718 = vsel %vm338, %v675, %v380
      %v720 = vsel %vm346, %v682, %v383
      %721 = vrot.lane.b32.xlu0 %v720, 64
      %v722 = vpop.permute.xlu0 %721
      %v724 = vsel %vm354, %v693, %v386
      %vm725 = vcmask 523264
      %v726 = vsel %vm725, %v639, %v649
      %v727 = vsel %vm725, %v635, %v651
      %v728 = vsel %vm725, %v656, %v667
      %v729 = vsel %vm725, %v658, %v669
      %v730 = vsel %vm725, %v674, %v685
      %v731 = vsel %vm725, %v676, %v687
      %v732 = vsel %vm725, %v692, %v703
      %v733 = vsel %vm725, %v694, %v705
      %v734 = vsel %vm725, %v640, %v710
      %v735 = vsel %vm725, %v712, %v716
      %v736 = vsel %vm725, %v718, %v722
      %v737 = vld [vmem:[%s3] sm:$0xff]
      %v738 = vld [vmem:[%s3 + $0x8] sm:$0xff]
      %v739 = vld [vmem:[%s3 + $0x10] sm:$0xff]
      %v740 = vld [vmem:[%s3 + $0x18] sm:$0xff]
      %v741 = vld [vmem:[%s3 + $0x20] sm:$0xff]
      %v742 = vld [vmem:[%s3 + $0x28] sm:$0xff]
      %v743 = vld [vmem:[%s3 + $0x30] sm:$0xff]
      %v744 = vld [vmem:[%s3 + $0x38] sm:$0xff]
      %v745 = vld [vmem:[%s3 + $0x40] sm:$0xff]
      %v746 = vld [vmem:[%s3 + $0x48] sm:$0xff]
      %v747 = vld [vmem:[%s3 + $0x50] sm:$0xff]
      %v748 = vld [vmem:[%s3 + $0x58] sm:$0xff]
      %v749 = vld [vmem:[%s3 + $0x60] sm:$0xff]
      %v750 = vld [vmem:[%s3 + $0x68] sm:$0xff]
      %v751 = vld [vmem:[%s3 + $0x70] sm:$0xff]
      %v752 = vld [vmem:[%s3 + $0x78] sm:$0xff]
      %v753 = vld [vmem:[%s3 + $0x80] sm:$0xff]
      %v754 = vld [vmem:[%s3 + $0x88] sm:$0xff]
      %v755 = vld [vmem:[%s3 + $0x90] sm:$0xff]
      %v756 = vld [vmem:[%s3 + $0x98] sm:$0xff]
      %v757 = vld [vmem:[%s3 + $0xa0] sm:$0xff]
      %v758 = vld [vmem:[%s3 + $0xa8] sm:$0xff]
      %v759 = vld [vmem:[%s3 + $0xb0] sm:$0xff]
      %v760 = vld [vmem:[%s3 + $0xb8] sm:$0xff]
      %v761 = vld [vmem:[%s3 + $0xc0] sm:$0xff]
      %v762 = vld [vmem:[%s3 + $0xc8] sm:$0xff]
      %v763 = vld [vmem:[%s3 + $0xd0] sm:$0xff]
      %v764 = vld [vmem:[%s3 + $0xd8] sm:$0xff]
      %v765 = vld [vmem:[%s3 + $0xe0] sm:$0xff]
      %v766 = vld [vmem:[%s3 + $0xe8] sm:$0xff]
      %v767 = vld [vmem:[%s3 + $0xf0] sm:$0xff]
      %v768 = vld [vmem:[%s3 + $0xf8] sm:$0xff]
      %v769 = vld [vmem:[%s3 + $0x100] sm:$0xff]
      %v770 = vld [vmem:[%s3 + $0x108] sm:$0xff]
      %v771 = vld [vmem:[%s3 + $0x110] sm:$0xff]
      %v772 = vld [vmem:[%s3 + $0x118] sm:$0xff]
      %v773 = vld [vmem:[%s3 + $0x120] sm:$0xff]
      %v774 = vld [vmem:[%s3 + $0x128] sm:$0xff]
      %v775 = vld [vmem:[%s3 + $0x130] sm:$0xff]
      %v776 = vld [vmem:[%s3 + $0x138] sm:$0xff]
      %v777 = vld [vmem:[%s3 + $0x140] sm:$0xff]
      %v778 = vld [vmem:[%s3 + $0x148] sm:$0xff]
      %v779 = vld [vmem:[%s3 + $0x150] sm:$0xff]
      %v780 = vld [vmem:[%s3 + $0x158] sm:$0xff]
      %v781 = vld [vmem:[%s3 + $0x160] sm:$0xff]
      %v782 = vld [vmem:[%s3 + $0x168] sm:$0xff]
      %v783 = vld [vmem:[%s3 + $0x170] sm:$0xff]
      %v784 = vld [vmem:[%s3 + $0x178] sm:$0xff]
      %v785 = vld [vmem:[%s3 + $0x180] sm:$0xff]
      %v786 = vld [vmem:[%s3 + $0x188] sm:$0xff]
      %v787 = vld [vmem:[%s3 + $0x190] sm:$0xff]
      %v788 = vld [vmem:[%s3 + $0x198] sm:$0xff]
      %v789 = vld [vmem:[%s3 + $0x1a0] sm:$0xff]
      %v790 = vld [vmem:[%s3 + $0x1a8] sm:$0xff]
      %v791 = vld [vmem:[%s3 + $0x1b0] sm:$0xff]
      %v792 = vld [vmem:[%s3 + $0x1b8] sm:$0xff]
      %v793 = vld [vmem:[%s3 + $0x1c0] sm:$0xff]
      %v794 = vld [vmem:[%s3 + $0x1c8] sm:$0xff]
      %v795 = vld [vmem:[%s3 + $0x1d0] sm:$0xff]
      %v796 = vld [vmem:[%s3 + $0x1d8] sm:$0xff]
      %v797 = vld [vmem:[%s3 + $0x1e0] sm:$0xff]
      %v798 = vld [vmem:[%s3 + $0x1e8] sm:$0xff]
      %v799 = vld [vmem:[%s3 + $0x1f0] sm:$0xff]
      %v800 = vld [vmem:[%s3 + $0x1f8] sm:$0xff]
      %v801 = vld [vmem:[%s3 + $0x200] sm:$0xff]
      %v802 = vld [vmem:[%s3 + $0x208] sm:$0xff]
      %v803 = vld [vmem:[%s3 + $0x210] sm:$0xff]
      %v804 = vld [vmem:[%s3 + $0x218] sm:$0xff]
      %v805 = vld [vmem:[%s3 + $0x220] sm:$0xff]
      %v806 = vld [vmem:[%s3 + $0x228] sm:$0xff]
      %v807 = vld [vmem:[%s3 + $0x230] sm:$0xff]
      %v808 = vld [vmem:[%s3 + $0x238] sm:$0xff]
      %v809 = vld [vmem:[%s3 + $0x240] sm:$0xff]
      %v810 = vld [vmem:[%s3 + $0x248] sm:$0xff]
      %v811 = vld [vmem:[%s3 + $0x250] sm:$0xff]
      %v812 = vld [vmem:[%s3 + $0x258] sm:$0xff]
      %v813 = vld [vmem:[%s3 + $0x260] sm:$0xff]
      %v814 = vld [vmem:[%s3 + $0x268] sm:$0xff]
      %v815 = vld [vmem:[%s3 + $0x270] sm:$0xff]
      %v816 = vld [vmem:[%s3 + $0x278] sm:$0xff]
      %v817 = vld [vmem:[%s3 + $0x280] sm:$0xff]
      %v818 = vld [vmem:[%s3 + $0x288] sm:$0xff]
      %v819 = vld [vmem:[%s3 + $0x290] sm:$0xff]
      %v820 = vld [vmem:[%s3 + $0x298] sm:$0xff]
      %v821 = vld [vmem:[%s3 + $0x2a0] sm:$0xff]
      %v822 = vld [vmem:[%s3 + $0x2a8] sm:$0xff]
      %v823 = vld [vmem:[%s3 + $0x2b0] sm:$0xff]
      %v824 = vld [vmem:[%s3 + $0x2b8] sm:$0xff]
      %v825 = vld [vmem:[%s3 + $0x2c0] sm:$0xff]
      %v826 = vld [vmem:[%s3 + $0x2c8] sm:$0xff]
      %v827 = vld [vmem:[%s3 + $0x2d0] sm:$0xff]
      %v828 = vld [vmem:[%s3 + $0x2d8] sm:$0xff]
      %v829 = vld [vmem:[%s3 + $0x2e0] sm:$0xff]
      %v830 = vld [vmem:[%s3 + $0x2e8] sm:$0xff]
      %v831 = vld [vmem:[%s3 + $0x2f0] sm:$0xff]
      %v832 = vld [vmem:[%s3 + $0x2f8] sm:$0xff]
      %v833 = vld [vmem:[%s3 + $0x300] sm:$0xff]
      %v834 = vld [vmem:[%s3 + $0x308] sm:$0xff]
      %v835 = vld [vmem:[%s3 + $0x310] sm:$0xff]
      %v836 = vld [vmem:[%s3 + $0x318] sm:$0xff]
      %v837 = vld [vmem:[%s3 + $0x320] sm:$0xff]
      %v838 = vld [vmem:[%s3 + $0x328] sm:$0xff]
      %v839 = vld [vmem:[%s3 + $0x330] sm:$0xff]
      %v840 = vld [vmem:[%s3 + $0x338] sm:$0xff]
      %v841 = vld [vmem:[%s3 + $0x340] sm:$0xff]
      %v842 = vld [vmem:[%s3 + $0x348] sm:$0xff]
      %v843 = vld [vmem:[%s3 + $0x350] sm:$0xff]
      %v844 = vld [vmem:[%s3 + $0x358] sm:$0xff]
      %v845 = vld [vmem:[%s3 + $0x360] sm:$0xff]
      %v846 = vld [vmem:[%s3 + $0x368] sm:$0xff]
      %v847 = vld [vmem:[%s3 + $0x370] sm:$0xff]
      %v848 = vld [vmem:[%s3 + $0x378] sm:$0xff]
      %v849 = vld [vmem:[%s3 + $0x380] sm:$0xff]
      %v850 = vld [vmem:[%s3 + $0x388] sm:$0xff]
      %v851 = vld [vmem:[%s3 + $0x390] sm:$0xff]
      %v852 = vld [vmem:[%s3 + $0x398] sm:$0xff]
      %v853 = vld [vmem:[%s3 + $0x3a0] sm:$0xff]
      %v854 = vld [vmem:[%s3 + $0x3a8] sm:$0xff]
      %v855 = vld [vmem:[%s3 + $0x3b0] sm:$0xff]
      %v856 = vld [vmem:[%s3 + $0x3b8] sm:$0xff]
      %v857 = vsel %vm725, %v694, 0
      %v859 = vsel %vm725, %v724, 0
      %861 = vmatpush.msra.mxu0 %v752
      %862 = vmatpush.msra.mxu0 %v751
      %863 = vmatpush.msra.mxu0 %v750
      %864 = vmatpush.msra.mxu0 %v749
      %865 = vmatpush.msra.mxu0 %v748
      %866 = vmatpush.msra.mxu0 %v747
      %867 = vmatpush.msra.mxu0 %v746
      %868 = vmatpush.msra.mxu0 %v745
      %869 = vmatpush.msra.mxu0 %v744
      %870 = vmatpush.msra.mxu0 %v743
      %871 = vmatpush.msra.mxu0 %v742
      %872 = vmatpush.msra.mxu0 %v741
      %873 = vmatpush.msra.mxu0 %v740
      %874 = vmatpush.msra.mxu0 %v739
      %875 = vmatpush.msra.mxu0 %v738
      %876 = vmatpush.msra.mxu0 %v737
      %877 = vmatmul.f32.gmra.mxu0 %v726
      %v878 = vpop.f32.mrf.mxu0
      %v879 = vadd.f32 0.0, %v878
      %880 = vmatmul.f32.gmra.mxu0 %v727
      %v881 = vpop.f32.mrf.mxu0
      %v882 = vadd.f32 0.0, %v881
      %883 = vdwg.mxu0
      %884 = vmatpush.msra.mxu0 %v768
      %885 = vmatpush.msra.mxu0 %v767
      %886 = vmatpush.msra.mxu0 %v766
      %887 = vmatpush.msra.mxu0 %v765
      %888 = vmatpush.msra.mxu0 %v764
      %889 = vmatpush.msra.mxu0 %v763
      %890 = vmatpush.msra.mxu0 %v762
      %891 = vmatpush.msra.mxu0 %v761
      %892 = vmatpush.msra.mxu0 %v760
      %893 = vmatpush.msra.mxu0 %v759
      %894 = vmatpush.msra.mxu0 %v758
      %895 = vmatpush.msra.mxu0 %v757
      %896 = vmatpush.msra.mxu0 %v756
      %897 = vmatpush.msra.mxu0 %v755
      %898 = vmatpush.msra.mxu0 %v754
      %899 = vmatpush.msra.mxu0 %v753
      %900 = vmatmul.f32.gmra.mxu0 %v728
      %v901 = vpop.f32.mrf.mxu0
      %v902 = vadd.f32 %v879, %v901
      %903 = vmatmul.f32.gmra.mxu0 %v729
      %v904 = vpop.f32.mrf.mxu0
      %v905 = vadd.f32 %v882, %v904
      %906 = vdwg.mxu0
      %907 = vmatpush.msra.mxu0 %v784
      %908 = vmatpush.msra.mxu0 %v783
      %909 = vmatpush.msra.mxu0 %v782
      %910 = vmatpush.msra.mxu0 %v781
      %911 = vmatpush.msra.mxu0 %v780
      %912 = vmatpush.msra.mxu0 %v779
      %913 = vmatpush.msra.mxu0 %v778
      %914 = vmatpush.msra.mxu0 %v777
      %915 = vmatpush.msra.mxu0 %v776
      %916 = vmatpush.msra.mxu0 %v775
      %917 = vmatpush.msra.mxu0 %v774
      %918 = vmatpush.msra.mxu0 %v773
      %919 = vmatpush.msra.mxu0 %v772
      %920 = vmatpush.msra.mxu0 %v771
      %921 = vmatpush.msra.mxu0 %v770
      %922 = vmatpush.msra.mxu0 %v769
      %923 = vmatmul.f32.gmra.mxu0 %v730
      %v924 = vpop.f32.mrf.mxu0
      %v925 = vadd.f32 %v902, %v924
      %926 = vmatmul.f32.gmra.mxu0 %v731
      %v927 = vpop.f32.mrf.mxu0
      %v928 = vadd.f32 %v905, %v927
      %929 = vdwg.mxu0
      %930 = vmatpush.msra.mxu0 %v800
      %931 = vmatpush.msra.mxu0 %v799
      %932 = vmatpush.msra.mxu0 %v798
      %933 = vmatpush.msra.mxu0 %v797
      %934 = vmatpush.msra.mxu0 %v796
      %935 = vmatpush.msra.mxu0 %v795
      %936 = vmatpush.msra.mxu0 %v794
      %937 = vmatpush.msra.mxu0 %v793
      %938 = vmatpush.msra.mxu0 %v792
      %939 = vmatpush.msra.mxu0 %v791
      %940 = vmatpush.msra.mxu0 %v790
      %941 = vmatpush.msra.mxu0 %v789
      %942 = vmatpush.msra.mxu0 %v788
      %943 = vmatpush.msra.mxu0 %v787
      %944 = vmatpush.msra.mxu0 %v786
      %945 = vmatpush.msra.mxu0 %v785
      %946 = vmatmul.f32.gmra.mxu0 %v732
      %v947 = vpop.f32.mrf.mxu0
      %v948 = vadd.f32 %v925, %v947
      %949 = vmatmul.f32.gmra.mxu0 %v733
      %v950 = vpop.f32.mrf.mxu0
      %v951 = vadd.f32 %v928, %v950
      %952 = vdwg.mxu0
      %953 = vmatpush.msra.mxu0 %v816
      %954 = vmatpush.msra.mxu0 %v815
      %955 = vmatpush.msra.mxu0 %v814
      %956 = vmatpush.msra.mxu0 %v813
      %957 = vmatpush.msra.mxu0 %v812
      %958 = vmatpush.msra.mxu0 %v811
      %959 = vmatpush.msra.mxu0 %v810
      %960 = vmatpush.msra.mxu0 %v809
      %961 = vmatpush.msra.mxu0 %v808
      %962 = vmatpush.msra.mxu0 %v807
      %963 = vmatpush.msra.mxu0 %v806
      %964 = vmatpush.msra.mxu0 %v805
      %965 = vmatpush.msra.mxu0 %v804
      %966 = vmatpush.msra.mxu0 %v803
      %967 = vmatpush.msra.mxu0 %v802
      %968 = vmatpush.msra.mxu0 %v801
      %969 = vmatmul.f32.gmra.mxu0 %v727
      %v970 = vpop.f32.mrf.mxu0
      %v971 = vadd.f32 %v948, %v970
      %972 = vmatmul.f32.gmra.mxu0 %v734
      %v973 = vpop.f32.mrf.mxu0
      %v974 = vadd.f32 %v951, %v973
      %975 = vdwg.mxu0
      %976 = vmatpush.msra.mxu0 %v832
      %977 = vmatpush.msra.mxu0 %v831
      %978 = vmatpush.msra.mxu0 %v830
      %979 = vmatpush.msra.mxu0 %v829
      %980 = vmatpush.msra.mxu0 %v828
      %981 = vmatpush.msra.mxu0 %v827
      %982 = vmatpush.msra.mxu0 %v826
      %983 = vmatpush.msra.mxu0 %v825
      %984 = vmatpush.msra.mxu0 %v824
      %985 = vmatpush.msra.mxu0 %v823
      %986 = vmatpush.msra.mxu0 %v822
      %987 = vmatpush.msra.mxu0 %v821
      %988 = vmatpush.msra.mxu0 %v820
      %989 = vmatpush.msra.mxu0 %v819
      %990 = vmatpush.msra.mxu0 %v818
      %991 = vmatpush.msra.mxu0 %v817
      %992 = vmatmul.f32.gmra.mxu0 %v729
      %v993 = vpop.f32.mrf.mxu0
      %v994 = vadd.f32 %v971, %v993
      %995 = vmatmul.f32.gmra.mxu0 %v735
      %v996 = vpop.f32.mrf.mxu0
      %v997 = vadd.f32 %v974, %v996
      %998 = vdwg.mxu0
      %999 = vmatpush.msra.mxu0 %v848
      %1000 = vmatpush.msra.mxu0 %v847
      %1001 = vmatpush.msra.mxu0 %v846
      %1002 = vmatpush.msra.mxu0 %v845
      %1003 = vmatpush.msra.mxu0 %v844
      %1004 = vmatpush.msra.mxu0 %v843
      %1005 = vmatpush.msra.mxu0 %v842
      %1006 = vmatpush.msra.mxu0 %v841
      %1007 = vmatpush.msra.mxu0 %v840
      %1008 = vmatpush.msra.mxu0 %v839
      %1009 = vmatpush.msra.mxu0 %v838
      %1010 = vmatpush.msra.mxu0 %v837
      %1011 = vmatpush.msra.mxu0 %v836
      %1012 = vmatpush.msra.mxu0 %v835
      %1013 = vmatpush.msra.mxu0 %v834
      %1014 = vmatpush.msra.mxu0 %v833
      %1015 = vmatmul.f32.gmra.mxu0 %v731
      %v1016 = vpop.f32.mrf.mxu0
      %v1017 = vadd.f32 %v994, %v1016
      %1018 = vmatmul.f32.gmra.mxu0 %v736
      %v1019 = vpop.f32.mrf.mxu0
      %v1020 = vadd.f32 %v997, %v1019
      %1021 = vdwg.mxu0
      %1022 = vmatpush.msra.mxu0 0.0
      %1023 = vmatpush.msra.mxu0 0.0
      %1024 = vmatpush.msra.mxu0 0.0
      %1025 = vmatpush.msra.mxu0 0.0
      %1026 = vmatpush.msra.mxu0 0.0
      %1027 = vmatpush.msra.mxu0 0.0
      %1028 = vmatpush.msra.mxu0 0.0
      %1029 = vmatpush.msra.mxu0 0.0
      %1030 = vmatpush.msra.mxu0 %v856
      %1031 = vmatpush.msra.mxu0 %v855
      %1032 = vmatpush.msra.mxu0 %v854
      %1033 = vmatpush.msra.mxu0 %v853
      %1034 = vmatpush.msra.mxu0 %v852
      %1035 = vmatpush.msra.mxu0 %v851
      %1036 = vmatpush.msra.mxu0 %v850
      %1037 = vmatpush.msra.mxu0 %v849
      %1038 = vmatmul.f32.gmra.mxu0 %v857
      %v1039 = vpop.f32.mrf.mxu0
      %v1040 = vadd.f32 %v1017, %v1039
      %1041 = vmatmul.f32.gmra.mxu0 %v859
      %v1042 = vpop.f32.mrf.mxu0
      %v1043 = vadd.f32 %v1020, %v1042
      %1044 = vdwg.mxu0
      %1045 = vmatpush.msra.mxu0 %v404
      %1046 = vmatpush.msra.mxu0 %v403
      %1047 = vmatpush.msra.mxu0 %v402
      %1048 = vmatpush.msra.mxu0 %v401
      %1049 = vmatpush.msra.mxu0 %v400
      %1050 = vmatpush.msra.mxu0 %v399
      %1051 = vmatpush.msra.mxu0 %v398
      %1052 = vmatpush.msra.mxu0 %v397
      %1053 = vmatpush.msra.mxu0 %v396
      %1054 = vmatpush.msra.mxu0 %v395
      %1055 = vmatpush.msra.mxu0 %v394
      %1056 = vmatpush.msra.mxu0 %v393
      %1057 = vmatpush.msra.mxu0 %v392
      %1058 = vmatpush.msra.mxu0 %v391
      %1059 = vmatpush.msra.mxu0 %v390
      %1060 = vmatpush.msra.mxu0 %v389
      %1061 = vmatmul.f32.gmra.mxu0 %v311
      %v1062 = vpop.f32.mrf.mxu0
      %v1063 = vadd.f32 %v1040, %v1062
      %1064 = vmatmul.f32.gmra.mxu0 %v307
      %v1065 = vpop.f32.mrf.mxu0
      %v1066 = vadd.f32 %v1043, %v1065
      %1067 = vdwg.mxu0
      %1068 = vmatpush.msra.mxu0 %v420
      %1069 = vmatpush.msra.mxu0 %v419
      %1070 = vmatpush.msra.mxu0 %v418
      %1071 = vmatpush.msra.mxu0 %v417
      %1072 = vmatpush.msra.mxu0 %v416
      %1073 = vmatpush.msra.mxu0 %v415
      %1074 = vmatpush.msra.mxu0 %v414
      %1075 = vmatpush.msra.mxu0 %v413
      %1076 = vmatpush.msra.mxu0 %v412
      %1077 = vmatpush.msra.mxu0 %v411
      %1078 = vmatpush.msra.mxu0 %v410
      %1079 = vmatpush.msra.mxu0 %v409
      %1080 = vmatpush.msra.mxu0 %v408
      %1081 = vmatpush.msra.mxu0 %v407
      %1082 = vmatpush.msra.mxu0 %v406
      %1083 = vmatpush.msra.mxu0 %v405
      %1084 = vmatmul.f32.gmra.mxu0 %v317
      %v1085 = vpop.f32.mrf.mxu0
      %v1086 = vadd.f32 %v1063, %v1085
      %1087 = vmatmul.f32.gmra.mxu0 %v319
      %v1088 = vpop.f32.mrf.mxu0
      %v1089 = vadd.f32 %v1066, %v1088
      %1090 = vdwg.mxu0
      %1091 = vmatpush.msra.mxu0 %v436
      %1092 = vmatpush.msra.mxu0 %v435
      %1093 = vmatpush.msra.mxu0 %v434
      %1094 = vmatpush.msra.mxu0 %v433
      %1095 = vmatpush.msra.mxu0 %v432
      %1096 = vmatpush.msra.mxu0 %v431
      %1097 = vmatpush.msra.mxu0 %v430
      %1098 = vmatpush.msra.mxu0 %v429
      %1099 = vmatpush.msra.mxu0 %v428
      %1100 = vmatpush.msra.mxu0 %v427
      %1101 = vmatpush.msra.mxu0 %v426
      %1102 = vmatpush.msra.mxu0 %v425
      %1103 = vmatpush.msra.mxu0 %v424
      %1104 = vmatpush.msra.mxu0 %v423
      %1105 = vmatpush.msra.mxu0 %v422
      %1106 = vmatpush.msra.mxu0 %v421
      %1107 = vmatmul.f32.gmra.mxu0 %v325
      %v1108 = vpop.f32.mrf.mxu0
      %v1109 = vadd.f32 %v1086, %v1108
      %1110 = vmatmul.f32.gmra.mxu0 %v327
      %v1111 = vpop.f32.mrf.mxu0
      %v1112 = vadd.f32 %v1089, %v1111
      %1113 = vdwg.mxu0
      %1114 = vmatpush.msra.mxu0 %v452
      %1115 = vmatpush.msra.mxu0 %v451
      %1116 = vmatpush.msra.mxu0 %v450
      %1117 = vmatpush.msra.mxu0 %v449
      %1118 = vmatpush.msra.mxu0 %v448
      %1119 = vmatpush.msra.mxu0 %v447
      %1120 = vmatpush.msra.mxu0 %v446
      %1121 = vmatpush.msra.mxu0 %v445
      %1122 = vmatpush.msra.mxu0 %v444
      %1123 = vmatpush.msra.mxu0 %v443
      %1124 = vmatpush.msra.mxu0 %v442
      %1125 = vmatpush.msra.mxu0 %v441
      %1126 = vmatpush.msra.mxu0 %v440
      %1127 = vmatpush.msra.mxu0 %v439
      %1128 = vmatpush.msra.mxu0 %v438
      %1129 = vmatpush.msra.mxu0 %v437
      %1130 = vmatmul.f32.gmra.mxu0 %v333
      %v1131 = vpop.f32.mrf.mxu0
      %v1132 = vadd.f32 %v1109, %v1131
      %1133 = vmatmul.f32.gmra.mxu0 %v335
      %v1134 = vpop.f32.mrf.mxu0
      %v1135 = vadd.f32 %v1112, %v1134
      %1136 = vdwg.mxu0
      %1137 = vmatpush.msra.mxu0 %v468
      %1138 = vmatpush.msra.mxu0 %v467
      %1139 = vmatpush.msra.mxu0 %v466
      %1140 = vmatpush.msra.mxu0 %v465
      %1141 = vmatpush.msra.mxu0 %v464
      %1142 = vmatpush.msra.mxu0 %v463
      %1143 = vmatpush.msra.mxu0 %v462
      %1144 = vmatpush.msra.mxu0 %v461
      %1145 = vmatpush.msra.mxu0 %v460
      %1146 = vmatpush.msra.mxu0 %v459
      %1147 = vmatpush.msra.mxu0 %v458
      %1148 = vmatpush.msra.mxu0 %v457
      %1149 = vmatpush.msra.mxu0 %v456
      %1150 = vmatpush.msra.mxu0 %v455
      %1151 = vmatpush.msra.mxu0 %v454
      %1152 = vmatpush.msra.mxu0 %v453
      %1153 = vmatmul.f32.gmra.mxu0 %v341
      %v1154 = vpop.f32.mrf.mxu0
      %v1155 = vadd.f32 %v1132, %v1154
      %1156 = vmatmul.f32.gmra.mxu0 %v343
      %v1157 = vpop.f32.mrf.mxu0
      %v1158 = vadd.f32 %v1135, %v1157
      %1159 = vdwg.mxu0
      %1160 = vmatpush.msra.mxu0 %v484
      %1161 = vmatpush.msra.mxu0 %v483
      %1162 = vmatpush.msra.mxu0 %v482
      %1163 = vmatpush.msra.mxu0 %v481
      %1164 = vmatpush.msra.mxu0 %v480
      %1165 = vmatpush.msra.mxu0 %v479
      %1166 = vmatpush.msra.mxu0 %v478
      %1167 = vmatpush.msra.mxu0 %v477
      %1168 = vmatpush.msra.mxu0 %v476
      %1169 = vmatpush.msra.mxu0 %v475
      %1170 = vmatpush.msra.mxu0 %v474
      %1171 = vmatpush.msra.mxu0 %v473
      %1172 = vmatpush.msra.mxu0 %v472
      %1173 = vmatpush.msra.mxu0 %v471
      %1174 = vmatpush.msra.mxu0 %v470
      %1175 = vmatpush.msra.mxu0 %v469
      %1176 = vmatmul.f32.gmra.mxu0 %v349
      %v1177 = vpop.f32.mrf.mxu0
      %v1178 = vadd.f32 %v1155, %v1177
      %1179 = vmatmul.f32.gmra.mxu0 %v351
      %v1180 = vpop.f32.mrf.mxu0
      %v1181 = vadd.f32 %v1158, %v1180
      %1182 = vdwg.mxu0
      %1183 = vmatpush.msra.mxu0 %v500
      %1184 = vmatpush.msra.mxu0 %v499
      %1185 = vmatpush.msra.mxu0 %v498
      %1186 = vmatpush.msra.mxu0 %v497
      %1187 = vmatpush.msra.mxu0 %v496
      %1188 = vmatpush.msra.mxu0 %v495
      %1189 = vmatpush.msra.mxu0 %v494
      %1190 = vmatpush.msra.mxu0 %v493
      %1191 = vmatpush.msra.mxu0 %v492
      %1192 = vmatpush.msra.mxu0 %v491
      %1193 = vmatpush.msra.mxu0 %v490
      %1194 = vmatpush.msra.mxu0 %v489
      %1195 = vmatpush.msra.mxu0 %v488
      %1196 = vmatpush.msra.mxu0 %v487
      %1197 = vmatpush.msra.mxu0 %v486
      %1198 = vmatpush.msra.mxu0 %v485
      %1199 = vmatmul.f32.gmra.mxu0 %v357
      %v1200 = vpop.f32.mrf.mxu0
      %v1201 = vadd.f32 %v1178, %v1200
      %1202 = vmatmul.f32.gmra.mxu0 %v359
      %v1203 = vpop.f32.mrf.mxu0
      %v1204 = vadd.f32 %v1181, %v1203
      %1205 = vdwg.mxu0
      %1206 = vmatpush.msra.mxu0 %v516
      %1207 = vmatpush.msra.mxu0 %v515
      %1208 = vmatpush.msra.mxu0 %v514
      %1209 = vmatpush.msra.mxu0 %v513
      %1210 = vmatpush.msra.mxu0 %v512
      %1211 = vmatpush.msra.mxu0 %v511
      %1212 = vmatpush.msra.mxu0 %v510
      %1213 = vmatpush.msra.mxu0 %v509
      %1214 = vmatpush.msra.mxu0 %v508
      %1215 = vmatpush.msra.mxu0 %v507
      %1216 = vmatpush.msra.mxu0 %v506
      %1217 = vmatpush.msra.mxu0 %v505
      %1218 = vmatpush.msra.mxu0 %v504
      %1219 = vmatpush.msra.mxu0 %v503
      %1220 = vmatpush.msra.mxu0 %v502
      %1221 = vmatpush.msra.mxu0 %v501
      %1222 = vmatmul.f32.gmra.mxu0 %v365
      %v1223 = vpop.f32.mrf.mxu0
      %v1224 = vadd.f32 %v1201, %v1223
      %1225 = vmatmul.f32.gmra.mxu0 %v367
      %v1226 = vpop.f32.mrf.mxu0
      %v1227 = vadd.f32 %v1204, %v1226
      %1228 = vdwg.mxu0
      %1229 = vmatpush.msra.mxu0 %v532
      %1230 = vmatpush.msra.mxu0 %v531
      %1231 = vmatpush.msra.mxu0 %v530
      %1232 = vmatpush.msra.mxu0 %v529
      %1233 = vmatpush.msra.mxu0 %v528
      %1234 = vmatpush.msra.mxu0 %v527
      %1235 = vmatpush.msra.mxu0 %v526
      %1236 = vmatpush.msra.mxu0 %v525
      %1237 = vmatpush.msra.mxu0 %v524
      %1238 = vmatpush.msra.mxu0 %v523
      %1239 = vmatpush.msra.mxu0 %v522
      %1240 = vmatpush.msra.mxu0 %v521
      %1241 = vmatpush.msra.mxu0 %v520
      %1242 = vmatpush.msra.mxu0 %v519
      %1243 = vmatpush.msra.mxu0 %v518
      %1244 = vmatpush.msra.mxu0 %v517
      %1245 = vmatmul.f32.gmra.mxu0 %v307
      %v1246 = vpop.f32.mrf.mxu0
      %v1247 = vadd.f32 %v1224, %v1246
      %1248 = vmatmul.f32.gmra.mxu0 %v312
      %v1249 = vpop.f32.mrf.mxu0
      %v1250 = vadd.f32 %v1227, %v1249
      %1251 = vdwg.mxu0
      %1252 = vmatpush.msra.mxu0 %v548
      %1253 = vmatpush.msra.mxu0 %v547
      %1254 = vmatpush.msra.mxu0 %v546
      %1255 = vmatpush.msra.mxu0 %v545
      %1256 = vmatpush.msra.mxu0 %v544
      %1257 = vmatpush.msra.mxu0 %v543
      %1258 = vmatpush.msra.mxu0 %v542
      %1259 = vmatpush.msra.mxu0 %v541
      %1260 = vmatpush.msra.mxu0 %v540
      %1261 = vmatpush.msra.mxu0 %v539
      %1262 = vmatpush.msra.mxu0 %v538
      %1263 = vmatpush.msra.mxu0 %v537
      %1264 = vmatpush.msra.mxu0 %v536
      %1265 = vmatpush.msra.mxu0 %v535
      %1266 = vmatpush.msra.mxu0 %v534
      %1267 = vmatpush.msra.mxu0 %v533
      %1268 = vmatmul.f32.gmra.mxu0 %v319
      %v1269 = vpop.f32.mrf.mxu0
      %v1270 = vadd.f32 %v1247, %v1269
      %1271 = vmatmul.f32.gmra.mxu0 %v372
      %v1272 = vpop.f32.mrf.mxu0
      %v1273 = vadd.f32 %v1250, %v1272
      %1274 = vdwg.mxu0
      %1275 = vmatpush.msra.mxu0 %v564
      %1276 = vmatpush.msra.mxu0 %v563
      %1277 = vmatpush.msra.mxu0 %v562
      %1278 = vmatpush.msra.mxu0 %v561
      %1279 = vmatpush.msra.mxu0 %v560
      %1280 = vmatpush.msra.mxu0 %v559
      %1281 = vmatpush.msra.mxu0 %v558
      %1282 = vmatpush.msra.mxu0 %v557
      %1283 = vmatpush.msra.mxu0 %v556
      %1284 = vmatpush.msra.mxu0 %v555
      %1285 = vmatpush.msra.mxu0 %v554
      %1286 = vmatpush.msra.mxu0 %v553
      %1287 = vmatpush.msra.mxu0 %v552
      %1288 = vmatpush.msra.mxu0 %v551
      %1289 = vmatpush.msra.mxu0 %v550
      %1290 = vmatpush.msra.mxu0 %v549
      %1291 = vmatmul.f32.gmra.mxu0 %v327
      %v1292 = vpop.f32.mrf.mxu0
      %v1293 = vadd.f32 %v1270, %v1292
      %1294 = vmatmul.f32.gmra.mxu0 %v375
      %v1295 = vpop.f32.mrf.mxu0
      %v1296 = vadd.f32 %v1273, %v1295
      %1297 = vdwg.mxu0
      %1298 = vmatpush.msra.mxu0 %v580
      %1299 = vmatpush.msra.mxu0 %v579
      %1300 = vmatpush.msra.mxu0 %v578
      %1301 = vmatpush.msra.mxu0 %v577
      %1302 = vmatpush.msra.mxu0 %v576
      %1303 = vmatpush.msra.mxu0 %v575
      %1304 = vmatpush.msra.mxu0 %v574
      %1305 = vmatpush.msra.mxu0 %v573
      %1306 = vmatpush.msra.mxu0 %v572
      %1307 = vmatpush.msra.mxu0 %v571
      %1308 = vmatpush.msra.mxu0 %v570
      %1309 = vmatpush.msra.mxu0 %v569
      %1310 = vmatpush.msra.mxu0 %v568
      %1311 = vmatpush.msra.mxu0 %v567
      %1312 = vmatpush.msra.mxu0 %v566
      %1313 = vmatpush.msra.mxu0 %v565
      %1314 = vmatmul.f32.gmra.mxu0 %v335
      %v1315 = vpop.f32.mrf.mxu0
      %v1316 = vadd.f32 %v1293, %v1315
      %1317 = vmatmul.f32.gmra.mxu0 %v378
      %v1318 = vpop.f32.mrf.mxu0
      %v1319 = vadd.f32 %v1296, %v1318
      %1320 = vdwg.mxu0
      %1321 = vmatpush.msra.mxu0 %v596
      %1322 = vmatpush.msra.mxu0 %v595
      %1323 = vmatpush.msra.mxu0 %v594
      %1324 = vmatpush.msra.mxu0 %v593
      %1325 = vmatpush.msra.mxu0 %v592
      %1326 = vmatpush.msra.mxu0 %v591
      %1327 = vmatpush.msra.mxu0 %v590
      %1328 = vmatpush.msra.mxu0 %v589
      %1329 = vmatpush.msra.mxu0 %v588
      %1330 = vmatpush.msra.mxu0 %v587
      %1331 = vmatpush.msra.mxu0 %v586
      %1332 = vmatpush.msra.mxu0 %v585
      %1333 = vmatpush.msra.mxu0 %v584
      %1334 = vmatpush.msra.mxu0 %v583
      %1335 = vmatpush.msra.mxu0 %v582
      %1336 = vmatpush.msra.mxu0 %v581
      %1337 = vmatmul.f32.gmra.mxu0 %v343
      %v1338 = vpop.f32.mrf.mxu0
      %v1339 = vadd.f32 %v1316, %v1338
      %1340 = vmatmul.f32.gmra.mxu0 %v381
      %v1341 = vpop.f32.mrf.mxu0
      %v1342 = vadd.f32 %v1319, %v1341
      %1343 = vdwg.mxu0
      %1344 = vmatpush.msra.mxu0 %v612
      %1345 = vmatpush.msra.mxu0 %v611
      %1346 = vmatpush.msra.mxu0 %v610
      %1347 = vmatpush.msra.mxu0 %v609
      %1348 = vmatpush.msra.mxu0 %v608
      %1349 = vmatpush.msra.mxu0 %v607
      %1350 = vmatpush.msra.mxu0 %v606
      %1351 = vmatpush.msra.mxu0 %v605
      %1352 = vmatpush.msra.mxu0 %v604
      %1353 = vmatpush.msra.mxu0 %v603
      %1354 = vmatpush.msra.mxu0 %v602
      %1355 = vmatpush.msra.mxu0 %v601
      %1356 = vmatpush.msra.mxu0 %v600
      %1357 = vmatpush.msra.mxu0 %v599
      %1358 = vmatpush.msra.mxu0 %v598
      %1359 = vmatpush.msra.mxu0 %v597
      %1360 = vmatmul.f32.gmra.mxu0 %v351
      %v1361 = vpop.f32.mrf.mxu0
      %v1362 = vadd.f32 %v1339, %v1361
      %1363 = vmatmul.f32.gmra.mxu0 %v384
      %v1364 = vpop.f32.mrf.mxu0
      %v1365 = vadd.f32 %v1342, %v1364
      %1366 = vdwg.mxu0
      %1367 = vmatpush.msra.mxu0 %v628
      %1368 = vmatpush.msra.mxu0 %v627
      %1369 = vmatpush.msra.mxu0 %v626
      %1370 = vmatpush.msra.mxu0 %v625
      %1371 = vmatpush.msra.mxu0 %v624
      %1372 = vmatpush.msra.mxu0 %v623
      %1373 = vmatpush.msra.mxu0 %v622
      %1374 = vmatpush.msra.mxu0 %v621
      %1375 = vmatpush.msra.mxu0 %v620
      %1376 = vmatpush.msra.mxu0 %v619
      %1377 = vmatpush.msra.mxu0 %v618
      %1378 = vmatpush.msra.mxu0 %v617
      %1379 = vmatpush.msra.mxu0 %v616
      %1380 = vmatpush.msra.mxu0 %v615
      %1381 = vmatpush.msra.mxu0 %v614
      %1382 = vmatpush.msra.mxu0 %v613
      %1383 = vmatmul.f32.gmra.mxu0 %v359
      %v1384 = vpop.f32.mrf.mxu0
      %v1385 = vadd.f32 %v1362, %v1384
      %1386 = vmatmul.f32.gmra.mxu0 %v387
      %v1387 = vpop.f32.mrf.mxu0
      %v1388 = vadd.f32 %v1365, %v1387
      %1389 = vdwg.mxu0
      %v1390 = vld [vmem:[%s4] sm:$0x1]
      %v1392 = vperm.slane %v1390, 0
      %v1394 = vadd.f32 %v1385, %v1392
      %v1395 = vadd.f32 %v1388, %v1392
      %v1396 = vmax.f32 %v1394, 0.0
      %v1397 = vmax.f32 %v1395, 0.0
      %1398 = vst.msk [vmem:[%s298] sm:$0xff] %vm725, %v1396
      %1399 = vst.msk [vmem:[%s298 + $0x8] sm:$0xff] %vm725, %v1397
      %s1400 = smul.u32 2, %s21
      %p1401 = scmp.lt.s32.totalorder %s20, 1
      %s1402 = scalar_select %p1401, %s20, 1
      %p1403 = scmp.lt.s32.totalorder %s1400, 1
      %s1404 = scalar_select %p1403, %s1400, 1
      %s1405 = smul.addr %s1402, 2
      %s1406 = sadd.s32 %s1404, %s1405
      %s1407 = smul.addr %s1406, 8
      %s1408 = scalar_lea.vmem %s5, %s1407
      // Predicated region
      $region41: #{wave_unet_forward.15} parent=39 // pred_check
        %p1409 = pneg %p167
      $region42: #{wave_unet_forward.15} parent=39 // pred_check_branch
        %1411 = sbr.rel (%p1409) target = $region44
      $region43: #{wave_unet_forward.15} parent=39 // pred_region
        %s1412 = smul.u32 2, %s21
      $region44: #{wave_unet_forward.15} parent=39 // pred_fallthru
        _
    $region40: #{wave_unet_forward.15} parent=5 // pred_fallthru
      _
    %p1413 = scmp.le.s32.totalorder 2, %s11
    // Predicated region
    $region45: #{wave_unet_forward.15} parent=5 // pred_check
      %p1414 = pneg %p1413
    $region46: #{wave_unet_forward.15} parent=5 // pred_check_branch
      %1416 = sbr.rel (%p1414) target = $region48
    $region47: #{wave_unet_forward.15} parent=5 // pred_region
      %s1417 = ssub.s32 %s11, 2
      // Predicated region
      $region49: #{wave_unet_forward.15} parent=47 // pred_check
        %p1418 = pneg %p173
      $region50: #{wave_unet_forward.15} parent=47 // pred_check_branch
        %1420 = sbr.rel (%p1418) target = $region52
      $region51: #{wave_unet_forward.15} parent=47 // pred_region
        %s1421 = smul.u32 2, %s23
        %p1422 = scmp.lt.s32.totalorder %s22, 1
        %s1423 = scalar_select %p1422, %s22, 1
        %p1424 = scmp.lt.s32.totalorder %s1421, 1
        %s1425 = scalar_select %p1424, %s1421, 1
        %s1426 = smul.addr %s1423, 2
        %s1427 = sadd.s32 %s1425, %s1426
        %s1428 = smul.addr %s1427, 8
        %s1429 = scalar_lea.vmem %s5, %s1428
      $region52: #{wave_unet_forward.15} parent=47 // pred_fallthru
        _
    $region48: #{wave_unet_forward.15} parent=5 // pred_fallthru
      _
  $region6: #{wave_unet_forward.15} parent=0 // loop_footer
    %s15 = sadd.s32 1, %s11
  $region7: #{wave_unet_forward.15} parent=0 // loop_footer_branch
    %10 = sbr.rel target = $region3
  $region8: #{wave_unet_forward.15} parent=0 // loop_exit
    _

// kernel: wave_unet_forward.18
$region0: #{wave_unet_forward.18}
  #allocation0 [shape = 'u32[]', space=smem, size = 0x4, offset = 0x4, fixed_abs, tag = 'smem constant byte address 0x4 - core index']
  #allocation1 [shape = 'u32[72,128]{1,0:T(1,128)}', space=vmem, size = 0x9000, scoped, tag = 'internal scratch']
  %s0 = inlined_call_operand.vmem [shape: f32[2,32,32], index: 0, kind: input, shape index: {}]
  %s1 = inlined_call_operand.vmem [shape: f32[32,6], index: 1, kind: input, shape index: {}]
  %s2 = inlined_call_operand.vmem [shape: f32[2,32,64], index: 2, kind: output, shape index: {}]
  %s3 = sld [smem:[#allocation0]]
  $region41: #{wave_unet_forward.18} parent=0
    _
  %s5 = ssub.s32 1, %s3
  %s6 = scalar_select 0, %s5, %s3
  loop: start=0, step=1, limit=4
  $region2: #{wave_unet_forward.18} parent=0 // loop_pre_header
    _
  $region3: #{wave_unet_forward.18} parent=0 // loop_header
    %s8 = sphi 0, %s12
    %p9 = scmp.ge.s32.totalorder %s8, 4
    %s18 = sphi 0, %s20
    %s21 = sphi 0, %s18
    %s22 = sphi 0, %s21
    %s38 = sphi 0, %s22
    %s42 = sphi 0, %s42
    %s44 = sphi 0, %s42
    %s45 = sphi 0, %s44
    %s59 = sphi 0, %s45
    %s65 = sphi 0, %s67
    %s68 = sphi 0, %s65
    %s69 = sphi 0, %s68
    %s85 = sphi 0, %s69
  $region4: #{wave_unet_forward.18} parent=0 // loop_header_branch
    %11 = sbr.rel (%p9) target = $region8
  $region5: #{wave_unet_forward.18} parent=0 // loop_body
    %s13 = ssub.s32 %s8, 1
    %s14 = ssub.s32 %s8, 2
    %s15 = sadd.s32 %s8, 1
    %s16 = ssub.s32 %s8, %s15
    %p17 = scmp.eq.s32.totalorder %s16, 0
    %s19 = sadd.s32 %s18, 1
    %s20 = scalar_select %p17, %s18, %s19
    %p23 = pneg %p17
    %p24 = scmp.eq.s32.totalorder %s8, 1
    %p25 = por %p23, %p24
    %p26 = scmp.ne.s32.totalorder %s18, %s21
    %p27 = scmp.eq.s32.totalorder %s8, 0
    %p28 = por %p26, %p27
    %p29 = scmp.ne.s32.totalorder %s18, %s21
    %p30 = scmp.eq.s32.totalorder %s13, 1
    %p31 = por %p29, %p30
    %p32 = scmp.ne.s32.totalorder %s21, %s22
    %p33 = scmp.eq.s32.totalorder %s13, 0
    %p34 = por %p32, %p33
    %p35 = scmp.ne.s32.totalorder %s21, %s22
    %p36 = scmp.eq.s32.totalorder %s14, 1
    %p37 = por %p35, %p36
    %p39 = scmp.ne.s32.totalorder %s22, %s38
    %p40 = scmp.eq.s32.totalorder %s14, 0
    %p41 = por %p39, %p40
    %s43 = sadd.s32 %s42, 1
    %p46 = scmp.eq.s32.totalorder %s8, 1
    %p47 = scmp.ne.s32.totalorder %s42, %s44
    %p48 = scmp.eq.s32.totalorder %s8, 0
    %p49 = por %p47, %p48
    %p50 = scmp.ne.s32.totalorder %s42, %s44
    %p51 = scmp.eq.s32.totalorder %s13, 1
    %p52 = por %p50, %p51
    %p53 = scmp.ne.s32.totalorder %s44, %s45
    %p54 = scmp.eq.s32.totalorder %s13, 0
    %p55 = por %p53, %p54
    %p56 = scmp.ne.s32.totalorder %s44, %s45
    %p57 = scmp.eq.s32.totalorder %s14, 1
    %p58 = por %p56, %p57
    %p60 = scmp.ne.s32.totalorder %s45, %s59
    %p61 = scmp.eq.s32.totalorder %s14, 0
    %p62 = por %p60, %p61
    %s63 = ssub.s32 %s8, %s15
    %p64 = scmp.eq.s32.totalorder %s63, 0
    %s66 = sadd.s32 %s65, 1
    %s67 = scalar_select %p64, %s65, %s66
    %p70 = pneg %p64
    %p71 = scmp.eq.s32.totalorder %s8, 1
    %p72 = por %p70, %p71
    %p73 = scmp.ne.s32.totalorder %s65, %s68
    %p74 = scmp.eq.s32.totalorder %s8, 0
    %p75 = por %p73, %p74
    %p76 = scmp.ne.s32.totalorder %s65, %s68
    %p77 = scmp.eq.s32.totalorder %s13, 1
    %p78 = por %p76, %p77
    %p79 = scmp.ne.s32.totalorder %s68, %s69
    %p80 = scmp.eq.s32.totalorder %s13, 0
    %p81 = por %p79, %p80
    %p82 = scmp.ne.s32.totalorder %s68, %s69
    %p83 = scmp.eq.s32.totalorder %s14, 1
    %p84 = por %p82, %p83
    %p86 = scmp.ne.s32.totalorder %s69, %s85
    %p87 = scmp.eq.s32.totalorder %s14, 0
    %p88 = por %p86, %p87
    %p89 = scmp.le.s32.totalorder 1, %s8
    %p90 = scmp.lt.s32.totalorder %s8, 3
    %p91 = pnand %p89, %p90
    %p92 = pneg %p91
    // Predicated region
    $region9: #{wave_unet_forward.18} parent=5 // pred_check
      _
    $region10: #{wave_unet_forward.18} parent=5 // pred_check_branch
      %94 = sbr.rel (%p91) target = $region12
    $region11: #{wave_unet_forward.18} parent=5 // pred_region
      %s95 = ssub.s32 %s8, 1
      // Predicated region
      $region13: #{wave_unet_forward.18} parent=11 // pred_check
        %p96 = pneg %p55
      $region14: #{wave_unet_forward.18} parent=11 // pred_check_branch
        %98 = sbr.rel (%p96) target = $region16
      $region15: #{wave_unet_forward.18} parent=11 // pred_region
        _
      $region16: #{wave_unet_forward.18} parent=11 // pred_fallthru
        _
    $region12: #{wave_unet_forward.18} parent=5 // pred_fallthru
      _
    %p99 = scmp.lt.s32.totalorder %s8, 2
    // Predicated region
    $region17: #{wave_unet_forward.18} parent=5 // pred_check
      %p100 = pneg %p99
    $region18: #{wave_unet_forward.18} parent=5 // pred_check_branch
      %102 = sbr.rel (%p100) target = $region20
    $region19: #{wave_unet_forward.18} parent=5 // pred_region
      // Predicated region
      $region21: #{wave_unet_forward.18} parent=19 // pred_check
        %p103 = pneg %p28
      $region22: #{wave_unet_forward.18} parent=19 // pred_check_branch
        %105 = sbr.rel (%p103) target = $region24
      $region23: #{wave_unet_forward.18} parent=19 // pred_region
        %p106 = scmp.lt.s32.totalorder %s8, 1
        %s107 = scalar_select %p106, %s8, 1
        %s108 = smul.addr %s107, 4
        %s109 = smul.addr %s108, 8
        %s110 = scalar_lea.vmem %s0, %s109
      $region24: #{wave_unet_forward.18} parent=19 // pred_fallthru
        _
    $region20: #{wave_unet_forward.18} parent=5 // pred_fallthru
      _
    %p111 = scmp.le.s32.totalorder 1, %s8
    %p112 = scmp.lt.s32.totalorder %s8, 3
    %p113 = pnand %p111, %p112
    %p114 = pneg %p113
    // Predicated region
    $region25: #{wave_unet_forward.18} parent=5 // pred_check
      _
    $region26: #{wave_unet_forward.18} parent=5 // pred_check_branch
      %116 = sbr.rel (%p113) target = $region28
    $region27: #{wave_unet_forward.18} parent=5 // pred_region
      %s117 = ssub.s32 %s8, 1
      %p118 = scmp.lt.s32.totalorder %s13, 1
      %s119 = scalar_select %p118, %s13, 1
      %s120 = smul.addr %s119, 4
      %s121 = smul.addr %s120, 8
      %s122 = scalar_lea.vmem %s0, %s121
      %p123 = pneg %p34
      %p124 = pneg %p31
      %p125 = pneg %p55
      %p126 = pneg %p52
      %p127 = pneg %p81
      %p128 = pneg %p78
      %p129 = scmp.lt.s32.totalorder %s13, 1
      %s130 = scalar_select %p129, %s13, 1
      %s131 = smul.addr %s130, 4
      %s132 = smul.addr %s131, 8
      %s133 = scalar_lea.vmem %s2, %s132
      %p134 = scmp.lt.s32.totalorder %s13, 1
      %s135 = scalar_select %p134, %s13, 1
      %s136 = smul.addr %s135, 4
      %s137 = smul.addr %s136, 8
      %s138 = scalar_lea.vmem %s0, %s137
      %p139 = scmp.lt.s32.totalorder %s13, 1
      %s140 = scalar_select %p139, %s13, 1
      %s141 = smul.addr %s140, 4
      %s142 = smul.addr %s141, 8
      %s143 = scalar_lea.vmem %s2, %s142
      %v144 = vld [vmem:[%s138] sm:$0xff]
      %v145 = vld [vmem:[%s138 + $0x8] sm:$0xff]
      %v146 = vld [vmem:[%s138 + $0x10] sm:$0xff]
      %v147 = vld [vmem:[%s138 + $0x18] sm:$0xff]
      %v148 = vld [vmem:[%s1] sm:$0xff]
      %v149 = vld [vmem:[%s1 + $0x8] sm:$0xff]
      %v150 = vld [vmem:[%s1 + $0x10] sm:$0xff]
      %v151 = vld [vmem:[%s1 + $0x18] sm:$0xff]
      %vm156 = vcmask 1040384
      %v157 = vrot.slane %v144, 7
      %v158 = vrot.slane %v145, 7
      %v159 = vsel %vm156, %v157, %v158
      %v160 = vrot.slane %v146, 7
      %v161 = vsel %vm156, %v158, %v160
      %v162 = vrot.slane %v147, 7
      %v163 = vsel %vm156, %v160, %v162
      %v168 = vsel %vm156, 0.0, %v157
      %vm169 = vcmask 1046528
      %v170 = vrot.slane %v144, 1
      %v171 = vrot.slane %v145, 1
      %v172 = vsel %vm169, %v170, %v171
      %v173 = vrot.slane %v146, 1
      %v174 = vsel %vm169, %v171, %v173
      %v175 = vrot.slane %v147, 1
      %v176 = vsel %vm169, %v173, %v175
      %v181 = vsel %vm169, %v175, 0.0
      %183 = vset.pattern.permute.xlu0 0
      %184 = vperm.xlu0 %183, %v148
      %v185 = vpop.permute.xlu0 %184
      %188 = vset.pattern.permute.xlu0 0
      %189 = vperm.xlu0 %188, %v149
      %v190 = vpop.permute.xlu0 %189
      %193 = vset.pattern.permute.xlu0 0
      %194 = vperm.xlu0 %193, %v150
      %v195 = vpop.permute.xlu0 %194
      %198 = vset.pattern.permute.xlu0 0
      %199 = vperm.xlu0 %198, %v151
      %v200 = vpop.permute.xlu0 %199
      %v202 = vmul.f32 %v185, %v168
      %v203 = vmul.f32 %v190, %v159
      %v204 = vmul.f32 %v195, %v161
      %v205 = vmul.f32 %v200, %v163
      %206 = vset.pattern.permute.xlu0 1
      %207 = vperm.xlu0 %206, %v148
      %v208 = vpop.permute.xlu0 %207
      %210 = vset.pattern.permute.xlu0 1
      %211 = vperm.xlu0 %210, %v149
      %v212 = vpop.permute.xlu0 %211
      %214 = vset.pattern.permute.xlu0 1
      %215 = vperm.xlu0 %214, %v150
      %v216 = vpop.permute.xlu0 %215
      %218 = vset.pattern.permute.xlu0 1
      %219 = vperm.xlu0 %218, %v151
      %v220 = vpop.permute.xlu0 %219
      %v222 = vmul.f32 %v208, %v144
      %v223 = vmul.f32 %v212, %v145
      %v224 = vmul.f32 %v216, %v146
      %v225 = vmul.f32 %v220, %v147
      %v226 = vadd.f32 %v202, %v222
      %v227 = vadd.f32 %v203, %v223
      %v228 = vadd.f32 %v204, %v224
      %v229 = vadd.f32 %v205, %v225
      %230 = vset.pattern.permute.xlu0 2
      %231 = vperm.xlu0 %230, %v148
      %v232 = vpop.permute.xlu0 %231
      %234 = vset.pattern.permute.xlu0 2
      %235 = vperm.xlu0 %234, %v149
      %v236 = vpop.permute.xlu0 %235
      %238 = vset.pattern.permute.xlu0 2
      %239 = vperm.xlu0 %238, %v150
      %v240 = vpop.permute.xlu0 %239
      %242 = vset.pattern.permute.xlu0 2
      %243 = vperm.xlu0 %242, %v151
      %v244 = vpop.permute.xlu0 %243
      %v246 = vmul.f32 %v232, %v172
      %v247 = vmul.f32 %v236, %v174
      %v248 = vmul.f32 %v240, %v176
      %v249 = vmul.f32 %v244, %v181
      %v250 = vadd.f32 %v226, %v246
      %v251 = vadd.f32 %v227, %v247
      %v252 = vadd.f32 %v228, %v248
      %v253 = vadd.f32 %v229, %v249
      %254 = vset.pattern.permute.xlu0 3
      %255 = vperm.xlu0 %254, %v148
      %v256 = vpop.permute.xlu0 %255
      %258 = vset.pattern.permute.xlu0 3
      %259 = vperm.xlu0 %258, %v149
      %v260 = vpop.permute.xlu0 %259
      %262 = vset.pattern.permute.xlu0 3
      %263 = vperm.xlu0 %262, %v150
      %v264 = vpop.permute.xlu0 %263
      %266 = vset.pattern.permute.xlu0 3
      %267 = vperm.xlu0 %266, %v151
      %v268 = vpop.permute.xlu0 %267
      %v270 = vmul.f32 %v256, %v168
      %v271 = vmul.f32 %v260, %v159
      %v272 = vmul.f32 %v264, %v161
      %v273 = vmul.f32 %v268, %v163
      %274 = vset.pattern.permute.xlu0 4
      %275 = vperm.xlu0 %274, %v148
      %v276 = vpop.permute.xlu0 %275
      %278 = vset.pattern.permute.xlu0 4
      %279 = vperm.xlu0 %278, %v149
      %v280 = vpop.permute.xlu0 %279
      %282 = vset.pattern.permute.xlu0 4
      %283 = vperm.xlu0 %282, %v150
      %v284 = vpop.permute.xlu0 %283
      %286 = vset.pattern.permute.xlu0 4
      %287 = vperm.xlu0 %286, %v151
      %v288 = vpop.permute.xlu0 %287
      %v290 = vmul.f32 %v276, %v144
      %v291 = vmul.f32 %v280, %v145
      %v292 = vmul.f32 %v284, %v146
      %v293 = vmul.f32 %v288, %v147
      %v294 = vadd.f32 %v270, %v290
      %v295 = vadd.f32 %v271, %v291
      %v296 = vadd.f32 %v272, %v292
      %v297 = vadd.f32 %v273, %v293
      %298 = vset.pattern.permute.xlu0 5
      %299 = vperm.xlu0 %298, %v148
      %v300 = vpop.permute.xlu0 %299
      %302 = vset.pattern.permute.xlu0 5
      %303 = vperm.xlu0 %302, %v149
      %v304 = vpop.permute.xlu0 %303
      %306 = vset.pattern.permute.xlu0 5
      %307 = vperm.xlu0 %306, %v150
      %v308 = vpop.permute.xlu0 %307
      %310 = vset.pattern.permute.xlu0 5
      %311 = vperm.xlu0 %310, %v151
      %v312 = vpop.permute.xlu0 %311
      %v314 = vmul.f32 %v300, %v172
      %v315 = vmul.f32 %v304, %v174
      %v316 = vmul.f32 %v308, %v176
      %v317 = vmul.f32 %v312, %v181
      %v318 = vadd.f32 %v294, %v314
      %v319 = vadd.f32 %v295, %v315
      %v320 = vadd.f32 %v296, %v316
      %v321 = vadd.f32 %v297, %v317
      %326 = vrot.lane.b32.xlu0 %v318, 32
      %v327 = vpop.permute.xlu0 %326
      %328 = vrot.lane.b32.xlu0 %v319, 32
      %v329 = vpop.permute.xlu0 %328
      %330 = vrot.lane.b32.xlu0 %v320, 32
      %v331 = vpop.permute.xlu0 %330
      %332 = vrot.lane.b32.xlu0 %v321, 32
      %v333 = vpop.permute.xlu0 %332
      %vm338 = vcmask 261120
      %v339 = vsel %vm338, %v250, %v327
      %v340 = vsel %vm338, %v251, %v329
      %v341 = vsel %vm338, %v252, %v331
      %v342 = vsel %vm338, %v253, %v333
      %vm343 = vcmask 523264
      %344 = vst.msk [vmem:[%s143] sm:$0xff] %vm343, %v339
      %345 = vst.msk [vmem:[%s143 + $0x8] sm:$0xff] %vm343, %v340
      %346 = vst.msk [vmem:[%s143 + $0x10] sm:$0xff] %vm343, %v341
      %347 = vst.msk [vmem:[%s143 + $0x18] sm:$0xff] %vm343, %v342
      %p348 = scmp.lt.s32.totalorder %s13, 1
      %s349 = scalar_select %p348, %s13, 1
      %s350 = smul.addr %s349, 4
      %s351 = smul.addr %s350, 8
      %s352 = scalar_lea.vmem %s2, %s351
      // Predicated region
      $region29: #{wave_unet_forward.18} parent=27 // pred_check
        %p353 = pneg %p78
      $region30: #{wave_unet_forward.18} parent=27 // pred_check_branch
        %355 = sbr.rel (%p353) target = $region32
      $region31: #{wave_unet_forward.18} parent=27 // pred_region
        _
      $region32: #{wave_unet_forward.18} parent=27 // pred_fallthru
        _
    $region28: #{wave_unet_forward.18} parent=5 // pred_fallthru
      _
    %p356 = scmp.le.s32.totalorder 2, %s8
    // Predicated region
    $region33: #{wave_unet_forward.18} parent=5 // pred_check
      %p357 = pneg %p356
    $region34: #{wave_unet_forward.18} parent=5 // pred_check_branch
      %359 = sbr.rel (%p357) target = $region36
    $region35: #{wave_unet_forward.18} parent=5 // pred_region
      %s360 = ssub.s32 %s8, 2
      // Predicated region
      $region37: #{wave_unet_forward.18} parent=35 // pred_check
        %p361 = pneg %p84
      $region38: #{wave_unet_forward.18} parent=35 // pred_check_branch
        %363 = sbr.rel (%p361) target = $region40
      $region39: #{wave_unet_forward.18} parent=35 // pred_region
        %p364 = scmp.lt.s32.totalorder %s14, 1
        %s365 = scalar_select %p364, %s14, 1
        %s366 = smul.addr %s365, 4
        %s367 = smul.addr %s366, 8
        %s368 = scalar_lea.vmem %s2, %s367
      $region40: #{wave_unet_forward.18} parent=35 // pred_fallthru
        _
    $region36: #{wave_unet_forward.18} parent=5 // pred_fallthru
      _
  $region6: #{wave_unet_forward.18} parent=0 // loop_footer
    %s12 = sadd.s32 1, %s8
  $region7: #{wave_unet_forward.18} parent=0 // loop_footer_branch
    %7 = sbr.rel target = $region3
  $region8: #{wave_unet_forward.18} parent=0 // loop_exit
    _

// kernel: wave_unet_forward.17
$region0: #{wave_unet_forward.17}
  #allocation0 [shape = 'u32[]', space=smem, size = 0x4, offset = 0x4, fixed_abs, tag = 'smem constant byte address 0x4 - core index']
  #allocation1 [shape = 'u32[72,128]{1,0:T(1,128)}', space=vmem, size = 0x9000, scoped, tag = 'internal scratch']
  %s0 = inlined_call_operand.vmem [shape: f32[2,32,64], index: 0, kind: input, shape index: {}, may-alias: {0,1,2}]
  %s1 = inlined_call_operand.vmem [shape: f32[2,32,64], index: 1, kind: input, shape index: {}, may-alias: {0,1,2}]
  %s2 = inlined_call_operand.vmem [shape: f32[2,32,64], index: 2, kind: input, shape index: {}, may-alias: {0,1,2}]
  %s3 = inlined_call_operand.vmem [shape: f32[2,32,32], index: 3, kind: input, shape index: {}, may-alias: {3,4,5}]
  %s4 = inlined_call_operand.vmem [shape: f32[2,32,32], index: 4, kind: input, shape index: {}, may-alias: {3,4,5}]
  %s5 = inlined_call_operand.vmem [shape: f32[2,32,32], index: 5, kind: input, shape index: {}, may-alias: {3,4,5}]
  %s6 = inlined_call_operand.vmem [shape: f32[960,32], index: 6, kind: input, shape index: {}]
  %s7 = inlined_call_operand.vmem [shape: f32[480,32], index: 7, kind: input, shape index: {}]
  %s8 = inlined_call_operand.vmem [shape: f32[1,32], index: 8, kind: input, shape index: {}]
  %s9 = inlined_call_operand.vmem [shape: f32[2,32,32], index: 9, kind: output, shape index: {}]
  %s10 = sld [smem:[#allocation0]]
  $region69: #{wave_unet_forward.17} parent=0
    _
  %s12 = ssub.s32 1, %s10
  %s13 = scalar_select 0, %s12, %s10
  loop: start=0, step=1, limit=6
  $region2: #{wave_unet_forward.17} parent=0 // loop_pre_header
    _
  $region3: #{wave_unet_forward.17} parent=0 // loop_header
    %s15 = sphi 0, %s19
    %p16 = scmp.ge.s32.totalorder %s15, 6
    %s22 = sphi 0, %s34
    %s23 = sphi 0, %s30
    %s24 = sphi 0, %s22
    %s25 = sphi 0, %s23
    %s26 = sphi 0, %s24
    %s27 = sphi 0, %s25
    %s39 = sphi 0, %s41
    %s42 = sphi 0, %s39
    %s43 = sphi 0, %s42
    %s59 = sphi 0, %s43
    %s75 = sphi 0, %s77
    %s78 = sphi 0, %s75
    %s79 = sphi 0, %s78
    %s95 = sphi 0, %s79
    %s111 = sphi 0, %s113
    %s114 = sphi 0, %s111
    %s115 = sphi 0, %s114
    %s131 = sphi 0, %s115
    %s139 = sphi 0, %s141
    %s142 = sphi 0, %s139
    %s143 = sphi 0, %s142
    %s159 = sphi 0, %s143
    %s175 = sphi 0, %s177
    %s178 = sphi 0, %s175
    %s179 = sphi 0, %s178
    %s195 = sphi 0, %s179
    %s211 = sphi 0, %s213
    %s214 = sphi 0, %s211
    %s215 = sphi 0, %s214
    %s231 = sphi 0, %s215
    %s235 = sphi 0, %s235
    %s237 = sphi 0, %s235
    %s238 = sphi 0, %s237
    %s252 = sphi 0, %s238
    %s256 = sphi 0, %s256
    %s258 = sphi 0, %s256
    %s259 = sphi 0, %s258
    %s273 = sphi 0, %s259
    %s277 = sphi 0, %s277
    %s279 = sphi 0, %s277
    %s280 = sphi 0, %s279
    %s294 = sphi 0, %s280
    %s302 = sphi 0, %s304
    %s305 = sphi 0, %s302
    %s306 = sphi 0, %s305
    %s322 = sphi 0, %s306
  $region4: #{wave_unet_forward.17} parent=0 // loop_header_branch
    %18 = sbr.rel (%p16) target = $region8
  $region5: #{wave_unet_forward.17} parent=0 // loop_body
    %s20 = ssub.s32 %s15, 1
    %s21 = ssub.s32 %s15, 2
    %s28 = sadd.s32 1, %s23
    %p29 = scmp.ge.s32.totalorder %s28, 2
    %s30 = scalar_select %p29, 0, %s28
    %s31 = sadd.s32 1, %s22
    %s32 = scalar_select %p29, %s31, %s22
    %p33 = scmp.ge.s32.totalorder %s32, 2
    %s34 = scalar_select %p33, 0, %s32
    %s35 = ssub.s32 %s22, %s34
    %s36 = ssub.s32 %s23, %s30
    %s37 = sor.u32 %s35, %s36
    %p38 = scmp.eq.s32.totalorder %s37, 0
    %s40 = sadd.s32 %s39, 1
    %s41 = scalar_select %p38, %s39, %s40
    %p44 = pneg %p38
    %p45 = scmp.eq.s32.totalorder %s15, 3
    %p46 = por %p44, %p45
    %p47 = scmp.ne.s32.totalorder %s39, %s42
    %p48 = scmp.eq.s32.totalorder %s15, 0
    %p49 = por %p47, %p48
    %p50 = scmp.ne.s32.totalorder %s39, %s42
    %p51 = scmp.eq.s32.totalorder %s20, 3
    %p52 = por %p50, %p51
    %p53 = scmp.ne.s32.totalorder %s42, %s43
    %p54 = scmp.eq.s32.totalorder %s20, 0
    %p55 = por %p53, %p54
    %p56 = scmp.ne.s32.totalorder %s42, %s43
    %p57 = scmp.eq.s32.totalorder %s21, 3
    %p58 = por %p56, %p57
    %p60 = scmp.ne.s32.totalorder %s43, %s59
    %p61 = scmp.eq.s32.totalorder %s21, 0
    %p62 = por %p60, %p61
    %s63 = smul.u32 %s23, 2
    %s64 = ssub.s32 %s63, 1
    %p65 = scmp.gt.s32.totalorder %s64, 0
    %s66 = scalar_select %p65, %s64, 0
    %s67 = smul.u32 %s30, 2
    %s68 = ssub.s32 %s67, 1
    %p69 = scmp.gt.s32.totalorder %s68, 0
    %s70 = scalar_select %p69, %s68, 0
    %s71 = ssub.s32 %s22, %s34
    %s72 = ssub.s32 %s66, %s70
    %s73 = sor.u32 %s71, %s72
    %p74 = scmp.eq.s32.totalorder %s73, 0
    %s76 = sadd.s32 %s75, 1
    %s77 = scalar_select %p74, %s75, %s76
    %p80 = pneg %p74
    %p81 = scmp.eq.s32.totalorder %s15, 3
    %p82 = por %p80, %p81
    %p83 = scmp.ne.s32.totalorder %s75, %s78
    %p84 = scmp.eq.s32.totalorder %s15, 0
    %p85 = por %p83, %p84
    %p86 = scmp.ne.s32.totalorder %s75, %s78
    %p87 = scmp.eq.s32.totalorder %s20, 3
    %p88 = por %p86, %p87
    %p89 = scmp.ne.s32.totalorder %s78, %s79
    %p90 = scmp.eq.s32.totalorder %s20, 0
    %p91 = por %p89, %p90
    %p92 = scmp.ne.s32.totalorder %s78, %s79
    %p93 = scmp.eq.s32.totalorder %s21, 3
    %p94 = por %p92, %p93
    %p96 = scmp.ne.s32.totalorder %s79, %s95
    %p97 = scmp.eq.s32.totalorder %s21, 0
    %p98 = por %p96, %p97
    %s99 = sadd.s32 %s23, 1
    %s100 = smul.u32 %s99, 2
    %p101 = scmp.lt.s32.totalorder %s100, 3
    %s102 = scalar_select %p101, %s100, 3
    %s103 = sadd.s32 %s30, 1
    %s104 = smul.u32 %s103, 2
    %p105 = scmp.lt.s32.totalorder %s104, 3
    %s106 = scalar_select %p105, %s104, 3
    %s107 = ssub.s32 %s22, %s34
    %s108 = ssub.s32 %s102, %s106
    %s109 = sor.u32 %s107, %s108
    %p110 = scmp.eq.s32.totalorder %s109, 0
    %s112 = sadd.s32 %s111, 1
    %s113 = scalar_select %p110, %s111, %s112
    %p116 = pneg %p110
    %p117 = scmp.eq.s32.totalorder %s15, 3
    %p118 = por %p116, %p117
    %p119 = scmp.ne.s32.totalorder %s111, %s114
    %p120 = scmp.eq.s32.totalorder %s15, 0
    %p121 = por %p119, %p120
    %p122 = scmp.ne.s32.totalorder %s111, %s114
    %p123 = scmp.eq.s32.totalorder %s20, 3
    %p124 = por %p122, %p123
    %p125 = scmp.ne.s32.totalorder %s114, %s115
    %p126 = scmp.eq.s32.totalorder %s20, 0
    %p127 = por %p125, %p126
    %p128 = scmp.ne.s32.totalorder %s114, %s115
    %p129 = scmp.eq.s32.totalorder %s21, 3
    %p130 = por %p128, %p129
    %p132 = scmp.ne.s32.totalorder %s115, %s131
    %p133 = scmp.eq.s32.totalorder %s21, 0
    %p134 = por %p132, %p133
    %s135 = ssub.s32 %s22, %s34
    %s136 = ssub.s32 %s23, %s30
    %s137 = sor.u32 %s135, %s136
    %p138 = scmp.eq.s32.totalorder %s137, 0
    %s140 = sadd.s32 %s139, 1
    %s141 = scalar_select %p138, %s139, %s140
    %p144 = pneg %p138
    %p145 = scmp.eq.s32.totalorder %s15, 3
    %p146 = por %p144, %p145
    %p147 = scmp.ne.s32.totalorder %s139, %s142
    %p148 = scmp.eq.s32.totalorder %s15, 0
    %p149 = por %p147, %p148
    %p150 = scmp.ne.s32.totalorder %s139, %s142
    %p151 = scmp.eq.s32.totalorder %s20, 3
    %p152 = por %p150, %p151
    %p153 = scmp.ne.s32.totalorder %s142, %s143
    %p154 = scmp.eq.s32.totalorder %s20, 0
    %p155 = por %p153, %p154
    %p156 = scmp.ne.s32.totalorder %s142, %s143
    %p157 = scmp.eq.s32.totalorder %s21, 3
    %p158 = por %p156, %p157
    %p160 = scmp.ne.s32.totalorder %s143, %s159
    %p161 = scmp.eq.s32.totalorder %s21, 0
    %p162 = por %p160, %p161
    %s163 = smul.u32 %s23, 2
    %s164 = ssub.s32 %s163, 1
    %p165 = scmp.gt.s32.totalorder %s164, 0
    %s166 = scalar_select %p165, %s164, 0
    %s167 = smul.u32 %s30, 2
    %s168 = ssub.s32 %s167, 1
    %p169 = scmp.gt.s32.totalorder %s168, 0
    %s170 = scalar_select %p169, %s168, 0
    %s171 = ssub.s32 %s22, %s34
    %s172 = ssub.s32 %s166, %s170
    %s173 = sor.u32 %s171, %s172
    %p174 = scmp.eq.s32.totalorder %s173, 0
    %s176 = sadd.s32 %s175, 1
    %s177 = scalar_select %p174, %s175, %s176
    %p180 = pneg %p174
    %p181 = scmp.eq.s32.totalorder %s15, 3
    %p182 = por %p180, %p181
    %p183 = scmp.ne.s32.totalorder %s175, %s178
    %p184 = scmp.eq.s32.totalorder %s15, 0
    %p185 = por %p183, %p184
    %p186 = scmp.ne.s32.totalorder %s175, %s178
    %p187 = scmp.eq.s32.totalorder %s20, 3
    %p188 = por %p186, %p187
    %p189 = scmp.ne.s32.totalorder %s178, %s179
    %p190 = scmp.eq.s32.totalorder %s20, 0
    %p191 = por %p189, %p190
    %p192 = scmp.ne.s32.totalorder %s178, %s179
    %p193 = scmp.eq.s32.totalorder %s21, 3
    %p194 = por %p192, %p193
    %p196 = scmp.ne.s32.totalorder %s179, %s195
    %p197 = scmp.eq.s32.totalorder %s21, 0
    %p198 = por %p196, %p197
    %s199 = sadd.s32 %s23, 1
    %s200 = smul.u32 %s199, 2
    %p201 = scmp.lt.s32.totalorder %s200, 3
    %s202 = scalar_select %p201, %s200, 3
    %s203 = sadd.s32 %s30, 1
    %s204 = smul.u32 %s203, 2
    %p205 = scmp.lt.s32.totalorder %s204, 3
    %s206 = scalar_select %p205, %s204, 3
    %s207 = ssub.s32 %s22, %s34
    %s208 = ssub.s32 %s202, %s206
    %s209 = sor.u32 %s207, %s208
    %p210 = scmp.eq.s32.totalorder %s209, 0
    %s212 = sadd.s32 %s211, 1
    %s213 = scalar_select %p210, %s211, %s212
    %p216 = pneg %p210
    %p217 = scmp.eq.s32.totalorder %s15, 3
    %p218 = por %p216, %p217
    %p219 = scmp.ne.s32.totalorder %s211, %s214
    %p220 = scmp.eq.s32.totalorder %s15, 0
    %p221 = por %p219, %p220
    %p222 = scmp.ne.s32.totalorder %s211, %s214
    %p223 = scmp.eq.s32.totalorder %s20, 3
    %p224 = por %p222, %p223
    %p225 = scmp.ne.s32.totalorder %s214, %s215
    %p226 = scmp.eq.s32.totalorder %s20, 0
    %p227 = por %p225, %p226
    %p228 = scmp.ne.s32.totalorder %s214, %s215
    %p229 = scmp.eq.s32.totalorder %s21, 3
    %p230 = por %p228, %p229
    %p232 = scmp.ne.s32.totalorder %s215, %s231
    %p233 = scmp.eq.s32.totalorder %s21, 0
    %p234 = por %p232, %p233
    %s236 = sadd.s32 %s235, 1
    %p239 = scmp.eq.s32.totalorder %s15, 3
    %p240 = scmp.ne.s32.totalorder %s235, %s237
    %p241 = scmp.eq.s32.totalorder %s15, 0
    %p242 = por %p240, %p241
    %p243 = scmp.ne.s32.totalorder %s235, %s237
    %p244 = scmp.eq.s32.totalorder %s20, 3
    %p245 = por %p243, %p244
    %p246 = scmp.ne.s32.totalorder %s237, %s238
    %p247 = scmp.eq.s32.totalorder %s20, 0
    %p248 = por %p246, %p247
    %p249 = scmp.ne.s32.totalorder %s237, %s238
    %p250 = scmp.eq.s32.totalorder %s21, 3
    %p251 = por %p249, %p250
    %p253 = scmp.ne.s32.totalorder %s238, %s252
    %p254 = scmp.eq.s32.totalorder %s21, 0
    %p255 = por %p253, %p254
    %s257 = sadd.s32 %s256, 1
    %p260 = scmp.eq.s32.totalorder %s15, 3
    %p261 = scmp.ne.s32.totalorder %s256, %s258
    %p262 = scmp.eq.s32.totalorder %s15, 0
    %p263 = por %p261, %p262
    %p264 = scmp.ne.s32.totalorder %s256, %s258
    %p265 = scmp.eq.s32.totalorder %s20, 3
    %p266 = por %p264, %p265
    %p267 = scmp.ne.s32.totalorder %s258, %s259
    %p268 = scmp.eq.s32.totalorder %s20, 0
    %p269 = por %p267, %p268
    %p270 = scmp.ne.s32.totalorder %s258, %s259
    %p271 = scmp.eq.s32.totalorder %s21, 3
    %p272 = por %p270, %p271
    %p274 = scmp.ne.s32.totalorder %s259, %s273
    %p275 = scmp.eq.s32.totalorder %s21, 0
    %p276 = por %p274, %p275
    %s278 = sadd.s32 %s277, 1
    %p281 = scmp.eq.s32.totalorder %s15, 3
    %p282 = scmp.ne.s32.totalorder %s277, %s279
    %p283 = scmp.eq.s32.totalorder %s15, 0
    %p284 = por %p282, %p283
    %p285 = scmp.ne.s32.totalorder %s277, %s279
    %p286 = scmp.eq.s32.totalorder %s20, 3
    %p287 = por %p285, %p286
    %p288 = scmp.ne.s32.totalorder %s279, %s280
    %p289 = scmp.eq.s32.totalorder %s20, 0
    %p290 = por %p288, %p289
    %p291 = scmp.ne.s32.totalorder %s279, %s280
    %p292 = scmp.eq.s32.totalorder %s21, 3
    %p293 = por %p291, %p292
    %p295 = scmp.ne.s32.totalorder %s280, %s294
    %p296 = scmp.eq.s32.totalorder %s21, 0
    %p297 = por %p295, %p296
    %s298 = ssub.s32 %s22, %s34
    %s299 = ssub.s32 %s23, %s30
    %s300 = sor.u32 %s298, %s299
    %p301 = scmp.eq.s32.totalorder %s300, 0
    %s303 = sadd.s32 %s302, 1
    %s304 = scalar_select %p301, %s302, %s303
    %p307 = pneg %p301
    %p308 = scmp.eq.s32.totalorder %s15, 3
    %p309 = por %p307, %p308
    %p310 = scmp.ne.s32.totalorder %s302, %s305
    %p311 = scmp.eq.s32.totalorder %s15, 0
    %p312 = por %p310, %p311
    %p313 = scmp.ne.s32.totalorder %s302, %s305
    %p314 = scmp.eq.s32.totalorder %s20, 3
    %p315 = por %p313, %p314
    %p316 = scmp.ne.s32.totalorder %s305, %s306
    %p317 = scmp.eq.s32.totalorder %s20, 0
    %p318 = por %p316, %p317
    %p319 = scmp.ne.s32.totalorder %s305, %s306
    %p320 = scmp.eq.s32.totalorder %s21, 3
    %p321 = por %p319, %p320
    %p323 = scmp.ne.s32.totalorder %s306, %s322
    %p324 = scmp.eq.s32.totalorder %s21, 0
    %p325 = por %p323, %p324
    %p326 = scmp.le.s32.totalorder 1, %s15
    %p327 = scmp.lt.s32.totalorder %s15, 5
    %p328 = pnand %p326, %p327
    %p329 = pneg %p328
    // Predicated region
    $region9: #{wave_unet_forward.17} parent=5 // pred_check
      _
    $region10: #{wave_unet_forward.17} parent=5 // pred_check_branch
      %331 = sbr.rel (%p328) target = $region12
    $region11: #{wave_unet_forward.17} parent=5 // pred_region
      %s332 = ssub.s32 %s15, 1
      // Predicated region
      $region13: #{wave_unet_forward.17} parent=11 // pred_check
        %p333 = pneg %p248
      $region14: #{wave_unet_forward.17} parent=11 // pred_check_branch
        %335 = sbr.rel (%p333) target = $region16
      $region15: #{wave_unet_forward.17} parent=11 // pred_region
        _
      $region16: #{wave_unet_forward.17} parent=11 // pred_fallthru
        _
      // Predicated region
      $region17: #{wave_unet_forward.17} parent=11 // pred_check
        %p336 = pneg %p269
      $region18: #{wave_unet_forward.17} parent=11 // pred_check_branch
        %338 = sbr.rel (%p336) target = $region20
      $region19: #{wave_unet_forward.17} parent=11 // pred_region
        _
      $region20: #{wave_unet_forward.17} parent=11 // pred_fallthru
        _
      // Predicated region
      $region21: #{wave_unet_forward.17} parent=11 // pred_check
        %p339 = pneg %p290
      $region22: #{wave_unet_forward.17} parent=11 // pred_check_branch
        %341 = sbr.rel (%p339) target = $region24
      $region23: #{wave_unet_forward.17} parent=11 // pred_region
        _
      $region24: #{wave_unet_forward.17} parent=11 // pred_fallthru
        _
    $region12: #{wave_unet_forward.17} parent=5 // pred_fallthru
      _
    %p342 = scmp.lt.s32.totalorder %s15, 4
    // Predicated region
    $region25: #{wave_unet_forward.17} parent=5 // pred_check
      %p343 = pneg %p342
    $region26: #{wave_unet_forward.17} parent=5 // pred_check_branch
      %345 = sbr.rel (%p343) target = $region28
    $region27: #{wave_unet_forward.17} parent=5 // pred_region
      // Predicated region
      $region29: #{wave_unet_forward.17} parent=27 // pred_check
        %p346 = pneg %p49
      $region30: #{wave_unet_forward.17} parent=27 // pred_check_branch
        %348 = sbr.rel (%p346) target = $region32
      $region31: #{wave_unet_forward.17} parent=27 // pred_region
        %s349 = smul.u32 2, %s23
        %p350 = scmp.lt.s32.totalorder %s22, 1
        %s351 = scalar_select %p350, %s22, 1
        %p352 = scmp.lt.s32.totalorder %s349, 3
        %s353 = scalar_select %p352, %s349, 3
        %s354 = smul.addr %s351, 4
        %s355 = sadd.s32 %s353, %s354
        %s356 = smul.addr %s355, 8
        %s357 = scalar_lea.vmem %s0, %s356
        %s358 = smul.u32 2, %s23
      $region32: #{wave_unet_forward.17} parent=27 // pred_fallthru
        _
      // Predicated region
      $region33: #{wave_unet_forward.17} parent=27 // pred_check
        %p359 = pneg %p85
      $region34: #{wave_unet_forward.17} parent=27 // pred_check_branch
        %361 = sbr.rel (%p359) target = $region36
      $region35: #{wave_unet_forward.17} parent=27 // pred_region
        %s362 = smul.u32 %s23, 2
        %s363 = ssub.s32 %s362, 1
        %p364 = scmp.gt.s32.totalorder %s363, 0
        %s365 = scalar_select %p364, %s363, 0
        %p366 = scmp.lt.s32.totalorder %s22, 1
        %s367 = scalar_select %p366, %s22, 1
        %p368 = scmp.lt.s32.totalorder %s365, 3
        %s369 = scalar_select %p368, %s365, 3
        %s370 = smul.addr %s367, 4
        %s371 = sadd.s32 %s369, %s370
        %s372 = smul.addr %s371, 8
        %s373 = scalar_lea.vmem %s1, %s372
        %s374 = smul.u32 %s23, 2
        %s375 = ssub.s32 %s374, 1
        %p376 = scmp.gt.s32.totalorder %s375, 0
        %s377 = scalar_select %p376, %s375, 0
      $region36: #{wave_unet_forward.17} parent=27 // pred_fallthru
        _
      // Predicated region
      $region37: #{wave_unet_forward.17} parent=27 // pred_check
        %p378 = pneg %p121
      $region38: #{wave_unet_forward.17} parent=27 // pred_check_branch
        %380 = sbr.rel (%p378) target = $region40
      $region39: #{wave_unet_forward.17} parent=27 // pred_region
        %s381 = sadd.s32 %s23, 1
        %s382 = smul.u32 %s381, 2
        %p383 = scmp.lt.s32.totalorder %s382, 3
        %s384 = scalar_select %p383, %s382, 3
        %p385 = scmp.lt.s32.totalorder %s22, 1
        %s386 = scalar_select %p385, %s22, 1
        %p387 = scmp.lt.s32.totalorder %s384, 3
        %s388 = scalar_select %p387, %s384, 3
        %s389 = smul.addr %s386, 4
        %s390 = sadd.s32 %s388, %s389
        %s391 = smul.addr %s390, 8
        %s392 = scalar_lea.vmem %s2, %s391
        %s393 = sadd.s32 %s23, 1
        %s394 = smul.u32 %s393, 2
        %p395 = scmp.lt.s32.totalorder %s394, 3
        %s396 = scalar_select %p395, %s394, 3
      $region40: #{wave_unet_forward.17} parent=27 // pred_fallthru
        _
      // Predicated region
      $region41: #{wave_unet_forward.17} parent=27 // pred_check
        %p397 = pneg %p149
      $region42: #{wave_unet_forward.17} parent=27 // pred_check_branch
        %399 = sbr.rel (%p397) target = $region44
      $region43: #{wave_unet_forward.17} parent=27 // pred_region
        %s400 = smul.u32 2, %s23
        %p401 = scmp.lt.s32.totalorder %s22, 1
        %s402 = scalar_select %p401, %s22, 1
        %p403 = scmp.lt.s32.totalorder %s400, 3
        %s404 = scalar_select %p403, %s400, 3
        %s405 = smul.addr %s402, 4
        %s406 = sadd.s32 %s404, %s405
        %s407 = smul.addr %s406, 8
        %s408 = scalar_lea.vmem %s3, %s407
        %s409 = smul.u32 2, %s23
      $region44: #{wave_unet_forward.17} parent=27 // pred_fallthru
        _
      // Predicated region
      $region45: #{wave_unet_forward.17} parent=27 // pred_check
        %p410 = pneg %p185
      $region46: #{wave_unet_forward.17} parent=27 // pred_check_branch
        %412 = sbr.rel (%p410) target = $region48
      $region47: #{wave_unet_forward.17} parent=27 // pred_region
        %s413 = smul.u32 %s23, 2
        %s414 = ssub.s32 %s413, 1
        %p415 = scmp.gt.s32.totalorder %s414, 0
        %s416 = scalar_select %p415, %s414, 0
        %p417 = scmp.lt.s32.totalorder %s22, 1
        %s418 = scalar_select %p417, %s22, 1
        %p419 = scmp.lt.s32.totalorder %s416, 3
        %s420 = scalar_select %p419, %s416, 3
        %s421 = smul.addr %s418, 4
        %s422 = sadd.s32 %s420, %s421
        %s423 = smul.addr %s422, 8
        %s424 = scalar_lea.vmem %s4, %s423
        %s425 = smul.u32 %s23, 2
        %s426 = ssub.s32 %s425, 1
        %p427 = scmp.gt.s32.totalorder %s426, 0
        %s428 = scalar_select %p427, %s426, 0
      $region48: #{wave_unet_forward.17} parent=27 // pred_fallthru
        _
      // Predicated region
      $region49: #{wave_unet_forward.17} parent=27 // pred_check
        %p429 = pneg %p221
      $region50: #{wave_unet_forward.17} parent=27 // pred_check_branch
        %431 = sbr.rel (%p429) target = $region52
      $region51: #{wave_unet_forward.17} parent=27 // pred_region
        %s432 = sadd.s32 %s23, 1
        %s433 = smul.u32 %s432, 2
        %p434 = scmp.lt.s32.totalorder %s433, 3
        %s435 = scalar_select %p434, %s433, 3
        %p436 = scmp.lt.s32.totalorder %s22, 1
        %s437 = scalar_select %p436, %s22, 1
        %p438 = scmp.lt.s32.totalorder %s435, 3
        %s439 = scalar_select %p438, %s435, 3
        %s440 = smul.addr %s437, 4
        %s441 = sadd.s32 %s439, %s440
        %s442 = smul.addr %s441, 8
        %s443 = scalar_lea.vmem %s5, %s442
        %s444 = sadd.s32 %s23, 1
        %s445 = smul.u32 %s444, 2
        %p446 = scmp.lt.s32.totalorder %s445, 3
        %s447 = scalar_select %p446, %s445, 3
      $region52: #{wave_unet_forward.17} parent=27 // pred_fallthru
        _
    $region28: #{wave_unet_forward.17} parent=5 // pred_fallthru
      _
    %p448 = scmp.le.s32.totalorder 1, %s15
    %p449 = scmp.lt.s32.totalorder %s15, 5
    %p450 = pnand %p448, %p449
    %p451 = pneg %p450
    // Predicated region
    $region53: #{wave_unet_forward.17} parent=5 // pred_check
      _
    $region54: #{wave_unet_forward.17} parent=5 // pred_check_branch
      %453 = sbr.rel (%p450) target = $region56
    $region55: #{wave_unet_forward.17} parent=5 // pred_region
      %s454 = ssub.s32 %s15, 1
      %s455 = smul.u32 2, %s25
      %p456 = scmp.lt.s32.totalorder %s24, 1
      %s457 = scalar_select %p456, %s24, 1
      %p458 = scmp.lt.s32.totalorder %s455, 3
      %s459 = scalar_select %p458, %s455, 3
      %s460 = smul.addr %s457, 4
      %s461 = sadd.s32 %s459, %s460
      %s462 = smul.addr %s461, 8
      %s463 = scalar_lea.vmem %s0, %s462
      %p464 = pneg %p55
      %p465 = pneg %p52
      %s466 = smul.u32 %s25, 2
      %s467 = ssub.s32 %s466, 1
      %p468 = scmp.gt.s32.totalorder %s467, 0
      %s469 = scalar_select %p468, %s467, 0
      %p470 = scmp.lt.s32.totalorder %s24, 1
      %s471 = scalar_select %p470, %s24, 1
      %p472 = scmp.lt.s32.totalorder %s469, 3
      %s473 = scalar_select %p472, %s469, 3
      %s474 = smul.addr %s471, 4
      %s475 = sadd.s32 %s473, %s474
      %s476 = smul.addr %s475, 8
      %s477 = scalar_lea.vmem %s1, %s476
      %p478 = pneg %p91
      %p479 = pneg %p88
      %s480 = sadd.s32 %s25, 1
      %s481 = smul.u32 %s480, 2
      %p482 = scmp.lt.s32.totalorder %s481, 3
      %s483 = scalar_select %p482, %s481, 3
      %p484 = scmp.lt.s32.totalorder %s24, 1
      %s485 = scalar_select %p484, %s24, 1
      %p486 = scmp.lt.s32.totalorder %s483, 3
      %s487 = scalar_select %p486, %s483, 3
      %s488 = smul.addr %s485, 4
      %s489 = sadd.s32 %s487, %s488
      %s490 = smul.addr %s489, 8
      %s491 = scalar_lea.vmem %s2, %s490
      %p492 = pneg %p127
      %p493 = pneg %p124
      %s494 = smul.u32 2, %s25
      %p495 = scmp.lt.s32.totalorder %s24, 1
      %s496 = scalar_select %p495, %s24, 1
      %p497 = scmp.lt.s32.totalorder %s494, 3
      %s498 = scalar_select %p497, %s494, 3
      %s499 = smul.addr %s496, 4
      %s500 = sadd.s32 %s498, %s499
      %s501 = smul.addr %s500, 8
      %s502 = scalar_lea.vmem %s3, %s501
      %p503 = pneg %p155
      %p504 = pneg %p152
      %s505 = smul.u32 %s25, 2
      %s506 = ssub.s32 %s505, 1
      %p507 = scmp.gt.s32.totalorder %s506, 0
      %s508 = scalar_select %p507, %s506, 0
      %p509 = scmp.lt.s32.totalorder %s24, 1
      %s510 = scalar_select %p509, %s24, 1
      %p511 = scmp.lt.s32.totalorder %s508, 3
      %s512 = scalar_select %p511, %s508, 3
      %s513 = smul.addr %s510, 4
      %s514 = sadd.s32 %s512, %s513
      %s515 = smul.addr %s514, 8
      %s516 = scalar_lea.vmem %s4, %s515
      %p517 = pneg %p191
      %p518 = pneg %p188
      %s519 = sadd.s32 %s25, 1
      %s520 = smul.u32 %s519, 2
      %p521 = scmp.lt.s32.totalorder %s520, 3
      %s522 = scalar_select %p521, %s520, 3
      %p523 = scmp.lt.s32.totalorder %s24, 1
      %s524 = scalar_select %p523, %s24, 1
      %p525 = scmp.lt.s32.totalorder %s522, 3
      %s526 = scalar_select %p525, %s522, 3
      %s527 = smul.addr %s524, 4
      %s528 = sadd.s32 %s526, %s527
      %s529 = smul.addr %s528, 8
      %s530 = scalar_lea.vmem %s5, %s529
      %p531 = pneg %p227
      %p532 = pneg %p224
      %p533 = pneg %p248
      %p534 = pneg %p245
      %p535 = pneg %p269
      %p536 = pneg %p266
      %p537 = pneg %p290
      %p538 = pneg %p287
      %p539 = pneg %p318
      %p540 = pneg %p315
      %s541 = smul.u32 2, %s25
      %p542 = scmp.lt.s32.totalorder %s24, 1
      %s543 = scalar_select %p542, %s24, 1
      %p544 = scmp.lt.s32.totalorder %s541, 3
      %s545 = scalar_select %p544, %s541, 3
      %s546 = smul.addr %s543, 4
      %s547 = sadd.s32 %s545, %s546
      %s548 = smul.addr %s547, 8
      %s549 = scalar_lea.vmem %s9, %s548
      %s550 = smul.u32 2, %s25
      %p551 = scmp.lt.s32.totalorder %s24, 1
      %s552 = scalar_select %p551, %s24, 1
      %p553 = scmp.lt.s32.totalorder %s550, 3
      %s554 = scalar_select %p553, %s550, 3
      %s555 = smul.addr %s552, 4
      %s556 = sadd.s32 %s554, %s555
      %s557 = smul.addr %s556, 8
      %s558 = scalar_lea.vmem %s0, %s557
      %s559 = smul.u32 2, %s25
      %s560 = smul.u32 %s25, 2
      %s561 = ssub.s32 %s560, 1
      %p562 = scmp.gt.s32.totalorder %s561, 0
      %s563 = scalar_select %p562, %s561, 0
      %p564 = scmp.lt.s32.totalorder %s24, 1
      %s565 = scalar_select %p564, %s24, 1
      %p566 = scmp.lt.s32.totalorder %s563, 3
      %s567 = scalar_select %p566, %s563, 3
      %s568 = smul.addr %s565, 4
      %s569 = sadd.s32 %s567, %s568
      %s570 = smul.addr %s569, 8
      %s571 = scalar_lea.vmem %s1, %s570
      %s572 = smul.u32 %s25, 2
      %s573 = ssub.s32 %s572, 1
      %p574 = scmp.gt.s32.totalorder %s573, 0
      %s575 = scalar_select %p574, %s573, 0
      %s576 = sadd.s32 %s25, 1
      %s577 = smul.u32 %s576, 2
      %p578 = scmp.lt.s32.totalorder %s577, 3
      %s579 = scalar_select %p578, %s577, 3
      %p580 = scmp.lt.s32.totalorder %s24, 1
      %s581 = scalar_select %p580, %s24, 1
      %p582 = scmp.lt.s32.totalorder %s579, 3
      %s583 = scalar_select %p582, %s579, 3
      %s584 = smul.addr %s581, 4
      %s585 = sadd.s32 %s583, %s584
      %s586 = smul.addr %s585, 8
      %s587 = scalar_lea.vmem %s2, %s586
      %s588 = sadd.s32 %s25, 1
      %s589 = smul.u32 %s588, 2
      %p590 = scmp.lt.s32.totalorder %s589, 3
      %s591 = scalar_select %p590, %s589, 3
      %s592 = smul.u32 2, %s25
      %p593 = scmp.lt.s32.totalorder %s24, 1
      %s594 = scalar_select %p593, %s24, 1
      %p595 = scmp.lt.s32.totalorder %s592, 3
      %s596 = scalar_select %p595, %s592, 3
      %s597 = smul.addr %s594, 4
      %s598 = sadd.s32 %s596, %s597
      %s599 = smul.addr %s598, 8
      %s600 = scalar_lea.vmem %s3, %s599
      %s601 = smul.u32 2, %s25
      %s602 = smul.u32 %s25, 2
      %s603 = ssub.s32 %s602, 1
      %p604 = scmp.gt.s32.totalorder %s603, 0
      %s605 = scalar_select %p604, %s603, 0
      %p606 = scmp.lt.s32.totalorder %s24, 1
      %s607 = scalar_select %p606, %s24, 1
      %p608 = scmp.lt.s32.totalorder %s605, 3
      %s609 = scalar_select %p608, %s605, 3
      %s610 = smul.addr %s607, 4
      %s611 = sadd.s32 %s609, %s610
      %s612 = smul.addr %s611, 8
      %s613 = scalar_lea.vmem %s4, %s612
      %s614 = smul.u32 %s25, 2
      %s615 = ssub.s32 %s614, 1
      %p616 = scmp.gt.s32.totalorder %s615, 0
      %s617 = scalar_select %p616, %s615, 0
      %s618 = sadd.s32 %s25, 1
      %s619 = smul.u32 %s618, 2
      %p620 = scmp.lt.s32.totalorder %s619, 3
      %s621 = scalar_select %p620, %s619, 3
      %p622 = scmp.lt.s32.totalorder %s24, 1
      %s623 = scalar_select %p622, %s24, 1
      %p624 = scmp.lt.s32.totalorder %s621, 3
      %s625 = scalar_select %p624, %s621, 3
      %s626 = smul.addr %s623, 4
      %s627 = sadd.s32 %s625, %s626
      %s628 = smul.addr %s627, 8
      %s629 = scalar_lea.vmem %s5, %s628
      %s630 = sadd.s32 %s25, 1
      %s631 = smul.u32 %s630, 2
      %p632 = scmp.lt.s32.totalorder %s631, 3
      %s633 = scalar_select %p632, %s631, 3
      %s634 = smul.u32 2, %s25
      %p635 = scmp.lt.s32.totalorder %s24, 1
      %s636 = scalar_select %p635, %s24, 1
      %p637 = scmp.lt.s32.totalorder %s634, 3
      %s638 = scalar_select %p637, %s634, 3
      %s639 = smul.addr %s636, 4
      %s640 = sadd.s32 %s638, %s639
      %s641 = smul.addr %s640, 8
      %s642 = scalar_lea.vmem %s9, %s641
      %s643 = smul.u32 2, %s25
      %v644 = vld [vmem:[%s558] sm:$0xff]
      %v645 = vld [vmem:[%s558 + $0x8] sm:$0xff]
      %v646 = vld [vmem:[%s571] sm:$0xff]
      %v647 = vld [vmem:[%s587] sm:$0xff]
      %p648 = scmp.eq.s32.totalorder %s25, 0
      %s649 = scalar_select %p648, 1, 0
      %v650 = vstv %s649
      %vm651 = vcmp.eq.s32.totalorder %v650, 1
      %v652 = vsel %vm651, 0.0, %v646
      %p653 = scmp.eq.s32.totalorder %s25, 1
      %s654 = scalar_select %p653, 1, 0
      %v655 = vstv %s654
      %vm656 = vcmp.eq.s32.totalorder %v655, 1
      %v657 = vsel %vm656, 0.0, %v647
      %v659 = vrot.slane %v652, 1
      %vm663 = vcmask 1046528
      %v664 = vrot.slane %v644, 1
      %v665 = vrot.slane %v645, 1
      %v666 = vsel %vm663, %v664, %v665
      %v671 = vrot.slane %v657, 1
      %v673 = vsel %vm663, %v659, %v664
      %v674 = vsel %vm663, %v665, %v671
      %v677 = vrot.slane %v673, 1
      %v678 = vrot.slane %v666, 1
      %v679 = vsel %vm663, %v677, %v678
      %v680 = vrot.slane %v674, 1
      %v681 = vsel %vm663, %v678, %v680
      %682 = vrot.lane.b32.xlu0 %v679, 64
      %v683 = vpop.permute.xlu0 %682
      %684 = vrot.lane.b32.xlu0 %v681, 64
      %v685 = vpop.permute.xlu0 %684
      %vm688 = vcmask 1045504
      %v689 = vrot.slane %v673, 2
      %v690 = vrot.slane %v666, 2
      %v691 = vsel %vm688, %v689, %v690
      %v692 = vrot.slane %v674, 2
      %v693 = vsel %vm688, %v690, %v692
      %vm696 = vcmask 1044480
      %v697 = vrot.slane %v673, 3
      %v698 = vrot.slane %v666, 3
      %v699 = vsel %vm696, %v697, %v698
      %v700 = vrot.slane %v674, 3
      %v701 = vsel %vm696, %v698, %v700
      %702 = vrot.lane.b32.xlu0 %v699, 64
      %v703 = vpop.permute.xlu0 %702
      %704 = vrot.lane.b32.xlu0 %v701, 64
      %v705 = vpop.permute.xlu0 %704
      %vm708 = vcmask 1043456
      %v709 = vrot.slane %v673, 4
      %v710 = vrot.slane %v666, 4
      %v711 = vsel %vm708, %v709, %v710
      %v712 = vrot.slane %v674, 4
      %v713 = vsel %vm708, %v710, %v712
      %vm716 = vcmask 1042432
      %v717 = vrot.slane %v673, 5
      %v718 = vrot.slane %v666, 5
      %v719 = vsel %vm716, %v717, %v718
      %v720 = vrot.slane %v674, 5
      %v721 = vsel %vm716, %v718, %v720
      %722 = vrot.lane.b32.xlu0 %v719, 64
      %v723 = vpop.permute.xlu0 %722
      %724 = vrot.lane.b32.xlu0 %v721, 64
      %v725 = vpop.permute.xlu0 %724
      %vm728 = vcmask 1041408
      %v729 = vrot.slane %v673, 6
      %v730 = vrot.slane %v666, 6
      %v731 = vsel %vm728, %v729, %v730
      %v732 = vrot.slane %v674, 6
      %v733 = vsel %vm728, %v730, %v732
      %vm736 = vcmask 1040384
      %v737 = vrot.slane %v673, 7
      %v738 = vrot.slane %v666, 7
      %v739 = vsel %vm736, %v737, %v738
      %v740 = vrot.slane %v674, 7
      %v741 = vsel %vm736, %v738, %v740
      %742 = vrot.lane.b32.xlu0 %v739, 64
      %v743 = vpop.permute.xlu0 %742
      %744 = vrot.lane.b32.xlu0 %v741, 64
      %v745 = vpop.permute.xlu0 %744
      %v748 = vrot.slane %v671, 1
      %v749 = vsel %vm663, %v680, %v748
      %750 = vrot.lane.b32.xlu0 %v749, 64
      %v751 = vpop.permute.xlu0 %750
      %v753 = vrot.slane %v671, 2
      %v754 = vsel %vm688, %v692, %v753
      %v756 = vrot.slane %v671, 3
      %v757 = vsel %vm696, %v700, %v756
      %758 = vrot.lane.b32.xlu0 %v757, 64
      %v759 = vpop.permute.xlu0 %758
      %v761 = vrot.slane %v671, 4
      %v762 = vsel %vm708, %v712, %v761
      %v764 = vrot.slane %v671, 5
      %v765 = vsel %vm716, %v720, %v764
      %766 = vrot.lane.b32.xlu0 %v765, 64
      %v767 = vpop.permute.xlu0 %766
      %v769 = vrot.slane %v671, 6
      %v770 = vsel %vm728, %v732, %v769
      %vm771 = vcmask 523264
      %v772 = vsel %vm771, %v673, %v683
      %v773 = vsel %vm771, %v666, %v685
      %v774 = vsel %vm771, %v691, %v703
      %v775 = vsel %vm771, %v693, %v705
      %v776 = vsel %vm771, %v711, %v723
      %v777 = vsel %vm771, %v713, %v725
      %v778 = vsel %vm771, %v731, %v743
      %v779 = vsel %vm771, %v733, %v745
      %v780 = vsel %vm771, %v674, %v751
      %v781 = vsel %vm771, %v754, %v759
      %v782 = vsel %vm771, %v762, %v767
      %v783 = vld [vmem:[%s6] sm:$0xff]
      %v784 = vld [vmem:[%s6 + $0x8] sm:$0xff]
      %v785 = vld [vmem:[%s6 + $0x10] sm:$0xff]
      %v786 = vld [vmem:[%s6 + $0x18] sm:$0xff]
      %v787 = vld [vmem:[%s6 + $0x20] sm:$0xff]
      %v788 = vld [vmem:[%s6 + $0x28] sm:$0xff]
      %v789 = vld [vmem:[%s6 + $0x30] sm:$0xff]
      %v790 = vld [vmem:[%s6 + $0x38] sm:$0xff]
      %v791 = vld [vmem:[%s6 + $0x40] sm:$0xff]
      %v792 = vld [vmem:[%s6 + $0x48] sm:$0xff]
      %v793 = vld [vmem:[%s6 + $0x50] sm:$0xff]
      %v794 = vld [vmem:[%s6 + $0x58] sm:$0xff]
      %v795 = vld [vmem:[%s6 + $0x60] sm:$0xff]
      %v796 = vld [vmem:[%s6 + $0x68] sm:$0xff]
      %v797 = vld [vmem:[%s6 + $0x70] sm:$0xff]
      %v798 = vld [vmem:[%s6 + $0x78] sm:$0xff]
      %v799 = vld [vmem:[%s6 + $0x80] sm:$0xff]
      %v800 = vld [vmem:[%s6 + $0x88] sm:$0xff]
      %v801 = vld [vmem:[%s6 + $0x90] sm:$0xff]
      %v802 = vld [vmem:[%s6 + $0x98] sm:$0xff]
      %v803 = vld [vmem:[%s6 + $0xa0] sm:$0xff]
      %v804 = vld [vmem:[%s6 + $0xa8] sm:$0xff]
      %v805 = vld [vmem:[%s6 + $0xb0] sm:$0xff]
      %v806 = vld [vmem:[%s6 + $0xb8] sm:$0xff]
      %v807 = vld [vmem:[%s6 + $0xc0] sm:$0xff]
      %v808 = vld [vmem:[%s6 + $0xc8] sm:$0xff]
      %v809 = vld [vmem:[%s6 + $0xd0] sm:$0xff]
      %v810 = vld [vmem:[%s6 + $0xd8] sm:$0xff]
      %v811 = vld [vmem:[%s6 + $0xe0] sm:$0xff]
      %v812 = vld [vmem:[%s6 + $0xe8] sm:$0xff]
      %v813 = vld [vmem:[%s6 + $0xf0] sm:$0xff]
      %v814 = vld [vmem:[%s6 + $0xf8] sm:$0xff]
      %v815 = vld [vmem:[%s6 + $0x100] sm:$0xff]
      %v816 = vld [vmem:[%s6 + $0x108] sm:$0xff]
      %v817 = vld [vmem:[%s6 + $0x110] sm:$0xff]
      %v818 = vld [vmem:[%s6 + $0x118] sm:$0xff]
      %v819 = vld [vmem:[%s6 + $0x120] sm:$0xff]
      %v820 = vld [vmem:[%s6 + $0x128] sm:$0xff]
      %v821 = vld [vmem:[%s6 + $0x130] sm:$0xff]
      %v822 = vld [vmem:[%s6 + $0x138] sm:$0xff]
      %v823 = vld [vmem:[%s6 + $0x140] sm:$0xff]
      %v824 = vld [vmem:[%s6 + $0x148] sm:$0xff]
      %v825 = vld [vmem:[%s6 + $0x150] sm:$0xff]
      %v826 = vld [vmem:[%s6 + $0x158] sm:$0xff]
      %v827 = vld [vmem:[%s6 + $0x160] sm:$0xff]
      %v828 = vld [vmem:[%s6 + $0x168] sm:$0xff]
      %v829 = vld [vmem:[%s6 + $0x170] sm:$0xff]
      %v830 = vld [vmem:[%s6 + $0x178] sm:$0xff]
      %v831 = vld [vmem:[%s6 + $0x180] sm:$0xff]
      %v832 = vld [vmem:[%s6 + $0x188] sm:$0xff]
      %v833 = vld [vmem:[%s6 + $0x190] sm:$0xff]
      %v834 = vld [vmem:[%s6 + $0x198] sm:$0xff]
      %v835 = vld [vmem:[%s6 + $0x1a0] sm:$0xff]
      %v836 = vld [vmem:[%s6 + $0x1a8] sm:$0xff]
      %v837 = vld [vmem:[%s6 + $0x1b0] sm:$0xff]
      %v838 = vld [vmem:[%s6 + $0x1b8] sm:$0xff]
      %v839 = vld [vmem:[%s6 + $0x1c0] sm:$0xff]
      %v840 = vld [vmem:[%s6 + $0x1c8] sm:$0xff]
      %v841 = vld [vmem:[%s6 + $0x1d0] sm:$0xff]
      %v842 = vld [vmem:[%s6 + $0x1d8] sm:$0xff]
      %v843 = vld [vmem:[%s6 + $0x1e0] sm:$0xff]
      %v844 = vld [vmem:[%s6 + $0x1e8] sm:$0xff]
      %v845 = vld [vmem:[%s6 + $0x1f0] sm:$0xff]
      %v846 = vld [vmem:[%s6 + $0x1f8] sm:$0xff]
      %v847 = vld [vmem:[%s6 + $0x200] sm:$0xff]
      %v848 = vld [vmem:[%s6 + $0x208] sm:$0xff]
      %v849 = vld [vmem:[%s6 + $0x210] sm:$0xff]
      %v850 = vld [vmem:[%s6 + $0x218] sm:$0xff]
      %v851 = vld [vmem:[%s6 + $0x220] sm:$0xff]
      %v852 = vld [vmem:[%s6 + $0x228] sm:$0xff]
      %v853 = vld [vmem:[%s6 + $0x230] sm:$0xff]
      %v854 = vld [vmem:[%s6 + $0x238] sm:$0xff]
      %v855 = vld [vmem:[%s6 + $0x240] sm:$0xff]
      %v856 = vld [vmem:[%s6 + $0x248] sm:$0xff]
      %v857 = vld [vmem:[%s6 + $0x250] sm:$0xff]
      %v858 = vld [vmem:[%s6 + $0x258] sm:$0xff]
      %v859 = vld [vmem:[%s6 + $0x260] sm:$0xff]
      %v860 = vld [vmem:[%s6 + $0x268] sm:$0xff]
      %v861 = vld [vmem:[%s6 + $0x270] sm:$0xff]
      %v862 = vld [vmem:[%s6 + $0x278] sm:$0xff]
      %v863 = vld [vmem:[%s6 + $0x280] sm:$0xff]
      %v864 = vld [vmem:[%s6 + $0x288] sm:$0xff]
      %v865 = vld [vmem:[%s6 + $0x290] sm:$0xff]
      %v866 = vld [vmem:[%s6 + $0x298] sm:$0xff]
      %v867 = vld [vmem:[%s6 + $0x2a0] sm:$0xff]
      %v868 = vld [vmem:[%s6 + $0x2a8] sm:$0xff]
      %v869 = vld [vmem:[%s6 + $0x2b0] sm:$0xff]
      %v870 = vld [vmem:[%s6 + $0x2b8] sm:$0xff]
      %v871 = vld [vmem:[%s6 + $0x2c0] sm:$0xff]
      %v872 = vld [vmem:[%s6 + $0x2c8] sm:$0xff]
      %v873 = vld [vmem:[%s6 + $0x2d0] sm:$0xff]
      %v874 = vld [vmem:[%s6 + $0x2d8] sm:$0xff]
      %v875 = vld [vmem:[%s6 + $0x2e0] sm:$0xff]
      %v876 = vld [vmem:[%s6 + $0x2e8] sm:$0xff]
      %v877 = vld [vmem:[%s6 + $0x2f0] sm:$0xff]
      %v878 = vld [vmem:[%s6 + $0x2f8] sm:$0xff]
      %v879 = vld [vmem:[%s6 + $0x300] sm:$0xff]
      %v880 = vld [vmem:[%s6 + $0x308] sm:$0xff]
      %v881 = vld [vmem:[%s6 + $0x310] sm:$0xff]
      %v882 = vld [vmem:[%s6 + $0x318] sm:$0xff]
      %v883 = vld [vmem:[%s6 + $0x320] sm:$0xff]
      %v884 = vld [vmem:[%s6 + $0x328] sm:$0xff]
      %v885 = vld [vmem:[%s6 + $0x330] sm:$0xff]
      %v886 = vld [vmem:[%s6 + $0x338] sm:$0xff]
      %v887 = vld [vmem:[%s6 + $0x340] sm:$0xff]
      %v888 = vld [vmem:[%s6 + $0x348] sm:$0xff]
      %v889 = vld [vmem:[%s6 + $0x350] sm:$0xff]
      %v890 = vld [vmem:[%s6 + $0x358] sm:$0xff]
      %v891 = vld [vmem:[%s6 + $0x360] sm:$0xff]
      %v892 = vld [vmem:[%s6 + $0x368] sm:$0xff]
      %v893 = vld [vmem:[%s6 + $0x370] sm:$0xff]
      %v894 = vld [vmem:[%s6 + $0x378] sm:$0xff]
      %v895 = vld [vmem:[%s6 + $0x380] sm:$0xff]
      %v896 = vld [vmem:[%s6 + $0x388] sm:$0xff]
      %v897 = vld [vmem:[%s6 + $0x390] sm:$0xff]
      %v898 = vld [vmem:[%s6 + $0x398] sm:$0xff]
      %v899 = vld [vmem:[%s6 + $0x3a0] sm:$0xff]
      %v900 = vld [vmem:[%s6 + $0x3a8] sm:$0xff]
      %v901 = vld [vmem:[%s6 + $0x3b0] sm:$0xff]
      %v902 = vld [vmem:[%s6 + $0x3b8] sm:$0xff]
      %v903 = vld [vmem:[%s600] sm:$0xff]
      %v904 = vld [vmem:[%s600 + $0x8] sm:$0xff]
      %v905 = vld [vmem:[%s613] sm:$0xff]
      %v906 = vld [vmem:[%s629] sm:$0xff]
      %v907 = vsel %vm651, 0.0, %v905
      %v908 = vsel %vm656, 0.0, %v906
      %v910 = vrot.slane %v907, 1
      %v914 = vrot.slane %v903, 1
      %v915 = vrot.slane %v904, 1
      %v916 = vsel %vm663, %v914, %v915
      %v921 = vrot.slane %v908, 1
      %v923 = vsel %vm663, %v910, %v914
      %v924 = vsel %vm663, %v915, %v921
      %v927 = vrot.slane %v923, 1
      %v928 = vrot.slane %v916, 1
      %v929 = vsel %vm663, %v927, %v928
      %v930 = vrot.slane %v924, 1
      %v931 = vsel %vm663, %v928, %v930
      %932 = vrot.lane.b32.xlu0 %v929, 32
      %v933 = vpop.permute.xlu0 %932
      %934 = vrot.lane.b32.xlu0 %v931, 32
      %v935 = vpop.permute.xlu0 %934
      %v938 = vrot.slane %v923, 2
      %v939 = vrot.slane %v916, 2
      %v940 = vsel %vm688, %v938, %v939
      %v941 = vrot.slane %v924, 2
      %v942 = vsel %vm688, %v939, %v941
      %943 = vrot.lane.b32.xlu0 %v940, 64
      %v944 = vpop.permute.xlu0 %943
      %945 = vrot.lane.b32.xlu0 %v942, 64
      %v946 = vpop.permute.xlu0 %945
      %v949 = vrot.slane %v923, 3
      %v950 = vrot.slane %v916, 3
      %v951 = vsel %vm696, %v949, %v950
      %v952 = vrot.slane %v924, 3
      %v953 = vsel %vm696, %v950, %v952
      %954 = vrot.lane.b32.xlu0 %v951, 96
      %v955 = vpop.permute.xlu0 %954
      %956 = vrot.lane.b32.xlu0 %v953, 96
      %v957 = vpop.permute.xlu0 %956
      %v960 = vrot.slane %v923, 4
      %v961 = vrot.slane %v916, 4
      %v962 = vsel %vm708, %v960, %v961
      %v963 = vrot.slane %v924, 4
      %v964 = vsel %vm708, %v961, %v963
      %v967 = vrot.slane %v923, 5
      %v968 = vrot.slane %v916, 5
      %v969 = vsel %vm716, %v967, %v968
      %v970 = vrot.slane %v924, 5
      %v971 = vsel %vm716, %v968, %v970
      %972 = vrot.lane.b32.xlu0 %v969, 32
      %v973 = vpop.permute.xlu0 %972
      %974 = vrot.lane.b32.xlu0 %v971, 32
      %v975 = vpop.permute.xlu0 %974
      %v978 = vrot.slane %v923, 6
      %v979 = vrot.slane %v916, 6
      %v980 = vsel %vm728, %v978, %v979
      %v981 = vrot.slane %v924, 6
      %v982 = vsel %vm728, %v979, %v981
      %983 = vrot.lane.b32.xlu0 %v980, 64
      %v984 = vpop.permute.xlu0 %983
      %985 = vrot.lane.b32.xlu0 %v982, 64
      %v986 = vpop.permute.xlu0 %985
      %v989 = vrot.slane %v923, 7
      %v990 = vrot.slane %v916, 7
      %v991 = vsel %vm736, %v989, %v990
      %v992 = vrot.slane %v924, 7
      %v993 = vsel %vm736, %v990, %v992
      %994 = vrot.lane.b32.xlu0 %v991, 96
      %v995 = vpop.permute.xlu0 %994
      %996 = vrot.lane.b32.xlu0 %v993, 96
      %v997 = vpop.permute.xlu0 %996
      %v1000 = vrot.slane %v921, 1
      %v1001 = vsel %vm663, %v930, %v1000
      %1002 = vrot.lane.b32.xlu0 %v1001, 32
      %v1003 = vpop.permute.xlu0 %1002
      %v1005 = vrot.slane %v921, 2
      %v1006 = vsel %vm688, %v941, %v1005
      %1007 = vrot.lane.b32.xlu0 %v1006, 64
      %v1008 = vpop.permute.xlu0 %1007
      %v1010 = vrot.slane %v921, 3
      %v1011 = vsel %vm696, %v952, %v1010
      %1012 = vrot.lane.b32.xlu0 %v1011, 96
      %v1013 = vpop.permute.xlu0 %1012
      %v1015 = vrot.slane %v921, 4
      %v1016 = vsel %vm708, %v963, %v1015
      %v1018 = vrot.slane %v921, 5
      %v1019 = vsel %vm716, %v970, %v1018
      %1020 = vrot.lane.b32.xlu0 %v1019, 32
      %v1021 = vpop.permute.xlu0 %1020
      %v1023 = vrot.slane %v921, 6
      %v1024 = vsel %vm728, %v981, %v1023
      %1025 = vrot.lane.b32.xlu0 %v1024, 64
      %v1026 = vpop.permute.xlu0 %1025
      %vm1028 = vcmask 261120
      %v1029 = vsel %vm1028, %v923, %v933
      %v1030 = vsel %vm1028, %v916, %v935
      %v1031 = vsel %vm771, %v1029, %v944
      %v1032 = vsel %vm771, %v1030, %v946
      %vm1033 = vcmask 785408
      %v1034 = vsel %vm1033, %v1031, %v955
      %v1035 = vsel %vm1033, %v1032, %v957
      %v1036 = vsel %vm1028, %v962, %v973
      %v1037 = vsel %vm1028, %v964, %v975
      %v1038 = vsel %vm771, %v1036, %v984
      %v1039 = vsel %vm771, %v1037, %v986
      %v1040 = vsel %vm1033, %v1038, %v995
      %v1041 = vsel %vm1033, %v1039, %v997
      %v1042 = vsel %vm1028, %v924, %v1003
      %v1043 = vsel %vm771, %v1042, %v1008
      %v1044 = vsel %vm1033, %v1043, %v1013
      %v1045 = vsel %vm1028, %v1016, %v1021
      %v1046 = vsel %vm771, %v1045, %v1026
      %v1047 = vld [vmem:[%s7] sm:$0xff]
      %v1048 = vld [vmem:[%s7 + $0x8] sm:$0xff]
      %v1049 = vld [vmem:[%s7 + $0x10] sm:$0xff]
      %v1050 = vld [vmem:[%s7 + $0x18] sm:$0xff]
      %v1051 = vld [vmem:[%s7 + $0x20] sm:$0xff]
      %v1052 = vld [vmem:[%s7 + $0x28] sm:$0xff]
      %v1053 = vld [vmem:[%s7 + $0x30] sm:$0xff]
      %v1054 = vld [vmem:[%s7 + $0x38] sm:$0xff]
      %v1055 = vld [vmem:[%s7 + $0x40] sm:$0xff]
      %v1056 = vld [vmem:[%s7 + $0x48] sm:$0xff]
      %v1057 = vld [vmem:[%s7 + $0x50] sm:$0xff]
      %v1058 = vld [vmem:[%s7 + $0x58] sm:$0xff]
      %v1059 = vld [vmem:[%s7 + $0x60] sm:$0xff]
      %v1060 = vld [vmem:[%s7 + $0x68] sm:$0xff]
      %v1061 = vld [vmem:[%s7 + $0x70] sm:$0xff]
      %v1062 = vld [vmem:[%s7 + $0x78] sm:$0xff]
      %v1063 = vld [vmem:[%s7 + $0x80] sm:$0xff]
      %v1064 = vld [vmem:[%s7 + $0x88] sm:$0xff]
      %v1065 = vld [vmem:[%s7 + $0x90] sm:$0xff]
      %v1066 = vld [vmem:[%s7 + $0x98] sm:$0xff]
      %v1067 = vld [vmem:[%s7 + $0xa0] sm:$0xff]
      %v1068 = vld [vmem:[%s7 + $0xa8] sm:$0xff]
      %v1069 = vld [vmem:[%s7 + $0xb0] sm:$0xff]
      %v1070 = vld [vmem:[%s7 + $0xb8] sm:$0xff]
      %v1071 = vld [vmem:[%s7 + $0xc0] sm:$0xff]
      %v1072 = vld [vmem:[%s7 + $0xc8] sm:$0xff]
      %v1073 = vld [vmem:[%s7 + $0xd0] sm:$0xff]
      %v1074 = vld [vmem:[%s7 + $0xd8] sm:$0xff]
      %v1075 = vld [vmem:[%s7 + $0xe0] sm:$0xff]
      %v1076 = vld [vmem:[%s7 + $0xe8] sm:$0xff]
      %v1077 = vld [vmem:[%s7 + $0xf0] sm:$0xff]
      %v1078 = vld [vmem:[%s7 + $0xf8] sm:$0xff]
      %v1079 = vld [vmem:[%s7 + $0x100] sm:$0xff]
      %v1080 = vld [vmem:[%s7 + $0x108] sm:$0xff]
      %v1081 = vld [vmem:[%s7 + $0x110] sm:$0xff]
      %v1082 = vld [vmem:[%s7 + $0x118] sm:$0xff]
      %v1083 = vld [vmem:[%s7 + $0x120] sm:$0xff]
      %v1084 = vld [vmem:[%s7 + $0x128] sm:$0xff]
      %v1085 = vld [vmem:[%s7 + $0x130] sm:$0xff]
      %v1086 = vld [vmem:[%s7 + $0x138] sm:$0xff]
      %v1087 = vld [vmem:[%s7 + $0x140] sm:$0xff]
      %v1088 = vld [vmem:[%s7 + $0x148] sm:$0xff]
      %v1089 = vld [vmem:[%s7 + $0x150] sm:$0xff]
      %v1090 = vld [vmem:[%s7 + $0x158] sm:$0xff]
      %v1091 = vld [vmem:[%s7 + $0x160] sm:$0xff]
      %v1092 = vld [vmem:[%s7 + $0x168] sm:$0xff]
      %v1093 = vld [vmem:[%s7 + $0x170] sm:$0xff]
      %v1094 = vld [vmem:[%s7 + $0x178] sm:$0xff]
      %v1095 = vld [vmem:[%s7 + $0x180] sm:$0xff]
      %v1096 = vld [vmem:[%s7 + $0x188] sm:$0xff]
      %v1097 = vld [vmem:[%s7 + $0x190] sm:$0xff]
      %v1098 = vld [vmem:[%s7 + $0x198] sm:$0xff]
      %v1099 = vld [vmem:[%s7 + $0x1a0] sm:$0xff]
      %v1100 = vld [vmem:[%s7 + $0x1a8] sm:$0xff]
      %v1101 = vld [vmem:[%s7 + $0x1b0] sm:$0xff]
      %v1102 = vld [vmem:[%s7 + $0x1b8] sm:$0xff]
      %v1103 = vld [vmem:[%s7 + $0x1c0] sm:$0xff]
      %v1104 = vld [vmem:[%s7 + $0x1c8] sm:$0xff]
      %v1105 = vld [vmem:[%s7 + $0x1d0] sm:$0xff]
      %v1106 = vld [vmem:[%s7 + $0x1d8] sm:$0xff]
      %v1108 = vsel %vm1033, %v1039, 0
      %v1111 = vsel %vm1033, %v1046, 0
      %1113 = vmatpush.msra.mxu0 %v1062
      %1114 = vmatpush.msra.mxu0 %v1061
      %1115 = vmatpush.msra.mxu0 %v1060
      %1116 = vmatpush.msra.mxu0 %v1059
      %1117 = vmatpush.msra.mxu0 %v1058
      %1118 = vmatpush.msra.mxu0 %v1057
      %1119 = vmatpush.msra.mxu0 %v1056
      %1120 = vmatpush.msra.mxu0 %v1055
      %1121 = vmatpush.msra.mxu0 %v1054
      %1122 = vmatpush.msra.mxu0 %v1053
      %1123 = vmatpush.msra.mxu0 %v1052
      %1124 = vmatpush.msra.mxu0 %v1051
      %1125 = vmatpush.msra.mxu0 %v1050
      %1126 = vmatpush.msra.mxu0 %v1049
      %1127 = vmatpush.msra.mxu0 %v1048
      %1128 = vmatpush.msra.mxu0 %v1047
      %1129 = vmatmul.f32.gmra.mxu0 %v1034
      %v1130 = vpop.f32.mrf.mxu0
      %v1131 = vadd.f32 0.0, %v1130
      %1132 = vmatmul.f32.gmra.mxu0 %v1035
      %v1133 = vpop.f32.mrf.mxu0
      %v1134 = vadd.f32 0.0, %v1133
      %1135 = vdwg.mxu0
      %1136 = vmatpush.msra.mxu0 %v1078
      %1137 = vmatpush.msra.mxu0 %v1077
      %1138 = vmatpush.msra.mxu0 %v1076
      %1139 = vmatpush.msra.mxu0 %v1075
      %1140 = vmatpush.msra.mxu0 %v1074
      %1141 = vmatpush.msra.mxu0 %v1073
      %1142 = vmatpush.msra.mxu0 %v1072
      %1143 = vmatpush.msra.mxu0 %v1071
      %1144 = vmatpush.msra.mxu0 %v1070
      %1145 = vmatpush.msra.mxu0 %v1069
      %1146 = vmatpush.msra.mxu0 %v1068
      %1147 = vmatpush.msra.mxu0 %v1067
      %1148 = vmatpush.msra.mxu0 %v1066
      %1149 = vmatpush.msra.mxu0 %v1065
      %1150 = vmatpush.msra.mxu0 %v1064
      %1151 = vmatpush.msra.mxu0 %v1063
      %1152 = vmatmul.f32.gmra.mxu0 %v1040
      %v1153 = vpop.f32.mrf.mxu0
      %v1154 = vadd.f32 %v1131, %v1153
      %1155 = vmatmul.f32.gmra.mxu0 %v1041
      %v1156 = vpop.f32.mrf.mxu0
      %v1157 = vadd.f32 %v1134, %v1156
      %1158 = vdwg.mxu0
      %1159 = vmatpush.msra.mxu0 %v1094
      %1160 = vmatpush.msra.mxu0 %v1093
      %1161 = vmatpush.msra.mxu0 %v1092
      %1162 = vmatpush.msra.mxu0 %v1091
      %1163 = vmatpush.msra.mxu0 %v1090
      %1164 = vmatpush.msra.mxu0 %v1089
      %1165 = vmatpush.msra.mxu0 %v1088
      %1166 = vmatpush.msra.mxu0 %v1087
      %1167 = vmatpush.msra.mxu0 %v1086
      %1168 = vmatpush.msra.mxu0 %v1085
      %1169 = vmatpush.msra.mxu0 %v1084
      %1170 = vmatpush.msra.mxu0 %v1083
      %1171 = vmatpush.msra.mxu0 %v1082
      %1172 = vmatpush.msra.mxu0 %v1081
      %1173 = vmatpush.msra.mxu0 %v1080
      %1174 = vmatpush.msra.mxu0 %v1079
      %1175 = vmatmul.f32.gmra.mxu0 %v1035
      %v1176 = vpop.f32.mrf.mxu0
      %v1177 = vadd.f32 %v1154, %v1176
      %1178 = vmatmul.f32.gmra.mxu0 %v1044
      %v1179 = vpop.f32.mrf.mxu0
      %v1180 = vadd.f32 %v1157, %v1179
      %1181 = vdwg.mxu0
      %1182 = vmatpush.msra.mxu0 0.0
      %1183 = vmatpush.msra.mxu0 0.0
      %1184 = vmatpush.msra.mxu0 0.0
      %1185 = vmatpush.msra.mxu0 0.0
      %1186 = vmatpush.msra.mxu0 %v1106
      %1187 = vmatpush.msra.mxu0 %v1105
      %1188 = vmatpush.msra.mxu0 %v1104
      %1189 = vmatpush.msra.mxu0 %v1103
      %1190 = vmatpush.msra.mxu0 %v1102
      %1191 = vmatpush.msra.mxu0 %v1101
      %1192 = vmatpush.msra.mxu0 %v1100
      %1193 = vmatpush.msra.mxu0 %v1099
      %1194 = vmatpush.msra.mxu0 %v1098
      %1195 = vmatpush.msra.mxu0 %v1097
      %1196 = vmatpush.msra.mxu0 %v1096
      %1197 = vmatpush.msra.mxu0 %v1095
      %1198 = vmatmul.f32.gmra.mxu0 %v1108
      %v1199 = vpop.f32.mrf.mxu0
      %v1200 = vadd.f32 %v1177, %v1199
      %1201 = vmatmul.f32.gmra.mxu0 %v1111
      %v1202 = vpop.f32.mrf.mxu0
      %v1203 = vadd.f32 %v1180, %v1202
      %1204 = vdwg.mxu0
      %v1205 = vsel %vm771, %v733, 0
      %v1207 = vsel %vm771, %v770, 0
      %1209 = vmatpush.msra.mxu0 %v798
      %1210 = vmatpush.msra.mxu0 %v797
      %1211 = vmatpush.msra.mxu0 %v796
      %1212 = vmatpush.msra.mxu0 %v795
      %1213 = vmatpush.msra.mxu0 %v794
      %1214 = vmatpush.msra.mxu0 %v793
      %1215 = vmatpush.msra.mxu0 %v792
      %1216 = vmatpush.msra.mxu0 %v791
      %1217 = vmatpush.msra.mxu0 %v790
      %1218 = vmatpush.msra.mxu0 %v789
      %1219 = vmatpush.msra.mxu0 %v788
      %1220 = vmatpush.msra.mxu0 %v787
      %1221 = vmatpush.msra.mxu0 %v786
      %1222 = vmatpush.msra.mxu0 %v785
      %1223 = vmatpush.msra.mxu0 %v784
      %1224 = vmatpush.msra.mxu0 %v783
      %1225 = vmatmul.f32.gmra.mxu0 %v772
      %v1226 = vpop.f32.mrf.mxu0
      %v1227 = vadd.f32 %v1200, %v1226
      %1228 = vmatmul.f32.gmra.mxu0 %v773
      %v1229 = vpop.f32.mrf.mxu0
      %v1230 = vadd.f32 %v1203, %v1229
      %1231 = vdwg.mxu0
      %1232 = vmatpush.msra.mxu0 %v814
      %1233 = vmatpush.msra.mxu0 %v813
      %1234 = vmatpush.msra.mxu0 %v812
      %1235 = vmatpush.msra.mxu0 %v811
      %1236 = vmatpush.msra.mxu0 %v810
      %1237 = vmatpush.msra.mxu0 %v809
      %1238 = vmatpush.msra.mxu0 %v808
      %1239 = vmatpush.msra.mxu0 %v807
      %1240 = vmatpush.msra.mxu0 %v806
      %1241 = vmatpush.msra.mxu0 %v805
      %1242 = vmatpush.msra.mxu0 %v804
      %1243 = vmatpush.msra.mxu0 %v803
      %1244 = vmatpush.msra.mxu0 %v802
      %1245 = vmatpush.msra.mxu0 %v801
      %1246 = vmatpush.msra.mxu0 %v800
      %1247 = vmatpush.msra.mxu0 %v799
      %1248 = vmatmul.f32.gmra.mxu0 %v774
      %v1249 = vpop.f32.mrf.mxu0
      %v1250 = vadd.f32 %v1227, %v1249
      %1251 = vmatmul.f32.gmra.mxu0 %v775
      %v1252 = vpop.f32.mrf.mxu0
      %v1253 = vadd.f32 %v1230, %v1252
      %1254 = vdwg.mxu0
      %1255 = vmatpush.msra.mxu0 %v830
      %1256 = vmatpush.msra.mxu0 %v829
      %1257 = vmatpush.msra.mxu0 %v828
      %1258 = vmatpush.msra.mxu0 %v827
      %1259 = vmatpush.msra.mxu0 %v826
      %1260 = vmatpush.msra.mxu0 %v825
      %1261 = vmatpush.msra.mxu0 %v824
      %1262 = vmatpush.msra.mxu0 %v823
      %1263 = vmatpush.msra.mxu0 %v822
      %1264 = vmatpush.msra.mxu0 %v821
      %1265 = vmatpush.msra.mxu0 %v820
      %1266 = vmatpush.msra.mxu0 %v819
      %1267 = vmatpush.msra.mxu0 %v818
      %1268 = vmatpush.msra.mxu0 %v817
      %1269 = vmatpush.msra.mxu0 %v816
      %1270 = vmatpush.msra.mxu0 %v815
      %1271 = vmatmul.f32.gmra.mxu0 %v776
      %v1272 = vpop.f32.mrf.mxu0
      %v1273 = vadd.f32 %v1250, %v1272
      %1274 = vmatmul.f32.gmra.mxu0 %v777
      %v1275 = vpop.f32.mrf.mxu0
      %v1276 = vadd.f32 %v1253, %v1275
      %1277 = vdwg.mxu0
      %1278 = vmatpush.msra.mxu0 %v846
      %1279 = vmatpush.msra.mxu0 %v845
      %1280 = vmatpush.msra.mxu0 %v844
      %1281 = vmatpush.msra.mxu0 %v843
      %1282 = vmatpush.msra.mxu0 %v842
      %1283 = vmatpush.msra.mxu0 %v841
      %1284 = vmatpush.msra.mxu0 %v840
      %1285 = vmatpush.msra.mxu0 %v839
      %1286 = vmatpush.msra.mxu0 %v838
      %1287 = vmatpush.msra.mxu0 %v837
      %1288 = vmatpush.msra.mxu0 %v836
      %1289 = vmatpush.msra.mxu0 %v835
      %1290 = vmatpush.msra.mxu0 %v834
      %1291 = vmatpush.msra.mxu0 %v833
      %1292 = vmatpush.msra.mxu0 %v832
      %1293 = vmatpush.msra.mxu0 %v831
      %1294 = vmatmul.f32.gmra.mxu0 %v778
      %v1295 = vpop.f32.mrf.mxu0
      %v1296 = vadd.f32 %v1273, %v1295
      %1297 = vmatmul.f32.gmra.mxu0 %v779
      %v1298 = vpop.f32.mrf.mxu0
      %v1299 = vadd.f32 %v1276, %v1298
      %1300 = vdwg.mxu0
      %1301 = vmatpush.msra.mxu0 %v862
      %1302 = vmatpush.msra.mxu0 %v861
      %1303 = vmatpush.msra.mxu0 %v860
      %1304 = vmatpush.msra.mxu0 %v859
      %1305 = vmatpush.msra.mxu0 %v858
      %1306 = vmatpush.msra.mxu0 %v857
      %1307 = vmatpush.msra.mxu0 %v856
      %1308 = vmatpush.msra.mxu0 %v855
      %1309 = vmatpush.msra.mxu0 %v854
      %1310 = vmatpush.msra.mxu0 %v853
      %1311 = vmatpush.msra.mxu0 %v852
      %1312 = vmatpush.msra.mxu0 %v851
      %1313 = vmatpush.msra.mxu0 %v850
      %1314 = vmatpush.msra.mxu0 %v849
      %1315 = vmatpush.msra.mxu0 %v848
      %1316 = vmatpush.msra.mxu0 %v847
      %1317 = vmatmul.f32.gmra.mxu0 %v773
      %v1318 = vpop.f32.mrf.mxu0
      %v1319 = vadd.f32 %v1296, %v1318
      %1320 = vmatmul.f32.gmra.mxu0 %v780
      %v1321 = vpop.f32.mrf.mxu0
      %v1322 = vadd.f32 %v1299, %v1321
      %1323 = vdwg.mxu0
      %1324 = vmatpush.msra.mxu0 %v878
      %1325 = vmatpush.msra.mxu0 %v877
      %1326 = vmatpush.msra.mxu0 %v876
      %1327 = vmatpush.msra.mxu0 %v875
      %1328 = vmatpush.msra.mxu0 %v874
      %1329 = vmatpush.msra.mxu0 %v873
      %1330 = vmatpush.msra.mxu0 %v872
      %1331 = vmatpush.msra.mxu0 %v871
      %1332 = vmatpush.msra.mxu0 %v870
      %1333 = vmatpush.msra.mxu0 %v869
      %1334 = vmatpush.msra.mxu0 %v868
      %1335 = vmatpush.msra.mxu0 %v867
      %1336 = vmatpush.msra.mxu0 %v866
      %1337 = vmatpush.msra.mxu0 %v865
      %1338 = vmatpush.msra.mxu0 %v864
      %1339 = vmatpush.msra.mxu0 %v863
      %1340 = vmatmul.f32.gmra.mxu0 %v775
      %v1341 = vpop.f32.mrf.mxu0
      %v1342 = vadd.f32 %v1319, %v1341
      %1343 = vmatmul.f32.gmra.mxu0 %v781
      %v1344 = vpop.f32.mrf.mxu0
      %v1345 = vadd.f32 %v1322, %v1344
      %1346 = vdwg.mxu0
      %1347 = vmatpush.msra.mxu0 %v894
      %1348 = vmatpush.msra.mxu0 %v893
      %1349 = vmatpush.msra.mxu0 %v892
      %1350 = vmatpush.msra.mxu0 %v891
      %1351 = vmatpush.msra.mxu0 %v890
      %1352 = vmatpush.msra.mxu0 %v889
      %1353 = vmatpush.msra.mxu0 %v888
      %1354 = vmatpush.msra.mxu0 %v887
      %1355 = vmatpush.msra.mxu0 %v886
      %1356 = vmatpush.msra.mxu0 %v885
      %1357 = vmatpush.msra.mxu0 %v884
      %1358 = vmatpush.msra.mxu0 %v883
      %1359 = vmatpush.msra.mxu0 %v882
      %1360 = vmatpush.msra.mxu0 %v881
      %1361 = vmatpush.msra.mxu0 %v880
      %1362 = vmatpush.msra.mxu0 %v879
      %1363 = vmatmul.f32.gmra.mxu0 %v777
      %v1364 = vpop.f32.mrf.mxu0
      %v1365 = vadd.f32 %v1342, %v1364
      %1366 = vmatmul.f32.gmra.mxu0 %v782
      %v1367 = vpop.f32.mrf.mxu0
      %v1368 = vadd.f32 %v1345, %v1367
      %1369 = vdwg.mxu0
      %1370 = vmatpush.msra.mxu0 0.0
      %1371 = vmatpush.msra.mxu0 0.0
      %1372 = vmatpush.msra.mxu0 0.0
      %1373 = vmatpush.msra.mxu0 0.0
      %1374 = vmatpush.msra.mxu0 0.0
      %1375 = vmatpush.msra.mxu0 0.0
      %1376 = vmatpush.msra.mxu0 0.0
      %1377 = vmatpush.msra.mxu0 0.0
      %1378 = vmatpush.msra.mxu0 %v902
      %1379 = vmatpush.msra.mxu0 %v901
      %1380 = vmatpush.msra.mxu0 %v900
      %1381 = vmatpush.msra.mxu0 %v899
      %1382 = vmatpush.msra.mxu0 %v898
      %1383 = vmatpush.msra.mxu0 %v897
      %1384 = vmatpush.msra.mxu0 %v896
      %1385 = vmatpush.msra.mxu0 %v895
      %1386 = vmatmul.f32.gmra.mxu0 %v1205
      %v1387 = vpop.f32.mrf.mxu0
      %v1388 = vadd.f32 %v1365, %v1387
      %1389 = vmatmul.f32.gmra.mxu0 %v1207
      %v1390 = vpop.f32.mrf.mxu0
      %v1391 = vadd.f32 %v1368, %v1390
      %1392 = vdwg.mxu0
      %v1393 = vld [vmem:[%s8] sm:$0x1]
      %v1395 = vperm.slane %v1393, 0
      %v1397 = vadd.f32 %v1388, %v1395
      %v1398 = vadd.f32 %v1391, %v1395
      %v1399 = vmax.f32 %v1397, 0.0
      %v1400 = vmax.f32 %v1398, 0.0
      %1401 = vst.msk [vmem:[%s642] sm:$0xff] %vm1028, %v1399
      %1402 = vst.msk [vmem:[%s642 + $0x8] sm:$0xff] %vm1028, %v1400
      %s1403 = smul.u32 2, %s25
      %p1404 = scmp.lt.s32.totalorder %s24, 1
      %s1405 = scalar_select %p1404, %s24, 1
      %p1406 = scmp.lt.s32.totalorder %s1403, 3
      %s1407 = scalar_select %p1406, %s1403, 3
      %s1408 = smul.addr %s1405, 4
      %s1409 = sadd.s32 %s1407, %s1408
      %s1410 = smul.addr %s1409, 8
      %s1411 = scalar_lea.vmem %s9, %s1410
      // Predicated region
      $region57: #{wave_unet_forward.17} parent=55 // pred_check
        %p1412 = pneg %p315
      $region58: #{wave_unet_forward.17} parent=55 // pred_check_branch
        %1414 = sbr.rel (%p1412) target = $region60
      $region59: #{wave_unet_forward.17} parent=55 // pred_region
        %s1415 = smul.u32 2, %s25
      $region60: #{wave_unet_forward.17} parent=55 // pred_fallthru
        _
    $region56: #{wave_unet_forward.17} parent=5 // pred_fallthru
      _
    %p1416 = scmp.le.s32.totalorder 2, %s15
    // Predicated region
    $region61: #{wave_unet_forward.17} parent=5 // pred_check
      %p1417 = pneg %p1416
    $region62: #{wave_unet_forward.17} parent=5 // pred_check_branch
      %1419 = sbr.rel (%p1417) target = $region64
    $region63: #{wave_unet_forward.17} parent=5 // pred_region
      %s1420 = ssub.s32 %s15, 2
      // Predicated region
      $region65: #{wave_unet_forward.17} parent=63 // pred_check
        %p1421 = pneg %p321
      $region66: #{wave_unet_forward.17} parent=63 // pred_check_branch
        %1423 = sbr.rel (%p1421) target = $region68
      $region67: #{wave_unet_forward.17} parent=63 // pred_region
        %s1424 = smul.u32 2, %s27
        %p1425 = scmp.lt.s32.totalorder %s26, 1
        %s1426 = scalar_select %p1425, %s26, 1
        %p1427 = scmp.lt.s32.totalorder %s1424, 3
        %s1428 = scalar_select %p1427, %s1424, 3
        %s1429 = smul.addr %s1426, 4
        %s1430 = sadd.s32 %s1428, %s1429
        %s1431 = smul.addr %s1430, 8
        %s1432 = scalar_lea.vmem %s9, %s1431
      $region68: #{wave_unet_forward.17} parent=63 // pred_fallthru
        _
    $region64: #{wave_unet_forward.17} parent=5 // pred_fallthru
      _
  $region6: #{wave_unet_forward.17} parent=0 // loop_footer
    %s19 = sadd.s32 1, %s15
  $region7: #{wave_unet_forward.17} parent=0 // loop_footer_branch
    %14 = sbr.rel target = $region3
  $region8: #{wave_unet_forward.17} parent=0 // loop_exit
    _

// kernel: wave_unet_forward.19
$region0: #{wave_unet_forward.19}
  #allocation0 [shape = 'u32[]', space=smem, size = 0x4, offset = 0x4, fixed_abs, tag = 'smem constant byte address 0x4 - core index']
  #allocation1 [shape = 'u32[72,128]{1,0:T(1,128)}', space=vmem, size = 0x9000, scoped, tag = 'internal scratch']
  %s0 = inlined_call_operand.vmem [shape: f32[2,64,32], index: 0, kind: input, shape index: {}, may-alias: {0,1,2}]
  %s1 = inlined_call_operand.vmem [shape: f32[2,64,32], index: 1, kind: input, shape index: {}, may-alias: {0,1,2}]
  %s2 = inlined_call_operand.vmem [shape: f32[2,64,32], index: 2, kind: input, shape index: {}, may-alias: {0,1,2}]
  %s3 = inlined_call_operand.vmem [shape: f32[2,64,16], index: 3, kind: input, shape index: {}, may-alias: {3,4,5}]
  %s4 = inlined_call_operand.vmem [shape: f32[2,64,16], index: 4, kind: input, shape index: {}, may-alias: {3,4,5}]
  %s5 = inlined_call_operand.vmem [shape: f32[2,64,16], index: 5, kind: input, shape index: {}, may-alias: {3,4,5}]
  %s6 = inlined_call_operand.vmem [shape: f32[480,16], index: 6, kind: input, shape index: {}]
  %s7 = inlined_call_operand.vmem [shape: f32[240,16], index: 7, kind: input, shape index: {}]
  %s8 = inlined_call_operand.vmem [shape: f32[1,16], index: 8, kind: input, shape index: {}]
  %s9 = inlined_call_operand.vmem [shape: f32[16,2], index: 9, kind: input, shape index: {}]
  %s10 = inlined_call_operand.vmem [shape: f32[1,2], index: 10, kind: input, shape index: {}]
  %s11 = inlined_call_operand.vmem [shape: f32[2,64,2], index: 11, kind: output, shape index: {}]
  %s12 = sld [smem:[#allocation0]]
  $region77: #{wave_unet_forward.19} parent=0
    _
  %s14 = ssub.s32 1, %s12
  %s15 = scalar_select 0, %s14, %s12
  loop: start=0, step=1, limit=10
  $region2: #{wave_unet_forward.19} parent=0 // loop_pre_header
    _
  $region3: #{wave_unet_forward.19} parent=0 // loop_header
    %s17 = sphi 0, %s21
    %p18 = scmp.ge.s32.totalorder %s17, 10
    %s24 = sphi 0, %s36
    %s25 = sphi 0, %s32
    %s26 = sphi 0, %s24
    %s27 = sphi 0, %s25
    %s28 = sphi 0, %s26
    %s29 = sphi 0, %s27
    %s41 = sphi 0, %s43
    %s44 = sphi 0, %s41
    %s45 = sphi 0, %s44
    %s61 = sphi 0, %s45
    %s77 = sphi 0, %s79
    %s80 = sphi 0, %s77
    %s81 = sphi 0, %s80
    %s97 = sphi 0, %s81
    %s113 = sphi 0, %s115
    %s116 = sphi 0, %s113
    %s117 = sphi 0, %s116
    %s133 = sphi 0, %s117
    %s141 = sphi 0, %s143
    %s144 = sphi 0, %s141
    %s145 = sphi 0, %s144
    %s161 = sphi 0, %s145
    %s177 = sphi 0, %s179
    %s180 = sphi 0, %s177
    %s181 = sphi 0, %s180
    %s197 = sphi 0, %s181
    %s213 = sphi 0, %s215
    %s216 = sphi 0, %s213
    %s217 = sphi 0, %s216
    %s233 = sphi 0, %s217
    %s237 = sphi 0, %s237
    %s239 = sphi 0, %s237
    %s240 = sphi 0, %s239
    %s254 = sphi 0, %s240
    %s258 = sphi 0, %s258
    %s260 = sphi 0, %s258
    %s261 = sphi 0, %s260
    %s275 = sphi 0, %s261
    %s279 = sphi 0, %s279
    %s281 = sphi 0, %s279
    %s282 = sphi 0, %s281
    %s296 = sphi 0, %s282
    %s300 = sphi 0, %s300
    %s302 = sphi 0, %s300
    %s303 = sphi 0, %s302
    %s317 = sphi 0, %s303
    %s321 = sphi 0, %s321
    %s323 = sphi 0, %s321
    %s324 = sphi 0, %s323
    %s338 = sphi 0, %s324
    %s346 = sphi 0, %s348
    %s349 = sphi 0, %s346
    %s350 = sphi 0, %s349
    %s366 = sphi 0, %s350
  $region4: #{wave_unet_forward.19} parent=0 // loop_header_branch
    %20 = sbr.rel (%p18) target = $region8
  $region5: #{wave_unet_forward.19} parent=0 // loop_body
    %s22 = ssub.s32 %s17, 1
    %s23 = ssub.s32 %s17, 2
    %s30 = sadd.s32 1, %s25
    %p31 = scmp.ge.s32.totalorder %s30, 4
    %s32 = scalar_select %p31, 0, %s30
    %s33 = sadd.s32 1, %s24
    %s34 = scalar_select %p31, %s33, %s24
    %p35 = scmp.ge.s32.totalorder %s34, 2
    %s36 = scalar_select %p35, 0, %s34
    %s37 = ssub.s32 %s24, %s36
    %s38 = ssub.s32 %s25, %s32
    %s39 = sor.u32 %s37, %s38
    %p40 = scmp.eq.s32.totalorder %s39, 0
    %s42 = sadd.s32 %s41, 1
    %s43 = scalar_select %p40, %s41, %s42
    %p46 = pneg %p40
    %p47 = scmp.eq.s32.totalorder %s17, 7
    %p48 = por %p46, %p47
    %p49 = scmp.ne.s32.totalorder %s41, %s44
    %p50 = scmp.eq.s32.totalorder %s17, 0
    %p51 = por %p49, %p50
    %p52 = scmp.ne.s32.totalorder %s41, %s44
    %p53 = scmp.eq.s32.totalorder %s22, 7
    %p54 = por %p52, %p53
    %p55 = scmp.ne.s32.totalorder %s44, %s45
    %p56 = scmp.eq.s32.totalorder %s22, 0
    %p57 = por %p55, %p56
    %p58 = scmp.ne.s32.totalorder %s44, %s45
    %p59 = scmp.eq.s32.totalorder %s23, 7
    %p60 = por %p58, %p59
    %p62 = scmp.ne.s32.totalorder %s45, %s61
    %p63 = scmp.eq.s32.totalorder %s23, 0
    %p64 = por %p62, %p63
    %s65 = smul.u32 %s25, 2
    %s66 = ssub.s32 %s65, 1
    %p67 = scmp.gt.s32.totalorder %s66, 0
    %s68 = scalar_select %p67, %s66, 0
    %s69 = smul.u32 %s32, 2
    %s70 = ssub.s32 %s69, 1
    %p71 = scmp.gt.s32.totalorder %s70, 0
    %s72 = scalar_select %p71, %s70, 0
    %s73 = ssub.s32 %s24, %s36
    %s74 = ssub.s32 %s68, %s72
    %s75 = sor.u32 %s73, %s74
    %p76 = scmp.eq.s32.totalorder %s75, 0
    %s78 = sadd.s32 %s77, 1
    %s79 = scalar_select %p76, %s77, %s78
    %p82 = pneg %p76
    %p83 = scmp.eq.s32.totalorder %s17, 7
    %p84 = por %p82, %p83
    %p85 = scmp.ne.s32.totalorder %s77, %s80
    %p86 = scmp.eq.s32.totalorder %s17, 0
    %p87 = por %p85, %p86
    %p88 = scmp.ne.s32.totalorder %s77, %s80
    %p89 = scmp.eq.s32.totalorder %s22, 7
    %p90 = por %p88, %p89
    %p91 = scmp.ne.s32.totalorder %s80, %s81
    %p92 = scmp.eq.s32.totalorder %s22, 0
    %p93 = por %p91, %p92
    %p94 = scmp.ne.s32.totalorder %s80, %s81
    %p95 = scmp.eq.s32.totalorder %s23, 7
    %p96 = por %p94, %p95
    %p98 = scmp.ne.s32.totalorder %s81, %s97
    %p99 = scmp.eq.s32.totalorder %s23, 0
    %p100 = por %p98, %p99
    %s101 = sadd.s32 %s25, 1
    %s102 = smul.u32 %s101, 2
    %p103 = scmp.lt.s32.totalorder %s102, 7
    %s104 = scalar_select %p103, %s102, 7
    %s105 = sadd.s32 %s32, 1
    %s106 = smul.u32 %s105, 2
    %p107 = scmp.lt.s32.totalorder %s106, 7
    %s108 = scalar_select %p107, %s106, 7
    %s109 = ssub.s32 %s24, %s36
    %s110 = ssub.s32 %s104, %s108
    %s111 = sor.u32 %s109, %s110
    %p112 = scmp.eq.s32.totalorder %s111, 0
    %s114 = sadd.s32 %s113, 1
    %s115 = scalar_select %p112, %s113, %s114
    %p118 = pneg %p112
    %p119 = scmp.eq.s32.totalorder %s17, 7
    %p120 = por %p118, %p119
    %p121 = scmp.ne.s32.totalorder %s113, %s116
    %p122 = scmp.eq.s32.totalorder %s17, 0
    %p123 = por %p121, %p122
    %p124 = scmp.ne.s32.totalorder %s113, %s116
    %p125 = scmp.eq.s32.totalorder %s22, 7
    %p126 = por %p124, %p125
    %p127 = scmp.ne.s32.totalorder %s116, %s117
    %p128 = scmp.eq.s32.totalorder %s22, 0
    %p129 = por %p127, %p128
    %p130 = scmp.ne.s32.totalorder %s116, %s117
    %p131 = scmp.eq.s32.totalorder %s23, 7
    %p132 = por %p130, %p131
    %p134 = scmp.ne.s32.totalorder %s117, %s133
    %p135 = scmp.eq.s32.totalorder %s23, 0
    %p136 = por %p134, %p135
    %s137 = ssub.s32 %s24, %s36
    %s138 = ssub.s32 %s25, %s32
    %s139 = sor.u32 %s137, %s138
    %p140 = scmp.eq.s32.totalorder %s139, 0
    %s142 = sadd.s32 %s141, 1
    %s143 = scalar_select %p140, %s141, %s142
    %p146 = pneg %p140
    %p147 = scmp.eq.s32.totalorder %s17, 7
    %p148 = por %p146, %p147
    %p149 = scmp.ne.s32.totalorder %s141, %s144
    %p150 = scmp.eq.s32.totalorder %s17, 0
    %p151 = por %p149, %p150
    %p152 = scmp.ne.s32.totalorder %s141, %s144
    %p153 = scmp.eq.s32.totalorder %s22, 7
    %p154 = por %p152, %p153
    %p155 = scmp.ne.s32.totalorder %s144, %s145
    %p156 = scmp.eq.s32.totalorder %s22, 0
    %p157 = por %p155, %p156
    %p158 = scmp.ne.s32.totalorder %s144, %s145
    %p159 = scmp.eq.s32.totalorder %s23, 7
    %p160 = por %p158, %p159
    %p162 = scmp.ne.s32.totalorder %s145, %s161
    %p163 = scmp.eq.s32.totalorder %s23, 0
    %p164 = por %p162, %p163
    %s165 = smul.u32 %s25, 2
    %s166 = ssub.s32 %s165, 1
    %p167 = scmp.gt.s32.totalorder %s166, 0
    %s168 = scalar_select %p167, %s166, 0
    %s169 = smul.u32 %s32, 2
    %s170 = ssub.s32 %s169, 1
    %p171 = scmp.gt.s32.totalorder %s170, 0
    %s172 = scalar_select %p171, %s170, 0
    %s173 = ssub.s32 %s24, %s36
    %s174 = ssub.s32 %s168, %s172
    %s175 = sor.u32 %s173, %s174
    %p176 = scmp.eq.s32.totalorder %s175, 0
    %s178 = sadd.s32 %s177, 1
    %s179 = scalar_select %p176, %s177, %s178
    %p182 = pneg %p176
    %p183 = scmp.eq.s32.totalorder %s17, 7
    %p184 = por %p182, %p183
    %p185 = scmp.ne.s32.totalorder %s177, %s180
    %p186 = scmp.eq.s32.totalorder %s17, 0
    %p187 = por %p185, %p186
    %p188 = scmp.ne.s32.totalorder %s177, %s180
    %p189 = scmp.eq.s32.totalorder %s22, 7
    %p190 = por %p188, %p189
    %p191 = scmp.ne.s32.totalorder %s180, %s181
    %p192 = scmp.eq.s32.totalorder %s22, 0
    %p193 = por %p191, %p192
    %p194 = scmp.ne.s32.totalorder %s180, %s181
    %p195 = scmp.eq.s32.totalorder %s23, 7
    %p196 = por %p194, %p195
    %p198 = scmp.ne.s32.totalorder %s181, %s197
    %p199 = scmp.eq.s32.totalorder %s23, 0
    %p200 = por %p198, %p199
    %s201 = sadd.s32 %s25, 1
    %s202 = smul.u32 %s201, 2
    %p203 = scmp.lt.s32.totalorder %s202, 7
    %s204 = scalar_select %p203, %s202, 7
    %s205 = sadd.s32 %s32, 1
    %s206 = smul.u32 %s205, 2
    %p207 = scmp.lt.s32.totalorder %s206, 7
    %s208 = scalar_select %p207, %s206, 7
    %s209 = ssub.s32 %s24, %s36
    %s210 = ssub.s32 %s204, %s208
    %s211 = sor.u32 %s209, %s210
    %p212 = scmp.eq.s32.totalorder %s211, 0
    %s214 = sadd.s32 %s213, 1
    %s215 = scalar_select %p212, %s213, %s214
    %p218 = pneg %p212
    %p219 = scmp.eq.s32.totalorder %s17, 7
    %p220 = por %p218, %p219
    %p221 = scmp.ne.s32.totalorder %s213, %s216
    %p222 = scmp.eq.s32.totalorder %s17, 0
    %p223 = por %p221, %p222
    %p224 = scmp.ne.s32.totalorder %s213, %s216
    %p225 = scmp.eq.s32.totalorder %s22, 7
    %p226 = por %p224, %p225
    %p227 = scmp.ne.s32.totalorder %s216, %s217
    %p228 = scmp.eq.s32.totalorder %s22, 0
    %p229 = por %p227, %p228
    %p230 = scmp.ne.s32.totalorder %s216, %s217
    %p231 = scmp.eq.s32.totalorder %s23, 7
    %p232 = por %p230, %p231
    %p234 = scmp.ne.s32.totalorder %s217, %s233
    %p235 = scmp.eq.s32.totalorder %s23, 0
    %p236 = por %p234, %p235
    %s238 = sadd.s32 %s237, 1
    %p241 = scmp.eq.s32.totalorder %s17, 7
    %p242 = scmp.ne.s32.totalorder %s237, %s239
    %p243 = scmp.eq.s32.totalorder %s17, 0
    %p244 = por %p242, %p243
    %p245 = scmp.ne.s32.totalorder %s237, %s239
    %p246 = scmp.eq.s32.totalorder %s22, 7
    %p247 = por %p245, %p246
    %p248 = scmp.ne.s32.totalorder %s239, %s240
    %p249 = scmp.eq.s32.totalorder %s22, 0
    %p250 = por %p248, %p249
    %p251 = scmp.ne.s32.totalorder %s239, %s240
    %p252 = scmp.eq.s32.totalorder %s23, 7
    %p253 = por %p251, %p252
    %p255 = scmp.ne.s32.totalorder %s240, %s254
    %p256 = scmp.eq.s32.totalorder %s23, 0
    %p257 = por %p255, %p256
    %s259 = sadd.s32 %s258, 1
    %p262 = scmp.eq.s32.totalorder %s17, 7
    %p263 = scmp.ne.s32.totalorder %s258, %s260
    %p264 = scmp.eq.s32.totalorder %s17, 0
    %p265 = por %p263, %p264
    %p266 = scmp.ne.s32.totalorder %s258, %s260
    %p267 = scmp.eq.s32.totalorder %s22, 7
    %p268 = por %p266, %p267
    %p269 = scmp.ne.s32.totalorder %s260, %s261
    %p270 = scmp.eq.s32.totalorder %s22, 0
    %p271 = por %p269, %p270
    %p272 = scmp.ne.s32.totalorder %s260, %s261
    %p273 = scmp.eq.s32.totalorder %s23, 7
    %p274 = por %p272, %p273
    %p276 = scmp.ne.s32.totalorder %s261, %s275
    %p277 = scmp.eq.s32.totalorder %s23, 0
    %p278 = por %p276, %p277
    %s280 = sadd.s32 %s279, 1
    %p283 = scmp.eq.s32.totalorder %s17, 7
    %p284 = scmp.ne.s32.totalorder %s279, %s281
    %p285 = scmp.eq.s32.totalorder %s17, 0
    %p286 = por %p284, %p285
    %p287 = scmp.ne.s32.totalorder %s279, %s281
    %p288 = scmp.eq.s32.totalorder %s22, 7
    %p289 = por %p287, %p288
    %p290 = scmp.ne.s32.totalorder %s281, %s282
    %p291 = scmp.eq.s32.totalorder %s22, 0
    %p292 = por %p290, %p291
    %p293 = scmp.ne.s32.totalorder %s281, %s282
    %p294 = scmp.eq.s32.totalorder %s23, 7
    %p295 = por %p293, %p294
    %p297 = scmp.ne.s32.totalorder %s282, %s296
    %p298 = scmp.eq.s32.totalorder %s23, 0
    %p299 = por %p297, %p298
    %s301 = sadd.s32 %s300, 1
    %p304 = scmp.eq.s32.totalorder %s17, 7
    %p305 = scmp.ne.s32.totalorder %s300, %s302
    %p306 = scmp.eq.s32.totalorder %s17, 0
    %p307 = por %p305, %p306
    %p308 = scmp.ne.s32.totalorder %s300, %s302
    %p309 = scmp.eq.s32.totalorder %s22, 7
    %p310 = por %p308, %p309
    %p311 = scmp.ne.s32.totalorder %s302, %s303
    %p312 = scmp.eq.s32.totalorder %s22, 0
    %p313 = por %p311, %p312
    %p314 = scmp.ne.s32.totalorder %s302, %s303
    %p315 = scmp.eq.s32.totalorder %s23, 7
    %p316 = por %p314, %p315
    %p318 = scmp.ne.s32.totalorder %s303, %s317
    %p319 = scmp.eq.s32.totalorder %s23, 0
    %p320 = por %p318, %p319
    %s322 = sadd.s32 %s321, 1
    %p325 = scmp.eq.s32.totalorder %s17, 7
    %p326 = scmp.ne.s32.totalorder %s321, %s323
    %p327 = scmp.eq.s32.totalorder %s17, 0
    %p328 = por %p326, %p327
    %p329 = scmp.ne.s32.totalorder %s321, %s323
    %p330 = scmp.eq.s32.totalorder %s22, 7
    %p331 = por %p329, %p330
    %p332 = scmp.ne.s32.totalorder %s323, %s324
    %p333 = scmp.eq.s32.totalorder %s22, 0
    %p334 = por %p332, %p333
    %p335 = scmp.ne.s32.totalorder %s323, %s324
    %p336 = scmp.eq.s32.totalorder %s23, 7
    %p337 = por %p335, %p336
    %p339 = scmp.ne.s32.totalorder %s324, %s338
    %p340 = scmp.eq.s32.totalorder %s23, 0
    %p341 = por %p339, %p340
    %s342 = ssub.s32 %s24, %s36
    %s343 = ssub.s32 %s25, %s32
    %s344 = sor.u32 %s342, %s343
    %p345 = scmp.eq.s32.totalorder %s344, 0
    %s347 = sadd.s32 %s346, 1
    %s348 = scalar_select %p345, %s346, %s347
    %p351 = pneg %p345
    %p352 = scmp.eq.s32.totalorder %s17, 7
    %p353 = por %p351, %p352
    %p354 = scmp.ne.s32.totalorder %s346, %s349
    %p355 = scmp.eq.s32.totalorder %s17, 0
    %p356 = por %p354, %p355
    %p357 = scmp.ne.s32.totalorder %s346, %s349
    %p358 = scmp.eq.s32.totalorder %s22, 7
    %p359 = por %p357, %p358
    %p360 = scmp.ne.s32.totalorder %s349, %s350
    %p361 = scmp.eq.s32.totalorder %s22, 0
    %p362 = por %p360, %p361
    %p363 = scmp.ne.s32.totalorder %s349, %s350
    %p364 = scmp.eq.s32.totalorder %s23, 7
    %p365 = por %p363, %p364
    %p367 = scmp.ne.s32.totalorder %s350, %s366
    %p368 = scmp.eq.s32.totalorder %s23, 0
    %p369 = por %p367, %p368
    %p370 = scmp.le.s32.totalorder 1, %s17
    %p371 = scmp.lt.s32.totalorder %s17, 9
    %p372 = pnand %p370, %p371
    %p373 = pneg %p372
    // Predicated region
    $region9: #{wave_unet_forward.19} parent=5 // pred_check
      _
    $region10: #{wave_unet_forward.19} parent=5 // pred_check_branch
      %375 = sbr.rel (%p372) target = $region12
    $region11: #{wave_unet_forward.19} parent=5 // pred_region
      %s376 = ssub.s32 %s17, 1
      // Predicated region
      $region13: #{wave_unet_forward.19} parent=11 // pred_check
        %p377 = pneg %p250
      $region14: #{wave_unet_forward.19} parent=11 // pred_check_branch
        %379 = sbr.rel (%p377) target = $region16
      $region15: #{wave_unet_forward.19} parent=11 // pred_region
        _
      $region16: #{wave_unet_forward.19} parent=11 // pred_fallthru
        _
      // Predicated region
      $region17: #{wave_unet_forward.19} parent=11 // pred_check
        %p380 = pneg %p271
      $region18: #{wave_unet_forward.19} parent=11 // pred_check_branch
        %382 = sbr.rel (%p380) target = $region20
      $region19: #{wave_unet_forward.19} parent=11 // pred_region
        _
      $region20: #{wave_unet_forward.19} parent=11 // pred_fallthru
        _
      // Predicated region
      $region21: #{wave_unet_forward.19} parent=11 // pred_check
        %p383 = pneg %p292
      $region22: #{wave_unet_forward.19} parent=11 // pred_check_branch
        %385 = sbr.rel (%p383) target = $region24
      $region23: #{wave_unet_forward.19} parent=11 // pred_region
        _
      $region24: #{wave_unet_forward.19} parent=11 // pred_fallthru
        _
      // Predicated region
      $region25: #{wave_unet_forward.19} parent=11 // pred_check
        %p386 = pneg %p313
      $region26: #{wave_unet_forward.19} parent=11 // pred_check_branch
        %388 = sbr.rel (%p386) target = $region28
      $region27: #{wave_unet_forward.19} parent=11 // pred_region
        _
      $region28: #{wave_unet_forward.19} parent=11 // pred_fallthru
        _
      // Predicated region
      $region29: #{wave_unet_forward.19} parent=11 // pred_check
        %p389 = pneg %p334
      $region30: #{wave_unet_forward.19} parent=11 // pred_check_branch
        %391 = sbr.rel (%p389) target = $region32
      $region31: #{wave_unet_forward.19} parent=11 // pred_region
        _
      $region32: #{wave_unet_forward.19} parent=11 // pred_fallthru
        _
    $region12: #{wave_unet_forward.19} parent=5 // pred_fallthru
      _
    %p392 = scmp.lt.s32.totalorder %s17, 8
    // Predicated region
    $region33: #{wave_unet_forward.19} parent=5 // pred_check
      %p393 = pneg %p392
    $region34: #{wave_unet_forward.19} parent=5 // pred_check_branch
      %395 = sbr.rel (%p393) target = $region36
    $region35: #{wave_unet_forward.19} parent=5 // pred_region
      // Predicated region
      $region37: #{wave_unet_forward.19} parent=35 // pred_check
        %p396 = pneg %p51
      $region38: #{wave_unet_forward.19} parent=35 // pred_check_branch
        %398 = sbr.rel (%p396) target = $region40
      $region39: #{wave_unet_forward.19} parent=35 // pred_region
        %s399 = smul.u32 2, %s25
        %p400 = scmp.lt.s32.totalorder %s24, 1
        %s401 = scalar_select %p400, %s24, 1
        %p402 = scmp.lt.s32.totalorder %s399, 7
        %s403 = scalar_select %p402, %s399, 7
        %s404 = smul.addr %s401, 8
        %s405 = sadd.s32 %s403, %s404
        %s406 = smul.addr %s405, 8
        %s407 = scalar_lea.vmem %s0, %s406
        %s408 = smul.u32 2, %s25
      $region40: #{wave_unet_forward.19} parent=35 // pred_fallthru
        _
      // Predicated region
      $region41: #{wave_unet_forward.19} parent=35 // pred_check
        %p409 = pneg %p87
      $region42: #{wave_unet_forward.19} parent=35 // pred_check_branch
        %411 = sbr.rel (%p409) target = $region44
      $region43: #{wave_unet_forward.19} parent=35 // pred_region
        %s412 = smul.u32 %s25, 2
        %s413 = ssub.s32 %s412, 1
        %p414 = scmp.gt.s32.totalorder %s413, 0
        %s415 = scalar_select %p414, %s413, 0
        %p416 = scmp.lt.s32.totalorder %s24, 1
        %s417 = scalar_select %p416, %s24, 1
        %p418 = scmp.lt.s32.totalorder %s415, 7
        %s419 = scalar_select %p418, %s415, 7
        %s420 = smul.addr %s417, 8
        %s421 = sadd.s32 %s419, %s420
        %s422 = smul.addr %s421, 8
        %s423 = scalar_lea.vmem %s1, %s422
        %s424 = smul.u32 %s25, 2
        %s425 = ssub.s32 %s424, 1
        %p426 = scmp.gt.s32.totalorder %s425, 0
        %s427 = scalar_select %p426, %s425, 0
      $region44: #{wave_unet_forward.19} parent=35 // pred_fallthru
        _
      // Predicated region
      $region45: #{wave_unet_forward.19} parent=35 // pred_check
        %p428 = pneg %p123
      $region46: #{wave_unet_forward.19} parent=35 // pred_check_branch
        %430 = sbr.rel (%p428) target = $region48
      $region47: #{wave_unet_forward.19} parent=35 // pred_region
        %s431 = sadd.s32 %s25, 1
        %s432 = smul.u32 %s431, 2
        %p433 = scmp.lt.s32.totalorder %s432, 7
        %s434 = scalar_select %p433, %s432, 7
        %p435 = scmp.lt.s32.totalorder %s24, 1
        %s436 = scalar_select %p435, %s24, 1
        %p437 = scmp.lt.s32.totalorder %s434, 7
        %s438 = scalar_select %p437, %s434, 7
        %s439 = smul.addr %s436, 8
        %s440 = sadd.s32 %s438, %s439
        %s441 = smul.addr %s440, 8
        %s442 = scalar_lea.vmem %s2, %s441
        %s443 = sadd.s32 %s25, 1
        %s444 = smul.u32 %s443, 2
        %p445 = scmp.lt.s32.totalorder %s444, 7
        %s446 = scalar_select %p445, %s444, 7
      $region48: #{wave_unet_forward.19} parent=35 // pred_fallthru
        _
      // Predicated region
      $region49: #{wave_unet_forward.19} parent=35 // pred_check
        %p447 = pneg %p151
      $region50: #{wave_unet_forward.19} parent=35 // pred_check_branch
        %449 = sbr.rel (%p447) target = $region52
      $region51: #{wave_unet_forward.19} parent=35 // pred_region
        %s450 = smul.u32 2, %s25
        %p451 = scmp.lt.s32.totalorder %s24, 1
        %s452 = scalar_select %p451, %s24, 1
        %p453 = scmp.lt.s32.totalorder %s450, 7
        %s454 = scalar_select %p453, %s450, 7
        %s455 = smul.addr %s452, 8
        %s456 = sadd.s32 %s454, %s455
        %s457 = smul.addr %s456, 8
        %s458 = scalar_lea.vmem %s3, %s457
        %s459 = smul.u32 2, %s25
      $region52: #{wave_unet_forward.19} parent=35 // pred_fallthru
        _
      // Predicated region
      $region53: #{wave_unet_forward.19} parent=35 // pred_check
        %p460 = pneg %p187
      $region54: #{wave_unet_forward.19} parent=35 // pred_check_branch
        %462 = sbr.rel (%p460) target = $region56
      $region55: #{wave_unet_forward.19} parent=35 // pred_region
        %s463 = smul.u32 %s25, 2
        %s464 = ssub.s32 %s463, 1
        %p465 = scmp.gt.s32.totalorder %s464, 0
        %s466 = scalar_select %p465, %s464, 0
        %p467 = scmp.lt.s32.totalorder %s24, 1
        %s468 = scalar_select %p467, %s24, 1
        %p469 = scmp.lt.s32.totalorder %s466, 7
        %s470 = scalar_select %p469, %s466, 7
        %s471 = smul.addr %s468, 8
        %s472 = sadd.s32 %s470, %s471
        %s473 = smul.addr %s472, 8
        %s474 = scalar_lea.vmem %s4, %s473
        %s475 = smul.u32 %s25, 2
        %s476 = ssub.s32 %s475, 1
        %p477 = scmp.gt.s32.totalorder %s476, 0
        %s478 = scalar_select %p477, %s476, 0
      $region56: #{wave_unet_forward.19} parent=35 // pred_fallthru
        _
      // Predicated region
      $region57: #{wave_unet_forward.19} parent=35 // pred_check
        %p479 = pneg %p223
      $region58: #{wave_unet_forward.19} parent=35 // pred_check_branch
        %481 = sbr.rel (%p479) target = $region60
      $region59: #{wave_unet_forward.19} parent=35 // pred_region
        %s482 = sadd.s32 %s25, 1
        %s483 = smul.u32 %s482, 2
        %p484 = scmp.lt.s32.totalorder %s483, 7
        %s485 = scalar_select %p484, %s483, 7
        %p486 = scmp.lt.s32.totalorder %s24, 1
        %s487 = scalar_select %p486, %s24, 1
        %p488 = scmp.lt.s32.totalorder %s485, 7
        %s489 = scalar_select %p488, %s485, 7
        %s490 = smul.addr %s487, 8
        %s491 = sadd.s32 %s489, %s490
        %s492 = smul.addr %s491, 8
        %s493 = scalar_lea.vmem %s5, %s492
        %s494 = sadd.s32 %s25, 1
        %s495 = smul.u32 %s494, 2
        %p496 = scmp.lt.s32.totalorder %s495, 7
        %s497 = scalar_select %p496, %s495, 7
      $region60: #{wave_unet_forward.19} parent=35 // pred_fallthru
        _
    $region36: #{wave_unet_forward.19} parent=5 // pred_fallthru
      _
    %p498 = scmp.le.s32.totalorder 1, %s17
    %p499 = scmp.lt.s32.totalorder %s17, 9
    %p500 = pnand %p498, %p499
    %p501 = pneg %p500
    // Predicated region
    $region61: #{wave_unet_forward.19} parent=5 // pred_check
      _
    $region62: #{wave_unet_forward.19} parent=5 // pred_check_branch
      %503 = sbr.rel (%p500) target = $region64
    $region63: #{wave_unet_forward.19} parent=5 // pred_region
      %s504 = ssub.s32 %s17, 1
      %s505 = smul.u32 2, %s27
      %p506 = scmp.lt.s32.totalorder %s26, 1
      %s507 = scalar_select %p506, %s26, 1
      %p508 = scmp.lt.s32.totalorder %s505, 7
      %s509 = scalar_select %p508, %s505, 7
      %s510 = smul.addr %s507, 8
      %s511 = sadd.s32 %s509, %s510
      %s512 = smul.addr %s511, 8
      %s513 = scalar_lea.vmem %s0, %s512
      %p514 = pneg %p57
      %p515 = pneg %p54
      %s516 = smul.u32 %s27, 2
      %s517 = ssub.s32 %s516, 1
      %p518 = scmp.gt.s32.totalorder %s517, 0
      %s519 = scalar_select %p518, %s517, 0
      %p520 = scmp.lt.s32.totalorder %s26, 1
      %s521 = scalar_select %p520, %s26, 1
      %p522 = scmp.lt.s32.totalorder %s519, 7
      %s523 = scalar_select %p522, %s519, 7
      %s524 = smul.addr %s521, 8
      %s525 = sadd.s32 %s523, %s524
      %s526 = smul.addr %s525, 8
      %s527 = scalar_lea.vmem %s1, %s526
      %p528 = pneg %p93
      %p529 = pneg %p90
      %s530 = sadd.s32 %s27, 1
      %s531 = smul.u32 %s530, 2
      %p532 = scmp.lt.s32.totalorder %s531, 7
      %s533 = scalar_select %p532, %s531, 7
      %p534 = scmp.lt.s32.totalorder %s26, 1
      %s535 = scalar_select %p534, %s26, 1
      %p536 = scmp.lt.s32.totalorder %s533, 7
      %s537 = scalar_select %p536, %s533, 7
      %s538 = smul.addr %s535, 8
      %s539 = sadd.s32 %s537, %s538
      %s540 = smul.addr %s539, 8
      %s541 = scalar_lea.vmem %s2, %s540
      %p542 = pneg %p129
      %p543 = pneg %p126
      %s544 = smul.u32 2, %s27
      %p545 = scmp.lt.s32.totalorder %s26, 1
      %s546 = scalar_select %p545, %s26, 1
      %p547 = scmp.lt.s32.totalorder %s544, 7
      %s548 = scalar_select %p547, %s544, 7
      %s549 = smul.addr %s546, 8
      %s550 = sadd.s32 %s548, %s549
      %s551 = smul.addr %s550, 8
      %s552 = scalar_lea.vmem %s3, %s551
      %p553 = pneg %p157
      %p554 = pneg %p154
      %s555 = smul.u32 %s27, 2
      %s556 = ssub.s32 %s555, 1
      %p557 = scmp.gt.s32.totalorder %s556, 0
      %s558 = scalar_select %p557, %s556, 0
      %p559 = scmp.lt.s32.totalorder %s26, 1
      %s560 = scalar_select %p559, %s26, 1
      %p561 = scmp.lt.s32.totalorder %s558, 7
      %s562 = scalar_select %p561, %s558, 7
      %s563 = smul.addr %s560, 8
      %s564 = sadd.s32 %s562, %s563
      %s565 = smul.addr %s564, 8
      %s566 = scalar_lea.vmem %s4, %s565
      %p567 = pneg %p193
      %p568 = pneg %p190
      %s569 = sadd.s32 %s27, 1
      %s570 = smul.u32 %s569, 2
      %p571 = scmp.lt.s32.totalorder %s570, 7
      %s572 = scalar_select %p571, %s570, 7
      %p573 = scmp.lt.s32.totalorder %s26, 1
      %s574 = scalar_select %p573, %s26, 1
      %p575 = scmp.lt.s32.totalorder %s572, 7
      %s576 = scalar_select %p575, %s572, 7
      %s577 = smul.addr %s574, 8
      %s578 = sadd.s32 %s576, %s577
      %s579 = smul.addr %s578, 8
      %s580 = scalar_lea.vmem %s5, %s579
      %p581 = pneg %p229
      %p582 = pneg %p226
      %p583 = pneg %p250
      %p584 = pneg %p247
      %p585 = pneg %p271
      %p586 = pneg %p268
      %p587 = pneg %p292
      %p588 = pneg %p289
      %p589 = pneg %p313
      %p590 = pneg %p310
      %p591 = pneg %p334
      %p592 = pneg %p331
      %p593 = pneg %p362
      %p594 = pneg %p359
      %s595 = smul.u32 2, %s27
      %p596 = scmp.lt.s32.totalorder %s26, 1
      %s597 = scalar_select %p596, %s26, 1
      %p598 = scmp.lt.s32.totalorder %s595, 7
      %s599 = scalar_select %p598, %s595, 7
      %s600 = smul.addr %s597, 8
      %s601 = sadd.s32 %s599, %s600
      %s602 = smul.addr %s601, 8
      %s603 = scalar_lea.vmem %s11, %s602
      %s604 = smul.u32 2, %s27
      %p605 = scmp.lt.s32.totalorder %s26, 1
      %s606 = scalar_select %p605, %s26, 1
      %p607 = scmp.lt.s32.totalorder %s604, 7
      %s608 = scalar_select %p607, %s604, 7
      %s609 = smul.addr %s606, 8
      %s610 = sadd.s32 %s608, %s609
      %s611 = smul.addr %s610, 8
      %s612 = scalar_lea.vmem %s0, %s611
      %s613 = smul.u32 2, %s27
      %s614 = smul.u32 %s27, 2
      %s615 = ssub.s32 %s614, 1
      %p616 = scmp.gt.s32.totalorder %s615, 0
      %s617 = scalar_select %p616, %s615, 0
      %p618 = scmp.lt.s32.totalorder %s26, 1
      %s619 = scalar_select %p618, %s26, 1
      %p620 = scmp.lt.s32.totalorder %s617, 7
      %s621 = scalar_select %p620, %s617, 7
      %s622 = smul.addr %s619, 8
      %s623 = sadd.s32 %s621, %s622
      %s624 = smul.addr %s623, 8
      %s625 = scalar_lea.vmem %s1, %s624
      %s626 = smul.u32 %s27, 2
      %s627 = ssub.s32 %s626, 1
      %p628 = scmp.gt.s32.totalorder %s627, 0
      %s629 = scalar_select %p628, %s627, 0
      %s630 = sadd.s32 %s27, 1
      %s631 = smul.u32 %s630, 2
      %p632 = scmp.lt.s32.totalorder %s631, 7
      %s633 = scalar_select %p632, %s631, 7
      %p634 = scmp.lt.s32.totalorder %s26, 1
      %s635 = scalar_select %p634, %s26, 1
      %p636 = scmp.lt.s32.totalorder %s633, 7
      %s637 = scalar_select %p636, %s633, 7
      %s638 = smul.addr %s635, 8
      %s639 = sadd.s32 %s637, %s638
      %s640 = smul.addr %s639, 8
      %s641 = scalar_lea.vmem %s2, %s640
      %s642 = sadd.s32 %s27, 1
      %s643 = smul.u32 %s642, 2
      %p644 = scmp.lt.s32.totalorder %s643, 7
      %s645 = scalar_select %p644, %s643, 7
      %s646 = smul.u32 2, %s27
      %p647 = scmp.lt.s32.totalorder %s26, 1
      %s648 = scalar_select %p647, %s26, 1
      %p649 = scmp.lt.s32.totalorder %s646, 7
      %s650 = scalar_select %p649, %s646, 7
      %s651 = smul.addr %s648, 8
      %s652 = sadd.s32 %s650, %s651
      %s653 = smul.addr %s652, 8
      %s654 = scalar_lea.vmem %s3, %s653
      %s655 = smul.u32 2, %s27
      %s656 = smul.u32 %s27, 2
      %s657 = ssub.s32 %s656, 1
      %p658 = scmp.gt.s32.totalorder %s657, 0
      %s659 = scalar_select %p658, %s657, 0
      %p660 = scmp.lt.s32.totalorder %s26, 1
      %s661 = scalar_select %p660, %s26, 1
      %p662 = scmp.lt.s32.totalorder %s659, 7
      %s663 = scalar_select %p662, %s659, 7
      %s664 = smul.addr %s661, 8
      %s665 = sadd.s32 %s663, %s664
      %s666 = smul.addr %s665, 8
      %s667 = scalar_lea.vmem %s4, %s666
      %s668 = smul.u32 %s27, 2
      %s669 = ssub.s32 %s668, 1
      %p670 = scmp.gt.s32.totalorder %s669, 0
      %s671 = scalar_select %p670, %s669, 0
      %s672 = sadd.s32 %s27, 1
      %s673 = smul.u32 %s672, 2
      %p674 = scmp.lt.s32.totalorder %s673, 7
      %s675 = scalar_select %p674, %s673, 7
      %p676 = scmp.lt.s32.totalorder %s26, 1
      %s677 = scalar_select %p676, %s26, 1
      %p678 = scmp.lt.s32.totalorder %s675, 7
      %s679 = scalar_select %p678, %s675, 7
      %s680 = smul.addr %s677, 8
      %s681 = sadd.s32 %s679, %s680
      %s682 = smul.addr %s681, 8
      %s683 = scalar_lea.vmem %s5, %s682
      %s684 = sadd.s32 %s27, 1
      %s685 = smul.u32 %s684, 2
      %p686 = scmp.lt.s32.totalorder %s685, 7
      %s687 = scalar_select %p686, %s685, 7
      %s688 = smul.u32 2, %s27
      %p689 = scmp.lt.s32.totalorder %s26, 1
      %s690 = scalar_select %p689, %s26, 1
      %p691 = scmp.lt.s32.totalorder %s688, 7
      %s692 = scalar_select %p691, %s688, 7
      %s693 = smul.addr %s690, 8
      %s694 = sadd.s32 %s692, %s693
      %s695 = smul.addr %s694, 8
      %s696 = scalar_lea.vmem %s11, %s695
      %s697 = smul.u32 2, %s27
      %v698 = vld [vmem:[%s612] sm:$0xff]
      %v699 = vld [vmem:[%s612 + $0x8] sm:$0xff]
      %v700 = vld [vmem:[%s625] sm:$0xff]
      %v701 = vld [vmem:[%s641] sm:$0xff]
      %p702 = scmp.eq.s32.totalorder %s27, 0
      %s703 = scalar_select %p702, 1, 0
      %v704 = vstv %s703
      %vm705 = vcmp.eq.s32.totalorder %v704, 1
      %v706 = vsel %vm705, 0.0, %v700
      %p707 = scmp.eq.s32.totalorder %s27, 3
      %s708 = scalar_select %p707, 1, 0
      %v709 = vstv %s708
      %vm710 = vcmp.eq.s32.totalorder %v709, 1
      %v711 = vsel %vm710, 0.0, %v701
      %v713 = vrot.slane %v706, 1
      %vm717 = vcmask 1046528
      %v718 = vrot.slane %v698, 1
      %v719 = vrot.slane %v699, 1
      %v720 = vsel %vm717, %v718, %v719
      %v725 = vrot.slane %v711, 1
      %v727 = vsel %vm717, %v713, %v718
      %v728 = vsel %vm717, %v719, %v725
      %v731 = vrot.slane %v727, 1
      %v732 = vrot.slane %v720, 1
      %v733 = vsel %vm717, %v731, %v732
      %v734 = vrot.slane %v728, 1
      %v735 = vsel %vm717, %v732, %v734
      %736 = vrot.lane.b32.xlu0 %v733, 32
      %v737 = vpop.permute.xlu0 %736
      %738 = vrot.lane.b32.xlu0 %v735, 32
      %v739 = vpop.permute.xlu0 %738
      %vm742 = vcmask 1045504
      %v743 = vrot.slane %v727, 2
      %v744 = vrot.slane %v720, 2
      %v745 = vsel %vm742, %v743, %v744
      %v746 = vrot.slane %v728, 2
      %v747 = vsel %vm742, %v744, %v746
      %748 = vrot.lane.b32.xlu0 %v745, 64
      %v749 = vpop.permute.xlu0 %748
      %750 = vrot.lane.b32.xlu0 %v747, 64
      %v751 = vpop.permute.xlu0 %750
      %vm754 = vcmask 1044480
      %v755 = vrot.slane %v727, 3
      %v756 = vrot.slane %v720, 3
      %v757 = vsel %vm754, %v755, %v756
      %v758 = vrot.slane %v728, 3
      %v759 = vsel %vm754, %v756, %v758
      %760 = vrot.lane.b32.xlu0 %v757, 96
      %v761 = vpop.permute.xlu0 %760
      %762 = vrot.lane.b32.xlu0 %v759, 96
      %v763 = vpop.permute.xlu0 %762
      %vm766 = vcmask 1043456
      %v767 = vrot.slane %v727, 4
      %v768 = vrot.slane %v720, 4
      %v769 = vsel %vm766, %v767, %v768
      %v770 = vrot.slane %v728, 4
      %v771 = vsel %vm766, %v768, %v770
      %vm774 = vcmask 1042432
      %v775 = vrot.slane %v727, 5
      %v776 = vrot.slane %v720, 5
      %v777 = vsel %vm774, %v775, %v776
      %v778 = vrot.slane %v728, 5
      %v779 = vsel %vm774, %v776, %v778
      %780 = vrot.lane.b32.xlu0 %v777, 32
      %v781 = vpop.permute.xlu0 %780
      %782 = vrot.lane.b32.xlu0 %v779, 32
      %v783 = vpop.permute.xlu0 %782
      %vm786 = vcmask 1041408
      %v787 = vrot.slane %v727, 6
      %v788 = vrot.slane %v720, 6
      %v789 = vsel %vm786, %v787, %v788
      %v790 = vrot.slane %v728, 6
      %v791 = vsel %vm786, %v788, %v790
      %792 = vrot.lane.b32.xlu0 %v789, 64
      %v793 = vpop.permute.xlu0 %792
      %794 = vrot.lane.b32.xlu0 %v791, 64
      %v795 = vpop.permute.xlu0 %794
      %vm798 = vcmask 1040384
      %v799 = vrot.slane %v727, 7
      %v800 = vrot.slane %v720, 7
      %v801 = vsel %vm798, %v799, %v800
      %v802 = vrot.slane %v728, 7
      %v803 = vsel %vm798, %v800, %v802
      %804 = vrot.lane.b32.xlu0 %v801, 96
      %v805 = vpop.permute.xlu0 %804
      %806 = vrot.lane.b32.xlu0 %v803, 96
      %v807 = vpop.permute.xlu0 %806
      %v810 = vrot.slane %v725, 1
      %v811 = vsel %vm717, %v734, %v810
      %812 = vrot.lane.b32.xlu0 %v811, 32
      %v813 = vpop.permute.xlu0 %812
      %v815 = vrot.slane %v725, 2
      %v816 = vsel %vm742, %v746, %v815
      %817 = vrot.lane.b32.xlu0 %v816, 64
      %v818 = vpop.permute.xlu0 %817
      %v820 = vrot.slane %v725, 3
      %v821 = vsel %vm754, %v758, %v820
      %822 = vrot.lane.b32.xlu0 %v821, 96
      %v823 = vpop.permute.xlu0 %822
      %v825 = vrot.slane %v725, 4
      %v826 = vsel %vm766, %v770, %v825
      %v828 = vrot.slane %v725, 5
      %v829 = vsel %vm774, %v778, %v828
      %830 = vrot.lane.b32.xlu0 %v829, 32
      %v831 = vpop.permute.xlu0 %830
      %v833 = vrot.slane %v725, 6
      %v834 = vsel %vm786, %v790, %v833
      %835 = vrot.lane.b32.xlu0 %v834, 64
      %v836 = vpop.permute.xlu0 %835
      %vm838 = vcmask 261120
      %v839 = vsel %vm838, %v727, %v737
      %v840 = vsel %vm838, %v720, %v739
      %vm841 = vcmask 523264
      %v842 = vsel %vm841, %v839, %v749
      %v843 = vsel %vm841, %v840, %v751
      %vm844 = vcmask 785408
      %v845 = vsel %vm844, %v842, %v761
      %v846 = vsel %vm844, %v843, %v763
      %v847 = vsel %vm838, %v769, %v781
      %v848 = vsel %vm838, %v771, %v783
      %v849 = vsel %vm841, %v847, %v793
      %v850 = vsel %vm841, %v848, %v795
      %v851 = vsel %vm844, %v849, %v805
      %v852 = vsel %vm844, %v850, %v807
      %v853 = vsel %vm838, %v728, %v813
      %v854 = vsel %vm841, %v853, %v818
      %v855 = vsel %vm844, %v854, %v823
      %v856 = vsel %vm838, %v826, %v831
      %v857 = vsel %vm841, %v856, %v836
      %v858 = vld [vmem:[%s6] sm:$0xff]
      %v859 = vld [vmem:[%s6 + $0x8] sm:$0xff]
      %v860 = vld [vmem:[%s6 + $0x10] sm:$0xff]
      %v861 = vld [vmem:[%s6 + $0x18] sm:$0xff]
      %v862 = vld [vmem:[%s6 + $0x20] sm:$0xff]
      %v863 = vld [vmem:[%s6 + $0x28] sm:$0xff]
      %v864 = vld [vmem:[%s6 + $0x30] sm:$0xff]
      %v865 = vld [vmem:[%s6 + $0x38] sm:$0xff]
      %v866 = vld [vmem:[%s6 + $0x40] sm:$0xff]
      %v867 = vld [vmem:[%s6 + $0x48] sm:$0xff]
      %v868 = vld [vmem:[%s6 + $0x50] sm:$0xff]
      %v869 = vld [vmem:[%s6 + $0x58] sm:$0xff]
      %v870 = vld [vmem:[%s6 + $0x60] sm:$0xff]
      %v871 = vld [vmem:[%s6 + $0x68] sm:$0xff]
      %v872 = vld [vmem:[%s6 + $0x70] sm:$0xff]
      %v873 = vld [vmem:[%s6 + $0x78] sm:$0xff]
      %v874 = vld [vmem:[%s6 + $0x80] sm:$0xff]
      %v875 = vld [vmem:[%s6 + $0x88] sm:$0xff]
      %v876 = vld [vmem:[%s6 + $0x90] sm:$0xff]
      %v877 = vld [vmem:[%s6 + $0x98] sm:$0xff]
      %v878 = vld [vmem:[%s6 + $0xa0] sm:$0xff]
      %v879 = vld [vmem:[%s6 + $0xa8] sm:$0xff]
      %v880 = vld [vmem:[%s6 + $0xb0] sm:$0xff]
      %v881 = vld [vmem:[%s6 + $0xb8] sm:$0xff]
      %v882 = vld [vmem:[%s6 + $0xc0] sm:$0xff]
      %v883 = vld [vmem:[%s6 + $0xc8] sm:$0xff]
      %v884 = vld [vmem:[%s6 + $0xd0] sm:$0xff]
      %v885 = vld [vmem:[%s6 + $0xd8] sm:$0xff]
      %v886 = vld [vmem:[%s6 + $0xe0] sm:$0xff]
      %v887 = vld [vmem:[%s6 + $0xe8] sm:$0xff]
      %v888 = vld [vmem:[%s6 + $0xf0] sm:$0xff]
      %v889 = vld [vmem:[%s6 + $0xf8] sm:$0xff]
      %v890 = vld [vmem:[%s6 + $0x100] sm:$0xff]
      %v891 = vld [vmem:[%s6 + $0x108] sm:$0xff]
      %v892 = vld [vmem:[%s6 + $0x110] sm:$0xff]
      %v893 = vld [vmem:[%s6 + $0x118] sm:$0xff]
      %v894 = vld [vmem:[%s6 + $0x120] sm:$0xff]
      %v895 = vld [vmem:[%s6 + $0x128] sm:$0xff]
      %v896 = vld [vmem:[%s6 + $0x130] sm:$0xff]
      %v897 = vld [vmem:[%s6 + $0x138] sm:$0xff]
      %v898 = vld [vmem:[%s6 + $0x140] sm:$0xff]
      %v899 = vld [vmem:[%s6 + $0x148] sm:$0xff]
      %v900 = vld [vmem:[%s6 + $0x150] sm:$0xff]
      %v901 = vld [vmem:[%s6 + $0x158] sm:$0xff]
      %v902 = vld [vmem:[%s6 + $0x160] sm:$0xff]
      %v903 = vld [vmem:[%s6 + $0x168] sm:$0xff]
      %v904 = vld [vmem:[%s6 + $0x170] sm:$0xff]
      %v905 = vld [vmem:[%s6 + $0x178] sm:$0xff]
      %v906 = vld [vmem:[%s6 + $0x180] sm:$0xff]
      %v907 = vld [vmem:[%s6 + $0x188] sm:$0xff]
      %v908 = vld [vmem:[%s6 + $0x190] sm:$0xff]
      %v909 = vld [vmem:[%s6 + $0x198] sm:$0xff]
      %v910 = vld [vmem:[%s6 + $0x1a0] sm:$0xff]
      %v911 = vld [vmem:[%s6 + $0x1a8] sm:$0xff]
      %v912 = vld [vmem:[%s6 + $0x1b0] sm:$0xff]
      %v913 = vld [vmem:[%s6 + $0x1b8] sm:$0xff]
      %v914 = vld [vmem:[%s6 + $0x1c0] sm:$0xff]
      %v915 = vld [vmem:[%s6 + $0x1c8] sm:$0xff]
      %v916 = vld [vmem:[%s6 + $0x1d0] sm:$0xff]
      %v917 = vld [vmem:[%s6 + $0x1d8] sm:$0xff]
      %v918 = vld [vmem:[%s654] sm:$0xff]
      %v919 = vld [vmem:[%s654 + $0x8] sm:$0xff]
      %v920 = vld [vmem:[%s667] sm:$0xff]
      %v921 = vld [vmem:[%s683] sm:$0xff]
      %v922 = vsel %vm705, 0.0, %v920
      %v923 = vsel %vm710, 0.0, %v921
      %v925 = vrot.slane %v922, 1
      %v929 = vrot.slane %v918, 1
      %v930 = vrot.slane %v919, 1
      %v931 = vsel %vm717, %v929, %v930
      %v936 = vrot.slane %v923, 1
      %v938 = vsel %vm717, %v925, %v929
      %v939 = vsel %vm717, %v930, %v936
      %v942 = vrot.slane %v938, 1
      %v943 = vrot.slane %v931, 1
      %v944 = vsel %vm717, %v942, %v943
      %v945 = vrot.slane %v939, 1
      %v946 = vsel %vm717, %v943, %v945
      %947 = vrot.lane.b32.xlu0 %v944, 16
      %v948 = vpop.permute.xlu0 %947
      %949 = vrot.lane.b32.xlu0 %v946, 16
      %v950 = vpop.permute.xlu0 %949
      %v953 = vrot.slane %v938, 2
      %v954 = vrot.slane %v931, 2
      %v955 = vsel %vm742, %v953, %v954
      %v956 = vrot.slane %v939, 2
      %v957 = vsel %vm742, %v954, %v956
      %958 = vrot.lane.b32.xlu0 %v955, 32
      %v959 = vpop.permute.xlu0 %958
      %960 = vrot.lane.b32.xlu0 %v957, 32
      %v961 = vpop.permute.xlu0 %960
      %v964 = vrot.slane %v938, 3
      %v965 = vrot.slane %v931, 3
      %v966 = vsel %vm754, %v964, %v965
      %v967 = vrot.slane %v939, 3
      %v968 = vsel %vm754, %v965, %v967
      %969 = vrot.lane.b32.xlu0 %v966, 48
      %v970 = vpop.permute.xlu0 %969
      %971 = vrot.lane.b32.xlu0 %v968, 48
      %v972 = vpop.permute.xlu0 %971
      %v975 = vrot.slane %v938, 4
      %v976 = vrot.slane %v931, 4
      %v977 = vsel %vm766, %v975, %v976
      %v978 = vrot.slane %v939, 4
      %v979 = vsel %vm766, %v976, %v978
      %980 = vrot.lane.b32.xlu0 %v977, 64
      %v981 = vpop.permute.xlu0 %980
      %982 = vrot.lane.b32.xlu0 %v979, 64
      %v983 = vpop.permute.xlu0 %982
      %v986 = vrot.slane %v938, 5
      %v987 = vrot.slane %v931, 5
      %v988 = vsel %vm774, %v986, %v987
      %v989 = vrot.slane %v939, 5
      %v990 = vsel %vm774, %v987, %v989
      %991 = vrot.lane.b32.xlu0 %v988, 80
      %v992 = vpop.permute.xlu0 %991
      %993 = vrot.lane.b32.xlu0 %v990, 80
      %v994 = vpop.permute.xlu0 %993
      %v997 = vrot.slane %v938, 6
      %v998 = vrot.slane %v931, 6
      %v999 = vsel %vm786, %v997, %v998
      %v1000 = vrot.slane %v939, 6
      %v1001 = vsel %vm786, %v998, %v1000
      %1002 = vrot.lane.b32.xlu0 %v999, 96
      %v1003 = vpop.permute.xlu0 %1002
      %1004 = vrot.lane.b32.xlu0 %v1001, 96
      %v1005 = vpop.permute.xlu0 %1004
      %v1008 = vrot.slane %v938, 7
      %v1009 = vrot.slane %v931, 7
      %v1010 = vsel %vm798, %v1008, %v1009
      %v1011 = vrot.slane %v939, 7
      %v1012 = vsel %vm798, %v1009, %v1011
      %1013 = vrot.lane.b32.xlu0 %v1010, 112
      %v1014 = vpop.permute.xlu0 %1013
      %1015 = vrot.lane.b32.xlu0 %v1012, 112
      %v1016 = vpop.permute.xlu0 %1015
      %v1019 = vrot.slane %v936, 1
      %v1020 = vsel %vm717, %v945, %v1019
      %1021 = vrot.lane.b32.xlu0 %v1020, 16
      %v1022 = vpop.permute.xlu0 %1021
      %v1024 = vrot.slane %v936, 2
      %v1025 = vsel %vm742, %v956, %v1024
      %1026 = vrot.lane.b32.xlu0 %v1025, 32
      %v1027 = vpop.permute.xlu0 %1026
      %v1029 = vrot.slane %v936, 3
      %v1030 = vsel %vm754, %v967, %v1029
      %1031 = vrot.lane.b32.xlu0 %v1030, 48
      %v1032 = vpop.permute.xlu0 %1031
      %v1034 = vrot.slane %v936, 4
      %v1035 = vsel %vm766, %v978, %v1034
      %1036 = vrot.lane.b32.xlu0 %v1035, 64
      %v1037 = vpop.permute.xlu0 %1036
      %v1039 = vrot.slane %v936, 5
      %v1040 = vsel %vm774, %v989, %v1039
      %1041 = vrot.lane.b32.xlu0 %v1040, 80
      %v1042 = vpop.permute.xlu0 %1041
      %v1044 = vrot.slane %v936, 6
      %v1045 = vsel %vm786, %v1000, %v1044
      %1046 = vrot.lane.b32.xlu0 %v1045, 96
      %v1047 = vpop.permute.xlu0 %1046
      %vm1049 = vcmask 130048
      %v1050 = vsel %vm1049, %v938, %v948
      %v1051 = vsel %vm1049, %v931, %v950
      %v1052 = vsel %vm838, %v1050, %v959
      %v1053 = vsel %vm838, %v1051, %v961
      %vm1054 = vcmask 392192
      %v1055 = vsel %vm1054, %v1052, %v970
      %v1056 = vsel %vm1054, %v1053, %v972
      %v1057 = vsel %vm841, %v1055, %v981
      %v1058 = vsel %vm841, %v1056, %v983
      %vm1059 = vcmask 654336
      %v1060 = vsel %vm1059, %v1057, %v992
      %v1061 = vsel %vm1059, %v1058, %v994
      %v1062 = vsel %vm844, %v1060, %v1003
      %v1063 = vsel %vm844, %v1061, %v1005
      %vm1064 = vcmask 916480
      %v1065 = vsel %vm1064, %v1062, %v1014
      %v1066 = vsel %vm1064, %v1063, %v1016
      %v1067 = vsel %vm1049, %v939, %v1022
      %v1068 = vsel %vm838, %v1067, %v1027
      %v1069 = vsel %vm1054, %v1068, %v1032
      %v1070 = vsel %vm841, %v1069, %v1037
      %v1071 = vsel %vm1059, %v1070, %v1042
      %v1072 = vsel %vm844, %v1071, %v1047
      %v1073 = vld [vmem:[%s7] sm:$0xff]
      %v1074 = vld [vmem:[%s7 + $0x8] sm:$0xff]
      %v1075 = vld [vmem:[%s7 + $0x10] sm:$0xff]
      %v1076 = vld [vmem:[%s7 + $0x18] sm:$0xff]
      %v1077 = vld [vmem:[%s7 + $0x20] sm:$0xff]
      %v1078 = vld [vmem:[%s7 + $0x28] sm:$0xff]
      %v1079 = vld [vmem:[%s7 + $0x30] sm:$0xff]
      %v1080 = vld [vmem:[%s7 + $0x38] sm:$0xff]
      %v1081 = vld [vmem:[%s7 + $0x40] sm:$0xff]
      %v1082 = vld [vmem:[%s7 + $0x48] sm:$0xff]
      %v1083 = vld [vmem:[%s7 + $0x50] sm:$0xff]
      %v1084 = vld [vmem:[%s7 + $0x58] sm:$0xff]
      %v1085 = vld [vmem:[%s7 + $0x60] sm:$0xff]
      %v1086 = vld [vmem:[%s7 + $0x68] sm:$0xff]
      %v1087 = vld [vmem:[%s7 + $0x70] sm:$0xff]
      %v1088 = vld [vmem:[%s7 + $0x78] sm:$0xff]
      %v1089 = vld [vmem:[%s7 + $0x80] sm:$0xff]
      %v1090 = vld [vmem:[%s7 + $0x88] sm:$0xff]
      %v1091 = vld [vmem:[%s7 + $0x90] sm:$0xff]
      %v1092 = vld [vmem:[%s7 + $0x98] sm:$0xff]
      %v1093 = vld [vmem:[%s7 + $0xa0] sm:$0xff]
      %v1094 = vld [vmem:[%s7 + $0xa8] sm:$0xff]
      %v1095 = vld [vmem:[%s7 + $0xb0] sm:$0xff]
      %v1096 = vld [vmem:[%s7 + $0xb8] sm:$0xff]
      %v1097 = vld [vmem:[%s7 + $0xc0] sm:$0xff]
      %v1098 = vld [vmem:[%s7 + $0xc8] sm:$0xff]
      %v1099 = vld [vmem:[%s7 + $0xd0] sm:$0xff]
      %v1100 = vld [vmem:[%s7 + $0xd8] sm:$0xff]
      %v1101 = vld [vmem:[%s7 + $0xe0] sm:$0xff]
      %v1102 = vld [vmem:[%s7 + $0xe8] sm:$0xff]
      %v1104 = vsel %vm1064, %v1063, 0
      %v1107 = vsel %vm1064, %v1072, 0
      %1109 = vmatpush.msra.mxu0 %v1088
      %1110 = vmatpush.msra.mxu0 %v1087
      %1111 = vmatpush.msra.mxu0 %v1086
      %1112 = vmatpush.msra.mxu0 %v1085
      %1113 = vmatpush.msra.mxu0 %v1084
      %1114 = vmatpush.msra.mxu0 %v1083
      %1115 = vmatpush.msra.mxu0 %v1082
      %1116 = vmatpush.msra.mxu0 %v1081
      %1117 = vmatpush.msra.mxu0 %v1080
      %1118 = vmatpush.msra.mxu0 %v1079
      %1119 = vmatpush.msra.mxu0 %v1078
      %1120 = vmatpush.msra.mxu0 %v1077
      %1121 = vmatpush.msra.mxu0 %v1076
      %1122 = vmatpush.msra.mxu0 %v1075
      %1123 = vmatpush.msra.mxu0 %v1074
      %1124 = vmatpush.msra.mxu0 %v1073
      %1125 = vmatmul.f32.gmra.mxu0 %v1065
      %v1126 = vpop.f32.mrf.mxu0
      %v1127 = vadd.f32 0.0, %v1126
      %1128 = vmatmul.f32.gmra.mxu0 %v1066
      %v1129 = vpop.f32.mrf.mxu0
      %v1130 = vadd.f32 0.0, %v1129
      %1131 = vdwg.mxu0
      %1132 = vmatpush.msra.mxu0 0.0
      %1133 = vmatpush.msra.mxu0 0.0
      %1134 = vmatpush.msra.mxu0 %v1102
      %1135 = vmatpush.msra.mxu0 %v1101
      %1136 = vmatpush.msra.mxu0 %v1100
      %1137 = vmatpush.msra.mxu0 %v1099
      %1138 = vmatpush.msra.mxu0 %v1098
      %1139 = vmatpush.msra.mxu0 %v1097
      %1140 = vmatpush.msra.mxu0 %v1096
      %1141 = vmatpush.msra.mxu0 %v1095
      %1142 = vmatpush.msra.mxu0 %v1094
      %1143 = vmatpush.msra.mxu0 %v1093
      %1144 = vmatpush.msra.mxu0 %v1092
      %1145 = vmatpush.msra.mxu0 %v1091
      %1146 = vmatpush.msra.mxu0 %v1090
      %1147 = vmatpush.msra.mxu0 %v1089
      %1148 = vmatmul.f32.gmra.mxu0 %v1104
      %v1149 = vpop.f32.mrf.mxu0
      %v1150 = vadd.f32 %v1127, %v1149
      %1151 = vmatmul.f32.gmra.mxu0 %v1107
      %v1152 = vpop.f32.mrf.mxu0
      %v1153 = vadd.f32 %v1130, %v1152
      %1154 = vdwg.mxu0
      %v1156 = vsel %vm844, %v850, 0
      %v1159 = vsel %vm844, %v857, 0
      %1161 = vmatpush.msra.mxu0 %v873
      %1162 = vmatpush.msra.mxu0 %v872
      %1163 = vmatpush.msra.mxu0 %v871
      %1164 = vmatpush.msra.mxu0 %v870
      %1165 = vmatpush.msra.mxu0 %v869
      %1166 = vmatpush.msra.mxu0 %v868
      %1167 = vmatpush.msra.mxu0 %v867
      %1168 = vmatpush.msra.mxu0 %v866
      %1169 = vmatpush.msra.mxu0 %v865
      %1170 = vmatpush.msra.mxu0 %v864
      %1171 = vmatpush.msra.mxu0 %v863
      %1172 = vmatpush.msra.mxu0 %v862
      %1173 = vmatpush.msra.mxu0 %v861
      %1174 = vmatpush.msra.mxu0 %v860
      %1175 = vmatpush.msra.mxu0 %v859
      %1176 = vmatpush.msra.mxu0 %v858
      %1177 = vmatmul.f32.gmra.mxu0 %v845
      %v1178 = vpop.f32.mrf.mxu0
      %v1179 = vadd.f32 %v1150, %v1178
      %1180 = vmatmul.f32.gmra.mxu0 %v846
      %v1181 = vpop.f32.mrf.mxu0
      %v1182 = vadd.f32 %v1153, %v1181
      %1183 = vdwg.mxu0
      %1184 = vmatpush.msra.mxu0 %v889
      %1185 = vmatpush.msra.mxu0 %v888
      %1186 = vmatpush.msra.mxu0 %v887
      %1187 = vmatpush.msra.mxu0 %v886
      %1188 = vmatpush.msra.mxu0 %v885
      %1189 = vmatpush.msra.mxu0 %v884
      %1190 = vmatpush.msra.mxu0 %v883
      %1191 = vmatpush.msra.mxu0 %v882
      %1192 = vmatpush.msra.mxu0 %v881
      %1193 = vmatpush.msra.mxu0 %v880
      %1194 = vmatpush.msra.mxu0 %v879
      %1195 = vmatpush.msra.mxu0 %v878
      %1196 = vmatpush.msra.mxu0 %v877
      %1197 = vmatpush.msra.mxu0 %v876
      %1198 = vmatpush.msra.mxu0 %v875
      %1199 = vmatpush.msra.mxu0 %v874
      %1200 = vmatmul.f32.gmra.mxu0 %v851
      %v1201 = vpop.f32.mrf.mxu0
      %v1202 = vadd.f32 %v1179, %v1201
      %1203 = vmatmul.f32.gmra.mxu0 %v852
      %v1204 = vpop.f32.mrf.mxu0
      %v1205 = vadd.f32 %v1182, %v1204
      %1206 = vdwg.mxu0
      %1207 = vmatpush.msra.mxu0 %v905
      %1208 = vmatpush.msra.mxu0 %v904
      %1209 = vmatpush.msra.mxu0 %v903
      %1210 = vmatpush.msra.mxu0 %v902
      %1211 = vmatpush.msra.mxu0 %v901
      %1212 = vmatpush.msra.mxu0 %v900
      %1213 = vmatpush.msra.mxu0 %v899
      %1214 = vmatpush.msra.mxu0 %v898
      %1215 = vmatpush.msra.mxu0 %v897
      %1216 = vmatpush.msra.mxu0 %v896
      %1217 = vmatpush.msra.mxu0 %v895
      %1218 = vmatpush.msra.mxu0 %v894
      %1219 = vmatpush.msra.mxu0 %v893
      %1220 = vmatpush.msra.mxu0 %v892
      %1221 = vmatpush.msra.mxu0 %v891
      %1222 = vmatpush.msra.mxu0 %v890
      %1223 = vmatmul.f32.gmra.mxu0 %v846
      %v1224 = vpop.f32.mrf.mxu0
      %v1225 = vadd.f32 %v1202, %v1224
      %1226 = vmatmul.f32.gmra.mxu0 %v855
      %v1227 = vpop.f32.mrf.mxu0
      %v1228 = vadd.f32 %v1205, %v1227
      %1229 = vdwg.mxu0
      %1230 = vmatpush.msra.mxu0 0.0
      %1231 = vmatpush.msra.mxu0 0.0
      %1232 = vmatpush.msra.mxu0 0.0
      %1233 = vmatpush.msra.mxu0 0.0
      %1234 = vmatpush.msra.mxu0 %v917
      %1235 = vmatpush.msra.mxu0 %v916
      %1236 = vmatpush.msra.mxu0 %v915
      %1237 = vmatpush.msra.mxu0 %v914
      %1238 = vmatpush.msra.mxu0 %v913
      %1239 = vmatpush.msra.mxu0 %v912
      %1240 = vmatpush.msra.mxu0 %v911
      %1241 = vmatpush.msra.mxu0 %v910
      %1242 = vmatpush.msra.mxu0 %v909
      %1243 = vmatpush.msra.mxu0 %v908
      %1244 = vmatpush.msra.mxu0 %v907
      %1245 = vmatpush.msra.mxu0 %v906
      %1246 = vmatmul.f32.gmra.mxu0 %v1156
      %v1247 = vpop.f32.mrf.mxu0
      %v1248 = vadd.f32 %v1225, %v1247
      %1249 = vmatmul.f32.gmra.mxu0 %v1159
      %v1250 = vpop.f32.mrf.mxu0
      %v1251 = vadd.f32 %v1228, %v1250
      %1252 = vdwg.mxu0
      %v1253 = vld [vmem:[%s8] sm:$0x1]
      %v1255 = vperm.slane %v1253, 0
      %v1257 = vadd.f32 %v1248, %v1255
      %v1258 = vadd.f32 %v1251, %v1255
      %v1259 = vmax.f32 %v1257, 0.0
      %v1260 = vmax.f32 %v1258, 0.0
      %v1261 = vld [vmem:[%s9] sm:$0xff]
      %v1262 = vld [vmem:[%s9 + $0x8] sm:$0xff]
      %v1263 = vld [vmem:[%s10] sm:$0x1]
      %v1265 = vperm.slane %v1263, 0
      %v1268 = vsel %vm1049, %v1259, 0
      %v1271 = vsel %vm1049, %v1260, 0
      %1273 = vmatpush.msra.mxu0 0.0
      %1274 = vmatpush.msra.mxu0 0.0
      %1275 = vmatpush.msra.mxu0 0.0
      %1276 = vmatpush.msra.mxu0 0.0
      %1277 = vmatpush.msra.mxu0 0.0
      %1278 = vmatpush.msra.mxu0 0.0
      %1279 = vmatpush.msra.mxu0 0.0
      %1280 = vmatpush.msra.mxu0 0.0
      %1281 = vmatpush.msra.mxu0 0.0
      %1282 = vmatpush.msra.mxu0 0.0
      %1283 = vmatpush.msra.mxu0 0.0
      %1284 = vmatpush.msra.mxu0 0.0
      %1285 = vmatpush.msra.mxu0 0.0
      %1286 = vmatpush.msra.mxu0 0.0
      %1287 = vmatpush.msra.mxu0 %v1262
      %1288 = vmatpush.msra.mxu0 %v1261
      %1289 = vmatmul.f32.gmra.mxu0 %v1268
      %v1290 = vpop.f32.mrf.mxu0
      %v1291 = vadd.f32 %v1265, %v1290
      %1292 = vmatmul.f32.gmra.mxu0 %v1271
      %v1293 = vpop.f32.mrf.mxu0
      %v1294 = vadd.f32 %v1265, %v1293
      %1295 = vdwg.mxu0
      %v1296 = vtanh.pop %v1291
      %v1297 = vtanh.pop %v1294
      %vm1298 = vcmask 15360
      %1299 = vst.msk [vmem:[%s696] sm:$0xff] %vm1298, %v1296
      %1300 = vst.msk [vmem:[%s696 + $0x8] sm:$0xff] %vm1298, %v1297
      %s1301 = smul.u32 2, %s27
      %p1302 = scmp.lt.s32.totalorder %s26, 1
      %s1303 = scalar_select %p1302, %s26, 1
      %p1304 = scmp.lt.s32.totalorder %s1301, 7
      %s1305 = scalar_select %p1304, %s1301, 7
      %s1306 = smul.addr %s1303, 8
      %s1307 = sadd.s32 %s1305, %s1306
      %s1308 = smul.addr %s1307, 8
      %s1309 = scalar_lea.vmem %s11, %s1308
      // Predicated region
      $region65: #{wave_unet_forward.19} parent=63 // pred_check
        %p1310 = pneg %p359
      $region66: #{wave_unet_forward.19} parent=63 // pred_check_branch
        %1312 = sbr.rel (%p1310) target = $region68
      $region67: #{wave_unet_forward.19} parent=63 // pred_region
        %s1313 = smul.u32 2, %s27
      $region68: #{wave_unet_forward.19} parent=63 // pred_fallthru
        _
    $region64: #{wave_unet_forward.19} parent=5 // pred_fallthru
      _
    %p1314 = scmp.le.s32.totalorder 2, %s17
    // Predicated region
    $region69: #{wave_unet_forward.19} parent=5 // pred_check
      %p1315 = pneg %p1314
    $region70: #{wave_unet_forward.19} parent=5 // pred_check_branch
      %1317 = sbr.rel (%p1315) target = $region72
    $region71: #{wave_unet_forward.19} parent=5 // pred_region
      %s1318 = ssub.s32 %s17, 2
      // Predicated region
      $region73: #{wave_unet_forward.19} parent=71 // pred_check
        %p1319 = pneg %p365
      $region74: #{wave_unet_forward.19} parent=71 // pred_check_branch
        %1321 = sbr.rel (%p1319) target = $region76
      $region75: #{wave_unet_forward.19} parent=71 // pred_region
        %s1322 = smul.u32 2, %s29
        %p1323 = scmp.lt.s32.totalorder %s28, 1
        %s1324 = scalar_select %p1323, %s28, 1
        %p1325 = scmp.lt.s32.totalorder %s1322, 7
        %s1326 = scalar_select %p1325, %s1322, 7
        %s1327 = smul.addr %s1324, 8
        %s1328 = sadd.s32 %s1326, %s1327
        %s1329 = smul.addr %s1328, 8
        %s1330 = scalar_lea.vmem %s11, %s1329
      $region76: #{wave_unet_forward.19} parent=71 // pred_fallthru
        _
    $region72: #{wave_unet_forward.19} parent=5 // pred_fallthru
      _
  $region6: #{wave_unet_forward.19} parent=0 // loop_footer
    %s21 = sadd.s32 1, %s17
  $region7: #{wave_unet_forward.19} parent=0 // loop_footer_branch
    %16 = sbr.rel target = $region3
  $region8: #{wave_unet_forward.19} parent=0 // loop_exit
    _

</llo_original>
